<compile_context>
chip_gen: v7x
topology: tpu7x:2x2x1
jax: 0.10.0
libtpu: 0.0.40
codegen_flags: <defaults>
</compile_context>

<pallas_src>
import functools
import math

import jax
import jax.numpy as jnp
from jax.experimental import pallas as pl
from jax.experimental.pallas import tpu as pltpu


# ----------------------------- helpers --------------------------------------

_SQRT1_2 = 0.7071067811865476


def _erf_f32(x):
    # Abramowitz & Stegun 7.1.26 erf approximation, max abs error ~1.5e-7.
    # Built only from ops with guaranteed Mosaic lowering (abs/where/exp/div).
    a1, a2, a3, a4, a5 = (0.254829592, -0.284496736, 1.421413741,
                          -1.453152027, 1.061405429)
    p = 0.3275911
    ax = jnp.abs(x)
    t = 1.0 / (1.0 + p * ax)
    poly = ((((a5 * t + a4) * t + a3) * t + a2) * t + a1) * t
    y = 1.0 - poly * jnp.exp(-ax * ax)
    return jnp.where(x < 0.0, -y, y)


def _gelu_f32(x):
    # nn.GELU() default (erf form), evaluated in f32 (EUP exp + VPU).
    return 0.5 * x * (1.0 + _erf_f32(x * _SQRT1_2))


def _pick_tile(dim, pref, align):
    """Largest divisor of dim <= pref that is a multiple of align, else full."""
    if dim <= pref:
        return dim
    t = (pref // align) * align
    while t >= align:
        if dim % t == 0:
            return t
        t -= align
    return dim


def _pick_row_tile(M):
    # bf16 rows pack 16 per sublane group; also keep >=2 grid steps when possible
    # so v7x's two TensorCores both get work and DMA prefetch overlaps.
    pref = max(16, min(512, M // 2))
    return _pick_tile(M, pref, 16)


def _pick_window_batch(nW, S, Cb, budget_bytes=8 * 1024 * 1024):
    """Windows per grid step; accounts for double-buffering; keeps >=2 steps."""
    cap = max(1, nW // 2)
    best = 1
    for wb in range(1, cap + 1):
        if nW % wb:
            continue
        io_bytes = 2 * (4 * wb * S * Cb * 2)     # double-buffered bf16 q/k/v/out
        tmp_bytes = 3 * wb * S * S * 4           # f32 scores / probs temporaries
        if io_bytes + tmp_bytes <= budget_bytes:
            best = wb
    return best


def _cparams(semantics, vmem_mib=None):
    kw = dict(dimension_semantics=semantics)
    if vmem_mib is not None:
        kw["vmem_limit_bytes"] = vmem_mib * 1024 * 1024
    return pltpu.CompilerParams(**kw)


# ----------------------------- Pallas kernels -------------------------------

def _matmul_kernel(x_ref, w_ref, b_ref, o_ref, acc_ref, *, activation):
    k = pl.program_id(2)

    @pl.when(k == 0)
    def _():
        acc_ref[...] = jnp.zeros_like(acc_ref)

    acc_ref[...] += jnp.dot(x_ref[...], w_ref[...],
                            preferred_element_type=jnp.float32)

    @pl.when(k == pl.num_programs(2) - 1)
    def _():
        y = acc_ref[...] + b_ref[...]
        if activation == "gelu":
            y = _gelu_f32(y)
        o_ref[...] = y.astype(o_ref.dtype)


def _matmul_res_kernel(x_ref, w_ref, b_ref, r_ref, o_ref, acc_ref, *, activation):
    k = pl.program_id(2)

    @pl.when(k == 0)
    def _():
        acc_ref[...] = jnp.zeros_like(acc_ref)

    acc_ref[...] += jnp.dot(x_ref[...], w_ref[...],
                            preferred_element_type=jnp.float32)

    @pl.when(k == pl.num_programs(2) - 1)
    def _():
        y = acc_ref[...] + b_ref[...]
        if activation == "gelu":
            y = _gelu_f32(y)
        y = y + r_ref[...].astype(jnp.float32)
        o_ref[...] = y.astype(o_ref.dtype)


def _layernorm_kernel(x_ref, g_ref, b_ref, o_ref, *, eps):
    x = x_ref[...].astype(jnp.float32)
    mu = jnp.mean(x, axis=-1, keepdims=True)
    var = jnp.mean(jnp.square(x - mu), axis=-1, keepdims=True)
    y = (x - mu) * jax.lax.rsqrt(var + eps)
    o_ref[...] = (y * g_ref[...] + b_ref[...]).astype(o_ref.dtype)


def _attn_kernel(q_ref, k_ref, v_ref, o_ref, *, num_heads, scale):
    # blocks: (Wb, S, Cb) lane-dense; heads are contiguous channel slices of Cb.
    Cb = q_ref.shape[-1]
    d = Cb // num_heads
    q = q_ref[...]
    k = k_ref[...]
    v = v_ref[...]
    outs = []
    for h in range(num_heads):
        sl = slice(h * d, (h + 1) * d)
        s = jnp.einsum('wqd,wkd->wqk', q[:, :, sl], k[:, :, sl],
                       preferred_element_type=jnp.float32) * scale
        s = s - jnp.max(s, axis=-1, keepdims=True)
        p = jnp.exp(s)
        p = p * pl.reciprocal(jnp.sum(p, axis=-1, keepdims=True), approx=True)
        outs.append(jnp.einsum('wqk,wkd->wqd', p.astype(v.dtype), v[:, :, sl],
                               preferred_element_type=jnp.float32))
    # Single full-lane store (no masked per-head vst).
    o_ref[...] = jnp.concatenate(outs, axis=-1).astype(o_ref.dtype)


def _dwconv3x3_kernel(xp_ref, w_ref, b_ref, o_ref):
    # Depthwise 3x3 conv + fused GELU.  xp_ref: (1, H+2, W+2, Ct) bf16 padded.
    H, W, Ct = o_ref.shape[1], o_ref.shape[2], o_ref.shape[3]
    xp = xp_ref[0].astype(jnp.float32)
    w = w_ref[...]                                            # (9, Ct) f32
    acc = jnp.zeros((H, W, Ct), jnp.float32)
    for ky in range(3):
        for kx in range(3):
            acc = acc + xp[ky:ky + H, kx:kx + W, :] * w[3 * ky + kx]
    acc = _gelu_f32(acc + b_ref[0])
    o_ref[0] = acc.astype(o_ref.dtype)


def _pa_kernel(xp_ref, w_ref, b_ref, o_ref):
    # PA: out = x * sigmoid(dwconv3x3(x)); x is the interior of the padded image
    # (no separate x input -> one less DMA / double buffer).
    H, W, Ct = o_ref.shape[1], o_ref.shape[2], o_ref.shape[3]
    xp = xp_ref[0].astype(jnp.float32)
    w = w_ref[...]
    acc = jnp.zeros((H, W, Ct), jnp.float32)
    for ky in range(3):
        for kx in range(3):
            acc = acc + xp[ky:ky + H, kx:kx + W, :] * w[3 * ky + kx]
    gate = jax.nn.sigmoid(acc + b_ref[0])
    o_ref[0] = (xp[1:H + 1, 1:W + 1, :] * gate).astype(o_ref.dtype)


def _conv3x3_res_kernel(xp_ref, w_ref, b_ref, r_ref, o_ref, *, H, W):
    # Dense 3x3 conv: padded bf16 image block (1, H+2, W+2, C), weights (9, C, tn)
    # bf16, residual/output as tokens (1, H*W, tn) f32.  9 shifted-slice matmuls
    # accumulated in f32 -> no im2col in HBM, no per-tap casts.
    C = xp_ref.shape[3]
    tn = o_ref.shape[2]
    xp = xp_ref[0]                                            # (H+2, W+2, C) bf16
    acc = jnp.zeros((H * W, tn), jnp.float32)
    for t in range(9):
        ky, kx = divmod(t, 3)
        patch = xp[ky:ky + H, kx:kx + W, :].reshape(H * W, C)
        acc = acc + jnp.dot(patch, w_ref[t], preferred_element_type=jnp.float32)
    y = acc + b_ref[...] + r_ref[0].astype(jnp.float32)
    o_ref[0] = y.astype(o_ref.dtype)


# ----------------------------- Pallas wrappers ------------------------------

def pallas_matmul(x, w, b, residual=None, activation=None, out_dtype=None):
    """y = act(x @ w + b) (+ residual); bf16 MXU operands, f32 accumulate."""
    M, K = x.shape
    N = w.shape[1]
    if x.dtype != jnp.bfloat16:
        x = x.astype(jnp.bfloat16)        # single wrapper cast (never per k-step)
    if w.dtype != jnp.bfloat16:
        w = w.astype(jnp.bfloat16)        # weights are normally pre-cast outside jit
    if out_dtype is None:
        out_dtype = residual.dtype if residual is not None else jnp.bfloat16

    tm = _pick_row_tile(M)
    tn = _pick_tile(N, 512, 128)
    tk = _pick_tile(K, 512, 128)
    grid = (M // tm, N // tn, K // tk)

    x_spec = pl.BlockSpec((tm, tk), lambda i, j, k: (i, k))
    w_spec = pl.BlockSpec((tk, tn), lambda i, j, k: (k, j))
    b_spec = pl.BlockSpec((1, tn), lambda i, j, k: (0, j))
    o_spec = pl.BlockSpec((tm, tn), lambda i, j, k: (i, j))
    scratch = [pltpu.VMEM((tm, tn), jnp.float32)]
    cparams = _cparams(("parallel", "parallel", "arbitrary"), vmem_mib=48)
    out_bytes = 2 if out_dtype == jnp.bfloat16 else 4
    cost = pl.CostEstimate(flops=2 * M * N * K, transcendentals=0,
                           bytes_accessed=2 * M * K + 2 * K * N + out_bytes * M * N
                           + (4 * M * N if residual is not None else 0))

    b2 = b.reshape(1, N).astype(jnp.float32)

    if residual is None:
        return pl.pallas_call(
            functools.partial(_matmul_kernel, activation=activation),
            out_shape=jax.ShapeDtypeStruct((M, N), out_dtype),
            grid=grid,
            in_specs=[x_spec, w_spec, b_spec],
            out_specs=o_spec,
            scratch_shapes=scratch,
            compiler_params=cparams,
            cost_estimate=cost,
        )(x, w, b2)

    r_spec = pl.BlockSpec((tm, tn), lambda i, j, k: (i, j))
    return pl.pallas_call(
        functools.partial(_matmul_res_kernel, activation=activation),
        out_shape=jax.ShapeDtypeStruct((M, N), out_dtype),
        grid=grid,
        in_specs=[x_spec, w_spec, b_spec, r_spec],
        out_specs=o_spec,
        scratch_shapes=scratch,
        compiler_params=cparams,
        cost_estimate=cost,
    )(x, w, b2, residual)


def pallas_layernorm(x2d, g, b, eps=1e-5, out_dtype=jnp.bfloat16):
    M, C = x2d.shape
    tm = _pick_row_tile(M)
    return pl.pallas_call(
        functools.partial(_layernorm_kernel, eps=eps),
        out_shape=jax.ShapeDtypeStruct((M, C), out_dtype),
        grid=(M // tm,),
        in_specs=[pl.BlockSpec((tm, C), lambda i: (i, 0)),
                  pl.BlockSpec((1, C), lambda i: (0, 0)),
                  pl.BlockSpec((1, C), lambda i: (0, 0))],
        out_specs=pl.BlockSpec((tm, C), lambda i: (i, 0)),
        compiler_params=_cparams(("parallel",)),
    )(x2d, g.reshape(1, C), b.reshape(1, C))


def pallas_window_attention(q, k, v, num_heads, scale):
    # q/k/v: (nW, S, Cb) lane-dense bf16 windows; Wb windows per grid step.
    nW, S, Cb = q.shape
    Wb = _pick_window_batch(nW, S, Cb)
    spec = pl.BlockSpec((Wb, S, Cb), lambda i: (i, 0, 0))
    return pl.pallas_call(
        functools.partial(_attn_kernel, num_heads=num_heads, scale=scale),
        out_shape=jax.ShapeDtypeStruct((nW, S, Cb), jnp.bfloat16),
        grid=(nW // Wb,),
        in_specs=[spec, spec, spec],
        out_specs=spec,
        compiler_params=_cparams(("parallel",), vmem_mib=48),
    )(q, k, v)


def pallas_dwconv3x3(x_nhwc, w9c, bias):
    """Depthwise 3x3 same conv + fused GELU; bf16 in/out."""
    B, H, W, C = x_nhwc.shape
    xp = jnp.pad(x_nhwc, ((0, 0), (1, 1), (1, 1), (0, 0)))
    tc = _pick_tile(C, 256, 128)
    return pl.pallas_call(
        _dwconv3x3_kernel,
        out_shape=jax.ShapeDtypeStruct((B, H, W, C), x_nhwc.dtype),
        grid=(B, C // tc),
        in_specs=[pl.BlockSpec((1, H + 2, W + 2, tc), lambda b, c: (b, 0, 0, c)),
                  pl.BlockSpec((9, tc), lambda b, c: (0, c)),
                  pl.BlockSpec((1, tc), lambda b, c: (0, c))],
        out_specs=pl.BlockSpec((1, H, W, tc), lambda b, c: (b, 0, 0, c)),
        compiler_params=_cparams(("parallel", "parallel"), vmem_mib=48),
    )(xp, w9c, bias.reshape(1, C))


def pallas_pa(x_nhwc, w9c, bias):
    """PA: x * sigmoid(dwconv3x3(x)); single padded-image input."""
    B, H, W, C = x_nhwc.shape
    xp = jnp.pad(x_nhwc, ((0, 0), (1, 1), (1, 1), (0, 0)))
    tc = _pick_tile(C, 256, 128)
    return pl.pallas_call(
        _pa_kernel,
        out_shape=jax.ShapeDtypeStruct((B, H, W, C), x_nhwc.dtype),
        grid=(B, C // tc),
        in_specs=[pl.BlockSpec((1, H + 2, W + 2, tc), lambda b, c: (b, 0, 0, c)),
                  pl.BlockSpec((9, tc), lambda b, c: (0, c)),
                  pl.BlockSpec((1, tc), lambda b, c: (0, c))],
        out_specs=pl.BlockSpec((1, H, W, tc), lambda b, c: (b, 0, 0, c)),
        compiler_params=_cparams(("parallel", "parallel"), vmem_mib=48),
    )(xp, w9c, bias.reshape(1, C))


def pallas_conv3x3_residual(x_nhwc, w9, b, resid_nhwc):
    """Dense 3x3 same conv + fused residual; returns (B, H*W, Co) f32 tokens."""
    B, H, W, C = x_nhwc.shape
    Co = w9.shape[2]
    HW = H * W
    # Pre-cast the image to bf16 ONCE, then pad (halves the padded-image DMA).
    xp = jnp.pad(x_nhwc.astype(jnp.bfloat16), ((0, 0), (1, 1), (1, 1), (0, 0)))
    resid = resid_nhwc.reshape(B, HW, Co)
    tn = _pick_tile(Co, 256, 128)
    if w9.dtype != jnp.bfloat16:
        w9 = w9.astype(jnp.bfloat16)
    return pl.pallas_call(
        functools.partial(_conv3x3_res_kernel, H=H, W=W),
        out_shape=jax.ShapeDtypeStruct((B, HW, Co), resid_nhwc.dtype),
        grid=(B, Co // tn),
        in_specs=[pl.BlockSpec((1, H + 2, W + 2, C), lambda b, j: (b, 0, 0, 0)),
                  pl.BlockSpec((9, C, tn), lambda b, j: (0, 0, j)),
                  pl.BlockSpec((1, tn), lambda b, j: (0, j)),
                  pl.BlockSpec((1, HW, tn), lambda b, j: (b, 0, j))],
        out_specs=pl.BlockSpec((1, HW, tn), lambda b, j: (b, 0, j)),
        compiler_params=_cparams(("parallel", "parallel"), vmem_mib=48),
        cost_estimate=pl.CostEstimate(
            flops=2 * B * HW * 9 * C * Co, transcendentals=0,
            bytes_accessed=2 * B * (H + 2) * (W + 2) * C + 8 * B * HW * Co),
    )(xp, w9, b.reshape(1, Co).astype(jnp.float32), resid)


# ----------------------------- JAX glue (windowing, blocks) -----------------

def to_windows(x, H, W, H_sp, W_sp):
    # x: (B, L, Cb) -> (nWindows, H_sp*W_sp, Cb)  (lane-dense, heads NOT split)
    B, L, Cb = x.shape
    x = x.reshape(B, H // H_sp, H_sp, W // W_sp, W_sp, Cb)
    x = x.transpose(0, 1, 3, 2, 4, 5).reshape(-1, H_sp * W_sp, Cb)
    return x


def from_windows(xw, H, W, H_sp, W_sp):
    # xw: (nWindows, S, Cb) -> (B, H*W, Cb)
    nW, S, Cb = xw.shape
    B = nW // ((H // H_sp) * (W // W_sp))
    x = xw.reshape(B, H // H_sp, W // W_sp, H_sp, W_sp, Cb)
    x = x.transpose(0, 1, 3, 2, 4, 5).reshape(B, H * W, Cb)
    return x


def cswin_block(x, p, H, W, num_heads, split_size):
    B, L, C = x.shape
    x2d = x.reshape(B * L, C)                                   # f32 residual stream

    img = pallas_layernorm(x2d, p['norm1_g'], p['norm1_b'])     # bf16
    qkv = pallas_matmul(img, p['qkv_w'], p['qkv_b'],
                        out_dtype=jnp.bfloat16).reshape(B, L, 3 * C)

    half = C // 2
    nh_b = num_heads // 2
    head_dim = C // num_heads
    scale = head_dim ** -0.5

    # branch 0 (idx=0): H_sp=H, W_sp=split_size ; branch 1 (idx=1): H_sp=split_size, W_sp=W
    branch_cfg = [(H, split_size, 0), (split_size, W, half)]
    outs = []
    for H_sp, W_sp, c0 in branch_cfg:
        qb = to_windows(qkv[:, :, c0:c0 + half], H, W, H_sp, W_sp)
        kb = to_windows(qkv[:, :, C + c0:C + c0 + half], H, W, H_sp, W_sp)
        vb = to_windows(qkv[:, :, 2 * C + c0:2 * C + c0 + half], H, W, H_sp, W_sp)
        ob = pallas_window_attention(qb, kb, vb, nh_b, scale)    # bf16
        outs.append(from_windows(ob, H, W, H_sp, W_sp))
    attened = jnp.concatenate(outs, axis=2).reshape(B * L, C)    # bf16

    # x = x + proj(attened)   (residual fused, f32 out)
    x2d = pallas_matmul(attened, p['proj_w'], p['proj_b'],
                        residual=x2d, out_dtype=x2d.dtype)

    # LeFF MLP: (linear1 + GELU) -> (depthwise 3x3 + GELU) -> linear2 (+x fused)
    y = pallas_layernorm(x2d, p['norm2_g'], p['norm2_b'])        # bf16
    hidden = p['fc1_w'].shape[1]
    y = pallas_matmul(y, p['fc1_w'], p['fc1_b'],
                      activation='gelu', out_dtype=jnp.bfloat16) # fused GELU
    y = y.reshape(B, H, W, hidden)                               # 'b (h w) c -> b h w c'
    y = pallas_dwconv3x3(y, p['dw_w'], p['dw_b'])                # fused GELU, bf16
    y = y.reshape(B * L, hidden)
    x2d = pallas_matmul(y, p['fc2_w'], p['fc2_b'],
                        residual=x2d, out_dtype=x2d.dtype)       # f32
    return x2d.reshape(B, L, C)


def rstb_forward(x_nchw, params, *, num_heads, split_size):
    B, C, H, W = x_nchw.shape
    x_nhwc = jnp.transpose(x_nchw, (0, 2, 3, 1))

    # PatchEmbed: PA (x * sigmoid(dwconv3x3(x))) then flatten(2).transpose(1,2)
    x_pa = pallas_pa(x_nhwc, params['pa_w'], params['pa_b'])
    tokens = x_pa.reshape(B, H * W, C)

    for blk in params['blocks']:
        tokens = cswin_block(tokens, blk, H, W, num_heads, split_size)

    # PatchUnEmbed + 3x3 conv + residual (is_spa=True), residual fused in kernel
    out_tokens = pallas_conv3x3_residual(tokens.reshape(B, H, W, C),
                                         params['conv_w'], params['conv_b'],
                                         x_nhwc)
    return jnp.transpose(out_tokens.reshape(B, H, W, C), (0, 3, 1, 2))


# ----------------------------- params ---------------------------------------

def make_params(key, dim, num_heads, depth, mlp_ratio):
    hidden = int(dim * mlp_ratio)
    keys = jax.random.split(key, depth * 10 + 4)
    ki = iter(keys)

    def unif(shape, bound):
        return jax.random.uniform(next(ki), shape, jnp.float32, -bound, bound)

    blocks = []
    for _ in range(depth):
        bd = 1.0 / math.sqrt(dim)
        bh = 1.0 / math.sqrt(hidden)
        blocks.append(dict(
            norm1_g=jnp.ones((dim,), jnp.float32), norm1_b=jnp.zeros((dim,), jnp.float32),
            qkv_w=unif((dim, 3 * dim), bd), qkv_b=unif((3 * dim,), bd),
            proj_w=unif((dim, dim), bd), proj_b=unif((dim,), bd),
            norm2_g=jnp.ones((dim,), jnp.float32), norm2_b=jnp.zeros((dim,), jnp.float32),
            fc1_w=unif((dim, hidden), bd), fc1_b=unif((hidden,), bd),
            dw_w=unif((9, hidden), 1.0 / 3.0), dw_b=unif((hidden,), 1.0 / 3.0),
            fc2_w=unif((hidden, dim), bh), fc2_b=unif((dim,), bh),
        ))
    bc = 1.0 / math.sqrt(9 * dim)
    return dict(
        blocks=blocks,
        pa_w=unif((9, dim), 1.0 / 3.0), pa_b=unif((dim,), 1.0 / 3.0),
        conv_w=unif((9, dim, dim), bc), conv_b=unif((dim,), bc),
    )


def cast_weights_bf16(params):
    """Pre-cast MXU weight matrices to bf16 once, outside the jitted forward."""
    def cast_block(bd):
        out = dict(bd)
        for k in ('qkv_w', 'proj_w', 'fc1_w', 'fc2_w'):
            out[k] = bd[k].astype(jnp.bfloat16)
        return out
    out = dict(params)
    out['blocks'] = [cast_block(b) for b in params['blocks']]
    out['conv_w'] = params['conv_w'].astype(jnp.bfloat16)
    return out


# ----------------------------- main ------------------------------------------

if __name__ == "__main__":
    B, dim, H, W = 2, 8, 8, 8
    depth, num_heads, split_size, mlp_ratio = 2, 4, 2, 2.0

    key = jax.random.PRNGKey(0)
    kx, kp = jax.random.split(key)
    x = jax.random.normal(kx, (B, dim, H, W), jnp.float32)       # NCHW, like PyTorch
    params = cast_weights_bf16(make_params(kp, dim, num_heads, depth, mlp_ratio))

    fwd = jax.jit(functools.partial(rstb_forward, num_heads=num_heads,
                                    split_size=split_size))
    out = fwd(x, params)
    jax.block_until_ready(out)
    assert out.shape == (B, dim, H, W) and out.dtype == jnp.float32
    assert bool(jnp.all(jnp.isfinite(out)))
    print("KERNEL_OK")
</pallas_src>

<mosaic_0001>
module attributes {stable_mosaic.version = 11 : i64} {
  func.func @_pa_kernel(%arg0: i32, %arg1: i32, %arg2: memref<1x10x10x8xf32, #tpu.memory_space<vmem>>, %arg3: memref<9x8xf32, #tpu.memory_space<vmem>>, %arg4: memref<1x8xf32, #tpu.memory_space<vmem>>, %arg5: memref<1x8x8x8xf32, #tpu.memory_space<vmem>>) attributes {dimension_semantics = [#tpu.dimension_semantics<parallel>, #tpu.dimension_semantics<parallel>], iteration_bounds = array<i64: 2, 1>, scalar_prefetch = 0 : i64, scratch_operands = 0 : i64, tpu.core_type = #tpu.core_type<tc>, window_params = [{transform_indices = @transform_0, window_bounds = array<i64: 1, 10, 10, 8>}, {transform_indices = @transform_1, window_bounds = array<i64: 9, 8>}, {transform_indices = @transform_2, window_bounds = array<i64: 1, 8>}, {transform_indices = @transform_3, window_bounds = array<i64: 1, 8, 8, 8>}]} {
    %c0 = arith.constant 0 : index
    %c0_0 = arith.constant 0 : index
    %c0_1 = arith.constant 0 : index
    %c0_2 = arith.constant 0 : index
    %0 = vector.load %arg2[%c0, %c0_0, %c0_1, %c0_2] : memref<1x10x10x8xf32, #tpu.memory_space<vmem>>, vector<1x10x10x8xf32>
    %1 = vector.shape_cast %0 : vector<1x10x10x8xf32> to vector<10x10x8xf32>
    %c0_3 = arith.constant 0 : index
    %c0_4 = arith.constant 0 : index
    %2 = vector.load %arg3[%c0_3, %c0_4] : memref<9x8xf32, #tpu.memory_space<vmem>>, vector<9x8xf32>
    %cst = arith.constant 0.000000e+00 : f32
    %3 = vector.broadcast %cst : f32 to vector<8x8x8xf32>
    %4 = vector.extract_strided_slice %1 {offsets = [0, 0, 0], sizes = [8, 8, 8], strides = [1, 1, 1]} : vector<10x10x8xf32> to vector<8x8x8xf32>
    %5 = vector.extract_strided_slice %2 {offsets = [0, 0], sizes = [1, 8], strides = [1, 1]} : vector<9x8xf32> to vector<1x8xf32>
    %6 = vector.shape_cast %5 : vector<1x8xf32> to vector<8xf32>
    %7 = vector.shape_cast %6 : vector<8xf32> to vector<1x1x8xf32>
    %8 = vector.broadcast %7 : vector<1x1x8xf32> to vector<8x8x8xf32>
    %9 = arith.mulf %4, %8 : vector<8x8x8xf32>
    %10 = arith.addf %3, %9 : vector<8x8x8xf32>
    %11 = vector.extract_strided_slice %1 {offsets = [0, 1, 0], sizes = [8, 8, 8], strides = [1, 1, 1]} : vector<10x10x8xf32> to vector<8x8x8xf32>
    %12 = vector.extract_strided_slice %2 {offsets = [1, 0], sizes = [1, 8], strides = [1, 1]} : vector<9x8xf32> to vector<1x8xf32>
    %13 = vector.shape_cast %12 : vector<1x8xf32> to vector<8xf32>
    %14 = vector.shape_cast %13 : vector<8xf32> to vector<1x1x8xf32>
    %15 = vector.broadcast %14 : vector<1x1x8xf32> to vector<8x8x8xf32>
    %16 = arith.mulf %11, %15 : vector<8x8x8xf32>
    %17 = arith.addf %10, %16 : vector<8x8x8xf32>
    %18 = vector.extract_strided_slice %1 {offsets = [0, 2, 0], sizes = [8, 8, 8], strides = [1, 1, 1]} : vector<10x10x8xf32> to vector<8x8x8xf32>
    %19 = vector.extract_strided_slice %2 {offsets = [2, 0], sizes = [1, 8], strides = [1, 1]} : vector<9x8xf32> to vector<1x8xf32>
    %20 = vector.shape_cast %19 : vector<1x8xf32> to vector<8xf32>
    %21 = vector.shape_cast %20 : vector<8xf32> to vector<1x1x8xf32>
    %22 = vector.broadcast %21 : vector<1x1x8xf32> to vector<8x8x8xf32>
    %23 = arith.mulf %18, %22 : vector<8x8x8xf32>
    %24 = arith.addf %17, %23 : vector<8x8x8xf32>
    %25 = vector.extract_strided_slice %1 {offsets = [1, 0, 0], sizes = [8, 8, 8], strides = [1, 1, 1]} : vector<10x10x8xf32> to vector<8x8x8xf32>
    %26 = vector.extract_strided_slice %2 {offsets = [3, 0], sizes = [1, 8], strides = [1, 1]} : vector<9x8xf32> to vector<1x8xf32>
    %27 = vector.shape_cast %26 : vector<1x8xf32> to vector<8xf32>
    %28 = vector.shape_cast %27 : vector<8xf32> to vector<1x1x8xf32>
    %29 = vector.broadcast %28 : vector<1x1x8xf32> to vector<8x8x8xf32>
    %30 = arith.mulf %25, %29 : vector<8x8x8xf32>
    %31 = arith.addf %24, %30 : vector<8x8x8xf32>
    %32 = vector.extract_strided_slice %1 {offsets = [1, 1, 0], sizes = [8, 8, 8], strides = [1, 1, 1]} : vector<10x10x8xf32> to vector<8x8x8xf32>
    %33 = vector.extract_strided_slice %2 {offsets = [4, 0], sizes = [1, 8], strides = [1, 1]} : vector<9x8xf32> to vector<1x8xf32>
    %34 = vector.shape_cast %33 : vector<1x8xf32> to vector<8xf32>
    %35 = vector.shape_cast %34 : vector<8xf32> to vector<1x1x8xf32>
    %36 = vector.broadcast %35 : vector<1x1x8xf32> to vector<8x8x8xf32>
    %37 = arith.mulf %32, %36 : vector<8x8x8xf32>
    %38 = arith.addf %31, %37 : vector<8x8x8xf32>
    %39 = vector.extract_strided_slice %1 {offsets = [1, 2, 0], sizes = [8, 8, 8], strides = [1, 1, 1]} : vector<10x10x8xf32> to vector<8x8x8xf32>
    %40 = vector.extract_strided_slice %2 {offsets = [5, 0], sizes = [1, 8], strides = [1, 1]} : vector<9x8xf32> to vector<1x8xf32>
    %41 = vector.shape_cast %40 : vector<1x8xf32> to vector<8xf32>
    %42 = vector.shape_cast %41 : vector<8xf32> to vector<1x1x8xf32>
    %43 = vector.broadcast %42 : vector<1x1x8xf32> to vector<8x8x8xf32>
    %44 = arith.mulf %39, %43 : vector<8x8x8xf32>
    %45 = arith.addf %38, %44 : vector<8x8x8xf32>
    %46 = vector.extract_strided_slice %1 {offsets = [2, 0, 0], sizes = [8, 8, 8], strides = [1, 1, 1]} : vector<10x10x8xf32> to vector<8x8x8xf32>
    %47 = vector.extract_strided_slice %2 {offsets = [6, 0], sizes = [1, 8], strides = [1, 1]} : vector<9x8xf32> to vector<1x8xf32>
    %48 = vector.shape_cast %47 : vector<1x8xf32> to vector<8xf32>
    %49 = vector.shape_cast %48 : vector<8xf32> to vector<1x1x8xf32>
    %50 = vector.broadcast %49 : vector<1x1x8xf32> to vector<8x8x8xf32>
    %51 = arith.mulf %46, %50 : vector<8x8x8xf32>
    %52 = arith.addf %45, %51 : vector<8x8x8xf32>
    %53 = vector.extract_strided_slice %1 {offsets = [2, 1, 0], sizes = [8, 8, 8], strides = [1, 1, 1]} : vector<10x10x8xf32> to vector<8x8x8xf32>
    %54 = vector.extract_strided_slice %2 {offsets = [7, 0], sizes = [1, 8], strides = [1, 1]} : vector<9x8xf32> to vector<1x8xf32>
    %55 = vector.shape_cast %54 : vector<1x8xf32> to vector<8xf32>
    %56 = vector.shape_cast %55 : vector<8xf32> to vector<1x1x8xf32>
    %57 = vector.broadcast %56 : vector<1x1x8xf32> to vector<8x8x8xf32>
    %58 = arith.mulf %53, %57 : vector<8x8x8xf32>
    %59 = arith.addf %52, %58 : vector<8x8x8xf32>
    %60 = vector.extract_strided_slice %1 {offsets = [2, 2, 0], sizes = [8, 8, 8], strides = [1, 1, 1]} : vector<10x10x8xf32> to vector<8x8x8xf32>
    %61 = vector.extract_strided_slice %2 {offsets = [8, 0], sizes = [1, 8], strides = [1, 1]} : vector<9x8xf32> to vector<1x8xf32>
    %62 = vector.shape_cast %61 : vector<1x8xf32> to vector<8xf32>
    %63 = vector.shape_cast %62 : vector<8xf32> to vector<1x1x8xf32>
    %64 = vector.broadcast %63 : vector<1x1x8xf32> to vector<8x8x8xf32>
    %65 = arith.mulf %60, %64 : vector<8x8x8xf32>
    %66 = arith.addf %59, %65 : vector<8x8x8xf32>
    %c0_5 = arith.constant 0 : index
    %c0_6 = arith.constant 0 : index
    %67 = vector.load %arg4[%c0_5, %c0_6] : memref<1x8xf32, #tpu.memory_space<vmem>>, vector<1x8xf32>
    %68 = vector.shape_cast %67 : vector<1x8xf32> to vector<8xf32>
    %69 = vector.shape_cast %68 : vector<8xf32> to vector<1x1x8xf32>
    %70 = vector.broadcast %69 : vector<1x1x8xf32> to vector<8x8x8xf32>
    %71 = arith.addf %66, %70 : vector<8x8x8xf32>
    %72 = arith.negf %71 : vector<8x8x8xf32>
    %73 = math.exp %72 : vector<8x8x8xf32>
    %cst_7 = arith.constant 1.000000e+00 : f32
    %74 = vector.broadcast %cst_7 : f32 to vector<8x8x8xf32>
    %75 = arith.addf %74, %73 : vector<8x8x8xf32>
    %76 = arith.divf %74, %75 : vector<8x8x8xf32>
    %77 = vector.extract_strided_slice %1 {offsets = [1, 1, 0], sizes = [8, 8, 8], strides = [1, 1, 1]} : vector<10x10x8xf32> to vector<8x8x8xf32>
    %78 = arith.mulf %77, %76 : vector<8x8x8xf32>
    %c0_8 = arith.constant 0 : index
    %c0_9 = arith.constant 0 : index
    %c0_10 = arith.constant 0 : index
    %c0_11 = arith.constant 0 : index
    %79 = vector.load %arg5[%c0_8, %c0_9, %c0_10, %c0_11] : memref<1x8x8x8xf32, #tpu.memory_space<vmem>>, vector<1x8x8x8xf32>
    %80 = vector.shape_cast %79 : vector<1x8x8x8xf32> to vector<8x8x8xf32>
    %81 = vector.shape_cast %78 : vector<8x8x8xf32> to vector<1x8x8x8xf32>
    tpu.vector_store %arg5[%c0_8, %c0_9, %c0_10, %c0_11], %81 {strides = array<i32>} : memref<1x8x8x8xf32, #tpu.memory_space<vmem>>, vector<1x8x8x8xf32>,
    return
  }
  func.func @transform_0(%arg0: i32, %arg1: i32) -> (i32, i32, i32, i32) {
    %c0_i32 = arith.constant 0 : i32
    %c0_i32_0 = arith.constant 0 : i32
    %c0_i32_1 = arith.constant 0 : i32
    return %arg0, %c0_i32, %c0_i32_0, %arg1 : i32, i32, i32, i32
  }
  func.func @transform_1(%arg0: i32, %arg1: i32) -> (i32, i32) {
    %c0_i32 = arith.constant 0 : i32
    %c0_i32_0 = arith.constant 0 : i32
    return %c0_i32, %arg1 : i32, i32
  }
  func.func @transform_2(%arg0: i32, %arg1: i32) -> (i32, i32) {
    %c0_i32 = arith.constant 0 : i32
    %c0_i32_0 = arith.constant 0 : i32
    return %c0_i32, %arg1 : i32, i32
  }
  func.func @transform_3(%arg0: i32, %arg1: i32) -> (i32, i32, i32, i32) {
    %c0_i32 = arith.constant 0 : i32
    %c0_i32_0 = arith.constant 0 : i32
    %c0_i32_1 = arith.constant 0 : i32
    return %arg0, %c0_i32, %c0_i32_0, %arg1 : i32, i32, i32, i32
  }
}

module attributes {stable_mosaic.version = 11 : i64} {
  func.func @_layernorm_kernel(%arg0: i32, %arg1: memref<64x8xf32, #tpu.memory_space<vmem>>, %arg2: memref<1x8xf32, #tpu.memory_space<vmem>>, %arg3: memref<1x8xf32, #tpu.memory_space<vmem>>, %arg4: memref<64x8xbf16, #tpu.memory_space<vmem>>) attributes {dimension_semantics = [#tpu.dimension_semantics<parallel>], iteration_bounds = array<i64: 2>, scalar_prefetch = 0 : i64, scratch_operands = 0 : i64, tpu.core_type = #tpu.core_type<tc>, window_params = [{transform_indices = @transform_0, window_bounds = array<i64: 64, 8>}, {pipeline_mode = #tpu.pipeline_mode<synchronous>, transform_indices = @transform_1, window_bounds = array<i64: 1, 8>}, {pipeline_mode = #tpu.pipeline_mode<synchronous>, transform_indices = @transform_2, window_bounds = array<i64: 1, 8>}, {transform_indices = @transform_3, window_bounds = array<i64: 64, 8>}]} {
    %c0 = arith.constant 0 : index
    %c0_0 = arith.constant 0 : index
    %0 = vector.load %arg1[%c0, %c0_0] : memref<64x8xf32, #tpu.memory_space<vmem>>, vector<64x8xf32>
    %cst = arith.constant dense<0.000000e+00> : vector<64xf32>
    %1 = vector.multi_reduction <add>, %0, %cst [1] : vector<64x8xf32> to vector<64xf32>
    %2 = vector.shape_cast %1 : vector<64xf32> to vector<64x1xf32>
    %cst_1 = arith.constant 8.000000e+00 : f32
    %3 = vector.broadcast %cst_1 : f32 to vector<64x1xf32>
    %4 = arith.divf %2, %3 : vector<64x1xf32>
    %5 = vector.broadcast %4 : vector<64x1xf32> to vector<64x8xf32>
    %6 = arith.subf %0, %5 : vector<64x8xf32>
    %7 = arith.mulf %6, %6 : vector<64x8xf32>
    %cst_2 = arith.constant dense<0.000000e+00> : vector<64xf32>
    %8 = vector.multi_reduction <add>, %7, %cst_2 [1] : vector<64x8xf32> to vector<64xf32>
    %9 = vector.shape_cast %8 : vector<64xf32> to vector<64x1xf32>
    %cst_3 = arith.constant 8.000000e+00 : f32
    %10 = vector.broadcast %cst_3 : f32 to vector<64x1xf32>
    %11 = arith.divf %9, %10 : vector<64x1xf32>
    %12 = vector.broadcast %4 : vector<64x1xf32> to vector<64x8xf32>
    %13 = arith.subf %0, %12 : vector<64x8xf32>
    %cst_4 = arith.constant 9.99999974E-6 : f32
    %14 = vector.broadcast %cst_4 : f32 to vector<64x1xf32>
    %15 = arith.addf %11, %14 : vector<64x1xf32>
    %16 = math.rsqrt %15 : vector<64x1xf32>
    %17 = vector.broadcast %16 : vector<64x1xf32> to vector<64x8xf32>
    %18 = arith.mulf %13, %17 : vector<64x8xf32>
    %c0_5 = arith.constant 0 : index
    %c0_6 = arith.constant 0 : index
    %19 = vector.load %arg2[%c0_5, %c0_6] : memref<1x8xf32, #tpu.memory_space<vmem>>, vector<1x8xf32>
    %20 = vector.broadcast %19 : vector<1x8xf32> to vector<64x8xf32>
    %21 = arith.mulf %18, %20 : vector<64x8xf32>
    %c0_7 = arith.constant 0 : index
    %c0_8 = arith.constant 0 : index
    %22 = vector.load %arg3[%c0_7, %c0_8] : memref<1x8xf32, #tpu.memory_space<vmem>>, vector<1x8xf32>
    %23 = vector.broadcast %22 : vector<1x8xf32> to vector<64x8xf32>
    %24 = arith.addf %21, %23 : vector<64x8xf32>
    %25 = arith.truncf %24 : vector<64x8xf32> to vector<64x8xbf16>
    %c0_9 = arith.constant 0 : index
    %c0_10 = arith.constant 0 : index
    %26 = vector.load %arg4[%c0_9, %c0_10] : memref<64x8xbf16, #tpu.memory_space<vmem>>, vector<64x8xbf16>
    tpu.vector_store %arg4[%c0_9, %c0_10], %25 {strides = array<i32>} : memref<64x8xbf16, #tpu.memory_space<vmem>>, vector<64x8xbf16>,
    return
  }
  func.func @transform_0(%arg0: i32) -> (i32, i32) {
    %c0_i32 = arith.constant 0 : i32
    %c0_i32_0 = arith.constant 0 : i32
    return %arg0, %c0_i32 : i32, i32
  }
  func.func @transform_1(%arg0: i32) -> (i32, i32) {
    %c0_i32 = arith.constant 0 : i32
    %c0_i32_0 = arith.constant 0 : i32
    %c0_i32_1 = arith.constant 0 : i32
    return %c0_i32, %c0_i32_0 : i32, i32
  }
  func.func @transform_2(%arg0: i32) -> (i32, i32) {
    %c0_i32 = arith.constant 0 : i32
    %c0_i32_0 = arith.constant 0 : i32
    %c0_i32_1 = arith.constant 0 : i32
    return %c0_i32, %c0_i32_0 : i32, i32
  }
  func.func @transform_3(%arg0: i32) -> (i32, i32) {
    %c0_i32 = arith.constant 0 : i32
    %c0_i32_0 = arith.constant 0 : i32
    return %arg0, %c0_i32 : i32, i32
  }
}

module attributes {stable_mosaic.version = 11 : i64} {
  func.func @_matmul_kernel(%arg0: i32, %arg1: i32, %arg2: i32, %arg3: memref<64x8xbf16, #tpu.memory_space<vmem>>, %arg4: memref<8x24xbf16, #tpu.memory_space<vmem>>, %arg5: memref<1x24xf32, #tpu.memory_space<vmem>>, %arg6: memref<64x24xbf16, #tpu.memory_space<vmem>>, %arg7: memref<64x24xf32, #tpu.memory_space<vmem>>) attributes {dimension_semantics = [#tpu.dimension_semantics<parallel>, #tpu.dimension_semantics<parallel>, #tpu.dimension_semantics<arbitrary>], iteration_bounds = array<i64: 2, 1, 1>, scalar_prefetch = 0 : i64, scratch_operands = 1 : i64, tpu.core_type = #tpu.core_type<tc>, window_params = [{transform_indices = @transform_0, window_bounds = array<i64: 64, 8>}, {transform_indices = @transform_1, window_bounds = array<i64: 8, 24>}, {transform_indices = @transform_2, window_bounds = array<i64: 1, 24>}, {transform_indices = @transform_3, window_bounds = array<i64: 64, 24>}]} {
    %c0_i32 = arith.constant 0 : i32
    %0 = arith.cmpi eq, %arg2, %c0_i32 : i32
    %1 = arith.extui %0 : i1 to i32
    %c0_i32_0 = arith.constant 0 : i32
    %2 = arith.cmpi ne, %1, %c0_i32_0 : i32
    scf.if %2 {
      %cst_10 = arith.constant 0.000000e+00 : f32
      %12 = vector.broadcast %cst_10 : f32 to vector<64x24xf32>
      %c0_11 = arith.constant 0 : index
      %c0_12 = arith.constant 0 : index
      %13 = vector.load %arg7[%c0_11, %c0_12] : memref<64x24xf32, #tpu.memory_space<vmem>>, vector<64x24xf32>
      tpu.vector_store %arg7[%c0_11, %c0_12], %12 {strides = array<i32>} : memref<64x24xf32, #tpu.memory_space<vmem>>, vector<64x24xf32>,
    } else {
    }
    %c0 = arith.constant 0 : index
    %c0_1 = arith.constant 0 : index
    %3 = vector.load %arg7[%c0, %c0_1] : memref<64x24xf32, #tpu.memory_space<vmem>>, vector<64x24xf32>
    %c0_2 = arith.constant 0 : index
    %c0_3 = arith.constant 0 : index
    %4 = vector.load %arg3[%c0_2, %c0_3] : memref<64x8xbf16, #tpu.memory_space<vmem>>, vector<64x8xbf16>
    %c0_4 = arith.constant 0 : index
    %c0_5 = arith.constant 0 : index
    %5 = vector.load %arg4[%c0_4, %c0_5] : memref<8x24xbf16, #tpu.memory_space<vmem>>, vector<8x24xbf16>
    %cst = arith.constant dense<0.000000e+00> : vector<64x24xf32>
    %6 = tpu.matmul %4, %5, %cst {dimension_numbers = #tpu.dot_dimension_numbers<[1], [0], [0], [1], [0, 0, 1, 1], [], []>} : vector<64x8xbf16>, vector<8x24xbf16>, vector<64x24xf32> -> vector<64x24xf32>
    %7 = arith.addf %3, %6 : vector<64x24xf32>
    %c0_6 = arith.constant 0 : index
    %c0_7 = arith.constant 0 : index
    %8 = vector.load %arg7[%c0_6, %c0_7] : memref<64x24xf32, #tpu.memory_space<vmem>>, vector<64x24xf32>
    tpu.vector_store %arg7[%c0_6, %c0_7], %7 {strides = array<i32>} : memref<64x24xf32, #tpu.memory_space<vmem>>, vector<64x24xf32>,
    %c0_i32_8 = arith.constant 0 : i32
    %9 = arith.cmpi eq, %arg2, %c0_i32_8 : i32
    %10 = arith.extui %9 : i1 to i32
    %c0_i32_9 = arith.constant 0 : i32
    %11 = arith.cmpi ne, %10, %c0_i32_9 : i32
    scf.if %11 {
      %c0_10 = arith.constant 0 : index
      %c0_11 = arith.constant 0 : index
      %12 = vector.load %arg7[%c0_10, %c0_11] : memref<64x24xf32, #tpu.memory_space<vmem>>, vector<64x24xf32>
      %c0_12 = arith.constant 0 : index
      %c0_13 = arith.constant 0 : index
      %13 = vector.load %arg5[%c0_12, %c0_13] : memref<1x24xf32, #tpu.memory_space<vmem>>, vector<1x24xf32>
      %14 = vector.broadcast %13 : vector<1x24xf32> to vector<64x24xf32>
      %15 = arith.addf %12, %14 : vector<64x24xf32>
      %16 = arith.truncf %15 : vector<64x24xf32> to vector<64x24xbf16>
      %c0_14 = arith.constant 0 : index
      %c0_15 = arith.constant 0 : index
      %17 = vector.load %arg6[%c0_14, %c0_15] : memref<64x24xbf16, #tpu.memory_space<vmem>>, vector<64x24xbf16>
      tpu.vector_store %arg6[%c0_14, %c0_15], %16 {strides = array<i32>} : memref<64x24xbf16, #tpu.memory_space<vmem>>, vector<64x24xbf16>,
    } else {
    }
    return
  }
  func.func @transform_0(%arg0: i32, %arg1: i32, %arg2: i32) -> (i32, i32) {
    %c0_i32 = arith.constant 0 : i32
    return %arg0, %arg2 : i32, i32
  }
  func.func @transform_1(%arg0: i32, %arg1: i32, %arg2: i32) -> (i32, i32) {
    %c0_i32 = arith.constant 0 : i32
    return %arg2, %arg1 : i32, i32
  }
  func.func @transform_2(%arg0: i32, %arg1: i32, %arg2: i32) -> (i32, i32) {
    %c0_i32 = arith.constant 0 : i32
    %c0_i32_0 = arith.constant 0 : i32
    return %c0_i32, %arg1 : i32, i32
  }
  func.func @transform_3(%arg0: i32, %arg1: i32, %arg2: i32) -> (i32, i32) {
    %c0_i32 = arith.constant 0 : i32
    return %arg0, %arg1 : i32, i32
  }
}

module attributes {stable_mosaic.version = 11 : i64} {
  func.func @_attn_kernel(%arg0: i32, %arg1: memref<4x16x4xbf16, #tpu.memory_space<vmem>>, %arg2: memref<4x16x4xbf16, #tpu.memory_space<vmem>>, %arg3: memref<4x16x4xbf16, #tpu.memory_space<vmem>>, %arg4: memref<4x16x4xbf16, #tpu.memory_space<vmem>>) attributes {dimension_semantics = [#tpu.dimension_semantics<parallel>], iteration_bounds = array<i64: 2>, scalar_prefetch = 0 : i64, scratch_operands = 0 : i64, tpu.core_type = #tpu.core_type<tc>, window_params = [{transform_indices = @transform_0, window_bounds = array<i64: 4, 16, 4>}, {transform_indices = @transform_1, window_bounds = array<i64: 4, 16, 4>}, {transform_indices = @transform_2, window_bounds = array<i64: 4, 16, 4>}, {transform_indices = @transform_3, window_bounds = array<i64: 4, 16, 4>}]} {
    %c0 = arith.constant 0 : index
    %c0_0 = arith.constant 0 : index
    %c0_1 = arith.constant 0 : index
    %0 = vector.load %arg1[%c0, %c0_0, %c0_1] : memref<4x16x4xbf16, #tpu.memory_space<vmem>>, vector<4x16x4xbf16>
    %c0_2 = arith.constant 0 : index
    %c0_3 = arith.constant 0 : index
    %c0_4 = arith.constant 0 : index
    %1 = vector.load %arg2[%c0_2, %c0_3, %c0_4] : memref<4x16x4xbf16, #tpu.memory_space<vmem>>, vector<4x16x4xbf16>
    %c0_5 = arith.constant 0 : index
    %c0_6 = arith.constant 0 : index
    %c0_7 = arith.constant 0 : index
    %2 = vector.load %arg3[%c0_5, %c0_6, %c0_7] : memref<4x16x4xbf16, #tpu.memory_space<vmem>>, vector<4x16x4xbf16>
    %3 = vector.extract_strided_slice %0 {offsets = [0, 0, 0], sizes = [4, 16, 2], strides = [1, 1, 1]} : vector<4x16x4xbf16> to vector<4x16x2xbf16>
    %4 = vector.extract_strided_slice %1 {offsets = [0, 0, 0], sizes = [4, 16, 2], strides = [1, 1, 1]} : vector<4x16x4xbf16> to vector<4x16x2xbf16>
    "tpu.trace_start"() <{level = 10 : i32, message = "wqd,wkd->wqk"}> : () -> ()
    %cst = arith.constant dense<0.000000e+00> : vector<4x16x16xf32>
    %5 = tpu.matmul %3, %4, %cst {dimension_numbers = #tpu.dot_dimension_numbers<[2], [2], [1], [1], [0, 0, 0, 1, 1, 1], [0], [0]>} : vector<4x16x2xbf16>, vector<4x16x2xbf16>, vector<4x16x16xf32> -> vector<4x16x16xf32>
    "tpu.trace_stop"() : () -> ()
    %cst_8 = arith.constant 0.707106769 : f32
    %6 = vector.broadcast %cst_8 : f32 to vector<4x16x16xf32>
    %7 = arith.mulf %5, %6 : vector<4x16x16xf32>
    %cst_9 = arith.constant dense<0xFF800000> : vector<4x16xf32>
    %8 = vector.multi_reduction <maximumf>, %7, %cst_9 [2] : vector<4x16x16xf32> to vector<4x16xf32>
    %9 = vector.shape_cast %8 : vector<4x16xf32> to vector<4x16x1xf32>
    %10 = vector.broadcast %9 : vector<4x16x1xf32> to vector<4x16x16xf32>
    %11 = arith.subf %7, %10 : vector<4x16x16xf32>
    %12 = math.exp %11 : vector<4x16x16xf32>
    %cst_10 = arith.constant dense<0.000000e+00> : vector<4x16xf32>
    %13 = vector.multi_reduction <add>, %12, %cst_10 [2] : vector<4x16x16xf32> to vector<4x16xf32>
    %14 = vector.shape_cast %13 : vector<4x16xf32> to vector<4x16x1xf32>
    %15 = tpu.reciprocal %14 {approx = true} : vector<4x16x1xf32> -> vector<4x16x1xf32>
    %16 = vector.broadcast %15 : vector<4x16x1xf32> to vector<4x16x16xf32>
    %17 = arith.mulf %12, %16 : vector<4x16x16xf32>
    %18 = arith.truncf %17 : vector<4x16x16xf32> to vector<4x16x16xbf16>
    %19 = vector.extract_strided_slice %2 {offsets = [0, 0, 0], sizes = [4, 16, 2], strides = [1, 1, 1]} : vector<4x16x4xbf16> to vector<4x16x2xbf16>
    "tpu.trace_start"() <{level = 10 : i32, message = "wqk,wkd->wqd"}> : () -> ()
    %cst_11 = arith.constant dense<0.000000e+00> : vector<4x16x2xf32>
    %20 = tpu.matmul %18, %19, %cst_11 {dimension_numbers = #tpu.dot_dimension_numbers<[2], [1], [1], [2], [0, 0, 0, 1, 1, 2], [0], [0]>} : vector<4x16x16xbf16>, vector<4x16x2xbf16>, vector<4x16x2xf32> -> vector<4x16x2xf32>
    "tpu.trace_stop"() : () -> ()
    %21 = vector.extract_strided_slice %0 {offsets = [0, 0, 2], sizes = [4, 16, 2], strides = [1, 1, 1]} : vector<4x16x4xbf16> to vector<4x16x2xbf16>
    %22 = vector.extract_strided_slice %1 {offsets = [0, 0, 2], sizes = [4, 16, 2], strides = [1, 1, 1]} : vector<4x16x4xbf16> to vector<4x16x2xbf16>
    "tpu.trace_start"() <{level = 10 : i32, message = "wqd,wkd->wqk"}> : () -> ()
    %cst_12 = arith.constant dense<0.000000e+00> : vector<4x16x16xf32>
    %23 = tpu.matmul %21, %22, %cst_12 {dimension_numbers = #tpu.dot_dimension_numbers<[2], [2], [1], [1], [0, 0, 0, 1, 1, 1], [0], [0]>} : vector<4x16x2xbf16>, vector<4x16x2xbf16>, vector<4x16x16xf32> -> vector<4x16x16xf32>
    "tpu.trace_stop"() : () -> ()
    %cst_13 = arith.constant 0.707106769 : f32
    %24 = vector.broadcast %cst_13 : f32 to vector<4x16x16xf32>
    %25 = arith.mulf %23, %24 : vector<4x16x16xf32>
    %cst_14 = arith.constant dense<0xFF800000> : vector<4x16xf32>
    %26 = vector.multi_reduction <maximumf>, %25, %cst_14 [2] : vector<4x16x16xf32> to vector<4x16xf32>
    %27 = vector.shape_cast %26 : vector<4x16xf32> to vector<4x16x1xf32>
    %28 = vector.broadcast %27 : vector<4x16x1xf32> to vector<4x16x16xf32>
    %29 = arith.subf %25, %28 : vector<4x16x16xf32>
    %30 = math.exp %29 : vector<4x16x16xf32>
    %cst_15 = arith.constant dense<0.000000e+00> : vector<4x16xf32>
    %31 = vector.multi_reduction <add>, %30, %cst_15 [2] : vector<4x16x16xf32> to vector<4x16xf32>
    %32 = vector.shape_cast %31 : vector<4x16xf32> to vector<4x16x1xf32>
    %33 = tpu.reciprocal %32 {approx = true} : vector<4x16x1xf32> -> vector<4x16x1xf32>
    %34 = vector.broadcast %33 : vector<4x16x1xf32> to vector<4x16x16xf32>
    %35 = arith.mulf %30, %34 : vector<4x16x16xf32>
    %36 = arith.truncf %35 : vector<4x16x16xf32> to vector<4x16x16xbf16>
    %37 = vector.extract_strided_slice %2 {offsets = [0, 0, 2], sizes = [4, 16, 2], strides = [1, 1, 1]} : vector<4x16x4xbf16> to vector<4x16x2xbf16>
    "tpu.trace_start"() <{level = 10 : i32, message = "wqk,wkd->wqd"}> : () -> ()
    %cst_16 = arith.constant dense<0.000000e+00> : vector<4x16x2xf32>
    %38 = tpu.matmul %36, %37, %cst_16 {dimension_numbers = #tpu.dot_dimension_numbers<[2], [1], [1], [2], [0, 0, 0, 1, 1, 2], [0], [0]>} : vector<4x16x16xbf16>, vector<4x16x2xbf16>, vector<4x16x2xf32> -> vector<4x16x2xf32>
    "tpu.trace_stop"() : () -> ()
    %39 = tpu.concatenate %20, %38 in 2 : vector<4x16x2xf32>, vector<4x16x2xf32> -> vector<4x16x4xf32>
    %40 = arith.truncf %39 : vector<4x16x4xf32> to vector<4x16x4xbf16>
    %c0_17 = arith.constant 0 : index
    %c0_18 = arith.constant 0 : index
    %c0_19 = arith.constant 0 : index
    %41 = vector.load %arg4[%c0_17, %c0_18, %c0_19] : memref<4x16x4xbf16, #tpu.memory_space<vmem>>, vector<4x16x4xbf16>
    tpu.vector_store %arg4[%c0_17, %c0_18, %c0_19], %40 {strides = array<i32>} : memref<4x16x4xbf16, #tpu.memory_space<vmem>>, vector<4x16x4xbf16>,
    return
  }
  func.func @transform_0(%arg0: i32) -> (i32, i32, i32) {
    %c0_i32 = arith.constant 0 : i32
    %c0_i32_0 = arith.constant 0 : i32
    %c0_i32_1 = arith.constant 0 : i32
    return %arg0, %c0_i32, %c0_i32_0 : i32, i32, i32
  }
  func.func @transform_1(%arg0: i32) -> (i32, i32, i32) {
    %c0_i32 = arith.constant 0 : i32
    %c0_i32_0 = arith.constant 0 : i32
    %c0_i32_1 = arith.constant 0 : i32
    return %arg0, %c0_i32, %c0_i32_0 : i32, i32, i32
  }
  func.func @transform_2(%arg0: i32) -> (i32, i32, i32) {
    %c0_i32 = arith.constant 0 : i32
    %c0_i32_0 = arith.constant 0 : i32
    %c0_i32_1 = arith.constant 0 : i32
    return %arg0, %c0_i32, %c0_i32_0 : i32, i32, i32
  }
  func.func @transform_3(%arg0: i32) -> (i32, i32, i32) {
    %c0_i32 = arith.constant 0 : i32
    %c0_i32_0 = arith.constant 0 : i32
    %c0_i32_1 = arith.constant 0 : i32
    return %arg0, %c0_i32, %c0_i32_0 : i32, i32, i32
  }
}

module attributes {stable_mosaic.version = 11 : i64} {
  func.func @_matmul_res_kernel(%arg0: i32, %arg1: i32, %arg2: i32, %arg3: memref<64x8xbf16, #tpu.memory_space<vmem>>, %arg4: memref<8x8xbf16, #tpu.memory_space<vmem>>, %arg5: memref<1x8xf32, #tpu.memory_space<vmem>>, %arg6: memref<64x8xf32, #tpu.memory_space<vmem>>, %arg7: memref<64x8xf32, #tpu.memory_space<vmem>>, %arg8: memref<64x8xf32, #tpu.memory_space<vmem>>) attributes {dimension_semantics = [#tpu.dimension_semantics<parallel>, #tpu.dimension_semantics<parallel>, #tpu.dimension_semantics<arbitrary>], iteration_bounds = array<i64: 2, 1, 1>, scalar_prefetch = 0 : i64, scratch_operands = 1 : i64, tpu.core_type = #tpu.core_type<tc>, window_params = [{transform_indices = @transform_0, window_bounds = array<i64: 64, 8>}, {transform_indices = @transform_1, window_bounds = array<i64: 8, 8>}, {transform_indices = @transform_2, window_bounds = array<i64: 1, 8>}, {transform_indices = @transform_3, window_bounds = array<i64: 64, 8>}, {transform_indices = @transform_4, window_bounds = array<i64: 64, 8>}]} {
    %c0_i32 = arith.constant 0 : i32
    %0 = arith.cmpi eq, %arg2, %c0_i32 : i32
    %1 = arith.extui %0 : i1 to i32
    %c0_i32_0 = arith.constant 0 : i32
    %2 = arith.cmpi ne, %1, %c0_i32_0 : i32
    scf.if %2 {
      %cst_10 = arith.constant 0.000000e+00 : f32
      %12 = vector.broadcast %cst_10 : f32 to vector<64x8xf32>
      %c0_11 = arith.constant 0 : index
      %c0_12 = arith.constant 0 : index
      %13 = vector.load %arg8[%c0_11, %c0_12] : memref<64x8xf32, #tpu.memory_space<vmem>>, vector<64x8xf32>
      tpu.vector_store %arg8[%c0_11, %c0_12], %12 {strides = array<i32>} : memref<64x8xf32, #tpu.memory_space<vmem>>, vector<64x8xf32>,
    } else {
    }
    %c0 = arith.constant 0 : index
    %c0_1 = arith.constant 0 : index
    %3 = vector.load %arg8[%c0, %c0_1] : memref<64x8xf32, #tpu.memory_space<vmem>>, vector<64x8xf32>
    %c0_2 = arith.constant 0 : index
    %c0_3 = arith.constant 0 : index
    %4 = vector.load %arg3[%c0_2, %c0_3] : memref<64x8xbf16, #tpu.memory_space<vmem>>, vector<64x8xbf16>
    %c0_4 = arith.constant 0 : index
    %c0_5 = arith.constant 0 : index
    %5 = vector.load %arg4[%c0_4, %c0_5] : memref<8x8xbf16, #tpu.memory_space<vmem>>, vector<8x8xbf16>
    %cst = arith.constant dense<0.000000e+00> : vector<64x8xf32>
    %6 = tpu.matmul %4, %5, %cst {dimension_numbers = #tpu.dot_dimension_numbers<[1], [0], [0], [1], [0, 0, 1, 1], [], []>} : vector<64x8xbf16>, vector<8x8xbf16>, vector<64x8xf32> -> vector<64x8xf32>
    %7 = arith.addf %3, %6 : vector<64x8xf32>
    %c0_6 = arith.constant 0 : index
    %c0_7 = arith.constant 0 : index
    %8 = vector.load %arg8[%c0_6, %c0_7] : memref<64x8xf32, #tpu.memory_space<vmem>>, vector<64x8xf32>
    tpu.vector_store %arg8[%c0_6, %c0_7], %7 {strides = array<i32>} : memref<64x8xf32, #tpu.memory_space<vmem>>, vector<64x8xf32>,
    %c0_i32_8 = arith.constant 0 : i32
    %9 = arith.cmpi eq, %arg2, %c0_i32_8 : i32
    %10 = arith.extui %9 : i1 to i32
    %c0_i32_9 = arith.constant 0 : i32
    %11 = arith.cmpi ne, %10, %c0_i32_9 : i32
    scf.if %11 {
      %c0_10 = arith.constant 0 : index
      %c0_11 = arith.constant 0 : index
      %12 = vector.load %arg8[%c0_10, %c0_11] : memref<64x8xf32, #tpu.memory_space<vmem>>, vector<64x8xf32>
      %c0_12 = arith.constant 0 : index
      %c0_13 = arith.constant 0 : index
      %13 = vector.load %arg5[%c0_12, %c0_13] : memref<1x8xf32, #tpu.memory_space<vmem>>, vector<1x8xf32>
      %14 = vector.broadcast %13 : vector<1x8xf32> to vector<64x8xf32>
      %15 = arith.addf %12, %14 : vector<64x8xf32>
      %c0_14 = arith.constant 0 : index
      %c0_15 = arith.constant 0 : index
      %16 = vector.load %arg6[%c0_14, %c0_15] : memref<64x8xf32, #tpu.memory_space<vmem>>, vector<64x8xf32>
      %17 = arith.addf %15, %16 : vector<64x8xf32>
      %c0_16 = arith.constant 0 : index
      %c0_17 = arith.constant 0 : index
      %18 = vector.load %arg7[%c0_16, %c0_17] : memref<64x8xf32, #tpu.memory_space<vmem>>, vector<64x8xf32>
      tpu.vector_store %arg7[%c0_16, %c0_17], %17 {strides = array<i32>} : memref<64x8xf32, #tpu.memory_space<vmem>>, vector<64x8xf32>,
    } else {
    }
    return
  }
  func.func @transform_0(%arg0: i32, %arg1: i32, %arg2: i32) -> (i32, i32) {
    %c0_i32 = arith.constant 0 : i32
    return %arg0, %arg2 : i32, i32
  }
  func.func @transform_1(%arg0: i32, %arg1: i32, %arg2: i32) -> (i32, i32) {
    %c0_i32 = arith.constant 0 : i32
    return %arg2, %arg1 : i32, i32
  }
  func.func @transform_2(%arg0: i32, %arg1: i32, %arg2: i32) -> (i32, i32) {
    %c0_i32 = arith.constant 0 : i32
    %c0_i32_0 = arith.constant 0 : i32
    return %c0_i32, %arg1 : i32, i32
  }
  func.func @transform_3(%arg0: i32, %arg1: i32, %arg2: i32) -> (i32, i32) {
    %c0_i32 = arith.constant 0 : i32
    return %arg0, %arg1 : i32, i32
  }
  func.func @transform_4(%arg0: i32, %arg1: i32, %arg2: i32) -> (i32, i32) {
    %c0_i32 = arith.constant 0 : i32
    return %arg0, %arg1 : i32, i32
  }
}

module attributes {stable_mosaic.version = 11 : i64} {
  func.func @_matmul_kernel(%arg0: i32, %arg1: i32, %arg2: i32, %arg3: memref<64x8xbf16, #tpu.memory_space<vmem>>, %arg4: memref<8x16xbf16, #tpu.memory_space<vmem>>, %arg5: memref<1x16xf32, #tpu.memory_space<vmem>>, %arg6: memref<64x16xbf16, #tpu.memory_space<vmem>>, %arg7: memref<64x16xf32, #tpu.memory_space<vmem>>) attributes {dimension_semantics = [#tpu.dimension_semantics<parallel>, #tpu.dimension_semantics<parallel>, #tpu.dimension_semantics<arbitrary>], iteration_bounds = array<i64: 2, 1, 1>, scalar_prefetch = 0 : i64, scratch_operands = 1 : i64, tpu.core_type = #tpu.core_type<tc>, window_params = [{transform_indices = @transform_0, window_bounds = array<i64: 64, 8>}, {transform_indices = @transform_1, window_bounds = array<i64: 8, 16>}, {transform_indices = @transform_2, window_bounds = array<i64: 1, 16>}, {transform_indices = @transform_3, window_bounds = array<i64: 64, 16>}]} {
    %c0_i32 = arith.constant 0 : i32
    %0 = arith.cmpi eq, %arg2, %c0_i32 : i32
    %1 = arith.extui %0 : i1 to i32
    %c0_i32_0 = arith.constant 0 : i32
    %2 = arith.cmpi ne, %1, %c0_i32_0 : i32
    scf.if %2 {
      %cst_10 = arith.constant 0.000000e+00 : f32
      %12 = vector.broadcast %cst_10 : f32 to vector<64x16xf32>
      %c0_11 = arith.constant 0 : index
      %c0_12 = arith.constant 0 : index
      %13 = vector.load %arg7[%c0_11, %c0_12] : memref<64x16xf32, #tpu.memory_space<vmem>>, vector<64x16xf32>
      tpu.vector_store %arg7[%c0_11, %c0_12], %12 {strides = array<i32>} : memref<64x16xf32, #tpu.memory_space<vmem>>, vector<64x16xf32>,
    } else {
    }
    %c0 = arith.constant 0 : index
    %c0_1 = arith.constant 0 : index
    %3 = vector.load %arg7[%c0, %c0_1] : memref<64x16xf32, #tpu.memory_space<vmem>>, vector<64x16xf32>
    %c0_2 = arith.constant 0 : index
    %c0_3 = arith.constant 0 : index
    %4 = vector.load %arg3[%c0_2, %c0_3] : memref<64x8xbf16, #tpu.memory_space<vmem>>, vector<64x8xbf16>
    %c0_4 = arith.constant 0 : index
    %c0_5 = arith.constant 0 : index
    %5 = vector.load %arg4[%c0_4, %c0_5] : memref<8x16xbf16, #tpu.memory_space<vmem>>, vector<8x16xbf16>
    %cst = arith.constant dense<0.000000e+00> : vector<64x16xf32>
    %6 = tpu.matmul %4, %5, %cst {dimension_numbers = #tpu.dot_dimension_numbers<[1], [0], [0], [1], [0, 0, 1, 1], [], []>} : vector<64x8xbf16>, vector<8x16xbf16>, vector<64x16xf32> -> vector<64x16xf32>
    %7 = arith.addf %3, %6 : vector<64x16xf32>
    %c0_6 = arith.constant 0 : index
    %c0_7 = arith.constant 0 : index
    %8 = vector.load %arg7[%c0_6, %c0_7] : memref<64x16xf32, #tpu.memory_space<vmem>>, vector<64x16xf32>
    tpu.vector_store %arg7[%c0_6, %c0_7], %7 {strides = array<i32>} : memref<64x16xf32, #tpu.memory_space<vmem>>, vector<64x16xf32>,
    %c0_i32_8 = arith.constant 0 : i32
    %9 = arith.cmpi eq, %arg2, %c0_i32_8 : i32
    %10 = arith.extui %9 : i1 to i32
    %c0_i32_9 = arith.constant 0 : i32
    %11 = arith.cmpi ne, %10, %c0_i32_9 : i32
    scf.if %11 {
      %c0_10 = arith.constant 0 : index
      %c0_11 = arith.constant 0 : index
      %12 = vector.load %arg7[%c0_10, %c0_11] : memref<64x16xf32, #tpu.memory_space<vmem>>, vector<64x16xf32>
      %c0_12 = arith.constant 0 : index
      %c0_13 = arith.constant 0 : index
      %13 = vector.load %arg5[%c0_12, %c0_13] : memref<1x16xf32, #tpu.memory_space<vmem>>, vector<1x16xf32>
      %14 = vector.broadcast %13 : vector<1x16xf32> to vector<64x16xf32>
      %15 = arith.addf %12, %14 : vector<64x16xf32>
      %cst_14 = arith.constant 5.000000e-01 : f32
      %16 = vector.broadcast %cst_14 : f32 to vector<64x16xf32>
      %17 = arith.mulf %16, %15 : vector<64x16xf32>
      %cst_15 = arith.constant 0.707106769 : f32
      %18 = vector.broadcast %cst_15 : f32 to vector<64x16xf32>
      %19 = arith.mulf %15, %18 : vector<64x16xf32>
      %20 = math.absf %19 : vector<64x16xf32>
      %cst_16 = arith.constant 0.327591091 : f32
      %21 = vector.broadcast %cst_16 : f32 to vector<64x16xf32>
      %22 = arith.mulf %21, %20 : vector<64x16xf32>
      %cst_17 = arith.constant 1.000000e+00 : f32
      %23 = vector.broadcast %cst_17 : f32 to vector<64x16xf32>
      %24 = arith.addf %23, %22 : vector<64x16xf32>
      %cst_18 = arith.constant 1.000000e+00 : f32
      %25 = vector.broadcast %cst_18 : f32 to vector<64x16xf32>
      %26 = arith.divf %25, %24 : vector<64x16xf32>
      %cst_19 = arith.constant 1.06140542 : f32
      %27 = vector.broadcast %cst_19 : f32 to vector<64x16xf32>
      %28 = arith.mulf %27, %26 : vector<64x16xf32>
      %cst_20 = arith.constant -1.45315206 : f32
      %29 = vector.broadcast %cst_20 : f32 to vector<64x16xf32>
      %30 = arith.addf %28, %29 : vector<64x16xf32>
      %31 = arith.mulf %30, %26 : vector<64x16xf32>
      %cst_21 = arith.constant 1.42141378 : f32
      %32 = vector.broadcast %cst_21 : f32 to vector<64x16xf32>
      %33 = arith.addf %31, %32 : vector<64x16xf32>
      %34 = arith.mulf %33, %26 : vector<64x16xf32>
      %cst_22 = arith.constant -0.284496725 : f32
      %35 = vector.broadcast %cst_22 : f32 to vector<64x16xf32>
      %36 = arith.addf %34, %35 : vector<64x16xf32>
      %37 = arith.mulf %36, %26 : vector<64x16xf32>
      %cst_23 = arith.constant 0.254829586 : f32
      %38 = vector.broadcast %cst_23 : f32 to vector<64x16xf32>
      %39 = arith.addf %37, %38 : vector<64x16xf32>
      %40 = arith.mulf %39, %26 : vector<64x16xf32>
      %cst_24 = arith.constant 0.000000e+00 : f32
      %41 = vector.broadcast %cst_24 : f32 to vector<64x16xf32>
      %42 = arith.subf %41, %20 : vector<64x16xf32>
      %43 = arith.mulf %42, %20 : vector<64x16xf32>
      %44 = math.exp %43 : vector<64x16xf32>
      %45 = arith.mulf %40, %44 : vector<64x16xf32>
      %cst_25 = arith.constant 1.000000e+00 : f32
      %46 = vector.broadcast %cst_25 : f32 to vector<64x16xf32>
      %47 = arith.subf %46, %45 : vector<64x16xf32>
      %cst_26 = arith.constant 0.000000e+00 : f32
      %48 = vector.broadcast %cst_26 : f32 to vector<64x16xf32>
      %49 = arith.cmpf olt, %19, %48 : vector<64x16xf32>
      %cst_27 = arith.constant 0.000000e+00 : f32
      %50 = vector.broadcast %cst_27 : f32 to vector<64x16xf32>
      %51 = arith.subf %50, %47 : vector<64x16xf32>
      %52 = arith.select %49, %51, %47 : vector<64x16xi1>, vector<64x16xf32>
      %cst_28 = arith.constant 1.000000e+00 : f32
      %53 = vector.broadcast %cst_28 : f32 to vector<64x16xf32>
      %54 = arith.addf %53, %52 : vector<64x16xf32>
      %55 = arith.mulf %17, %54 : vector<64x16xf32>
      %56 = arith.truncf %55 : vector<64x16xf32> to vector<64x16xbf16>
      %c0_29 = arith.constant 0 : index
      %c0_30 = arith.constant 0 : index
      %57 = vector.load %arg6[%c0_29, %c0_30] : memref<64x16xbf16, #tpu.memory_space<vmem>>, vector<64x16xbf16>
      tpu.vector_store %arg6[%c0_29, %c0_30], %56 {strides = array<i32>} : memref<64x16xbf16, #tpu.memory_space<vmem>>, vector<64x16xbf16>,
    } else {
    }
    return
  }
  func.func @transform_0(%arg0: i32, %arg1: i32, %arg2: i32) -> (i32, i32) {
    %c0_i32 = arith.constant 0 : i32
    return %arg0, %arg2 : i32, i32
  }
  func.func @transform_1(%arg0: i32, %arg1: i32, %arg2: i32) -> (i32, i32) {
    %c0_i32 = arith.constant 0 : i32
    return %arg2, %arg1 : i32, i32
  }
  func.func @transform_2(%arg0: i32, %arg1: i32, %arg2: i32) -> (i32, i32) {
    %c0_i32 = arith.constant 0 : i32
    %c0_i32_0 = arith.constant 0 : i32
    return %c0_i32, %arg1 : i32, i32
  }
  func.func @transform_3(%arg0: i32, %arg1: i32, %arg2: i32) -> (i32, i32) {
    %c0_i32 = arith.constant 0 : i32
    return %arg0, %arg1 : i32, i32
  }
}

module attributes {stable_mosaic.version = 11 : i64} {
  func.func @_dwconv3x3_kernel(%arg0: i32, %arg1: i32, %arg2: memref<1x10x10x16xbf16, #tpu.memory_space<vmem>>, %arg3: memref<9x16xf32, #tpu.memory_space<vmem>>, %arg4: memref<1x16xf32, #tpu.memory_space<vmem>>, %arg5: memref<1x8x8x16xbf16, #tpu.memory_space<vmem>>) attributes {dimension_semantics = [#tpu.dimension_semantics<parallel>, #tpu.dimension_semantics<parallel>], iteration_bounds = array<i64: 2, 1>, scalar_prefetch = 0 : i64, scratch_operands = 0 : i64, tpu.core_type = #tpu.core_type<tc>, window_params = [{transform_indices = @transform_0, window_bounds = array<i64: 1, 10, 10, 16>}, {transform_indices = @transform_1, window_bounds = array<i64: 9, 16>}, {transform_indices = @transform_2, window_bounds = array<i64: 1, 16>}, {transform_indices = @transform_3, window_bounds = array<i64: 1, 8, 8, 16>}]} {
    %c0 = arith.constant 0 : index
    %c0_0 = arith.constant 0 : index
    %c0_1 = arith.constant 0 : index
    %c0_2 = arith.constant 0 : index
    %0 = vector.load %arg2[%c0, %c0_0, %c0_1, %c0_2] : memref<1x10x10x16xbf16, #tpu.memory_space<vmem>>, vector<1x10x10x16xbf16>
    %1 = vector.shape_cast %0 : vector<1x10x10x16xbf16> to vector<10x10x16xbf16>
    %2 = arith.extf %1 : vector<10x10x16xbf16> to vector<10x10x16xf32>
    %c0_3 = arith.constant 0 : index
    %c0_4 = arith.constant 0 : index
    %3 = vector.load %arg3[%c0_3, %c0_4] : memref<9x16xf32, #tpu.memory_space<vmem>>, vector<9x16xf32>
    %cst = arith.constant 0.000000e+00 : f32
    %4 = vector.broadcast %cst : f32 to vector<8x8x16xf32>
    %5 = vector.extract_strided_slice %2 {offsets = [0, 0, 0], sizes = [8, 8, 16], strides = [1, 1, 1]} : vector<10x10x16xf32> to vector<8x8x16xf32>
    %6 = vector.extract_strided_slice %3 {offsets = [0, 0], sizes = [1, 16], strides = [1, 1]} : vector<9x16xf32> to vector<1x16xf32>
    %7 = vector.shape_cast %6 : vector<1x16xf32> to vector<16xf32>
    %8 = vector.shape_cast %7 : vector<16xf32> to vector<1x1x16xf32>
    %9 = vector.broadcast %8 : vector<1x1x16xf32> to vector<8x8x16xf32>
    %10 = arith.mulf %5, %9 : vector<8x8x16xf32>
    %11 = arith.addf %4, %10 : vector<8x8x16xf32>
    %12 = vector.extract_strided_slice %2 {offsets = [0, 1, 0], sizes = [8, 8, 16], strides = [1, 1, 1]} : vector<10x10x16xf32> to vector<8x8x16xf32>
    %13 = vector.extract_strided_slice %3 {offsets = [1, 0], sizes = [1, 16], strides = [1, 1]} : vector<9x16xf32> to vector<1x16xf32>
    %14 = vector.shape_cast %13 : vector<1x16xf32> to vector<16xf32>
    %15 = vector.shape_cast %14 : vector<16xf32> to vector<1x1x16xf32>
    %16 = vector.broadcast %15 : vector<1x1x16xf32> to vector<8x8x16xf32>
    %17 = arith.mulf %12, %16 : vector<8x8x16xf32>
    %18 = arith.addf %11, %17 : vector<8x8x16xf32>
    %19 = vector.extract_strided_slice %2 {offsets = [0, 2, 0], sizes = [8, 8, 16], strides = [1, 1, 1]} : vector<10x10x16xf32> to vector<8x8x16xf32>
    %20 = vector.extract_strided_slice %3 {offsets = [2, 0], sizes = [1, 16], strides = [1, 1]} : vector<9x16xf32> to vector<1x16xf32>
    %21 = vector.shape_cast %20 : vector<1x16xf32> to vector<16xf32>
    %22 = vector.shape_cast %21 : vector<16xf32> to vector<1x1x16xf32>
    %23 = vector.broadcast %22 : vector<1x1x16xf32> to vector<8x8x16xf32>
    %24 = arith.mulf %19, %23 : vector<8x8x16xf32>
    %25 = arith.addf %18, %24 : vector<8x8x16xf32>
    %26 = vector.extract_strided_slice %2 {offsets = [1, 0, 0], sizes = [8, 8, 16], strides = [1, 1, 1]} : vector<10x10x16xf32> to vector<8x8x16xf32>
    %27 = vector.extract_strided_slice %3 {offsets = [3, 0], sizes = [1, 16], strides = [1, 1]} : vector<9x16xf32> to vector<1x16xf32>
    %28 = vector.shape_cast %27 : vector<1x16xf32> to vector<16xf32>
    %29 = vector.shape_cast %28 : vector<16xf32> to vector<1x1x16xf32>
    %30 = vector.broadcast %29 : vector<1x1x16xf32> to vector<8x8x16xf32>
    %31 = arith.mulf %26, %30 : vector<8x8x16xf32>
    %32 = arith.addf %25, %31 : vector<8x8x16xf32>
    %33 = vector.extract_strided_slice %2 {offsets = [1, 1, 0], sizes = [8, 8, 16], strides = [1, 1, 1]} : vector<10x10x16xf32> to vector<8x8x16xf32>
    %34 = vector.extract_strided_slice %3 {offsets = [4, 0], sizes = [1, 16], strides = [1, 1]} : vector<9x16xf32> to vector<1x16xf32>
    %35 = vector.shape_cast %34 : vector<1x16xf32> to vector<16xf32>
    %36 = vector.shape_cast %35 : vector<16xf32> to vector<1x1x16xf32>
    %37 = vector.broadcast %36 : vector<1x1x16xf32> to vector<8x8x16xf32>
    %38 = arith.mulf %33, %37 : vector<8x8x16xf32>
    %39 = arith.addf %32, %38 : vector<8x8x16xf32>
    %40 = vector.extract_strided_slice %2 {offsets = [1, 2, 0], sizes = [8, 8, 16], strides = [1, 1, 1]} : vector<10x10x16xf32> to vector<8x8x16xf32>
    %41 = vector.extract_strided_slice %3 {offsets = [5, 0], sizes = [1, 16], strides = [1, 1]} : vector<9x16xf32> to vector<1x16xf32>
    %42 = vector.shape_cast %41 : vector<1x16xf32> to vector<16xf32>
    %43 = vector.shape_cast %42 : vector<16xf32> to vector<1x1x16xf32>
    %44 = vector.broadcast %43 : vector<1x1x16xf32> to vector<8x8x16xf32>
    %45 = arith.mulf %40, %44 : vector<8x8x16xf32>
    %46 = arith.addf %39, %45 : vector<8x8x16xf32>
    %47 = vector.extract_strided_slice %2 {offsets = [2, 0, 0], sizes = [8, 8, 16], strides = [1, 1, 1]} : vector<10x10x16xf32> to vector<8x8x16xf32>
    %48 = vector.extract_strided_slice %3 {offsets = [6, 0], sizes = [1, 16], strides = [1, 1]} : vector<9x16xf32> to vector<1x16xf32>
    %49 = vector.shape_cast %48 : vector<1x16xf32> to vector<16xf32>
    %50 = vector.shape_cast %49 : vector<16xf32> to vector<1x1x16xf32>
    %51 = vector.broadcast %50 : vector<1x1x16xf32> to vector<8x8x16xf32>
    %52 = arith.mulf %47, %51 : vector<8x8x16xf32>
    %53 = arith.addf %46, %52 : vector<8x8x16xf32>
    %54 = vector.extract_strided_slice %2 {offsets = [2, 1, 0], sizes = [8, 8, 16], strides = [1, 1, 1]} : vector<10x10x16xf32> to vector<8x8x16xf32>
    %55 = vector.extract_strided_slice %3 {offsets = [7, 0], sizes = [1, 16], strides = [1, 1]} : vector<9x16xf32> to vector<1x16xf32>
    %56 = vector.shape_cast %55 : vector<1x16xf32> to vector<16xf32>
    %57 = vector.shape_cast %56 : vector<16xf32> to vector<1x1x16xf32>
    %58 = vector.broadcast %57 : vector<1x1x16xf32> to vector<8x8x16xf32>
    %59 = arith.mulf %54, %58 : vector<8x8x16xf32>
    %60 = arith.addf %53, %59 : vector<8x8x16xf32>
    %61 = vector.extract_strided_slice %2 {offsets = [2, 2, 0], sizes = [8, 8, 16], strides = [1, 1, 1]} : vector<10x10x16xf32> to vector<8x8x16xf32>
    %62 = vector.extract_strided_slice %3 {offsets = [8, 0], sizes = [1, 16], strides = [1, 1]} : vector<9x16xf32> to vector<1x16xf32>
    %63 = vector.shape_cast %62 : vector<1x16xf32> to vector<16xf32>
    %64 = vector.shape_cast %63 : vector<16xf32> to vector<1x1x16xf32>
    %65 = vector.broadcast %64 : vector<1x1x16xf32> to vector<8x8x16xf32>
    %66 = arith.mulf %61, %65 : vector<8x8x16xf32>
    %67 = arith.addf %60, %66 : vector<8x8x16xf32>
    %c0_5 = arith.constant 0 : index
    %c0_6 = arith.constant 0 : index
    %68 = vector.load %arg4[%c0_5, %c0_6] : memref<1x16xf32, #tpu.memory_space<vmem>>, vector<1x16xf32>
    %69 = vector.shape_cast %68 : vector<1x16xf32> to vector<16xf32>
    %70 = vector.shape_cast %69 : vector<16xf32> to vector<1x1x16xf32>
    %71 = vector.broadcast %70 : vector<1x1x16xf32> to vector<8x8x16xf32>
    %72 = arith.addf %67, %71 : vector<8x8x16xf32>
    %cst_7 = arith.constant 5.000000e-01 : f32
    %73 = vector.broadcast %cst_7 : f32 to vector<8x8x16xf32>
    %74 = arith.mulf %73, %72 : vector<8x8x16xf32>
    %cst_8 = arith.constant 0.707106769 : f32
    %75 = vector.broadcast %cst_8 : f32 to vector<8x8x16xf32>
    %76 = arith.mulf %72, %75 : vector<8x8x16xf32>
    %77 = math.absf %76 : vector<8x8x16xf32>
    %cst_9 = arith.constant 0.327591091 : f32
    %78 = vector.broadcast %cst_9 : f32 to vector<8x8x16xf32>
    %79 = arith.mulf %78, %77 : vector<8x8x16xf32>
    %cst_10 = arith.constant 1.000000e+00 : f32
    %80 = vector.broadcast %cst_10 : f32 to vector<8x8x16xf32>
    %81 = arith.addf %80, %79 : vector<8x8x16xf32>
    %cst_11 = arith.constant 1.000000e+00 : f32
    %82 = vector.broadcast %cst_11 : f32 to vector<8x8x16xf32>
    %83 = arith.divf %82, %81 : vector<8x8x16xf32>
    %cst_12 = arith.constant 1.06140542 : f32
    %84 = vector.broadcast %cst_12 : f32 to vector<8x8x16xf32>
    %85 = arith.mulf %84, %83 : vector<8x8x16xf32>
    %cst_13 = arith.constant -1.45315206 : f32
    %86 = vector.broadcast %cst_13 : f32 to vector<8x8x16xf32>
    %87 = arith.addf %85, %86 : vector<8x8x16xf32>
    %88 = arith.mulf %87, %83 : vector<8x8x16xf32>
    %cst_14 = arith.constant 1.42141378 : f32
    %89 = vector.broadcast %cst_14 : f32 to vector<8x8x16xf32>
    %90 = arith.addf %88, %89 : vector<8x8x16xf32>
    %91 = arith.mulf %90, %83 : vector<8x8x16xf32>
    %cst_15 = arith.constant -0.284496725 : f32
    %92 = vector.broadcast %cst_15 : f32 to vector<8x8x16xf32>
    %93 = arith.addf %91, %92 : vector<8x8x16xf32>
    %94 = arith.mulf %93, %83 : vector<8x8x16xf32>
    %cst_16 = arith.constant 0.254829586 : f32
    %95 = vector.broadcast %cst_16 : f32 to vector<8x8x16xf32>
    %96 = arith.addf %94, %95 : vector<8x8x16xf32>
    %97 = arith.mulf %96, %83 : vector<8x8x16xf32>
    %cst_17 = arith.constant 0.000000e+00 : f32
    %98 = vector.broadcast %cst_17 : f32 to vector<8x8x16xf32>
    %99 = arith.subf %98, %77 : vector<8x8x16xf32>
    %100 = arith.mulf %99, %77 : vector<8x8x16xf32>
    %101 = math.exp %100 : vector<8x8x16xf32>
    %102 = arith.mulf %97, %101 : vector<8x8x16xf32>
    %cst_18 = arith.constant 1.000000e+00 : f32
    %103 = vector.broadcast %cst_18 : f32 to vector<8x8x16xf32>
    %104 = arith.subf %103, %102 : vector<8x8x16xf32>
    %cst_19 = arith.constant 0.000000e+00 : f32
    %105 = vector.broadcast %cst_19 : f32 to vector<8x8x16xf32>
    %106 = arith.cmpf olt, %76, %105 : vector<8x8x16xf32>
    %cst_20 = arith.constant 0.000000e+00 : f32
    %107 = vector.broadcast %cst_20 : f32 to vector<8x8x16xf32>
    %108 = arith.subf %107, %104 : vector<8x8x16xf32>
    %109 = arith.select %106, %108, %104 : vector<8x8x16xi1>, vector<8x8x16xf32>
    %cst_21 = arith.constant 1.000000e+00 : f32
    %110 = vector.broadcast %cst_21 : f32 to vector<8x8x16xf32>
    %111 = arith.addf %110, %109 : vector<8x8x16xf32>
    %112 = arith.mulf %74, %111 : vector<8x8x16xf32>
    %113 = arith.truncf %112 : vector<8x8x16xf32> to vector<8x8x16xbf16>
    %c0_22 = arith.constant 0 : index
    %c0_23 = arith.constant 0 : index
    %c0_24 = arith.constant 0 : index
    %c0_25 = arith.constant 0 : index
    %114 = vector.load %arg5[%c0_22, %c0_23, %c0_24, %c0_25] : memref<1x8x8x16xbf16, #tpu.memory_space<vmem>>, vector<1x8x8x16xbf16>
    %115 = vector.shape_cast %114 : vector<1x8x8x16xbf16> to vector<8x8x16xbf16>
    %116 = vector.shape_cast %113 : vector<8x8x16xbf16> to vector<1x8x8x16xbf16>
    tpu.vector_store %arg5[%c0_22, %c0_23, %c0_24, %c0_25], %116 {strides = array<i32>} : memref<1x8x8x16xbf16, #tpu.memory_space<vmem>>, vector<1x8x8x16xbf16>,
    return
  }
  func.func @transform_0(%arg0: i32, %arg1: i32) -> (i32, i32, i32, i32) {
    %c0_i32 = arith.constant 0 : i32
    %c0_i32_0 = arith.constant 0 : i32
    %c0_i32_1 = arith.constant 0 : i32
    return %arg0, %c0_i32, %c0_i32_0, %arg1 : i32, i32, i32, i32
  }
  func.func @transform_1(%arg0: i32, %arg1: i32) -> (i32, i32) {
    %c0_i32 = arith.constant 0 : i32
    %c0_i32_0 = arith.constant 0 : i32
    return %c0_i32, %arg1 : i32, i32
  }
  func.func @transform_2(%arg0: i32, %arg1: i32) -> (i32, i32) {
    %c0_i32 = arith.constant 0 : i32
    %c0_i32_0 = arith.constant 0 : i32
    return %c0_i32, %arg1 : i32, i32
  }
  func.func @transform_3(%arg0: i32, %arg1: i32) -> (i32, i32, i32, i32) {
    %c0_i32 = arith.constant 0 : i32
    %c0_i32_0 = arith.constant 0 : i32
    %c0_i32_1 = arith.constant 0 : i32
    return %arg0, %c0_i32, %c0_i32_0, %arg1 : i32, i32, i32, i32
  }
}

module attributes {stable_mosaic.version = 11 : i64} {
  func.func @_matmul_res_kernel(%arg0: i32, %arg1: i32, %arg2: i32, %arg3: memref<64x16xbf16, #tpu.memory_space<vmem>>, %arg4: memref<16x8xbf16, #tpu.memory_space<vmem>>, %arg5: memref<1x8xf32, #tpu.memory_space<vmem>>, %arg6: memref<64x8xf32, #tpu.memory_space<vmem>>, %arg7: memref<64x8xf32, #tpu.memory_space<vmem>>, %arg8: memref<64x8xf32, #tpu.memory_space<vmem>>) attributes {dimension_semantics = [#tpu.dimension_semantics<parallel>, #tpu.dimension_semantics<parallel>, #tpu.dimension_semantics<arbitrary>], iteration_bounds = array<i64: 2, 1, 1>, scalar_prefetch = 0 : i64, scratch_operands = 1 : i64, tpu.core_type = #tpu.core_type<tc>, window_params = [{transform_indices = @transform_0, window_bounds = array<i64: 64, 16>}, {transform_indices = @transform_1, window_bounds = array<i64: 16, 8>}, {transform_indices = @transform_2, window_bounds = array<i64: 1, 8>}, {transform_indices = @transform_3, window_bounds = array<i64: 64, 8>}, {transform_indices = @transform_4, window_bounds = array<i64: 64, 8>}]} {
    %c0_i32 = arith.constant 0 : i32
    %0 = arith.cmpi eq, %arg2, %c0_i32 : i32
    %1 = arith.extui %0 : i1 to i32
    %c0_i32_0 = arith.constant 0 : i32
    %2 = arith.cmpi ne, %1, %c0_i32_0 : i32
    scf.if %2 {
      %cst_10 = arith.constant 0.000000e+00 : f32
      %12 = vector.broadcast %cst_10 : f32 to vector<64x8xf32>
      %c0_11 = arith.constant 0 : index
      %c0_12 = arith.constant 0 : index
      %13 = vector.load %arg8[%c0_11, %c0_12] : memref<64x8xf32, #tpu.memory_space<vmem>>, vector<64x8xf32>
      tpu.vector_store %arg8[%c0_11, %c0_12], %12 {strides = array<i32>} : memref<64x8xf32, #tpu.memory_space<vmem>>, vector<64x8xf32>,
    } else {
    }
    %c0 = arith.constant 0 : index
    %c0_1 = arith.constant 0 : index
    %3 = vector.load %arg8[%c0, %c0_1] : memref<64x8xf32, #tpu.memory_space<vmem>>, vector<64x8xf32>
    %c0_2 = arith.constant 0 : index
    %c0_3 = arith.constant 0 : index
    %4 = vector.load %arg3[%c0_2, %c0_3] : memref<64x16xbf16, #tpu.memory_space<vmem>>, vector<64x16xbf16>
    %c0_4 = arith.constant 0 : index
    %c0_5 = arith.constant 0 : index
    %5 = vector.load %arg4[%c0_4, %c0_5] : memref<16x8xbf16, #tpu.memory_space<vmem>>, vector<16x8xbf16>
    %cst = arith.constant dense<0.000000e+00> : vector<64x8xf32>
    %6 = tpu.matmul %4, %5, %cst {dimension_numbers = #tpu.dot_dimension_numbers<[1], [0], [0], [1], [0, 0, 1, 1], [], []>} : vector<64x16xbf16>, vector<16x8xbf16>, vector<64x8xf32> -> vector<64x8xf32>
    %7 = arith.addf %3, %6 : vector<64x8xf32>
    %c0_6 = arith.constant 0 : index
    %c0_7 = arith.constant 0 : index
    %8 = vector.load %arg8[%c0_6, %c0_7] : memref<64x8xf32, #tpu.memory_space<vmem>>, vector<64x8xf32>
    tpu.vector_store %arg8[%c0_6, %c0_7], %7 {strides = array<i32>} : memref<64x8xf32, #tpu.memory_space<vmem>>, vector<64x8xf32>,
    %c0_i32_8 = arith.constant 0 : i32
    %9 = arith.cmpi eq, %arg2, %c0_i32_8 : i32
    %10 = arith.extui %9 : i1 to i32
    %c0_i32_9 = arith.constant 0 : i32
    %11 = arith.cmpi ne, %10, %c0_i32_9 : i32
    scf.if %11 {
      %c0_10 = arith.constant 0 : index
      %c0_11 = arith.constant 0 : index
      %12 = vector.load %arg8[%c0_10, %c0_11] : memref<64x8xf32, #tpu.memory_space<vmem>>, vector<64x8xf32>
      %c0_12 = arith.constant 0 : index
      %c0_13 = arith.constant 0 : index
      %13 = vector.load %arg5[%c0_12, %c0_13] : memref<1x8xf32, #tpu.memory_space<vmem>>, vector<1x8xf32>
      %14 = vector.broadcast %13 : vector<1x8xf32> to vector<64x8xf32>
      %15 = arith.addf %12, %14 : vector<64x8xf32>
      %c0_14 = arith.constant 0 : index
      %c0_15 = arith.constant 0 : index
      %16 = vector.load %arg6[%c0_14, %c0_15] : memref<64x8xf32, #tpu.memory_space<vmem>>, vector<64x8xf32>
      %17 = arith.addf %15, %16 : vector<64x8xf32>
      %c0_16 = arith.constant 0 : index
      %c0_17 = arith.constant 0 : index
      %18 = vector.load %arg7[%c0_16, %c0_17] : memref<64x8xf32, #tpu.memory_space<vmem>>, vector<64x8xf32>
      tpu.vector_store %arg7[%c0_16, %c0_17], %17 {strides = array<i32>} : memref<64x8xf32, #tpu.memory_space<vmem>>, vector<64x8xf32>,
    } else {
    }
    return
  }
  func.func @transform_0(%arg0: i32, %arg1: i32, %arg2: i32) -> (i32, i32) {
    %c0_i32 = arith.constant 0 : i32
    return %arg0, %arg2 : i32, i32
  }
  func.func @transform_1(%arg0: i32, %arg1: i32, %arg2: i32) -> (i32, i32) {
    %c0_i32 = arith.constant 0 : i32
    return %arg2, %arg1 : i32, i32
  }
  func.func @transform_2(%arg0: i32, %arg1: i32, %arg2: i32) -> (i32, i32) {
    %c0_i32 = arith.constant 0 : i32
    %c0_i32_0 = arith.constant 0 : i32
    return %c0_i32, %arg1 : i32, i32
  }
  func.func @transform_3(%arg0: i32, %arg1: i32, %arg2: i32) -> (i32, i32) {
    %c0_i32 = arith.constant 0 : i32
    return %arg0, %arg1 : i32, i32
  }
  func.func @transform_4(%arg0: i32, %arg1: i32, %arg2: i32) -> (i32, i32) {
    %c0_i32 = arith.constant 0 : i32
    return %arg0, %arg1 : i32, i32
  }
}

module attributes {stable_mosaic.version = 11 : i64} {
  func.func @_conv3x3_res_kernel(%arg0: i32, %arg1: i32, %arg2: memref<1x10x10x8xbf16, #tpu.memory_space<vmem>>, %arg3: memref<9x8x8xbf16, #tpu.memory_space<vmem>>, %arg4: memref<1x8xf32, #tpu.memory_space<vmem>>, %arg5: memref<1x64x8xf32, #tpu.memory_space<vmem>>, %arg6: memref<1x64x8xf32, #tpu.memory_space<vmem>>) attributes {dimension_semantics = [#tpu.dimension_semantics<parallel>, #tpu.dimension_semantics<parallel>], iteration_bounds = array<i64: 2, 1>, scalar_prefetch = 0 : i64, scratch_operands = 0 : i64, tpu.core_type = #tpu.core_type<tc>, window_params = [{transform_indices = @transform_0, window_bounds = array<i64: 1, 10, 10, 8>}, {transform_indices = @transform_1, window_bounds = array<i64: 9, 8, 8>}, {transform_indices = @transform_2, window_bounds = array<i64: 1, 8>}, {transform_indices = @transform_3, window_bounds = array<i64: 1, 64, 8>}, {transform_indices = @transform_4, window_bounds = array<i64: 1, 64, 8>}]} {
    %c0 = arith.constant 0 : index
    %c0_0 = arith.constant 0 : index
    %c0_1 = arith.constant 0 : index
    %c0_2 = arith.constant 0 : index
    %0 = vector.load %arg2[%c0, %c0_0, %c0_1, %c0_2] : memref<1x10x10x8xbf16, #tpu.memory_space<vmem>>, vector<1x10x10x8xbf16>
    %1 = vector.shape_cast %0 : vector<1x10x10x8xbf16> to vector<10x10x8xbf16>
    %cst = arith.constant 0.000000e+00 : f32
    %2 = vector.broadcast %cst : f32 to vector<64x8xf32>
    %3 = vector.extract_strided_slice %1 {offsets = [0, 0, 0], sizes = [8, 8, 8], strides = [1, 1, 1]} : vector<10x10x8xbf16> to vector<8x8x8xbf16>
    %4 = vector.shape_cast %3 : vector<8x8x8xbf16> to vector<64x8xbf16>
    %c0_3 = arith.constant 0 : index
    %c0_4 = arith.constant 0 : index
    %c0_5 = arith.constant 0 : index
    %5 = vector.load %arg3[%c0_3, %c0_4, %c0_5] : memref<9x8x8xbf16, #tpu.memory_space<vmem>>, vector<1x8x8xbf16>
    %6 = vector.shape_cast %5 : vector<1x8x8xbf16> to vector<8x8xbf16>
    %cst_6 = arith.constant dense<0.000000e+00> : vector<64x8xf32>
    %7 = tpu.matmul %4, %6, %cst_6 {dimension_numbers = #tpu.dot_dimension_numbers<[1], [0], [0], [1], [0, 0, 1, 1], [], []>} : vector<64x8xbf16>, vector<8x8xbf16>, vector<64x8xf32> -> vector<64x8xf32>
    %8 = arith.addf %2, %7 : vector<64x8xf32>
    %9 = vector.extract_strided_slice %1 {offsets = [0, 1, 0], sizes = [8, 8, 8], strides = [1, 1, 1]} : vector<10x10x8xbf16> to vector<8x8x8xbf16>
    %10 = vector.shape_cast %9 : vector<8x8x8xbf16> to vector<64x8xbf16>
    %c1 = arith.constant 1 : index
    %c0_7 = arith.constant 0 : index
    %c0_8 = arith.constant 0 : index
    %11 = vector.load %arg3[%c1, %c0_7, %c0_8] : memref<9x8x8xbf16, #tpu.memory_space<vmem>>, vector<1x8x8xbf16>
    %12 = vector.shape_cast %11 : vector<1x8x8xbf16> to vector<8x8xbf16>
    %cst_9 = arith.constant dense<0.000000e+00> : vector<64x8xf32>
    %13 = tpu.matmul %10, %12, %cst_9 {dimension_numbers = #tpu.dot_dimension_numbers<[1], [0], [0], [1], [0, 0, 1, 1], [], []>} : vector<64x8xbf16>, vector<8x8xbf16>, vector<64x8xf32> -> vector<64x8xf32>
    %14 = arith.addf %8, %13 : vector<64x8xf32>
    %15 = vector.extract_strided_slice %1 {offsets = [0, 2, 0], sizes = [8, 8, 8], strides = [1, 1, 1]} : vector<10x10x8xbf16> to vector<8x8x8xbf16>
    %16 = vector.shape_cast %15 : vector<8x8x8xbf16> to vector<64x8xbf16>
    %c2 = arith.constant 2 : index
    %c0_10 = arith.constant 0 : index
    %c0_11 = arith.constant 0 : index
    %17 = vector.load %arg3[%c2, %c0_10, %c0_11] : memref<9x8x8xbf16, #tpu.memory_space<vmem>>, vector<1x8x8xbf16>
    %18 = vector.shape_cast %17 : vector<1x8x8xbf16> to vector<8x8xbf16>
    %cst_12 = arith.constant dense<0.000000e+00> : vector<64x8xf32>
    %19 = tpu.matmul %16, %18, %cst_12 {dimension_numbers = #tpu.dot_dimension_numbers<[1], [0], [0], [1], [0, 0, 1, 1], [], []>} : vector<64x8xbf16>, vector<8x8xbf16>, vector<64x8xf32> -> vector<64x8xf32>
    %20 = arith.addf %14, %19 : vector<64x8xf32>
    %21 = vector.extract_strided_slice %1 {offsets = [1, 0, 0], sizes = [8, 8, 8], strides = [1, 1, 1]} : vector<10x10x8xbf16> to vector<8x8x8xbf16>
    %22 = vector.shape_cast %21 : vector<8x8x8xbf16> to vector<64x8xbf16>
    %c3 = arith.constant 3 : index
    %c0_13 = arith.constant 0 : index
    %c0_14 = arith.constant 0 : index
    %23 = vector.load %arg3[%c3, %c0_13, %c0_14] : memref<9x8x8xbf16, #tpu.memory_space<vmem>>, vector<1x8x8xbf16>
    %24 = vector.shape_cast %23 : vector<1x8x8xbf16> to vector<8x8xbf16>
    %cst_15 = arith.constant dense<0.000000e+00> : vector<64x8xf32>
    %25 = tpu.matmul %22, %24, %cst_15 {dimension_numbers = #tpu.dot_dimension_numbers<[1], [0], [0], [1], [0, 0, 1, 1], [], []>} : vector<64x8xbf16>, vector<8x8xbf16>, vector<64x8xf32> -> vector<64x8xf32>
    %26 = arith.addf %20, %25 : vector<64x8xf32>
    %27 = vector.extract_strided_slice %1 {offsets = [1, 1, 0], sizes = [8, 8, 8], strides = [1, 1, 1]} : vector<10x10x8xbf16> to vector<8x8x8xbf16>
    %28 = vector.shape_cast %27 : vector<8x8x8xbf16> to vector<64x8xbf16>
    %c4 = arith.constant 4 : index
    %c0_16 = arith.constant 0 : index
    %c0_17 = arith.constant 0 : index
    %29 = vector.load %arg3[%c4, %c0_16, %c0_17] : memref<9x8x8xbf16, #tpu.memory_space<vmem>>, vector<1x8x8xbf16>
    %30 = vector.shape_cast %29 : vector<1x8x8xbf16> to vector<8x8xbf16>
    %cst_18 = arith.constant dense<0.000000e+00> : vector<64x8xf32>
    %31 = tpu.matmul %28, %30, %cst_18 {dimension_numbers = #tpu.dot_dimension_numbers<[1], [0], [0], [1], [0, 0, 1, 1], [], []>} : vector<64x8xbf16>, vector<8x8xbf16>, vector<64x8xf32> -> vector<64x8xf32>
    %32 = arith.addf %26, %31 : vector<64x8xf32>
    %33 = vector.extract_strided_slice %1 {offsets = [1, 2, 0], sizes = [8, 8, 8], strides = [1, 1, 1]} : vector<10x10x8xbf16> to vector<8x8x8xbf16>
    %34 = vector.shape_cast %33 : vector<8x8x8xbf16> to vector<64x8xbf16>
    %c5 = arith.constant 5 : index
    %c0_19 = arith.constant 0 : index
    %c0_20 = arith.constant 0 : index
    %35 = vector.load %arg3[%c5, %c0_19, %c0_20] : memref<9x8x8xbf16, #tpu.memory_space<vmem>>, vector<1x8x8xbf16>
    %36 = vector.shape_cast %35 : vector<1x8x8xbf16> to vector<8x8xbf16>
    %cst_21 = arith.constant dense<0.000000e+00> : vector<64x8xf32>
    %37 = tpu.matmul %34, %36, %cst_21 {dimension_numbers = #tpu.dot_dimension_numbers<[1], [0], [0], [1], [0, 0, 1, 1], [], []>} : vector<64x8xbf16>, vector<8x8xbf16>, vector<64x8xf32> -> vector<64x8xf32>
    %38 = arith.addf %32, %37 : vector<64x8xf32>
    %39 = vector.extract_strided_slice %1 {offsets = [2, 0, 0], sizes = [8, 8, 8], strides = [1, 1, 1]} : vector<10x10x8xbf16> to vector<8x8x8xbf16>
    %40 = vector.shape_cast %39 : vector<8x8x8xbf16> to vector<64x8xbf16>
    %c6 = arith.constant 6 : index
    %c0_22 = arith.constant 0 : index
    %c0_23 = arith.constant 0 : index
    %41 = vector.load %arg3[%c6, %c0_22, %c0_23] : memref<9x8x8xbf16, #tpu.memory_space<vmem>>, vector<1x8x8xbf16>
    %42 = vector.shape_cast %41 : vector<1x8x8xbf16> to vector<8x8xbf16>
    %cst_24 = arith.constant dense<0.000000e+00> : vector<64x8xf32>
    %43 = tpu.matmul %40, %42, %cst_24 {dimension_numbers = #tpu.dot_dimension_numbers<[1], [0], [0], [1], [0, 0, 1, 1], [], []>} : vector<64x8xbf16>, vector<8x8xbf16>, vector<64x8xf32> -> vector<64x8xf32>
    %44 = arith.addf %38, %43 : vector<64x8xf32>
    %45 = vector.extract_strided_slice %1 {offsets = [2, 1, 0], sizes = [8, 8, 8], strides = [1, 1, 1]} : vector<10x10x8xbf16> to vector<8x8x8xbf16>
    %46 = vector.shape_cast %45 : vector<8x8x8xbf16> to vector<64x8xbf16>
    %c7 = arith.constant 7 : index
    %c0_25 = arith.constant 0 : index
    %c0_26 = arith.constant 0 : index
    %47 = vector.load %arg3[%c7, %c0_25, %c0_26] : memref<9x8x8xbf16, #tpu.memory_space<vmem>>, vector<1x8x8xbf16>
    %48 = vector.shape_cast %47 : vector<1x8x8xbf16> to vector<8x8xbf16>
    %cst_27 = arith.constant dense<0.000000e+00> : vector<64x8xf32>
    %49 = tpu.matmul %46, %48, %cst_27 {dimension_numbers = #tpu.dot_dimension_numbers<[1], [0], [0], [1], [0, 0, 1, 1], [], []>} : vector<64x8xbf16>, vector<8x8xbf16>, vector<64x8xf32> -> vector<64x8xf32>
    %50 = arith.addf %44, %49 : vector<64x8xf32>
    %51 = vector.extract_strided_slice %1 {offsets = [2, 2, 0], sizes = [8, 8, 8], strides = [1, 1, 1]} : vector<10x10x8xbf16> to vector<8x8x8xbf16>
    %52 = vector.shape_cast %51 : vector<8x8x8xbf16> to vector<64x8xbf16>
    %c8 = arith.constant 8 : index
    %c0_28 = arith.constant 0 : index
    %c0_29 = arith.constant 0 : index
    %53 = vector.load %arg3[%c8, %c0_28, %c0_29] : memref<9x8x8xbf16, #tpu.memory_space<vmem>>, vector<1x8x8xbf16>
    %54 = vector.shape_cast %53 : vector<1x8x8xbf16> to vector<8x8xbf16>
    %cst_30 = arith.constant dense<0.000000e+00> : vector<64x8xf32>
    %55 = tpu.matmul %52, %54, %cst_30 {dimension_numbers = #tpu.dot_dimension_numbers<[1], [0], [0], [1], [0, 0, 1, 1], [], []>} : vector<64x8xbf16>, vector<8x8xbf16>, vector<64x8xf32> -> vector<64x8xf32>
    %56 = arith.addf %50, %55 : vector<64x8xf32>
    %c0_31 = arith.constant 0 : index
    %c0_32 = arith.constant 0 : index
    %57 = vector.load %arg4[%c0_31, %c0_32] : memref<1x8xf32, #tpu.memory_space<vmem>>, vector<1x8xf32>
    %58 = vector.broadcast %57 : vector<1x8xf32> to vector<64x8xf32>
    %59 = arith.addf %56, %58 : vector<64x8xf32>
    %c0_33 = arith.constant 0 : index
    %c0_34 = arith.constant 0 : index
    %c0_35 = arith.constant 0 : index
    %60 = vector.load %arg5[%c0_33, %c0_34, %c0_35] : memref<1x64x8xf32, #tpu.memory_space<vmem>>, vector<1x64x8xf32>
    %61 = vector.shape_cast %60 : vector<1x64x8xf32> to vector<64x8xf32>
    %62 = arith.addf %59, %61 : vector<64x8xf32>
    %c0_36 = arith.constant 0 : index
    %c0_37 = arith.constant 0 : index
    %c0_38 = arith.constant 0 : index
    %63 = vector.load %arg6[%c0_36, %c0_37, %c0_38] : memref<1x64x8xf32, #tpu.memory_space<vmem>>, vector<1x64x8xf32>
    %64 = vector.shape_cast %63 : vector<1x64x8xf32> to vector<64x8xf32>
    %65 = vector.shape_cast %62 : vector<64x8xf32> to vector<1x64x8xf32>
    tpu.vector_store %arg6[%c0_36, %c0_37, %c0_38], %65 {strides = array<i32>} : memref<1x64x8xf32, #tpu.memory_space<vmem>>, vector<1x64x8xf32>,
    return
  }
  func.func @transform_0(%arg0: i32, %arg1: i32) -> (i32, i32, i32, i32) {
    %c0_i32 = arith.constant 0 : i32
    %c0_i32_0 = arith.constant 0 : i32
    %c0_i32_1 = arith.constant 0 : i32
    %c0_i32_2 = arith.constant 0 : i32
    return %arg0, %c0_i32, %c0_i32_0, %c0_i32_1 : i32, i32, i32, i32
  }
  func.func @transform_1(%arg0: i32, %arg1: i32) -> (i32, i32, i32) {
    %c0_i32 = arith.constant 0 : i32
    %c0_i32_0 = arith.constant 0 : i32
    %c0_i32_1 = arith.constant 0 : i32
    return %c0_i32, %c0_i32_0, %arg1 : i32, i32, i32
  }
  func.func @transform_2(%arg0: i32, %arg1: i32) -> (i32, i32) {
    %c0_i32 = arith.constant 0 : i32
    %c0_i32_0 = arith.constant 0 : i32
    return %c0_i32, %arg1 : i32, i32
  }
  func.func @transform_3(%arg0: i32, %arg1: i32) -> (i32, i32, i32) {
    %c0_i32 = arith.constant 0 : i32
    %c0_i32_0 = arith.constant 0 : i32
    return %arg0, %c0_i32, %arg1 : i32, i32, i32
  }
  func.func @transform_4(%arg0: i32, %arg1: i32) -> (i32, i32, i32) {
    %c0_i32 = arith.constant 0 : i32
    %c0_i32_0 = arith.constant 0 : i32
    return %arg0, %c0_i32, %arg1 : i32, i32, i32
  }
}

</mosaic_0001>

<llo_original>
// kernel: rstb_forward.21
$region0: #{rstb_forward.21}
  #allocation0 [shape = 'u32[]', space=smem, size = 0x4, offset = 0x4, fixed_abs, tag = 'smem constant byte address 0x4 - core index']
  #allocation1 [shape = 'u32[144,128]{1,0:T(1,128)}', space=vmem, size = 0x12000, scoped, tag = 'internal scratch']
  %s0 = inlined_call_operand.vmem [shape: f32[128,8], index: 0, kind: input, shape index: {}]
  %s1 = inlined_call_operand.vmem [shape: f32[1,8], index: 1, kind: input, shape index: {}]
  %s2 = inlined_call_operand.vmem [shape: f32[1,8], index: 2, kind: input, shape index: {}]
  %s3 = inlined_call_operand.vmem [shape: bf16[128,8], index: 3, kind: output, shape index: {}]
  %s4 = sld [smem:[#allocation0]]
  $region45: #{rstb_forward.21} parent=0
    _
  %s6 = ssub.s32 1, %s4
  %s7 = scalar_select 0, %s6, %s4
  loop: start=0, step=1, limit=4
  $region2: #{rstb_forward.21} parent=0 // loop_pre_header
    _
  $region3: #{rstb_forward.21} parent=0 // loop_header
    %s9 = sphi 0, %s13
    %p10 = scmp.ge.s32.totalorder %s9, 4
    %s19 = sphi 0, %s21
    %s22 = sphi 0, %s19
    %s23 = sphi 0, %s22
    %s39 = sphi 0, %s23
    %s43 = sphi 0, %s43
    %s45 = sphi 0, %s43
    %s46 = sphi 0, %s45
    %s60 = sphi 0, %s46
    %s64 = sphi 0, %s64
    %s66 = sphi 0, %s64
    %s67 = sphi 0, %s66
    %s81 = sphi 0, %s67
    %s87 = sphi 0, %s89
    %s90 = sphi 0, %s87
    %s91 = sphi 0, %s90
    %s107 = sphi 0, %s91
  $region4: #{rstb_forward.21} parent=0 // loop_header_branch
    %12 = sbr.rel (%p10) target = $region8
  $region5: #{rstb_forward.21} parent=0 // loop_body
    %s14 = ssub.s32 %s9, 1
    %s15 = ssub.s32 %s9, 2
    %s16 = sadd.s32 %s9, 1
    %s17 = ssub.s32 %s9, %s16
    %p18 = scmp.eq.s32.totalorder %s17, 0
    %s20 = sadd.s32 %s19, 1
    %s21 = scalar_select %p18, %s19, %s20
    %p24 = pneg %p18
    %p25 = scmp.eq.s32.totalorder %s9, 1
    %p26 = por %p24, %p25
    %p27 = scmp.ne.s32.totalorder %s19, %s22
    %p28 = scmp.eq.s32.totalorder %s9, 0
    %p29 = por %p27, %p28
    %p30 = scmp.ne.s32.totalorder %s19, %s22
    %p31 = scmp.eq.s32.totalorder %s14, 1
    %p32 = por %p30, %p31
    %p33 = scmp.ne.s32.totalorder %s22, %s23
    %p34 = scmp.eq.s32.totalorder %s14, 0
    %p35 = por %p33, %p34
    %p36 = scmp.ne.s32.totalorder %s22, %s23
    %p37 = scmp.eq.s32.totalorder %s15, 1
    %p38 = por %p36, %p37
    %p40 = scmp.ne.s32.totalorder %s23, %s39
    %p41 = scmp.eq.s32.totalorder %s15, 0
    %p42 = por %p40, %p41
    %s44 = sadd.s32 %s43, 1
    %p47 = scmp.eq.s32.totalorder %s9, 1
    %p48 = scmp.ne.s32.totalorder %s43, %s45
    %p49 = scmp.eq.s32.totalorder %s9, 0
    %p50 = por %p48, %p49
    %p51 = scmp.ne.s32.totalorder %s43, %s45
    %p52 = scmp.eq.s32.totalorder %s14, 1
    %p53 = por %p51, %p52
    %p54 = scmp.ne.s32.totalorder %s45, %s46
    %p55 = scmp.eq.s32.totalorder %s14, 0
    %p56 = por %p54, %p55
    %p57 = scmp.ne.s32.totalorder %s45, %s46
    %p58 = scmp.eq.s32.totalorder %s15, 1
    %p59 = por %p57, %p58
    %p61 = scmp.ne.s32.totalorder %s46, %s60
    %p62 = scmp.eq.s32.totalorder %s15, 0
    %p63 = por %p61, %p62
    %s65 = sadd.s32 %s64, 1
    %p68 = scmp.eq.s32.totalorder %s9, 1
    %p69 = scmp.ne.s32.totalorder %s64, %s66
    %p70 = scmp.eq.s32.totalorder %s9, 0
    %p71 = por %p69, %p70
    %p72 = scmp.ne.s32.totalorder %s64, %s66
    %p73 = scmp.eq.s32.totalorder %s14, 1
    %p74 = por %p72, %p73
    %p75 = scmp.ne.s32.totalorder %s66, %s67
    %p76 = scmp.eq.s32.totalorder %s14, 0
    %p77 = por %p75, %p76
    %p78 = scmp.ne.s32.totalorder %s66, %s67
    %p79 = scmp.eq.s32.totalorder %s15, 1
    %p80 = por %p78, %p79
    %p82 = scmp.ne.s32.totalorder %s67, %s81
    %p83 = scmp.eq.s32.totalorder %s15, 0
    %p84 = por %p82, %p83
    %s85 = ssub.s32 %s9, %s16
    %p86 = scmp.eq.s32.totalorder %s85, 0
    %s88 = sadd.s32 %s87, 1
    %s89 = scalar_select %p86, %s87, %s88
    %p92 = pneg %p86
    %p93 = scmp.eq.s32.totalorder %s9, 1
    %p94 = por %p92, %p93
    %p95 = scmp.ne.s32.totalorder %s87, %s90
    %p96 = scmp.eq.s32.totalorder %s9, 0
    %p97 = por %p95, %p96
    %p98 = scmp.ne.s32.totalorder %s87, %s90
    %p99 = scmp.eq.s32.totalorder %s14, 1
    %p100 = por %p98, %p99
    %p101 = scmp.ne.s32.totalorder %s90, %s91
    %p102 = scmp.eq.s32.totalorder %s14, 0
    %p103 = por %p101, %p102
    %p104 = scmp.ne.s32.totalorder %s90, %s91
    %p105 = scmp.eq.s32.totalorder %s15, 1
    %p106 = por %p104, %p105
    %p108 = scmp.ne.s32.totalorder %s91, %s107
    %p109 = scmp.eq.s32.totalorder %s15, 0
    %p110 = por %p108, %p109
    %p111 = scmp.le.s32.totalorder 1, %s9
    %p112 = scmp.lt.s32.totalorder %s9, 3
    %p113 = pnand %p111, %p112
    %p114 = pneg %p113
    // Predicated region
    $region9: #{rstb_forward.21} parent=5 // pred_check
      _
    $region10: #{rstb_forward.21} parent=5 // pred_check_branch
      %116 = sbr.rel (%p113) target = $region12
    $region11: #{rstb_forward.21} parent=5 // pred_region
      %s117 = ssub.s32 %s9, 1
      // Predicated region
      $region13: #{rstb_forward.21} parent=11 // pred_check
        %p118 = pneg %p56
      $region14: #{rstb_forward.21} parent=11 // pred_check_branch
        %120 = sbr.rel (%p118) target = $region16
      $region15: #{rstb_forward.21} parent=11 // pred_region
        _
      $region16: #{rstb_forward.21} parent=11 // pred_fallthru
        _
      // Predicated region
      $region17: #{rstb_forward.21} parent=11 // pred_check
        %p121 = pneg %p77
      $region18: #{rstb_forward.21} parent=11 // pred_check_branch
        %123 = sbr.rel (%p121) target = $region20
      $region19: #{rstb_forward.21} parent=11 // pred_region
        _
      $region20: #{rstb_forward.21} parent=11 // pred_fallthru
        _
    $region12: #{rstb_forward.21} parent=5 // pred_fallthru
      _
    %p124 = scmp.lt.s32.totalorder %s9, 2
    // Predicated region
    $region21: #{rstb_forward.21} parent=5 // pred_check
      %p125 = pneg %p124
    $region22: #{rstb_forward.21} parent=5 // pred_check_branch
      %127 = sbr.rel (%p125) target = $region24
    $region23: #{rstb_forward.21} parent=5 // pred_region
      // Predicated region
      $region25: #{rstb_forward.21} parent=23 // pred_check
        %p128 = pneg %p29
      $region26: #{rstb_forward.21} parent=23 // pred_check_branch
        %130 = sbr.rel (%p128) target = $region28
      $region27: #{rstb_forward.21} parent=23 // pred_region
        %s131 = smul.u32 8, %s9
        %p132 = scmp.lt.s32.totalorder %s131, 15
        %s133 = scalar_select %p132, %s131, 15
        %s134 = smul.addr %s133, 8
        %s135 = scalar_lea.vmem %s0, %s134
        %s136 = smul.u32 8, %s9
      $region28: #{rstb_forward.21} parent=23 // pred_fallthru
        _
    $region24: #{rstb_forward.21} parent=5 // pred_fallthru
      _
    %p137 = scmp.le.s32.totalorder 1, %s9
    %p138 = scmp.lt.s32.totalorder %s9, 3
    %p139 = pnand %p137, %p138
    %p140 = pneg %p139
    // Predicated region
    $region29: #{rstb_forward.21} parent=5 // pred_check
      _
    $region30: #{rstb_forward.21} parent=5 // pred_check_branch
      %142 = sbr.rel (%p139) target = $region32
    $region31: #{rstb_forward.21} parent=5 // pred_region
      %s143 = ssub.s32 %s9, 1
      %s144 = smul.u32 8, %s14
      %p145 = scmp.lt.s32.totalorder %s144, 15
      %s146 = scalar_select %p145, %s144, 15
      %s147 = smul.addr %s146, 8
      %s148 = scalar_lea.vmem %s0, %s147
      %p149 = pneg %p35
      %p150 = pneg %p32
      %p151 = pneg %p56
      %p152 = pneg %p53
      %p153 = pneg %p77
      %p154 = pneg %p74
      %p155 = pneg %p103
      %p156 = pneg %p100
      %s157 = smul.u32 8, %s14
      %p158 = scmp.lt.s32.totalorder %s157, 15
      %s159 = scalar_select %p158, %s157, 15
      %s160 = smul.addr %s159, 4
      %s161 = scalar_lea.vmem %s3, %s160
      %s162 = smul.u32 8, %s14
      %p163 = scmp.lt.s32.totalorder %s162, 15
      %s164 = scalar_select %p163, %s162, 15
      %s165 = smul.addr %s164, 8
      %s166 = scalar_lea.vmem %s0, %s165
      %s167 = smul.u32 8, %s14
      %s168 = smul.u32 8, %s14
      %p169 = scmp.lt.s32.totalorder %s168, 15
      %s170 = scalar_select %p169, %s168, 15
      %s171 = smul.addr %s170, 4
      %s172 = scalar_lea.vmem %s3, %s171
      %s173 = smul.u32 8, %s14
      %v174 = vld [vmem:[%s166] sm:$0xff]
      %v175 = vld [vmem:[%s166 + $0x8] sm:$0xff]
      %v176 = vld [vmem:[%s166 + $0x10] sm:$0xff]
      %v177 = vld [vmem:[%s166 + $0x18] sm:$0xff]
      %v178 = vld [vmem:[%s166 + $0x20] sm:$0xff]
      %v179 = vld [vmem:[%s166 + $0x28] sm:$0xff]
      %v180 = vld [vmem:[%s166 + $0x30] sm:$0xff]
      %v181 = vld [vmem:[%s166 + $0x38] sm:$0xff]
      %vm182 = vcmask 64512
      %v183 = vsel %vm182, %v174, 0.0
      %184 = vadd.xlane.f32.xlu0 %v183
      %v185 = vpop.xlane.xlu0 %184
      %v186 = vsel %vm182, %v175, 0.0
      %187 = vadd.xlane.f32.xlu0 %v186
      %v188 = vpop.xlane.xlu0 %187
      %v189 = vsel %vm182, %v176, 0.0
      %190 = vadd.xlane.f32.xlu0 %v189
      %v191 = vpop.xlane.xlu0 %190
      %v192 = vsel %vm182, %v177, 0.0
      %193 = vadd.xlane.f32.xlu0 %v192
      %v194 = vpop.xlane.xlu0 %193
      %v195 = vsel %vm182, %v178, 0.0
      %196 = vadd.xlane.f32.xlu0 %v195
      %v197 = vpop.xlane.xlu0 %196
      %v198 = vsel %vm182, %v179, 0.0
      %199 = vadd.xlane.f32.xlu0 %v198
      %v200 = vpop.xlane.xlu0 %199
      %v201 = vsel %vm182, %v180, 0.0
      %202 = vadd.xlane.f32.xlu0 %v201
      %v203 = vpop.xlane.xlu0 %202
      %v204 = vsel %vm182, %v181, 0.0
      %205 = vadd.xlane.f32.xlu0 %v204
      %v206 = vpop.xlane.xlu0 %205
      %v207 = vrcp.pop 8.0
      %v208 = vmul.f32 %v185, %v207
      %v209 = vmul.f32 %v188, %v207
      %v210 = vmul.f32 %v191, %v207
      %v211 = vmul.f32 %v194, %v207
      %v212 = vmul.f32 %v197, %v207
      %v213 = vmul.f32 %v200, %v207
      %v214 = vmul.f32 %v203, %v207
      %v215 = vmul.f32 %v206, %v207
      %v216 = vsub.f32 %v174, %v208
      %v217 = vsub.f32 %v175, %v209
      %v218 = vsub.f32 %v176, %v210
      %v219 = vsub.f32 %v177, %v211
      %v220 = vsub.f32 %v178, %v212
      %v221 = vsub.f32 %v179, %v213
      %v222 = vsub.f32 %v180, %v214
      %v223 = vsub.f32 %v181, %v215
      %v224 = vmul.f32 %v216, %v216
      %v225 = vmul.f32 %v217, %v217
      %v226 = vmul.f32 %v218, %v218
      %v227 = vmul.f32 %v219, %v219
      %v228 = vmul.f32 %v220, %v220
      %v229 = vmul.f32 %v221, %v221
      %v230 = vmul.f32 %v222, %v222
      %v231 = vmul.f32 %v223, %v223
      %v232 = vsel %vm182, %v224, 0.0
      %233 = vadd.xlane.f32.xlu0 %v232
      %v234 = vpop.xlane.xlu0 %233
      %v235 = vsel %vm182, %v225, 0.0
      %236 = vadd.xlane.f32.xlu0 %v235
      %v237 = vpop.xlane.xlu0 %236
      %v238 = vsel %vm182, %v226, 0.0
      %239 = vadd.xlane.f32.xlu0 %v238
      %v240 = vpop.xlane.xlu0 %239
      %v241 = vsel %vm182, %v227, 0.0
      %242 = vadd.xlane.f32.xlu0 %v241
      %v243 = vpop.xlane.xlu0 %242
      %v244 = vsel %vm182, %v228, 0.0
      %245 = vadd.xlane.f32.xlu0 %v244
      %v246 = vpop.xlane.xlu0 %245
      %v247 = vsel %vm182, %v229, 0.0
      %248 = vadd.xlane.f32.xlu0 %v247
      %v249 = vpop.xlane.xlu0 %248
      %v250 = vsel %vm182, %v230, 0.0
      %251 = vadd.xlane.f32.xlu0 %v250
      %v252 = vpop.xlane.xlu0 %251
      %v253 = vsel %vm182, %v231, 0.0
      %254 = vadd.xlane.f32.xlu0 %v253
      %v255 = vpop.xlane.xlu0 %254
      %v256 = vmul.f32 %v234, %v207
      %v257 = vmul.f32 %v237, %v207
      %v258 = vmul.f32 %v240, %v207
      %v259 = vmul.f32 %v243, %v207
      %v260 = vmul.f32 %v246, %v207
      %v261 = vmul.f32 %v249, %v207
      %v262 = vmul.f32 %v252, %v207
      %v263 = vmul.f32 %v255, %v207
      %v264 = vadd.f32 %v256, 1e-05
      %v265 = vadd.f32 %v257, 1e-05
      %v266 = vadd.f32 %v258, 1e-05
      %v267 = vadd.f32 %v259, 1e-05
      %v268 = vadd.f32 %v260, 1e-05
      %v269 = vadd.f32 %v261, 1e-05
      %v270 = vadd.f32 %v262, 1e-05
      %v271 = vadd.f32 %v263, 1e-05
      %v272 = vrsqrt.pop %v264
      %v273 = vrsqrt.pop %v265
      %v274 = vrsqrt.pop %v266
      %v275 = vrsqrt.pop %v267
      %v276 = vrsqrt.pop %v268
      %v277 = vrsqrt.pop %v269
      %v278 = vrsqrt.pop %v270
      %v279 = vrsqrt.pop %v271
      %v280 = vmul.f32 %v216, %v272
      %v281 = vmul.f32 %v217, %v273
      %v282 = vmul.f32 %v218, %v274
      %v283 = vmul.f32 %v219, %v275
      %v284 = vmul.f32 %v220, %v276
      %v285 = vmul.f32 %v221, %v277
      %v286 = vmul.f32 %v222, %v278
      %v287 = vmul.f32 %v223, %v279
      %v288 = vld [vmem:[%s1] sm:$0x1]
      %v290 = vlaneseq
      %v291 = vshrl.u32 %v290, 7
      %v292 = vsub.s32 0, %v291
      %v293 = vrot.slane %v288, %v292
      %v295 = vmul.f32 %v280, %v293
      %v296 = vmul.f32 %v281, %v293
      %v297 = vmul.f32 %v282, %v293
      %v298 = vmul.f32 %v283, %v293
      %v299 = vmul.f32 %v284, %v293
      %v300 = vmul.f32 %v285, %v293
      %v301 = vmul.f32 %v286, %v293
      %v302 = vmul.f32 %v287, %v293
      %v303 = vld [vmem:[%s2] sm:$0x1]
      %v305 = vlaneseq
      %v306 = vshrl.u32 %v305, 7
      %v307 = vsub.s32 0, %v306
      %v308 = vrot.slane %v303, %v307
      %v310 = vadd.f32 %v295, %v308
      %v311 = vadd.f32 %v296, %v308
      %v312 = vadd.f32 %v297, %v308
      %v313 = vadd.f32 %v298, %v308
      %v314 = vadd.f32 %v299, %v308
      %v315 = vadd.f32 %v300, %v308
      %v316 = vadd.f32 %v301, %v308
      %v317 = vadd.f32 %v302, %v308
      %v318 = vpack.c.bf16 %v311, %v310
      %v319 = vpack.c.bf16 %v313, %v312
      %v320 = vpack.c.bf16 %v315, %v314
      %v321 = vpack.c.bf16 %v317, %v316
      %v326 = vunpack.c.l.b16 %v318
      %v327 = vunpack.c.h.b16 %v318
      %v328 = vunpack.c.l.b16 %v319
      %v329 = vunpack.c.h.b16 %v319
      %v330 = vunpack.c.l.b16 %v320
      %v331 = vunpack.c.h.b16 %v320
      %v332 = vunpack.c.l.b16 %v321
      %v333 = vunpack.c.h.b16 %v321
      %v334 = vpack.c.b16 %v326, %v326
      %v335 = vpack.c.b16 %v327, %v327
      %v336 = vpack.c.b16 %v328, %v328
      %v337 = vpack.c.b16 %v329, %v329
      %v338 = vpack.c.b16 %v330, %v330
      %v339 = vpack.c.b16 %v331, %v331
      %v340 = vpack.c.b16 %v332, %v332
      %v341 = vpack.c.b16 %v333, %v333
      %vm350 = vcmask 60416
      %351 = vst.msk [vmem:[%s172] sm:$0xf] %vm350, %v334
      %352 = vst.msk [vmem:[%s172 + $0x4] sm:$0xf] %vm350, %v335
      %353 = vst.msk [vmem:[%s172 + $0x8] sm:$0xf] %vm350, %v336
      %354 = vst.msk [vmem:[%s172 + $0xc] sm:$0xf] %vm350, %v337
      %355 = vst.msk [vmem:[%s172 + $0x10] sm:$0xf] %vm350, %v338
      %356 = vst.msk [vmem:[%s172 + $0x14] sm:$0xf] %vm350, %v339
      %357 = vst.msk [vmem:[%s172 + $0x18] sm:$0xf] %vm350, %v340
      %358 = vst.msk [vmem:[%s172 + $0x1c] sm:$0xf] %vm350, %v341
      %s359 = smul.u32 8, %s14
      %p360 = scmp.lt.s32.totalorder %s359, 15
      %s361 = scalar_select %p360, %s359, 15
      %s362 = smul.addr %s361, 4
      %s363 = scalar_lea.vmem %s3, %s362
      // Predicated region
      $region33: #{rstb_forward.21} parent=31 // pred_check
        %p364 = pneg %p100
      $region34: #{rstb_forward.21} parent=31 // pred_check_branch
        %366 = sbr.rel (%p364) target = $region36
      $region35: #{rstb_forward.21} parent=31 // pred_region
        %s367 = smul.u32 8, %s14
      $region36: #{rstb_forward.21} parent=31 // pred_fallthru
        _
    $region32: #{rstb_forward.21} parent=5 // pred_fallthru
      _
    %p368 = scmp.le.s32.totalorder 2, %s9
    // Predicated region
    $region37: #{rstb_forward.21} parent=5 // pred_check
      %p369 = pneg %p368
    $region38: #{rstb_forward.21} parent=5 // pred_check_branch
      %371 = sbr.rel (%p369) target = $region40
    $region39: #{rstb_forward.21} parent=5 // pred_region
      %s372 = ssub.s32 %s9, 2
      // Predicated region
      $region41: #{rstb_forward.21} parent=39 // pred_check
        %p373 = pneg %p106
      $region42: #{rstb_forward.21} parent=39 // pred_check_branch
        %375 = sbr.rel (%p373) target = $region44
      $region43: #{rstb_forward.21} parent=39 // pred_region
        %s376 = smul.u32 8, %s15
        %p377 = scmp.lt.s32.totalorder %s376, 15
        %s378 = scalar_select %p377, %s376, 15
        %s379 = smul.addr %s378, 4
        %s380 = scalar_lea.vmem %s3, %s379
      $region44: #{rstb_forward.21} parent=39 // pred_fallthru
        _
    $region40: #{rstb_forward.21} parent=5 // pred_fallthru
      _
  $region6: #{rstb_forward.21} parent=0 // loop_footer
    %s13 = sadd.s32 1, %s9
  $region7: #{rstb_forward.21} parent=0 // loop_footer_branch
    %8 = sbr.rel target = $region3
  $region8: #{rstb_forward.21} parent=0 // loop_exit
    _

// kernel: rstb_forward.22
$region0: #{rstb_forward.22}
  #allocation0 [shape = 'u32[]', space=smem, size = 0x4, offset = 0x4, fixed_abs, tag = 'smem constant byte address 0x4 - core index']
  #allocation1 [shape = 'u32[144,128]{1,0:T(1,128)}', space=vmem, size = 0x12000, scoped, tag = 'internal scratch']
  #allocation2 [shape = 'f32[64,24]{1,0:T(8,128)}', space=vmem, size = 0x8000, scoped, tag = 'scratch operand']
  %s0 = inlined_call_operand.vmem [shape: bf16[128,8], index: 0, kind: input, shape index: {}]
  %s1 = inlined_call_operand.vmem [shape: bf16[8,24], index: 1, kind: input, shape index: {}]
  %s2 = inlined_call_operand.vmem [shape: f32[1,24], index: 2, kind: input, shape index: {}]
  %s3 = inlined_call_operand.vmem [shape: bf16[128,24], index: 3, kind: output, shape index: {}]
  %s4 = sld [smem:[#allocation0]]
  $region53: #{rstb_forward.22} parent=0
    _
  %s6 = ssub.s32 1, %s4
  %s7 = scalar_select 0, %s6, %s4
  loop: start=0, step=1, limit=4
  $region2: #{rstb_forward.22} parent=0 // loop_pre_header
    _
  $region3: #{rstb_forward.22} parent=0 // loop_header
    %s9 = sphi 0, %s13
    %p10 = scmp.ge.s32.totalorder %s9, 4
    %s16 = sphi 0, %s35
    %s17 = sphi 0, %s31
    %s18 = sphi 0, %s27
    %s19 = sphi 0, %s16
    %s20 = sphi 0, %s17
    %s21 = sphi 0, %s18
    %s22 = sphi 0, %s19
    %s23 = sphi 0, %s20
    %s24 = sphi 0, %s21
    %s40 = sphi 0, %s42
    %s43 = sphi 0, %s40
    %s44 = sphi 0, %s43
    %s60 = sphi 0, %s44
    %s68 = sphi 0, %s70
    %s71 = sphi 0, %s68
    %s72 = sphi 0, %s71
    %s88 = sphi 0, %s72
    %s94 = sphi 0, %s96
    %s97 = sphi 0, %s94
    %s98 = sphi 0, %s97
    %s114 = sphi 0, %s98
    %s122 = sphi 0, %s124
    %s125 = sphi 0, %s122
    %s126 = sphi 0, %s125
    %s142 = sphi 0, %s126
  $region4: #{rstb_forward.22} parent=0 // loop_header_branch
    %12 = sbr.rel (%p10) target = $region8
  $region5: #{rstb_forward.22} parent=0 // loop_body
    %s14 = ssub.s32 %s9, 1
    %s15 = ssub.s32 %s9, 2
    %s25 = sadd.s32 1, %s18
    %p26 = scmp.ge.s32.totalorder %s25, 1
    %s27 = scalar_select %p26, 0, %s25
    %s28 = sadd.s32 1, %s17
    %s29 = scalar_select %p26, %s28, %s17
    %p30 = scmp.ge.s32.totalorder %s29, 1
    %s31 = scalar_select %p30, 0, %s29
    %s32 = sadd.s32 1, %s16
    %s33 = scalar_select %p30, %s32, %s16
    %p34 = scmp.ge.s32.totalorder %s33, 2
    %s35 = scalar_select %p34, 0, %s33
    %s36 = ssub.s32 %s16, %s35
    %s37 = ssub.s32 %s18, %s27
    %s38 = sor.u32 %s36, %s37
    %p39 = scmp.eq.s32.totalorder %s38, 0
    %s41 = sadd.s32 %s40, 1
    %s42 = scalar_select %p39, %s40, %s41
    %p45 = pneg %p39
    %p46 = scmp.eq.s32.totalorder %s9, 1
    %p47 = por %p45, %p46
    %p48 = scmp.ne.s32.totalorder %s40, %s43
    %p49 = scmp.eq.s32.totalorder %s9, 0
    %p50 = por %p48, %p49
    %p51 = scmp.ne.s32.totalorder %s40, %s43
    %p52 = scmp.eq.s32.totalorder %s14, 1
    %p53 = por %p51, %p52
    %p54 = scmp.ne.s32.totalorder %s43, %s44
    %p55 = scmp.eq.s32.totalorder %s14, 0
    %p56 = por %p54, %p55
    %p57 = scmp.ne.s32.totalorder %s43, %s44
    %p58 = scmp.eq.s32.totalorder %s15, 1
    %p59 = por %p57, %p58
    %p61 = scmp.ne.s32.totalorder %s44, %s60
    %p62 = scmp.eq.s32.totalorder %s15, 0
    %p63 = por %p61, %p62
    %s64 = ssub.s32 %s18, %s27
    %s65 = ssub.s32 %s17, %s31
    %s66 = sor.u32 %s64, %s65
    %p67 = scmp.eq.s32.totalorder %s66, 0
    %s69 = sadd.s32 %s68, 1
    %s70 = scalar_select %p67, %s68, %s69
    %p73 = pneg %p67
    %p74 = scmp.eq.s32.totalorder %s9, 1
    %p75 = por %p73, %p74
    %p76 = scmp.ne.s32.totalorder %s68, %s71
    %p77 = scmp.eq.s32.totalorder %s9, 0
    %p78 = por %p76, %p77
    %p79 = scmp.ne.s32.totalorder %s68, %s71
    %p80 = scmp.eq.s32.totalorder %s14, 1
    %p81 = por %p79, %p80
    %p82 = scmp.ne.s32.totalorder %s71, %s72
    %p83 = scmp.eq.s32.totalorder %s14, 0
    %p84 = por %p82, %p83
    %p85 = scmp.ne.s32.totalorder %s71, %s72
    %p86 = scmp.eq.s32.totalorder %s15, 1
    %p87 = por %p85, %p86
    %p89 = scmp.ne.s32.totalorder %s72, %s88
    %p90 = scmp.eq.s32.totalorder %s15, 0
    %p91 = por %p89, %p90
    %s92 = ssub.s32 %s17, %s31
    %p93 = scmp.eq.s32.totalorder %s92, 0
    %s95 = sadd.s32 %s94, 1
    %s96 = scalar_select %p93, %s94, %s95
    %p99 = pneg %p93
    %p100 = scmp.eq.s32.totalorder %s9, 1
    %p101 = por %p99, %p100
    %p102 = scmp.ne.s32.totalorder %s94, %s97
    %p103 = scmp.eq.s32.totalorder %s9, 0
    %p104 = por %p102, %p103
    %p105 = scmp.ne.s32.totalorder %s94, %s97
    %p106 = scmp.eq.s32.totalorder %s14, 1
    %p107 = por %p105, %p106
    %p108 = scmp.ne.s32.totalorder %s97, %s98
    %p109 = scmp.eq.s32.totalorder %s14, 0
    %p110 = por %p108, %p109
    %p111 = scmp.ne.s32.totalorder %s97, %s98
    %p112 = scmp.eq.s32.totalorder %s15, 1
    %p113 = por %p111, %p112
    %p115 = scmp.ne.s32.totalorder %s98, %s114
    %p116 = scmp.eq.s32.totalorder %s15, 0
    %p117 = por %p115, %p116
    %s118 = ssub.s32 %s16, %s35
    %s119 = ssub.s32 %s17, %s31
    %s120 = sor.u32 %s118, %s119
    %p121 = scmp.eq.s32.totalorder %s120, 0
    %s123 = sadd.s32 %s122, 1
    %s124 = scalar_select %p121, %s122, %s123
    %p127 = pneg %p121
    %p128 = scmp.eq.s32.totalorder %s9, 1
    %p129 = por %p127, %p128
    %p130 = scmp.ne.s32.totalorder %s122, %s125
    %p131 = scmp.eq.s32.totalorder %s9, 0
    %p132 = por %p130, %p131
    %p133 = scmp.ne.s32.totalorder %s122, %s125
    %p134 = scmp.eq.s32.totalorder %s14, 1
    %p135 = por %p133, %p134
    %p136 = scmp.ne.s32.totalorder %s125, %s126
    %p137 = scmp.eq.s32.totalorder %s14, 0
    %p138 = por %p136, %p137
    %p139 = scmp.ne.s32.totalorder %s125, %s126
    %p140 = scmp.eq.s32.totalorder %s15, 1
    %p141 = por %p139, %p140
    %p143 = scmp.ne.s32.totalorder %s126, %s142
    %p144 = scmp.eq.s32.totalorder %s15, 0
    %p145 = por %p143, %p144
    %p146 = scmp.le.s32.totalorder 1, %s9
    %p147 = scmp.lt.s32.totalorder %s9, 3
    %p148 = pnand %p146, %p147
    %p149 = pneg %p148
    // Predicated region
    $region9: #{rstb_forward.22} parent=5 // pred_check
      _
    $region10: #{rstb_forward.22} parent=5 // pred_check_branch
      %151 = sbr.rel (%p148) target = $region12
    $region11: #{rstb_forward.22} parent=5 // pred_region
      %s152 = ssub.s32 %s9, 1
      // Predicated region
      $region13: #{rstb_forward.22} parent=11 // pred_check
        %p153 = pneg %p84
      $region14: #{rstb_forward.22} parent=11 // pred_check_branch
        %155 = sbr.rel (%p153) target = $region16
      $region15: #{rstb_forward.22} parent=11 // pred_region
        %p156 = scmp.lt.s32.totalorder %s21, 0
        %s157 = scalar_select %p156, %s21, 0
        %p158 = scmp.lt.s32.totalorder %s20, 0
        %s159 = scalar_select %p158, %s20, 0
        %s160 = sadd.s32 %s159, %s157
        %s161 = smul.addr %s160, 4
        %s162 = scalar_lea.vmem %s1, %s161
      $region16: #{rstb_forward.22} parent=11 // pred_fallthru
        _
      // Predicated region
      $region17: #{rstb_forward.22} parent=11 // pred_check
        %p163 = pneg %p110
      $region18: #{rstb_forward.22} parent=11 // pred_check_branch
        %165 = sbr.rel (%p163) target = $region20
      $region19: #{rstb_forward.22} parent=11 // pred_region
        %p166 = scmp.lt.s32.totalorder %s20, 0
        %s167 = scalar_select %p166, %s20, 0
        %s168 = scalar_lea.vmem %s2, %s167
      $region20: #{rstb_forward.22} parent=11 // pred_fallthru
        _
    $region12: #{rstb_forward.22} parent=5 // pred_fallthru
      _
    %p169 = scmp.lt.s32.totalorder %s9, 2
    // Predicated region
    $region21: #{rstb_forward.22} parent=5 // pred_check
      %p170 = pneg %p169
    $region22: #{rstb_forward.22} parent=5 // pred_check_branch
      %172 = sbr.rel (%p170) target = $region24
    $region23: #{rstb_forward.22} parent=5 // pred_region
      // Predicated region
      $region25: #{rstb_forward.22} parent=23 // pred_check
        %p173 = pneg %p50
      $region26: #{rstb_forward.22} parent=23 // pred_check_branch
        %175 = sbr.rel (%p173) target = $region28
      $region27: #{rstb_forward.22} parent=23 // pred_region
        %s176 = smul.u32 8, %s16
        %p177 = scmp.lt.s32.totalorder %s176, 15
        %s178 = scalar_select %p177, %s176, 15
        %p179 = scmp.lt.s32.totalorder %s18, 0
        %s180 = scalar_select %p179, %s18, 0
        %s181 = sadd.s32 %s180, %s178
        %s182 = smul.addr %s181, 4
        %s183 = scalar_lea.vmem %s0, %s182
        %s184 = smul.u32 8, %s16
      $region28: #{rstb_forward.22} parent=23 // pred_fallthru
        _
    $region24: #{rstb_forward.22} parent=5 // pred_fallthru
      _
    %p185 = scmp.le.s32.totalorder 1, %s9
    %p186 = scmp.lt.s32.totalorder %s9, 3
    %p187 = pnand %p185, %p186
    %p188 = pneg %p187
    // Predicated region
    $region29: #{rstb_forward.22} parent=5 // pred_check
      _
    $region30: #{rstb_forward.22} parent=5 // pred_check_branch
      %190 = sbr.rel (%p187) target = $region32
    $region31: #{rstb_forward.22} parent=5 // pred_region
      %s191 = ssub.s32 %s9, 1
      %s192 = smul.u32 8, %s19
      %p193 = scmp.lt.s32.totalorder %s192, 15
      %s194 = scalar_select %p193, %s192, 15
      %p195 = scmp.lt.s32.totalorder %s21, 0
      %s196 = scalar_select %p195, %s21, 0
      %s197 = sadd.s32 %s196, %s194
      %s198 = smul.addr %s197, 4
      %s199 = scalar_lea.vmem %s0, %s198
      %p200 = pneg %p56
      %p201 = pneg %p53
      %p202 = scmp.lt.s32.totalorder %s21, 0
      %s203 = scalar_select %p202, %s21, 0
      %p204 = scmp.lt.s32.totalorder %s20, 0
      %s205 = scalar_select %p204, %s20, 0
      %s206 = sadd.s32 %s205, %s203
      %s207 = smul.addr %s206, 4
      %s208 = scalar_lea.vmem %s1, %s207
      %p209 = pneg %p84
      %p210 = pneg %p81
      %p211 = scmp.lt.s32.totalorder %s20, 0
      %s212 = scalar_select %p211, %s20, 0
      %s213 = scalar_lea.vmem %s2, %s212
      %p214 = pneg %p110
      %p215 = pneg %p107
      %p216 = pneg %p138
      %p217 = pneg %p135
      %s218 = smul.u32 8, %s19
      %p219 = scmp.lt.s32.totalorder %s218, 15
      %s220 = scalar_select %p219, %s218, 15
      %p221 = scmp.lt.s32.totalorder %s20, 0
      %s222 = scalar_select %p221, %s20, 0
      %s223 = sadd.s32 %s222, %s220
      %s224 = smul.addr %s223, 4
      %s225 = scalar_lea.vmem %s3, %s224
      %s226 = smul.u32 8, %s19
      %p227 = scmp.lt.s32.totalorder %s226, 15
      %s228 = scalar_select %p227, %s226, 15
      %p229 = scmp.lt.s32.totalorder %s21, 0
      %s230 = scalar_select %p229, %s21, 0
      %s231 = sadd.s32 %s230, %s228
      %s232 = smul.addr %s231, 4
      %s233 = scalar_lea.vmem %s0, %s232
      %s234 = smul.u32 8, %s19
      %p235 = scmp.lt.s32.totalorder %s21, 0
      %s236 = scalar_select %p235, %s21, 0
      %p237 = scmp.lt.s32.totalorder %s20, 0
      %s238 = scalar_select %p237, %s20, 0
      %s239 = sadd.s32 %s238, %s236
      %s240 = smul.addr %s239, 4
      %s241 = scalar_lea.vmem %s1, %s240
      %p242 = scmp.lt.s32.totalorder %s20, 0
      %s243 = scalar_select %p242, %s20, 0
      %s244 = scalar_lea.vmem %s2, %s243
      %s245 = smul.u32 8, %s19
      %p246 = scmp.lt.s32.totalorder %s245, 15
      %s247 = scalar_select %p246, %s245, 15
      %p248 = scmp.lt.s32.totalorder %s20, 0
      %s249 = scalar_select %p248, %s20, 0
      %s250 = sadd.s32 %s249, %s247
      %s251 = smul.addr %s250, 4
      %s252 = scalar_lea.vmem %s3, %s251
      %s253 = smul.u32 8, %s19
      %p255 = scmp.eq.s32.totalorder %s21, 0
      // Predicated region
      $region33: #{rstb_forward.22} parent=31 // pred_check
        %p256 = pneg %p255
      $region34: #{rstb_forward.22} parent=31 // pred_check_branch
        %258 = sbr.rel (%p256) target = $region36
      $region35: #{rstb_forward.22} parent=31 // pred_region
        %vm259 = vcmask 195584
        %260 = vst.msk [vmem:[#allocation2] sm:$0xff] %vm259, 0.0
        %261 = vst.msk [vmem:[#allocation2 + $0x8] sm:$0xff] %vm259, 0.0
        %262 = vst.msk [vmem:[#allocation2 + $0x10] sm:$0xff] %vm259, 0.0
        %263 = vst.msk [vmem:[#allocation2 + $0x18] sm:$0xff] %vm259, 0.0
        %264 = vst.msk [vmem:[#allocation2 + $0x20] sm:$0xff] %vm259, 0.0
        %265 = vst.msk [vmem:[#allocation2 + $0x28] sm:$0xff] %vm259, 0.0
        %266 = vst.msk [vmem:[#allocation2 + $0x30] sm:$0xff] %vm259, 0.0
        %267 = vst.msk [vmem:[#allocation2 + $0x38] sm:$0xff] %vm259, 0.0
      $region36: #{rstb_forward.22} parent=31 // pred_fallthru
        _
      %v268 = vld [vmem:[#allocation2] sm:$0xff]
      %v269 = vld [vmem:[#allocation2 + $0x8] sm:$0xff]
      %v270 = vld [vmem:[#allocation2 + $0x10] sm:$0xff]
      %v271 = vld [vmem:[#allocation2 + $0x18] sm:$0xff]
      %v272 = vld [vmem:[#allocation2 + $0x20] sm:$0xff]
      %v273 = vld [vmem:[#allocation2 + $0x28] sm:$0xff]
      %v274 = vld [vmem:[#allocation2 + $0x30] sm:$0xff]
      %v275 = vld [vmem:[#allocation2 + $0x38] sm:$0xff]
      %v276 = vld [vmem:[%s233] sm:$0xf]
      %v277 = vld [vmem:[%s233 + $0x4] sm:$0xf]
      %v278 = vld [vmem:[%s233 + $0x8] sm:$0xf]
      %v279 = vld [vmem:[%s233 + $0xc] sm:$0xf]
      %v280 = vld [vmem:[%s233 + $0x10] sm:$0xf]
      %v281 = vld [vmem:[%s233 + $0x14] sm:$0xf]
      %v282 = vld [vmem:[%s233 + $0x18] sm:$0xf]
      %v283 = vld [vmem:[%s233 + $0x1c] sm:$0xf]
      %v284 = vld [vmem:[%s241] sm:$0xf]
      %v293 = vunpack.c.l.b16 %v276
      %v294 = vunpack.c.l.b16 %v277
      %v295 = vunpack.c.l.b16 %v278
      %v296 = vunpack.c.l.b16 %v279
      %v297 = vunpack.c.l.b16 %v280
      %v298 = vunpack.c.l.b16 %v281
      %v299 = vunpack.c.l.b16 %v282
      %v300 = vunpack.c.l.b16 %v283
      %v301 = vpack.c.b16 %v294, %v293
      %v302 = vpack.c.b16 %v296, %v295
      %v303 = vpack.c.b16 %v298, %v297
      %v304 = vpack.c.b16 %v300, %v299
      %vm305 = vcmask 64512
      %v307 = vsel %vm305, %v301, 0
      %v310 = vsel %vm305, %v302, 0
      %v313 = vsel %vm305, %v303, 0
      %v316 = vsel %vm305, %v304, 0
      %vm318 = vcmask 1043456
      %v320 = vsel %vm318, %v284, 0
      %322 = vmatprep.subr.bf16.mxu0 0
      %323 = vmatpush1.bf16.msra.mxu0 %v320
      %324 = vmatprep.subr.bf16.mxu0 0
      %325 = vmatpush1.bf16.msra.mxu0 0
      %326 = vmatprep.subr.bf16.mxu0 0
      %327 = vmatpush1.bf16.msra.mxu0 0
      %328 = vmatprep.subr.bf16.mxu0 0
      %329 = vmatpush1.bf16.msra.mxu0 0
      %330 = vmatprep.subr.bf16.mxu0 0
      %331 = vmatpush1.bf16.msra.mxu0 0
      %332 = vmatprep.subr.bf16.mxu0 0
      %333 = vmatpush1.bf16.msra.mxu0 0
      %334 = vmatprep.subr.bf16.mxu0 0
      %335 = vmatpush1.bf16.msra.mxu0 0
      %336 = vmatprep.subr.bf16.mxu0 0
      %337 = vmatpush1.bf16.msra.mxu0 0
      %338 = vmatprep.subr.bf16.mxu0 0
      %339 = vmatpush1.bf16.msra.mxu0 0
      %340 = vmatprep.subr.bf16.mxu0 0
      %341 = vmatpush1.bf16.msra.mxu0 0
      %342 = vmatprep.subr.bf16.mxu0 0
      %343 = vmatpush1.bf16.msra.mxu0 0
      %344 = vmatprep.subr.bf16.mxu0 0
      %345 = vmatpush1.bf16.msra.mxu0 0
      %346 = vmatprep.subr.bf16.mxu0 0
      %347 = vmatpush1.bf16.msra.mxu0 0
      %348 = vmatprep.subr.bf16.mxu0 0
      %349 = vmatpush1.bf16.msra.mxu0 0
      %350 = vmatprep.subr.bf16.mxu0 0
      %351 = vmatpush1.bf16.msra.mxu0 0
      %352 = vmatprep.subr.bf16.mxu0 0
      %353 = vmatpush1.bf16.msra.mxu0 0
      %354 = vmatprep.mubr.bf16.mxu0 0
      %355 = vmatmul.mubr.bf16.gmra.mrb[0].mxu0 %v307
      %v356 = vpop.f32.mrb[0].mxu0
      %v357 = vadd.f32 0.0, %v356
      %v358 = vpop.f32.mrb[0].mxu0
      %v359 = vpop.f32.mrb[0].mxu0
      %v360 = vadd.f32 0.0, %v359
      %v361 = vpop.f32.mrb[0].mxu0
      %362 = vmatprep.mubr.bf16.mxu0 0
      %363 = vmatmul.mubr.bf16.gmra.mrb[0].mxu0 %v310
      %v364 = vpop.f32.mrb[0].mxu0
      %v365 = vadd.f32 0.0, %v364
      %v366 = vpop.f32.mrb[0].mxu0
      %v367 = vpop.f32.mrb[0].mxu0
      %v368 = vadd.f32 0.0, %v367
      %v369 = vpop.f32.mrb[0].mxu0
      %370 = vmatprep.mubr.bf16.mxu0 0
      %371 = vmatmul.mubr.bf16.gmra.mrb[0].mxu0 %v313
      %v372 = vpop.f32.mrb[0].mxu0
      %v373 = vadd.f32 0.0, %v372
      %v374 = vpop.f32.mrb[0].mxu0
      %v375 = vpop.f32.mrb[0].mxu0
      %v376 = vadd.f32 0.0, %v375
      %v377 = vpop.f32.mrb[0].mxu0
      %378 = vmatprep.mubr.bf16.mxu0 0
      %379 = vmatmul.mubr.bf16.gmra.mrb[0].mxu0 %v316
      %v380 = vpop.f32.mrb[0].mxu0
      %v381 = vadd.f32 0.0, %v380
      %v382 = vpop.f32.mrb[0].mxu0
      %v383 = vpop.f32.mrb[0].mxu0
      %v384 = vadd.f32 0.0, %v383
      %v385 = vpop.f32.mrb[0].mxu0
      %386 = vdwg.mxu0
      %v387 = vadd.f32 %v268, %v357
      %v388 = vadd.f32 %v269, %v360
      %v389 = vadd.f32 %v270, %v365
      %v390 = vadd.f32 %v271, %v368
      %v391 = vadd.f32 %v272, %v373
      %v392 = vadd.f32 %v273, %v376
      %v393 = vadd.f32 %v274, %v381
      %v394 = vadd.f32 %v275, %v384
      %vm395 = vcmask 195584
      %396 = vst.msk [vmem:[#allocation2] sm:$0xff] %vm395, %v387
      %397 = vst.msk [vmem:[#allocation2 + $0x8] sm:$0xff] %vm395, %v388
      %398 = vst.msk [vmem:[#allocation2 + $0x10] sm:$0xff] %vm395, %v389
      %399 = vst.msk [vmem:[#allocation2 + $0x18] sm:$0xff] %vm395, %v390
      %400 = vst.msk [vmem:[#allocation2 + $0x20] sm:$0xff] %vm395, %v391
      %401 = vst.msk [vmem:[#allocation2 + $0x28] sm:$0xff] %vm395, %v392
      %402 = vst.msk [vmem:[#allocation2 + $0x30] sm:$0xff] %vm395, %v393
      %403 = vst.msk [vmem:[#allocation2 + $0x38] sm:$0xff] %vm395, %v394
      // Predicated region
      $region37: #{rstb_forward.22} parent=31 // pred_check
        %p404 = pneg %p255
      $region38: #{rstb_forward.22} parent=31 // pred_check_branch
        %406 = sbr.rel (%p404) target = $region40
      $region39: #{rstb_forward.22} parent=31 // pred_region
        %v407 = vld [vmem:[#allocation2] sm:$0xff]
        %v408 = vld [vmem:[#allocation2 + $0x8] sm:$0xff]
        %v409 = vld [vmem:[#allocation2 + $0x10] sm:$0xff]
        %v410 = vld [vmem:[#allocation2 + $0x18] sm:$0xff]
        %v411 = vld [vmem:[#allocation2 + $0x20] sm:$0xff]
        %v412 = vld [vmem:[#allocation2 + $0x28] sm:$0xff]
        %v413 = vld [vmem:[#allocation2 + $0x30] sm:$0xff]
        %v414 = vld [vmem:[#allocation2 + $0x38] sm:$0xff]
        %v415 = vld [vmem:[%s244] sm:$0x1]
        %v417 = vlaneseq
        %v418 = vshrl.u32 %v417, 7
        %v419 = vsub.s32 0, %v418
        %v420 = vrot.slane %v415, %v419
        %v422 = vadd.f32 %v407, %v420
        %v423 = vadd.f32 %v408, %v420
        %v424 = vadd.f32 %v409, %v420
        %v425 = vadd.f32 %v410, %v420
        %v426 = vadd.f32 %v411, %v420
        %v427 = vadd.f32 %v412, %v420
        %v428 = vadd.f32 %v413, %v420
        %v429 = vadd.f32 %v414, %v420
        %v430 = vpack.c.bf16 %v423, %v422
        %v431 = vpack.c.bf16 %v425, %v424
        %v432 = vpack.c.bf16 %v427, %v426
        %v433 = vpack.c.bf16 %v429, %v428
        %v438 = vunpack.c.l.b16 %v430
        %v439 = vunpack.c.h.b16 %v430
        %v440 = vunpack.c.l.b16 %v431
        %v441 = vunpack.c.h.b16 %v431
        %v442 = vunpack.c.l.b16 %v432
        %v443 = vunpack.c.h.b16 %v432
        %v444 = vunpack.c.l.b16 %v433
        %v445 = vunpack.c.h.b16 %v433
        %v446 = vpack.c.b16 %v438, %v438
        %v447 = vpack.c.b16 %v439, %v439
        %v448 = vpack.c.b16 %v440, %v440
        %v449 = vpack.c.b16 %v441, %v441
        %v450 = vpack.c.b16 %v442, %v442
        %v451 = vpack.c.b16 %v443, %v443
        %v452 = vpack.c.b16 %v444, %v444
        %v453 = vpack.c.b16 %v445, %v445
        %vm462 = vcmask 191488
        %463 = vst.msk [vmem:[%s252] sm:$0xf] %vm462, %v446
        %464 = vst.msk [vmem:[%s252 + $0x4] sm:$0xf] %vm462, %v447
        %465 = vst.msk [vmem:[%s252 + $0x8] sm:$0xf] %vm462, %v448
        %466 = vst.msk [vmem:[%s252 + $0xc] sm:$0xf] %vm462, %v449
        %467 = vst.msk [vmem:[%s252 + $0x10] sm:$0xf] %vm462, %v450
        %468 = vst.msk [vmem:[%s252 + $0x14] sm:$0xf] %vm462, %v451
        %469 = vst.msk [vmem:[%s252 + $0x18] sm:$0xf] %vm462, %v452
        %470 = vst.msk [vmem:[%s252 + $0x1c] sm:$0xf] %vm462, %v453
      $region40: #{rstb_forward.22} parent=31 // pred_fallthru
        _
      %s471 = smul.u32 8, %s19
      %p472 = scmp.lt.s32.totalorder %s471, 15
      %s473 = scalar_select %p472, %s471, 15
      %p474 = scmp.lt.s32.totalorder %s20, 0
      %s475 = scalar_select %p474, %s20, 0
      %s476 = sadd.s32 %s475, %s473
      %s477 = smul.addr %s476, 4
      %s478 = scalar_lea.vmem %s3, %s477
      // Predicated region
      $region41: #{rstb_forward.22} parent=31 // pred_check
        %p479 = pneg %p135
      $region42: #{rstb_forward.22} parent=31 // pred_check_branch
        %481 = sbr.rel (%p479) target = $region44
      $region43: #{rstb_forward.22} parent=31 // pred_region
        %s482 = smul.u32 8, %s19
      $region44: #{rstb_forward.22} parent=31 // pred_fallthru
        _
    $region32: #{rstb_forward.22} parent=5 // pred_fallthru
      _
    %p483 = scmp.le.s32.totalorder 2, %s9
    // Predicated region
    $region45: #{rstb_forward.22} parent=5 // pred_check
      %p484 = pneg %p483
    $region46: #{rstb_forward.22} parent=5 // pred_check_branch
      %486 = sbr.rel (%p484) target = $region48
    $region47: #{rstb_forward.22} parent=5 // pred_region
      %s487 = ssub.s32 %s9, 2
      // Predicated region
      $region49: #{rstb_forward.22} parent=47 // pred_check
        %p488 = pneg %p141
      $region50: #{rstb_forward.22} parent=47 // pred_check_branch
        %490 = sbr.rel (%p488) target = $region52
      $region51: #{rstb_forward.22} parent=47 // pred_region
        %s491 = smul.u32 8, %s22
        %p492 = scmp.lt.s32.totalorder %s491, 15
        %s493 = scalar_select %p492, %s491, 15
        %p494 = scmp.lt.s32.totalorder %s23, 0
        %s495 = scalar_select %p494, %s23, 0
        %s496 = sadd.s32 %s495, %s493
        %s497 = smul.addr %s496, 4
        %s498 = scalar_lea.vmem %s3, %s497
      $region52: #{rstb_forward.22} parent=47 // pred_fallthru
        _
    $region48: #{rstb_forward.22} parent=5 // pred_fallthru
      _
  $region6: #{rstb_forward.22} parent=0 // loop_footer
    %s13 = sadd.s32 1, %s9
  $region7: #{rstb_forward.22} parent=0 // loop_footer_branch
    %8 = sbr.rel target = $region3
  $region8: #{rstb_forward.22} parent=0 // loop_exit
    _

// kernel: rstb_forward.20
$region0: #{rstb_forward.20}
  #allocation0 [shape = 'u32[]', space=smem, size = 0x4, offset = 0x4, fixed_abs, tag = 'smem constant byte address 0x4 - core index']
  #allocation1 [shape = 'u32[144,128]{1,0:T(1,128)}', space=vmem, size = 0x12000, scoped, tag = 'internal scratch']
  %s0 = inlined_call_operand.vmem [shape: f32[2,10,10,8], index: 0, kind: input, shape index: {}]
  %s1 = inlined_call_operand.vmem [shape: f32[9,8], index: 1, kind: input, shape index: {}]
  %s2 = inlined_call_operand.vmem [shape: f32[1,8], index: 2, kind: input, shape index: {}]
  %s3 = inlined_call_operand.vmem [shape: f32[2,8,8,8], index: 3, kind: output, shape index: {}]
  %s4 = sld [smem:[#allocation0]]
  $region45: #{rstb_forward.20} parent=0
    _
  %s6 = ssub.s32 1, %s4
  %s7 = scalar_select 0, %s6, %s4
  loop: start=0, step=1, limit=4
  $region2: #{rstb_forward.20} parent=0 // loop_pre_header
    _
  $region3: #{rstb_forward.20} parent=0 // loop_header
    %s9 = sphi 0, %s13
    %p10 = scmp.ge.s32.totalorder %s9, 4
    %s16 = sphi 0, %s28
    %s17 = sphi 0, %s24
    %s18 = sphi 0, %s16
    %s19 = sphi 0, %s17
    %s20 = sphi 0, %s18
    %s21 = sphi 0, %s19
    %s33 = sphi 0, %s35
    %s36 = sphi 0, %s33
    %s37 = sphi 0, %s36
    %s53 = sphi 0, %s37
    %s59 = sphi 0, %s61
    %s62 = sphi 0, %s59
    %s63 = sphi 0, %s62
    %s79 = sphi 0, %s63
    %s85 = sphi 0, %s87
    %s88 = sphi 0, %s85
    %s89 = sphi 0, %s88
    %s105 = sphi 0, %s89
    %s113 = sphi 0, %s115
    %s116 = sphi 0, %s113
    %s117 = sphi 0, %s116
    %s133 = sphi 0, %s117
  $region4: #{rstb_forward.20} parent=0 // loop_header_branch
    %12 = sbr.rel (%p10) target = $region8
  $region5: #{rstb_forward.20} parent=0 // loop_body
    %s14 = ssub.s32 %s9, 1
    %s15 = ssub.s32 %s9, 2
    %s22 = sadd.s32 1, %s17
    %p23 = scmp.ge.s32.totalorder %s22, 1
    %s24 = scalar_select %p23, 0, %s22
    %s25 = sadd.s32 1, %s16
    %s26 = scalar_select %p23, %s25, %s16
    %p27 = scmp.ge.s32.totalorder %s26, 2
    %s28 = scalar_select %p27, 0, %s26
    %s29 = ssub.s32 %s16, %s28
    %s30 = ssub.s32 %s17, %s24
    %s31 = sor.u32 %s29, %s30
    %p32 = scmp.eq.s32.totalorder %s31, 0
    %s34 = sadd.s32 %s33, 1
    %s35 = scalar_select %p32, %s33, %s34
    %p38 = pneg %p32
    %p39 = scmp.eq.s32.totalorder %s9, 1
    %p40 = por %p38, %p39
    %p41 = scmp.ne.s32.totalorder %s33, %s36
    %p42 = scmp.eq.s32.totalorder %s9, 0
    %p43 = por %p41, %p42
    %p44 = scmp.ne.s32.totalorder %s33, %s36
    %p45 = scmp.eq.s32.totalorder %s14, 1
    %p46 = por %p44, %p45
    %p47 = scmp.ne.s32.totalorder %s36, %s37
    %p48 = scmp.eq.s32.totalorder %s14, 0
    %p49 = por %p47, %p48
    %p50 = scmp.ne.s32.totalorder %s36, %s37
    %p51 = scmp.eq.s32.totalorder %s15, 1
    %p52 = por %p50, %p51
    %p54 = scmp.ne.s32.totalorder %s37, %s53
    %p55 = scmp.eq.s32.totalorder %s15, 0
    %p56 = por %p54, %p55
    %s57 = ssub.s32 %s17, %s24
    %p58 = scmp.eq.s32.totalorder %s57, 0
    %s60 = sadd.s32 %s59, 1
    %s61 = scalar_select %p58, %s59, %s60
    %p64 = pneg %p58
    %p65 = scmp.eq.s32.totalorder %s9, 1
    %p66 = por %p64, %p65
    %p67 = scmp.ne.s32.totalorder %s59, %s62
    %p68 = scmp.eq.s32.totalorder %s9, 0
    %p69 = por %p67, %p68
    %p70 = scmp.ne.s32.totalorder %s59, %s62
    %p71 = scmp.eq.s32.totalorder %s14, 1
    %p72 = por %p70, %p71
    %p73 = scmp.ne.s32.totalorder %s62, %s63
    %p74 = scmp.eq.s32.totalorder %s14, 0
    %p75 = por %p73, %p74
    %p76 = scmp.ne.s32.totalorder %s62, %s63
    %p77 = scmp.eq.s32.totalorder %s15, 1
    %p78 = por %p76, %p77
    %p80 = scmp.ne.s32.totalorder %s63, %s79
    %p81 = scmp.eq.s32.totalorder %s15, 0
    %p82 = por %p80, %p81
    %s83 = ssub.s32 %s17, %s24
    %p84 = scmp.eq.s32.totalorder %s83, 0
    %s86 = sadd.s32 %s85, 1
    %s87 = scalar_select %p84, %s85, %s86
    %p90 = pneg %p84
    %p91 = scmp.eq.s32.totalorder %s9, 1
    %p92 = por %p90, %p91
    %p93 = scmp.ne.s32.totalorder %s85, %s88
    %p94 = scmp.eq.s32.totalorder %s9, 0
    %p95 = por %p93, %p94
    %p96 = scmp.ne.s32.totalorder %s85, %s88
    %p97 = scmp.eq.s32.totalorder %s14, 1
    %p98 = por %p96, %p97
    %p99 = scmp.ne.s32.totalorder %s88, %s89
    %p100 = scmp.eq.s32.totalorder %s14, 0
    %p101 = por %p99, %p100
    %p102 = scmp.ne.s32.totalorder %s88, %s89
    %p103 = scmp.eq.s32.totalorder %s15, 1
    %p104 = por %p102, %p103
    %p106 = scmp.ne.s32.totalorder %s89, %s105
    %p107 = scmp.eq.s32.totalorder %s15, 0
    %p108 = por %p106, %p107
    %s109 = ssub.s32 %s16, %s28
    %s110 = ssub.s32 %s17, %s24
    %s111 = sor.u32 %s109, %s110
    %p112 = scmp.eq.s32.totalorder %s111, 0
    %s114 = sadd.s32 %s113, 1
    %s115 = scalar_select %p112, %s113, %s114
    %p118 = pneg %p112
    %p119 = scmp.eq.s32.totalorder %s9, 1
    %p120 = por %p118, %p119
    %p121 = scmp.ne.s32.totalorder %s113, %s116
    %p122 = scmp.eq.s32.totalorder %s9, 0
    %p123 = por %p121, %p122
    %p124 = scmp.ne.s32.totalorder %s113, %s116
    %p125 = scmp.eq.s32.totalorder %s14, 1
    %p126 = por %p124, %p125
    %p127 = scmp.ne.s32.totalorder %s116, %s117
    %p128 = scmp.eq.s32.totalorder %s14, 0
    %p129 = por %p127, %p128
    %p130 = scmp.ne.s32.totalorder %s116, %s117
    %p131 = scmp.eq.s32.totalorder %s15, 1
    %p132 = por %p130, %p131
    %p134 = scmp.ne.s32.totalorder %s117, %s133
    %p135 = scmp.eq.s32.totalorder %s15, 0
    %p136 = por %p134, %p135
    %p137 = scmp.le.s32.totalorder 1, %s9
    %p138 = scmp.lt.s32.totalorder %s9, 3
    %p139 = pnand %p137, %p138
    %p140 = pneg %p139
    // Predicated region
    $region9: #{rstb_forward.20} parent=5 // pred_check
      _
    $region10: #{rstb_forward.20} parent=5 // pred_check_branch
      %142 = sbr.rel (%p139) target = $region12
    $region11: #{rstb_forward.20} parent=5 // pred_region
      %s143 = ssub.s32 %s9, 1
      // Predicated region
      $region13: #{rstb_forward.20} parent=11 // pred_check
        %p144 = pneg %p75
      $region14: #{rstb_forward.20} parent=11 // pred_check_branch
        %146 = sbr.rel (%p144) target = $region16
      $region15: #{rstb_forward.20} parent=11 // pred_region
        %p147 = scmp.lt.s32.totalorder %s19, 0
        %s148 = scalar_select %p147, %s19, 0
        %s149 = smul.addr %s148, 8
        %s150 = scalar_lea.vmem %s1, %s149
      $region16: #{rstb_forward.20} parent=11 // pred_fallthru
        _
      // Predicated region
      $region17: #{rstb_forward.20} parent=11 // pred_check
        %p151 = pneg %p101
      $region18: #{rstb_forward.20} parent=11 // pred_check_branch
        %153 = sbr.rel (%p151) target = $region20
      $region19: #{rstb_forward.20} parent=11 // pred_region
        %p154 = scmp.lt.s32.totalorder %s19, 0
        %s155 = scalar_select %p154, %s19, 0
        %s156 = scalar_lea.vmem %s2, %s155
      $region20: #{rstb_forward.20} parent=11 // pred_fallthru
        _
    $region12: #{rstb_forward.20} parent=5 // pred_fallthru
      _
    %p157 = scmp.lt.s32.totalorder %s9, 2
    // Predicated region
    $region21: #{rstb_forward.20} parent=5 // pred_check
      %p158 = pneg %p157
    $region22: #{rstb_forward.20} parent=5 // pred_check_branch
      %160 = sbr.rel (%p158) target = $region24
    $region23: #{rstb_forward.20} parent=5 // pred_region
      // Predicated region
      $region25: #{rstb_forward.20} parent=23 // pred_check
        %p161 = pneg %p43
      $region26: #{rstb_forward.20} parent=23 // pred_check_branch
        %163 = sbr.rel (%p161) target = $region28
      $region27: #{rstb_forward.20} parent=23 // pred_region
        %p164 = scmp.lt.s32.totalorder %s16, 1
        %s165 = scalar_select %p164, %s16, 1
        %p166 = scmp.lt.s32.totalorder %s17, 0
        %s167 = scalar_select %p166, %s17, 0
        %s168 = smul.addr %s165, 20
        %s169 = sadd.s32 %s167, %s168
        %s170 = smul.addr %s169, 8
        %s171 = scalar_lea.vmem %s0, %s170
      $region28: #{rstb_forward.20} parent=23 // pred_fallthru
        _
    $region24: #{rstb_forward.20} parent=5 // pred_fallthru
      _
    %p172 = scmp.le.s32.totalorder 1, %s9
    %p173 = scmp.lt.s32.totalorder %s9, 3
    %p174 = pnand %p172, %p173
    %p175 = pneg %p174
    // Predicated region
    $region29: #{rstb_forward.20} parent=5 // pred_check
      _
    $region30: #{rstb_forward.20} parent=5 // pred_check_branch
      %177 = sbr.rel (%p174) target = $region32
    $region31: #{rstb_forward.20} parent=5 // pred_region
      %s178 = ssub.s32 %s9, 1
      %p179 = scmp.lt.s32.totalorder %s18, 1
      %s180 = scalar_select %p179, %s18, 1
      %p181 = scmp.lt.s32.totalorder %s19, 0
      %s182 = scalar_select %p181, %s19, 0
      %s183 = smul.addr %s180, 20
      %s184 = sadd.s32 %s182, %s183
      %s185 = smul.addr %s184, 8
      %s186 = scalar_lea.vmem %s0, %s185
      %p187 = pneg %p49
      %p188 = pneg %p46
      %p189 = scmp.lt.s32.totalorder %s19, 0
      %s190 = scalar_select %p189, %s19, 0
      %s191 = smul.addr %s190, 8
      %s192 = scalar_lea.vmem %s1, %s191
      %p193 = pneg %p75
      %p194 = pneg %p72
      %p195 = scmp.lt.s32.totalorder %s19, 0
      %s196 = scalar_select %p195, %s19, 0
      %s197 = scalar_lea.vmem %s2, %s196
      %p198 = pneg %p101
      %p199 = pneg %p98
      %p200 = pneg %p129
      %p201 = pneg %p126
      %p202 = scmp.lt.s32.totalorder %s18, 1
      %s203 = scalar_select %p202, %s18, 1
      %p204 = scmp.lt.s32.totalorder %s19, 0
      %s205 = scalar_select %p204, %s19, 0
      %s206 = smul.addr %s203, 8
      %s207 = sadd.s32 %s205, %s206
      %s208 = smul.addr %s207, 8
      %s209 = scalar_lea.vmem %s3, %s208
      %p210 = scmp.lt.s32.totalorder %s18, 1
      %s211 = scalar_select %p210, %s18, 1
      %p212 = scmp.lt.s32.totalorder %s19, 0
      %s213 = scalar_select %p212, %s19, 0
      %s214 = smul.addr %s211, 20
      %s215 = sadd.s32 %s213, %s214
      %s216 = smul.addr %s215, 8
      %s217 = scalar_lea.vmem %s0, %s216
      %p218 = scmp.lt.s32.totalorder %s19, 0
      %s219 = scalar_select %p218, %s19, 0
      %s220 = smul.addr %s219, 8
      %s221 = scalar_lea.vmem %s1, %s220
      %p222 = scmp.lt.s32.totalorder %s19, 0
      %s223 = scalar_select %p222, %s19, 0
      %s224 = scalar_lea.vmem %s2, %s223
      %p225 = scmp.lt.s32.totalorder %s18, 1
      %s226 = scalar_select %p225, %s18, 1
      %p227 = scmp.lt.s32.totalorder %s19, 0
      %s228 = scalar_select %p227, %s19, 0
      %s229 = smul.addr %s226, 8
      %s230 = sadd.s32 %s228, %s229
      %s231 = smul.addr %s230, 8
      %s232 = scalar_lea.vmem %s3, %s231
      %v233 = vld [vmem:[%s217] sm:$0xff]
      %v234 = vld [vmem:[%s217 + $0x8] sm:$0x3]
      %v235 = vld [vmem:[%s217 + $0x10] sm:$0xff]
      %v236 = vld [vmem:[%s217 + $0x18] sm:$0x3]
      %v237 = vld [vmem:[%s217 + $0x20] sm:$0xff]
      %v238 = vld [vmem:[%s217 + $0x28] sm:$0x3]
      %v239 = vld [vmem:[%s217 + $0x30] sm:$0xff]
      %v240 = vld [vmem:[%s217 + $0x38] sm:$0x3]
      %v241 = vld [vmem:[%s217 + $0x40] sm:$0xff]
      %v242 = vld [vmem:[%s217 + $0x48] sm:$0x3]
      %v243 = vld [vmem:[%s217 + $0x50] sm:$0xff]
      %v244 = vld [vmem:[%s217 + $0x58] sm:$0x3]
      %v245 = vld [vmem:[%s217 + $0x60] sm:$0xff]
      %v246 = vld [vmem:[%s217 + $0x68] sm:$0x3]
      %v247 = vld [vmem:[%s217 + $0x70] sm:$0xff]
      %v248 = vld [vmem:[%s217 + $0x78] sm:$0x3]
      %v249 = vld [vmem:[%s217 + $0x80] sm:$0xff]
      %v250 = vld [vmem:[%s217 + $0x88] sm:$0x3]
      %v251 = vld [vmem:[%s217 + $0x90] sm:$0xff]
      %v252 = vld [vmem:[%s217 + $0x98] sm:$0x3]
      %v253 = vld [vmem:[%s221] sm:$0xff]
      %v254 = vld [vmem:[%s221 + $0x8] sm:$0x1]
      %v255 = vlaneseq
      %v256 = vshrl.u32 %v255, 7
      %v257 = vsub.s32 0, %v256
      %v258 = vrot.slane %v253, %v257
      %v259 = vmul.f32 %v233, %v258
      %v260 = vmul.f32 %v235, %v258
      %v261 = vmul.f32 %v237, %v258
      %v262 = vmul.f32 %v239, %v258
      %v263 = vmul.f32 %v241, %v258
      %v264 = vmul.f32 %v243, %v258
      %v265 = vmul.f32 %v245, %v258
      %v266 = vmul.f32 %v247, %v258
      %v267 = vadd.f32 %v259, 0.0
      %v268 = vadd.f32 %v260, 0.0
      %v269 = vadd.f32 %v261, 0.0
      %v270 = vadd.f32 %v262, 0.0
      %v271 = vadd.f32 %v263, 0.0
      %v272 = vadd.f32 %v264, 0.0
      %v273 = vadd.f32 %v265, 0.0
      %v274 = vadd.f32 %v266, 0.0
      %v275 = vlaneseq
      %v276 = vshrl.u32 %v275, 7
      %v277 = vsub.s32 1, %v276
      %v278 = vrot.slane %v253, %v277
      %v279 = vmul.f32 %v233, %v278
      %v280 = vmul.f32 %v234, %v278
      %v281 = vmul.f32 %v235, %v278
      %v282 = vmul.f32 %v236, %v278
      %v283 = vmul.f32 %v237, %v278
      %v284 = vmul.f32 %v238, %v278
      %v285 = vmul.f32 %v239, %v278
      %v286 = vmul.f32 %v240, %v278
      %v287 = vmul.f32 %v241, %v278
      %v288 = vmul.f32 %v242, %v278
      %v289 = vmul.f32 %v243, %v278
      %v290 = vmul.f32 %v244, %v278
      %v291 = vmul.f32 %v245, %v278
      %v292 = vmul.f32 %v246, %v278
      %v293 = vmul.f32 %v247, %v278
      %v294 = vmul.f32 %v248, %v278
      %vm311 = vcmask 1046528
      %v312 = vrot.slane %v279, 1
      %v313 = vrot.slane %v280, 1
      %v314 = vsel %vm311, %v312, %v313
      %v315 = vrot.slane %v281, 1
      %v316 = vrot.slane %v282, 1
      %v317 = vsel %vm311, %v315, %v316
      %v318 = vrot.slane %v283, 1
      %v319 = vrot.slane %v284, 1
      %v320 = vsel %vm311, %v318, %v319
      %v321 = vrot.slane %v285, 1
      %v322 = vrot.slane %v286, 1
      %v323 = vsel %vm311, %v321, %v322
      %v324 = vrot.slane %v287, 1
      %v325 = vrot.slane %v288, 1
      %v326 = vsel %vm311, %v324, %v325
      %v327 = vrot.slane %v289, 1
      %v328 = vrot.slane %v290, 1
      %v329 = vsel %vm311, %v327, %v328
      %v330 = vrot.slane %v291, 1
      %v331 = vrot.slane %v292, 1
      %v332 = vsel %vm311, %v330, %v331
      %v333 = vrot.slane %v293, 1
      %v334 = vrot.slane %v294, 1
      %v335 = vsel %vm311, %v333, %v334
      %v344 = vadd.f32 %v267, %v314
      %v345 = vadd.f32 %v268, %v317
      %v346 = vadd.f32 %v269, %v320
      %v347 = vadd.f32 %v270, %v323
      %v348 = vadd.f32 %v271, %v326
      %v349 = vadd.f32 %v272, %v329
      %v350 = vadd.f32 %v273, %v332
      %v351 = vadd.f32 %v274, %v335
      %v352 = vlaneseq
      %v353 = vshrl.u32 %v352, 7
      %v354 = vsub.s32 2, %v353
      %v355 = vrot.slane %v253, %v354
      %v356 = vmul.f32 %v233, %v355
      %v357 = vmul.f32 %v234, %v355
      %v358 = vmul.f32 %v235, %v355
      %v359 = vmul.f32 %v236, %v355
      %v360 = vmul.f32 %v237, %v355
      %v361 = vmul.f32 %v238, %v355
      %v362 = vmul.f32 %v239, %v355
      %v363 = vmul.f32 %v240, %v355
      %v364 = vmul.f32 %v241, %v355
      %v365 = vmul.f32 %v242, %v355
      %v366 = vmul.f32 %v243, %v355
      %v367 = vmul.f32 %v244, %v355
      %v368 = vmul.f32 %v245, %v355
      %v369 = vmul.f32 %v246, %v355
      %v370 = vmul.f32 %v247, %v355
      %v371 = vmul.f32 %v248, %v355
      %vm388 = vcmask 1045504
      %v389 = vrot.slane %v356, 2
      %v390 = vrot.slane %v357, 2
      %v391 = vsel %vm388, %v389, %v390
      %v392 = vrot.slane %v358, 2
      %v393 = vrot.slane %v359, 2
      %v394 = vsel %vm388, %v392, %v393
      %v395 = vrot.slane %v360, 2
      %v396 = vrot.slane %v361, 2
      %v397 = vsel %vm388, %v395, %v396
      %v398 = vrot.slane %v362, 2
      %v399 = vrot.slane %v363, 2
      %v400 = vsel %vm388, %v398, %v399
      %v401 = vrot.slane %v364, 2
      %v402 = vrot.slane %v365, 2
      %v403 = vsel %vm388, %v401, %v402
      %v404 = vrot.slane %v366, 2
      %v405 = vrot.slane %v367, 2
      %v406 = vsel %vm388, %v404, %v405
      %v407 = vrot.slane %v368, 2
      %v408 = vrot.slane %v369, 2
      %v409 = vsel %vm388, %v407, %v408
      %v410 = vrot.slane %v370, 2
      %v411 = vrot.slane %v371, 2
      %v412 = vsel %vm388, %v410, %v411
      %v421 = vadd.f32 %v344, %v391
      %v422 = vadd.f32 %v345, %v394
      %v423 = vadd.f32 %v346, %v397
      %v424 = vadd.f32 %v347, %v400
      %v425 = vadd.f32 %v348, %v403
      %v426 = vadd.f32 %v349, %v406
      %v427 = vadd.f32 %v350, %v409
      %v428 = vadd.f32 %v351, %v412
      %v429 = vlaneseq
      %v430 = vshrl.u32 %v429, 7
      %v431 = vsub.s32 3, %v430
      %v432 = vrot.slane %v253, %v431
      %v433 = vmul.f32 %v235, %v432
      %v434 = vmul.f32 %v237, %v432
      %v435 = vmul.f32 %v239, %v432
      %v436 = vmul.f32 %v241, %v432
      %v437 = vmul.f32 %v243, %v432
      %v438 = vmul.f32 %v245, %v432
      %v439 = vmul.f32 %v247, %v432
      %v440 = vmul.f32 %v249, %v432
      %v441 = vadd.f32 %v421, %v433
      %v442 = vadd.f32 %v422, %v434
      %v443 = vadd.f32 %v423, %v435
      %v444 = vadd.f32 %v424, %v436
      %v445 = vadd.f32 %v425, %v437
      %v446 = vadd.f32 %v426, %v438
      %v447 = vadd.f32 %v427, %v439
      %v448 = vadd.f32 %v428, %v440
      %v449 = vlaneseq
      %v450 = vshrl.u32 %v449, 7
      %v451 = vsub.s32 4, %v450
      %v452 = vrot.slane %v253, %v451
      %v453 = vmul.f32 %v235, %v452
      %v454 = vmul.f32 %v236, %v452
      %v455 = vmul.f32 %v237, %v452
      %v456 = vmul.f32 %v238, %v452
      %v457 = vmul.f32 %v239, %v452
      %v458 = vmul.f32 %v240, %v452
      %v459 = vmul.f32 %v241, %v452
      %v460 = vmul.f32 %v242, %v452
      %v461 = vmul.f32 %v243, %v452
      %v462 = vmul.f32 %v244, %v452
      %v463 = vmul.f32 %v245, %v452
      %v464 = vmul.f32 %v246, %v452
      %v465 = vmul.f32 %v247, %v452
      %v466 = vmul.f32 %v248, %v452
      %v467 = vmul.f32 %v249, %v452
      %v468 = vmul.f32 %v250, %v452
      %v485 = vrot.slane %v453, 1
      %v486 = vrot.slane %v454, 1
      %v487 = vsel %vm311, %v485, %v486
      %v488 = vrot.slane %v455, 1
      %v489 = vrot.slane %v456, 1
      %v490 = vsel %vm311, %v488, %v489
      %v491 = vrot.slane %v457, 1
      %v492 = vrot.slane %v458, 1
      %v493 = vsel %vm311, %v491, %v492
      %v494 = vrot.slane %v459, 1
      %v495 = vrot.slane %v460, 1
      %v496 = vsel %vm311, %v494, %v495
      %v497 = vrot.slane %v461, 1
      %v498 = vrot.slane %v462, 1
      %v499 = vsel %vm311, %v497, %v498
      %v500 = vrot.slane %v463, 1
      %v501 = vrot.slane %v464, 1
      %v502 = vsel %vm311, %v500, %v501
      %v503 = vrot.slane %v465, 1
      %v504 = vrot.slane %v466, 1
      %v505 = vsel %vm311, %v503, %v504
      %v506 = vrot.slane %v467, 1
      %v507 = vrot.slane %v468, 1
      %v508 = vsel %vm311, %v506, %v507
      %v517 = vadd.f32 %v441, %v487
      %v518 = vadd.f32 %v442, %v490
      %v519 = vadd.f32 %v443, %v493
      %v520 = vadd.f32 %v444, %v496
      %v521 = vadd.f32 %v445, %v499
      %v522 = vadd.f32 %v446, %v502
      %v523 = vadd.f32 %v447, %v505
      %v524 = vadd.f32 %v448, %v508
      %v525 = vlaneseq
      %v526 = vshrl.u32 %v525, 7
      %v527 = vsub.s32 5, %v526
      %v528 = vrot.slane %v253, %v527
      %v529 = vmul.f32 %v235, %v528
      %v530 = vmul.f32 %v236, %v528
      %v531 = vmul.f32 %v237, %v528
      %v532 = vmul.f32 %v238, %v528
      %v533 = vmul.f32 %v239, %v528
      %v534 = vmul.f32 %v240, %v528
      %v535 = vmul.f32 %v241, %v528
      %v536 = vmul.f32 %v242, %v528
      %v537 = vmul.f32 %v243, %v528
      %v538 = vmul.f32 %v244, %v528
      %v539 = vmul.f32 %v245, %v528
      %v540 = vmul.f32 %v246, %v528
      %v541 = vmul.f32 %v247, %v528
      %v542 = vmul.f32 %v248, %v528
      %v543 = vmul.f32 %v249, %v528
      %v544 = vmul.f32 %v250, %v528
      %v561 = vrot.slane %v529, 2
      %v562 = vrot.slane %v530, 2
      %v563 = vsel %vm388, %v561, %v562
      %v564 = vrot.slane %v531, 2
      %v565 = vrot.slane %v532, 2
      %v566 = vsel %vm388, %v564, %v565
      %v567 = vrot.slane %v533, 2
      %v568 = vrot.slane %v534, 2
      %v569 = vsel %vm388, %v567, %v568
      %v570 = vrot.slane %v535, 2
      %v571 = vrot.slane %v536, 2
      %v572 = vsel %vm388, %v570, %v571
      %v573 = vrot.slane %v537, 2
      %v574 = vrot.slane %v538, 2
      %v575 = vsel %vm388, %v573, %v574
      %v576 = vrot.slane %v539, 2
      %v577 = vrot.slane %v540, 2
      %v578 = vsel %vm388, %v576, %v577
      %v579 = vrot.slane %v541, 2
      %v580 = vrot.slane %v542, 2
      %v581 = vsel %vm388, %v579, %v580
      %v582 = vrot.slane %v543, 2
      %v583 = vrot.slane %v544, 2
      %v584 = vsel %vm388, %v582, %v583
      %v593 = vadd.f32 %v517, %v563
      %v594 = vadd.f32 %v518, %v566
      %v595 = vadd.f32 %v519, %v569
      %v596 = vadd.f32 %v520, %v572
      %v597 = vadd.f32 %v521, %v575
      %v598 = vadd.f32 %v522, %v578
      %v599 = vadd.f32 %v523, %v581
      %v600 = vadd.f32 %v524, %v584
      %v601 = vlaneseq
      %v602 = vshrl.u32 %v601, 7
      %v603 = vsub.s32 6, %v602
      %v604 = vrot.slane %v253, %v603
      %v605 = vmul.f32 %v237, %v604
      %v606 = vmul.f32 %v239, %v604
      %v607 = vmul.f32 %v241, %v604
      %v608 = vmul.f32 %v243, %v604
      %v609 = vmul.f32 %v245, %v604
      %v610 = vmul.f32 %v247, %v604
      %v611 = vmul.f32 %v249, %v604
      %v612 = vmul.f32 %v251, %v604
      %v613 = vadd.f32 %v593, %v605
      %v614 = vadd.f32 %v594, %v606
      %v615 = vadd.f32 %v595, %v607
      %v616 = vadd.f32 %v596, %v608
      %v617 = vadd.f32 %v597, %v609
      %v618 = vadd.f32 %v598, %v610
      %v619 = vadd.f32 %v599, %v611
      %v620 = vadd.f32 %v600, %v612
      %v621 = vlaneseq
      %v622 = vshrl.u32 %v621, 7
      %v623 = vsub.s32 7, %v622
      %v624 = vrot.slane %v253, %v623
      %v625 = vmul.f32 %v237, %v624
      %v626 = vmul.f32 %v238, %v624
      %v627 = vmul.f32 %v239, %v624
      %v628 = vmul.f32 %v240, %v624
      %v629 = vmul.f32 %v241, %v624
      %v630 = vmul.f32 %v242, %v624
      %v631 = vmul.f32 %v243, %v624
      %v632 = vmul.f32 %v244, %v624
      %v633 = vmul.f32 %v245, %v624
      %v634 = vmul.f32 %v246, %v624
      %v635 = vmul.f32 %v247, %v624
      %v636 = vmul.f32 %v248, %v624
      %v637 = vmul.f32 %v249, %v624
      %v638 = vmul.f32 %v250, %v624
      %v639 = vmul.f32 %v251, %v624
      %v640 = vmul.f32 %v252, %v624
      %v657 = vrot.slane %v625, 1
      %v658 = vrot.slane %v626, 1
      %v659 = vsel %vm311, %v657, %v658
      %v660 = vrot.slane %v627, 1
      %v661 = vrot.slane %v628, 1
      %v662 = vsel %vm311, %v660, %v661
      %v663 = vrot.slane %v629, 1
      %v664 = vrot.slane %v630, 1
      %v665 = vsel %vm311, %v663, %v664
      %v666 = vrot.slane %v631, 1
      %v667 = vrot.slane %v632, 1
      %v668 = vsel %vm311, %v666, %v667
      %v669 = vrot.slane %v633, 1
      %v670 = vrot.slane %v634, 1
      %v671 = vsel %vm311, %v669, %v670
      %v672 = vrot.slane %v635, 1
      %v673 = vrot.slane %v636, 1
      %v674 = vsel %vm311, %v672, %v673
      %v675 = vrot.slane %v637, 1
      %v676 = vrot.slane %v638, 1
      %v677 = vsel %vm311, %v675, %v676
      %v678 = vrot.slane %v639, 1
      %v679 = vrot.slane %v640, 1
      %v680 = vsel %vm311, %v678, %v679
      %v689 = vadd.f32 %v613, %v659
      %v690 = vadd.f32 %v614, %v662
      %v691 = vadd.f32 %v615, %v665
      %v692 = vadd.f32 %v616, %v668
      %v693 = vadd.f32 %v617, %v671
      %v694 = vadd.f32 %v618, %v674
      %v695 = vadd.f32 %v619, %v677
      %v696 = vadd.f32 %v620, %v680
      %v697 = vlaneseq
      %v698 = vshrl.u32 %v697, 7
      %v699 = vsub.s32 0, %v698
      %v700 = vrot.slane %v254, %v699
      %v701 = vmul.f32 %v237, %v700
      %v702 = vmul.f32 %v238, %v700
      %v703 = vmul.f32 %v239, %v700
      %v704 = vmul.f32 %v240, %v700
      %v705 = vmul.f32 %v241, %v700
      %v706 = vmul.f32 %v242, %v700
      %v707 = vmul.f32 %v243, %v700
      %v708 = vmul.f32 %v244, %v700
      %v709 = vmul.f32 %v245, %v700
      %v710 = vmul.f32 %v246, %v700
      %v711 = vmul.f32 %v247, %v700
      %v712 = vmul.f32 %v248, %v700
      %v713 = vmul.f32 %v249, %v700
      %v714 = vmul.f32 %v250, %v700
      %v715 = vmul.f32 %v251, %v700
      %v716 = vmul.f32 %v252, %v700
      %v733 = vrot.slane %v701, 2
      %v734 = vrot.slane %v702, 2
      %v735 = vsel %vm388, %v733, %v734
      %v736 = vrot.slane %v703, 2
      %v737 = vrot.slane %v704, 2
      %v738 = vsel %vm388, %v736, %v737
      %v739 = vrot.slane %v705, 2
      %v740 = vrot.slane %v706, 2
      %v741 = vsel %vm388, %v739, %v740
      %v742 = vrot.slane %v707, 2
      %v743 = vrot.slane %v708, 2
      %v744 = vsel %vm388, %v742, %v743
      %v745 = vrot.slane %v709, 2
      %v746 = vrot.slane %v710, 2
      %v747 = vsel %vm388, %v745, %v746
      %v748 = vrot.slane %v711, 2
      %v749 = vrot.slane %v712, 2
      %v750 = vsel %vm388, %v748, %v749
      %v751 = vrot.slane %v713, 2
      %v752 = vrot.slane %v714, 2
      %v753 = vsel %vm388, %v751, %v752
      %v754 = vrot.slane %v715, 2
      %v755 = vrot.slane %v716, 2
      %v756 = vsel %vm388, %v754, %v755
      %v765 = vadd.f32 %v689, %v735
      %v766 = vadd.f32 %v690, %v738
      %v767 = vadd.f32 %v691, %v741
      %v768 = vadd.f32 %v692, %v744
      %v769 = vadd.f32 %v693, %v747
      %v770 = vadd.f32 %v694, %v750
      %v771 = vadd.f32 %v695, %v753
      %v772 = vadd.f32 %v696, %v756
      %v773 = vld [vmem:[%s224] sm:$0x1]
      %v775 = vlaneseq
      %v776 = vshrl.u32 %v775, 7
      %v777 = vsub.s32 0, %v776
      %v778 = vrot.slane %v773, %v777
      %v780 = vadd.f32 %v765, %v778
      %v781 = vadd.f32 %v766, %v778
      %v782 = vadd.f32 %v767, %v778
      %v783 = vadd.f32 %v768, %v778
      %v784 = vadd.f32 %v769, %v778
      %v785 = vadd.f32 %v770, %v778
      %v786 = vadd.f32 %v771, %v778
      %v787 = vadd.f32 %v772, %v778
      %v788 = vxor.u32 %v780, 2147483648
      %v789 = vxor.u32 %v781, 2147483648
      %v790 = vxor.u32 %v782, 2147483648
      %v791 = vxor.u32 %v783, 2147483648
      %v792 = vxor.u32 %v784, 2147483648
      %v793 = vxor.u32 %v785, 2147483648
      %v794 = vxor.u32 %v786, 2147483648
      %v795 = vxor.u32 %v787, 2147483648
      %v796 = vmul.f32 %v788, 1.442695
      %v797 = vpow.pop %v796
      %v798 = vmul.f32 %v789, 1.442695
      %v799 = vpow.pop %v798
      %v800 = vmul.f32 %v790, 1.442695
      %v801 = vpow.pop %v800
      %v802 = vmul.f32 %v791, 1.442695
      %v803 = vpow.pop %v802
      %v804 = vmul.f32 %v792, 1.442695
      %v805 = vpow.pop %v804
      %v806 = vmul.f32 %v793, 1.442695
      %v807 = vpow.pop %v806
      %v808 = vmul.f32 %v794, 1.442695
      %v809 = vpow.pop %v808
      %v810 = vmul.f32 %v795, 1.442695
      %v811 = vpow.pop %v810
      %v812 = vadd.f32 %v797, 1.0
      %v813 = vadd.f32 %v799, 1.0
      %v814 = vadd.f32 %v801, 1.0
      %v815 = vadd.f32 %v803, 1.0
      %v816 = vadd.f32 %v805, 1.0
      %v817 = vadd.f32 %v807, 1.0
      %v818 = vadd.f32 %v809, 1.0
      %v819 = vadd.f32 %v811, 1.0
      %v820 = vrcp.pop %v812
      %v821 = vmul.f32 1.0, %v820
      %v822 = vrcp.pop %v813
      %v823 = vmul.f32 1.0, %v822
      %v824 = vrcp.pop %v814
      %v825 = vmul.f32 1.0, %v824
      %v826 = vrcp.pop %v815
      %v827 = vmul.f32 1.0, %v826
      %v828 = vrcp.pop %v816
      %v829 = vmul.f32 1.0, %v828
      %v830 = vrcp.pop %v817
      %v831 = vmul.f32 1.0, %v830
      %v832 = vrcp.pop %v818
      %v833 = vmul.f32 1.0, %v832
      %v834 = vrcp.pop %v819
      %v835 = vmul.f32 1.0, %v834
      %v844 = vrot.slane %v821, 7
      %v845 = vrot.slane %v823, 7
      %v846 = vrot.slane %v825, 7
      %v847 = vrot.slane %v827, 7
      %v848 = vrot.slane %v829, 7
      %v849 = vrot.slane %v831, 7
      %v850 = vrot.slane %v833, 7
      %v851 = vrot.slane %v835, 7
      %v860 = vmul.f32 %v235, %v844
      %v861 = vmul.f32 %v236, %v844
      %v862 = vmul.f32 %v237, %v845
      %v863 = vmul.f32 %v238, %v845
      %v864 = vmul.f32 %v239, %v846
      %v865 = vmul.f32 %v240, %v846
      %v866 = vmul.f32 %v241, %v847
      %v867 = vmul.f32 %v242, %v847
      %v868 = vmul.f32 %v243, %v848
      %v869 = vmul.f32 %v244, %v848
      %v870 = vmul.f32 %v245, %v849
      %v871 = vmul.f32 %v246, %v849
      %v872 = vmul.f32 %v247, %v850
      %v873 = vmul.f32 %v248, %v850
      %v874 = vmul.f32 %v249, %v851
      %v875 = vmul.f32 %v250, %v851
      %vm876 = vcmask 64513
      %877 = vst.msk [vmem:[%s232 - $0x1] sm:$0xfe] %vm876, %v860
      %vm878 = vcmask 57344
      %879 = vst.msk [vmem:[%s232 + $0x7] sm:$0x1] %vm878, %v861
      %880 = vst.msk [vmem:[%s232 + $0x7] sm:$0xfe] %vm876, %v862
      %881 = vst.msk [vmem:[%s232 + $0xf] sm:$0x1] %vm878, %v863
      %882 = vst.msk [vmem:[%s232 + $0xf] sm:$0xfe] %vm876, %v864
      %883 = vst.msk [vmem:[%s232 + $0x17] sm:$0x1] %vm878, %v865
      %884 = vst.msk [vmem:[%s232 + $0x17] sm:$0xfe] %vm876, %v866
      %885 = vst.msk [vmem:[%s232 + $0x1f] sm:$0x1] %vm878, %v867
      %886 = vst.msk [vmem:[%s232 + $0x1f] sm:$0xfe] %vm876, %v868
      %887 = vst.msk [vmem:[%s232 + $0x27] sm:$0x1] %vm878, %v869
      %888 = vst.msk [vmem:[%s232 + $0x27] sm:$0xfe] %vm876, %v870
      %889 = vst.msk [vmem:[%s232 + $0x2f] sm:$0x1] %vm878, %v871
      %890 = vst.msk [vmem:[%s232 + $0x2f] sm:$0xfe] %vm876, %v872
      %891 = vst.msk [vmem:[%s232 + $0x37] sm:$0x1] %vm878, %v873
      %892 = vst.msk [vmem:[%s232 + $0x37] sm:$0xfe] %vm876, %v874
      %893 = vst.msk [vmem:[%s232 + $0x3f] sm:$0x1] %vm878, %v875
      %p894 = scmp.lt.s32.totalorder %s18, 1
      %s895 = scalar_select %p894, %s18, 1
      %p896 = scmp.lt.s32.totalorder %s19, 0
      %s897 = scalar_select %p896, %s19, 0
      %s898 = smul.addr %s895, 8
      %s899 = sadd.s32 %s897, %s898
      %s900 = smul.addr %s899, 8
      %s901 = scalar_lea.vmem %s3, %s900
      // Predicated region
      $region33: #{rstb_forward.20} parent=31 // pred_check
        %p902 = pneg %p126
      $region34: #{rstb_forward.20} parent=31 // pred_check_branch
        %904 = sbr.rel (%p902) target = $region36
      $region35: #{rstb_forward.20} parent=31 // pred_region
        _
      $region36: #{rstb_forward.20} parent=31 // pred_fallthru
        _
    $region32: #{rstb_forward.20} parent=5 // pred_fallthru
      _
    %p905 = scmp.le.s32.totalorder 2, %s9
    // Predicated region
    $region37: #{rstb_forward.20} parent=5 // pred_check
      %p906 = pneg %p905
    $region38: #{rstb_forward.20} parent=5 // pred_check_branch
      %908 = sbr.rel (%p906) target = $region40
    $region39: #{rstb_forward.20} parent=5 // pred_region
      %s909 = ssub.s32 %s9, 2
      // Predicated region
      $region41: #{rstb_forward.20} parent=39 // pred_check
        %p910 = pneg %p132
      $region42: #{rstb_forward.20} parent=39 // pred_check_branch
        %912 = sbr.rel (%p910) target = $region44
      $region43: #{rstb_forward.20} parent=39 // pred_region
        %p913 = scmp.lt.s32.totalorder %s20, 1
        %s914 = scalar_select %p913, %s20, 1
        %p915 = scmp.lt.s32.totalorder %s21, 0
        %s916 = scalar_select %p915, %s21, 0
        %s917 = smul.addr %s914, 8
        %s918 = sadd.s32 %s916, %s917
        %s919 = smul.addr %s918, 8
        %s920 = scalar_lea.vmem %s3, %s919
      $region44: #{rstb_forward.20} parent=39 // pred_fallthru
        _
    $region40: #{rstb_forward.20} parent=5 // pred_fallthru
      _
  $region6: #{rstb_forward.20} parent=0 // loop_footer
    %s13 = sadd.s32 1, %s9
  $region7: #{rstb_forward.20} parent=0 // loop_footer_branch
    %8 = sbr.rel target = $region3
  $region8: #{rstb_forward.20} parent=0 // loop_exit
    _

// kernel: rstb_forward.25
$region0: #{rstb_forward.25}
  #allocation0 [shape = 'u32[]', space=smem, size = 0x4, offset = 0x4, fixed_abs, tag = 'smem constant byte address 0x4 - core index']
  #allocation1 [shape = 'u32[144,128]{1,0:T(1,128)}', space=vmem, size = 0x12000, scoped, tag = 'internal scratch']
  #allocation2 [shape = 'f32[64,8]{1,0:T(8,128)}', space=vmem, size = 0x8000, scoped, tag = 'scratch operand']
  %s0 = inlined_call_operand.vmem [shape: bf16[128,8], index: 0, kind: input, shape index: {}]
  %s1 = inlined_call_operand.vmem [shape: bf16[8,8], index: 1, kind: input, shape index: {}]
  %s2 = inlined_call_operand.vmem [shape: f32[1,8], index: 2, kind: input, shape index: {}]
  %s3 = inlined_call_operand.vmem [shape: f32[128,8], index: 3, kind: input, shape index: {}]
  %s4 = inlined_call_operand.vmem [shape: f32[128,8], index: 4, kind: output, shape index: {}]
  %s5 = sld [smem:[#allocation0]]
  $region57: #{rstb_forward.25} parent=0
    _
  %s7 = ssub.s32 1, %s5
  %s8 = scalar_select 0, %s7, %s5
  loop: start=0, step=1, limit=4
  $region2: #{rstb_forward.25} parent=0 // loop_pre_header
    _
  $region3: #{rstb_forward.25} parent=0 // loop_header
    %s10 = sphi 0, %s14
    %p11 = scmp.ge.s32.totalorder %s10, 4
    %s17 = sphi 0, %s36
    %s18 = sphi 0, %s32
    %s19 = sphi 0, %s28
    %s20 = sphi 0, %s17
    %s21 = sphi 0, %s18
    %s22 = sphi 0, %s19
    %s23 = sphi 0, %s20
    %s24 = sphi 0, %s21
    %s25 = sphi 0, %s22
    %s41 = sphi 0, %s43
    %s44 = sphi 0, %s41
    %s45 = sphi 0, %s44
    %s61 = sphi 0, %s45
    %s69 = sphi 0, %s71
    %s72 = sphi 0, %s69
    %s73 = sphi 0, %s72
    %s89 = sphi 0, %s73
    %s95 = sphi 0, %s97
    %s98 = sphi 0, %s95
    %s99 = sphi 0, %s98
    %s115 = sphi 0, %s99
    %s123 = sphi 0, %s125
    %s126 = sphi 0, %s123
    %s127 = sphi 0, %s126
    %s143 = sphi 0, %s127
    %s151 = sphi 0, %s153
    %s154 = sphi 0, %s151
    %s155 = sphi 0, %s154
    %s171 = sphi 0, %s155
  $region4: #{rstb_forward.25} parent=0 // loop_header_branch
    %13 = sbr.rel (%p11) target = $region8
  $region5: #{rstb_forward.25} parent=0 // loop_body
    %s15 = ssub.s32 %s10, 1
    %s16 = ssub.s32 %s10, 2
    %s26 = sadd.s32 1, %s19
    %p27 = scmp.ge.s32.totalorder %s26, 1
    %s28 = scalar_select %p27, 0, %s26
    %s29 = sadd.s32 1, %s18
    %s30 = scalar_select %p27, %s29, %s18
    %p31 = scmp.ge.s32.totalorder %s30, 1
    %s32 = scalar_select %p31, 0, %s30
    %s33 = sadd.s32 1, %s17
    %s34 = scalar_select %p31, %s33, %s17
    %p35 = scmp.ge.s32.totalorder %s34, 2
    %s36 = scalar_select %p35, 0, %s34
    %s37 = ssub.s32 %s17, %s36
    %s38 = ssub.s32 %s19, %s28
    %s39 = sor.u32 %s37, %s38
    %p40 = scmp.eq.s32.totalorder %s39, 0
    %s42 = sadd.s32 %s41, 1
    %s43 = scalar_select %p40, %s41, %s42
    %p46 = pneg %p40
    %p47 = scmp.eq.s32.totalorder %s10, 1
    %p48 = por %p46, %p47
    %p49 = scmp.ne.s32.totalorder %s41, %s44
    %p50 = scmp.eq.s32.totalorder %s10, 0
    %p51 = por %p49, %p50
    %p52 = scmp.ne.s32.totalorder %s41, %s44
    %p53 = scmp.eq.s32.totalorder %s15, 1
    %p54 = por %p52, %p53
    %p55 = scmp.ne.s32.totalorder %s44, %s45
    %p56 = scmp.eq.s32.totalorder %s15, 0
    %p57 = por %p55, %p56
    %p58 = scmp.ne.s32.totalorder %s44, %s45
    %p59 = scmp.eq.s32.totalorder %s16, 1
    %p60 = por %p58, %p59
    %p62 = scmp.ne.s32.totalorder %s45, %s61
    %p63 = scmp.eq.s32.totalorder %s16, 0
    %p64 = por %p62, %p63
    %s65 = ssub.s32 %s19, %s28
    %s66 = ssub.s32 %s18, %s32
    %s67 = sor.u32 %s65, %s66
    %p68 = scmp.eq.s32.totalorder %s67, 0
    %s70 = sadd.s32 %s69, 1
    %s71 = scalar_select %p68, %s69, %s70
    %p74 = pneg %p68
    %p75 = scmp.eq.s32.totalorder %s10, 1
    %p76 = por %p74, %p75
    %p77 = scmp.ne.s32.totalorder %s69, %s72
    %p78 = scmp.eq.s32.totalorder %s10, 0
    %p79 = por %p77, %p78
    %p80 = scmp.ne.s32.totalorder %s69, %s72
    %p81 = scmp.eq.s32.totalorder %s15, 1
    %p82 = por %p80, %p81
    %p83 = scmp.ne.s32.totalorder %s72, %s73
    %p84 = scmp.eq.s32.totalorder %s15, 0
    %p85 = por %p83, %p84
    %p86 = scmp.ne.s32.totalorder %s72, %s73
    %p87 = scmp.eq.s32.totalorder %s16, 1
    %p88 = por %p86, %p87
    %p90 = scmp.ne.s32.totalorder %s73, %s89
    %p91 = scmp.eq.s32.totalorder %s16, 0
    %p92 = por %p90, %p91
    %s93 = ssub.s32 %s18, %s32
    %p94 = scmp.eq.s32.totalorder %s93, 0
    %s96 = sadd.s32 %s95, 1
    %s97 = scalar_select %p94, %s95, %s96
    %p100 = pneg %p94
    %p101 = scmp.eq.s32.totalorder %s10, 1
    %p102 = por %p100, %p101
    %p103 = scmp.ne.s32.totalorder %s95, %s98
    %p104 = scmp.eq.s32.totalorder %s10, 0
    %p105 = por %p103, %p104
    %p106 = scmp.ne.s32.totalorder %s95, %s98
    %p107 = scmp.eq.s32.totalorder %s15, 1
    %p108 = por %p106, %p107
    %p109 = scmp.ne.s32.totalorder %s98, %s99
    %p110 = scmp.eq.s32.totalorder %s15, 0
    %p111 = por %p109, %p110
    %p112 = scmp.ne.s32.totalorder %s98, %s99
    %p113 = scmp.eq.s32.totalorder %s16, 1
    %p114 = por %p112, %p113
    %p116 = scmp.ne.s32.totalorder %s99, %s115
    %p117 = scmp.eq.s32.totalorder %s16, 0
    %p118 = por %p116, %p117
    %s119 = ssub.s32 %s17, %s36
    %s120 = ssub.s32 %s18, %s32
    %s121 = sor.u32 %s119, %s120
    %p122 = scmp.eq.s32.totalorder %s121, 0
    %s124 = sadd.s32 %s123, 1
    %s125 = scalar_select %p122, %s123, %s124
    %p128 = pneg %p122
    %p129 = scmp.eq.s32.totalorder %s10, 1
    %p130 = por %p128, %p129
    %p131 = scmp.ne.s32.totalorder %s123, %s126
    %p132 = scmp.eq.s32.totalorder %s10, 0
    %p133 = por %p131, %p132
    %p134 = scmp.ne.s32.totalorder %s123, %s126
    %p135 = scmp.eq.s32.totalorder %s15, 1
    %p136 = por %p134, %p135
    %p137 = scmp.ne.s32.totalorder %s126, %s127
    %p138 = scmp.eq.s32.totalorder %s15, 0
    %p139 = por %p137, %p138
    %p140 = scmp.ne.s32.totalorder %s126, %s127
    %p141 = scmp.eq.s32.totalorder %s16, 1
    %p142 = por %p140, %p141
    %p144 = scmp.ne.s32.totalorder %s127, %s143
    %p145 = scmp.eq.s32.totalorder %s16, 0
    %p146 = por %p144, %p145
    %s147 = ssub.s32 %s17, %s36
    %s148 = ssub.s32 %s18, %s32
    %s149 = sor.u32 %s147, %s148
    %p150 = scmp.eq.s32.totalorder %s149, 0
    %s152 = sadd.s32 %s151, 1
    %s153 = scalar_select %p150, %s151, %s152
    %p156 = pneg %p150
    %p157 = scmp.eq.s32.totalorder %s10, 1
    %p158 = por %p156, %p157
    %p159 = scmp.ne.s32.totalorder %s151, %s154
    %p160 = scmp.eq.s32.totalorder %s10, 0
    %p161 = por %p159, %p160
    %p162 = scmp.ne.s32.totalorder %s151, %s154
    %p163 = scmp.eq.s32.totalorder %s15, 1
    %p164 = por %p162, %p163
    %p165 = scmp.ne.s32.totalorder %s154, %s155
    %p166 = scmp.eq.s32.totalorder %s15, 0
    %p167 = por %p165, %p166
    %p168 = scmp.ne.s32.totalorder %s154, %s155
    %p169 = scmp.eq.s32.totalorder %s16, 1
    %p170 = por %p168, %p169
    %p172 = scmp.ne.s32.totalorder %s155, %s171
    %p173 = scmp.eq.s32.totalorder %s16, 0
    %p174 = por %p172, %p173
    %p175 = scmp.le.s32.totalorder 1, %s10
    %p176 = scmp.lt.s32.totalorder %s10, 3
    %p177 = pnand %p175, %p176
    %p178 = pneg %p177
    // Predicated region
    $region9: #{rstb_forward.25} parent=5 // pred_check
      _
    $region10: #{rstb_forward.25} parent=5 // pred_check_branch
      %180 = sbr.rel (%p177) target = $region12
    $region11: #{rstb_forward.25} parent=5 // pred_region
      %s181 = ssub.s32 %s10, 1
      // Predicated region
      $region13: #{rstb_forward.25} parent=11 // pred_check
        %p182 = pneg %p85
      $region14: #{rstb_forward.25} parent=11 // pred_check_branch
        %184 = sbr.rel (%p182) target = $region16
      $region15: #{rstb_forward.25} parent=11 // pred_region
        %p185 = scmp.lt.s32.totalorder %s22, 0
        %s186 = scalar_select %p185, %s22, 0
        %p187 = scmp.lt.s32.totalorder %s21, 0
        %s188 = scalar_select %p187, %s21, 0
        %s189 = sadd.s32 %s188, %s186
        %s190 = smul.addr %s189, 4
        %s191 = scalar_lea.vmem %s1, %s190
      $region16: #{rstb_forward.25} parent=11 // pred_fallthru
        _
      // Predicated region
      $region17: #{rstb_forward.25} parent=11 // pred_check
        %p192 = pneg %p111
      $region18: #{rstb_forward.25} parent=11 // pred_check_branch
        %194 = sbr.rel (%p192) target = $region20
      $region19: #{rstb_forward.25} parent=11 // pred_region
        %p195 = scmp.lt.s32.totalorder %s21, 0
        %s196 = scalar_select %p195, %s21, 0
        %s197 = scalar_lea.vmem %s2, %s196
      $region20: #{rstb_forward.25} parent=11 // pred_fallthru
        _
    $region12: #{rstb_forward.25} parent=5 // pred_fallthru
      _
    %p198 = scmp.lt.s32.totalorder %s10, 2
    // Predicated region
    $region21: #{rstb_forward.25} parent=5 // pred_check
      %p199 = pneg %p198
    $region22: #{rstb_forward.25} parent=5 // pred_check_branch
      %201 = sbr.rel (%p199) target = $region24
    $region23: #{rstb_forward.25} parent=5 // pred_region
      // Predicated region
      $region25: #{rstb_forward.25} parent=23 // pred_check
        %p202 = pneg %p51
      $region26: #{rstb_forward.25} parent=23 // pred_check_branch
        %204 = sbr.rel (%p202) target = $region28
      $region27: #{rstb_forward.25} parent=23 // pred_region
        %s205 = smul.u32 8, %s17
        %p206 = scmp.lt.s32.totalorder %s205, 15
        %s207 = scalar_select %p206, %s205, 15
        %p208 = scmp.lt.s32.totalorder %s19, 0
        %s209 = scalar_select %p208, %s19, 0
        %s210 = sadd.s32 %s209, %s207
        %s211 = smul.addr %s210, 4
        %s212 = scalar_lea.vmem %s0, %s211
        %s213 = smul.u32 8, %s17
      $region28: #{rstb_forward.25} parent=23 // pred_fallthru
        _
      // Predicated region
      $region29: #{rstb_forward.25} parent=23 // pred_check
        %p214 = pneg %p133
      $region30: #{rstb_forward.25} parent=23 // pred_check_branch
        %216 = sbr.rel (%p214) target = $region32
      $region31: #{rstb_forward.25} parent=23 // pred_region
        %s217 = smul.u32 8, %s17
        %p218 = scmp.lt.s32.totalorder %s217, 15
        %s219 = scalar_select %p218, %s217, 15
        %p220 = scmp.lt.s32.totalorder %s18, 0
        %s221 = scalar_select %p220, %s18, 0
        %s222 = sadd.s32 %s221, %s219
        %s223 = smul.addr %s222, 8
        %s224 = scalar_lea.vmem %s3, %s223
        %s225 = smul.u32 8, %s17
      $region32: #{rstb_forward.25} parent=23 // pred_fallthru
        _
    $region24: #{rstb_forward.25} parent=5 // pred_fallthru
      _
    %p226 = scmp.le.s32.totalorder 1, %s10
    %p227 = scmp.lt.s32.totalorder %s10, 3
    %p228 = pnand %p226, %p227
    %p229 = pneg %p228
    // Predicated region
    $region33: #{rstb_forward.25} parent=5 // pred_check
      _
    $region34: #{rstb_forward.25} parent=5 // pred_check_branch
      %231 = sbr.rel (%p228) target = $region36
    $region35: #{rstb_forward.25} parent=5 // pred_region
      %s232 = ssub.s32 %s10, 1
      %s233 = smul.u32 8, %s20
      %p234 = scmp.lt.s32.totalorder %s233, 15
      %s235 = scalar_select %p234, %s233, 15
      %p236 = scmp.lt.s32.totalorder %s22, 0
      %s237 = scalar_select %p236, %s22, 0
      %s238 = sadd.s32 %s237, %s235
      %s239 = smul.addr %s238, 4
      %s240 = scalar_lea.vmem %s0, %s239
      %p241 = pneg %p57
      %p242 = pneg %p54
      %p243 = scmp.lt.s32.totalorder %s22, 0
      %s244 = scalar_select %p243, %s22, 0
      %p245 = scmp.lt.s32.totalorder %s21, 0
      %s246 = scalar_select %p245, %s21, 0
      %s247 = sadd.s32 %s246, %s244
      %s248 = smul.addr %s247, 4
      %s249 = scalar_lea.vmem %s1, %s248
      %p250 = pneg %p85
      %p251 = pneg %p82
      %p252 = scmp.lt.s32.totalorder %s21, 0
      %s253 = scalar_select %p252, %s21, 0
      %s254 = scalar_lea.vmem %s2, %s253
      %p255 = pneg %p111
      %p256 = pneg %p108
      %s257 = smul.u32 8, %s20
      %p258 = scmp.lt.s32.totalorder %s257, 15
      %s259 = scalar_select %p258, %s257, 15
      %p260 = scmp.lt.s32.totalorder %s21, 0
      %s261 = scalar_select %p260, %s21, 0
      %s262 = sadd.s32 %s261, %s259
      %s263 = smul.addr %s262, 8
      %s264 = scalar_lea.vmem %s3, %s263
      %p265 = pneg %p139
      %p266 = pneg %p136
      %p267 = pneg %p167
      %p268 = pneg %p164
      %s269 = smul.u32 8, %s20
      %p270 = scmp.lt.s32.totalorder %s269, 15
      %s271 = scalar_select %p270, %s269, 15
      %p272 = scmp.lt.s32.totalorder %s21, 0
      %s273 = scalar_select %p272, %s21, 0
      %s274 = sadd.s32 %s273, %s271
      %s275 = smul.addr %s274, 8
      %s276 = scalar_lea.vmem %s4, %s275
      %s277 = smul.u32 8, %s20
      %p278 = scmp.lt.s32.totalorder %s277, 15
      %s279 = scalar_select %p278, %s277, 15
      %p280 = scmp.lt.s32.totalorder %s22, 0
      %s281 = scalar_select %p280, %s22, 0
      %s282 = sadd.s32 %s281, %s279
      %s283 = smul.addr %s282, 4
      %s284 = scalar_lea.vmem %s0, %s283
      %s285 = smul.u32 8, %s20
      %p286 = scmp.lt.s32.totalorder %s22, 0
      %s287 = scalar_select %p286, %s22, 0
      %p288 = scmp.lt.s32.totalorder %s21, 0
      %s289 = scalar_select %p288, %s21, 0
      %s290 = sadd.s32 %s289, %s287
      %s291 = smul.addr %s290, 4
      %s292 = scalar_lea.vmem %s1, %s291
      %p293 = scmp.lt.s32.totalorder %s21, 0
      %s294 = scalar_select %p293, %s21, 0
      %s295 = scalar_lea.vmem %s2, %s294
      %s296 = smul.u32 8, %s20
      %p297 = scmp.lt.s32.totalorder %s296, 15
      %s298 = scalar_select %p297, %s296, 15
      %p299 = scmp.lt.s32.totalorder %s21, 0
      %s300 = scalar_select %p299, %s21, 0
      %s301 = sadd.s32 %s300, %s298
      %s302 = smul.addr %s301, 8
      %s303 = scalar_lea.vmem %s3, %s302
      %s304 = smul.u32 8, %s20
      %s305 = smul.u32 8, %s20
      %p306 = scmp.lt.s32.totalorder %s305, 15
      %s307 = scalar_select %p306, %s305, 15
      %p308 = scmp.lt.s32.totalorder %s21, 0
      %s309 = scalar_select %p308, %s21, 0
      %s310 = sadd.s32 %s309, %s307
      %s311 = smul.addr %s310, 8
      %s312 = scalar_lea.vmem %s4, %s311
      %s313 = smul.u32 8, %s20
      %p315 = scmp.eq.s32.totalorder %s22, 0
      // Predicated region
      $region37: #{rstb_forward.25} parent=35 // pred_check
        %p316 = pneg %p315
      $region38: #{rstb_forward.25} parent=35 // pred_check_branch
        %318 = sbr.rel (%p316) target = $region40
      $region39: #{rstb_forward.25} parent=35 // pred_region
        %vm319 = vcmask 64512
        %320 = vst.msk [vmem:[#allocation2] sm:$0xff] %vm319, 0.0
        %321 = vst.msk [vmem:[#allocation2 + $0x8] sm:$0xff] %vm319, 0.0
        %322 = vst.msk [vmem:[#allocation2 + $0x10] sm:$0xff] %vm319, 0.0
        %323 = vst.msk [vmem:[#allocation2 + $0x18] sm:$0xff] %vm319, 0.0
        %324 = vst.msk [vmem:[#allocation2 + $0x20] sm:$0xff] %vm319, 0.0
        %325 = vst.msk [vmem:[#allocation2 + $0x28] sm:$0xff] %vm319, 0.0
        %326 = vst.msk [vmem:[#allocation2 + $0x30] sm:$0xff] %vm319, 0.0
        %327 = vst.msk [vmem:[#allocation2 + $0x38] sm:$0xff] %vm319, 0.0
      $region40: #{rstb_forward.25} parent=35 // pred_fallthru
        _
      %v328 = vld [vmem:[#allocation2] sm:$0xff]
      %v329 = vld [vmem:[#allocation2 + $0x8] sm:$0xff]
      %v330 = vld [vmem:[#allocation2 + $0x10] sm:$0xff]
      %v331 = vld [vmem:[#allocation2 + $0x18] sm:$0xff]
      %v332 = vld [vmem:[#allocation2 + $0x20] sm:$0xff]
      %v333 = vld [vmem:[#allocation2 + $0x28] sm:$0xff]
      %v334 = vld [vmem:[#allocation2 + $0x30] sm:$0xff]
      %v335 = vld [vmem:[#allocation2 + $0x38] sm:$0xff]
      %v336 = vld [vmem:[%s284] sm:$0xf]
      %v337 = vld [vmem:[%s284 + $0x4] sm:$0xf]
      %v338 = vld [vmem:[%s284 + $0x8] sm:$0xf]
      %v339 = vld [vmem:[%s284 + $0xc] sm:$0xf]
      %v340 = vld [vmem:[%s284 + $0x10] sm:$0xf]
      %v341 = vld [vmem:[%s284 + $0x14] sm:$0xf]
      %v342 = vld [vmem:[%s284 + $0x18] sm:$0xf]
      %v343 = vld [vmem:[%s284 + $0x1c] sm:$0xf]
      %v344 = vld [vmem:[%s292] sm:$0xf]
      %v353 = vunpack.c.l.b16 %v336
      %v354 = vunpack.c.l.b16 %v337
      %v355 = vunpack.c.l.b16 %v338
      %v356 = vunpack.c.l.b16 %v339
      %v357 = vunpack.c.l.b16 %v340
      %v358 = vunpack.c.l.b16 %v341
      %v359 = vunpack.c.l.b16 %v342
      %v360 = vunpack.c.l.b16 %v343
      %v361 = vpack.c.b16 %v354, %v353
      %v362 = vpack.c.b16 %v356, %v355
      %v363 = vpack.c.b16 %v358, %v357
      %v364 = vpack.c.b16 %v360, %v359
      %vm365 = vcmask 64512
      %v367 = vsel %vm365, %v361, 0
      %v370 = vsel %vm365, %v362, 0
      %v373 = vsel %vm365, %v363, 0
      %v376 = vsel %vm365, %v364, 0
      %vm378 = vcmask 1043456
      %v380 = vsel %vm378, %v344, 0
      %382 = vmatprep.subr.bf16.mxu0 0
      %383 = vmatpush1.bf16.msra.mxu0 %v380
      %384 = vmatprep.subr.bf16.mxu0 0
      %385 = vmatpush1.bf16.msra.mxu0 0
      %386 = vmatprep.subr.bf16.mxu0 0
      %387 = vmatpush1.bf16.msra.mxu0 0
      %388 = vmatprep.subr.bf16.mxu0 0
      %389 = vmatpush1.bf16.msra.mxu0 0
      %390 = vmatprep.subr.bf16.mxu0 0
      %391 = vmatpush1.bf16.msra.mxu0 0
      %392 = vmatprep.subr.bf16.mxu0 0
      %393 = vmatpush1.bf16.msra.mxu0 0
      %394 = vmatprep.subr.bf16.mxu0 0
      %395 = vmatpush1.bf16.msra.mxu0 0
      %396 = vmatprep.subr.bf16.mxu0 0
      %397 = vmatpush1.bf16.msra.mxu0 0
      %398 = vmatprep.subr.bf16.mxu0 0
      %399 = vmatpush1.bf16.msra.mxu0 0
      %400 = vmatprep.subr.bf16.mxu0 0
      %401 = vmatpush1.bf16.msra.mxu0 0
      %402 = vmatprep.subr.bf16.mxu0 0
      %403 = vmatpush1.bf16.msra.mxu0 0
      %404 = vmatprep.subr.bf16.mxu0 0
      %405 = vmatpush1.bf16.msra.mxu0 0
      %406 = vmatprep.subr.bf16.mxu0 0
      %407 = vmatpush1.bf16.msra.mxu0 0
      %408 = vmatprep.subr.bf16.mxu0 0
      %409 = vmatpush1.bf16.msra.mxu0 0
      %410 = vmatprep.subr.bf16.mxu0 0
      %411 = vmatpush1.bf16.msra.mxu0 0
      %412 = vmatprep.subr.bf16.mxu0 0
      %413 = vmatpush1.bf16.msra.mxu0 0
      %414 = vmatprep.mubr.bf16.mxu0 0
      %415 = vmatmul.mubr.bf16.gmra.mrb[0].mxu0 %v367
      %v416 = vpop.f32.mrb[0].mxu0
      %v417 = vadd.f32 0.0, %v416
      %v418 = vpop.f32.mrb[0].mxu0
      %v419 = vpop.f32.mrb[0].mxu0
      %v420 = vadd.f32 0.0, %v419
      %v421 = vpop.f32.mrb[0].mxu0
      %422 = vmatprep.mubr.bf16.mxu0 0
      %423 = vmatmul.mubr.bf16.gmra.mrb[0].mxu0 %v370
      %v424 = vpop.f32.mrb[0].mxu0
      %v425 = vadd.f32 0.0, %v424
      %v426 = vpop.f32.mrb[0].mxu0
      %v427 = vpop.f32.mrb[0].mxu0
      %v428 = vadd.f32 0.0, %v427
      %v429 = vpop.f32.mrb[0].mxu0
      %430 = vmatprep.mubr.bf16.mxu0 0
      %431 = vmatmul.mubr.bf16.gmra.mrb[0].mxu0 %v373
      %v432 = vpop.f32.mrb[0].mxu0
      %v433 = vadd.f32 0.0, %v432
      %v434 = vpop.f32.mrb[0].mxu0
      %v435 = vpop.f32.mrb[0].mxu0
      %v436 = vadd.f32 0.0, %v435
      %v437 = vpop.f32.mrb[0].mxu0
      %438 = vmatprep.mubr.bf16.mxu0 0
      %439 = vmatmul.mubr.bf16.gmra.mrb[0].mxu0 %v376
      %v440 = vpop.f32.mrb[0].mxu0
      %v441 = vadd.f32 0.0, %v440
      %v442 = vpop.f32.mrb[0].mxu0
      %v443 = vpop.f32.mrb[0].mxu0
      %v444 = vadd.f32 0.0, %v443
      %v445 = vpop.f32.mrb[0].mxu0
      %446 = vdwg.mxu0
      %v447 = vadd.f32 %v328, %v417
      %v448 = vadd.f32 %v329, %v420
      %v449 = vadd.f32 %v330, %v425
      %v450 = vadd.f32 %v331, %v428
      %v451 = vadd.f32 %v332, %v433
      %v452 = vadd.f32 %v333, %v436
      %v453 = vadd.f32 %v334, %v441
      %v454 = vadd.f32 %v335, %v444
      %455 = vst.msk [vmem:[#allocation2] sm:$0xff] %vm365, %v447
      %456 = vst.msk [vmem:[#allocation2 + $0x8] sm:$0xff] %vm365, %v448
      %457 = vst.msk [vmem:[#allocation2 + $0x10] sm:$0xff] %vm365, %v449
      %458 = vst.msk [vmem:[#allocation2 + $0x18] sm:$0xff] %vm365, %v450
      %459 = vst.msk [vmem:[#allocation2 + $0x20] sm:$0xff] %vm365, %v451
      %460 = vst.msk [vmem:[#allocation2 + $0x28] sm:$0xff] %vm365, %v452
      %461 = vst.msk [vmem:[#allocation2 + $0x30] sm:$0xff] %vm365, %v453
      %462 = vst.msk [vmem:[#allocation2 + $0x38] sm:$0xff] %vm365, %v454
      // Predicated region
      $region41: #{rstb_forward.25} parent=35 // pred_check
        %p463 = pneg %p315
      $region42: #{rstb_forward.25} parent=35 // pred_check_branch
        %465 = sbr.rel (%p463) target = $region44
      $region43: #{rstb_forward.25} parent=35 // pred_region
        %v466 = vld [vmem:[#allocation2] sm:$0xff]
        %v467 = vld [vmem:[#allocation2 + $0x8] sm:$0xff]
        %v468 = vld [vmem:[#allocation2 + $0x10] sm:$0xff]
        %v469 = vld [vmem:[#allocation2 + $0x18] sm:$0xff]
        %v470 = vld [vmem:[#allocation2 + $0x20] sm:$0xff]
        %v471 = vld [vmem:[#allocation2 + $0x28] sm:$0xff]
        %v472 = vld [vmem:[#allocation2 + $0x30] sm:$0xff]
        %v473 = vld [vmem:[#allocation2 + $0x38] sm:$0xff]
        %v474 = vld [vmem:[%s295] sm:$0x1]
        %v476 = vlaneseq
        %v477 = vshrl.u32 %v476, 7
        %v478 = vsub.s32 0, %v477
        %v479 = vrot.slane %v474, %v478
        %v481 = vadd.f32 %v466, %v479
        %v482 = vadd.f32 %v467, %v479
        %v483 = vadd.f32 %v468, %v479
        %v484 = vadd.f32 %v469, %v479
        %v485 = vadd.f32 %v470, %v479
        %v486 = vadd.f32 %v471, %v479
        %v487 = vadd.f32 %v472, %v479
        %v488 = vadd.f32 %v473, %v479
        %v489 = vld [vmem:[%s303] sm:$0xff]
        %v490 = vld [vmem:[%s303 + $0x8] sm:$0xff]
        %v491 = vld [vmem:[%s303 + $0x10] sm:$0xff]
        %v492 = vld [vmem:[%s303 + $0x18] sm:$0xff]
        %v493 = vld [vmem:[%s303 + $0x20] sm:$0xff]
        %v494 = vld [vmem:[%s303 + $0x28] sm:$0xff]
        %v495 = vld [vmem:[%s303 + $0x30] sm:$0xff]
        %v496 = vld [vmem:[%s303 + $0x38] sm:$0xff]
        %v497 = vadd.f32 %v481, %v489
        %v498 = vadd.f32 %v482, %v490
        %v499 = vadd.f32 %v483, %v491
        %v500 = vadd.f32 %v484, %v492
        %v501 = vadd.f32 %v485, %v493
        %v502 = vadd.f32 %v486, %v494
        %v503 = vadd.f32 %v487, %v495
        %v504 = vadd.f32 %v488, %v496
        %505 = vst.msk [vmem:[%s312] sm:$0xff] %vm365, %v497
        %506 = vst.msk [vmem:[%s312 + $0x8] sm:$0xff] %vm365, %v498
        %507 = vst.msk [vmem:[%s312 + $0x10] sm:$0xff] %vm365, %v499
        %508 = vst.msk [vmem:[%s312 + $0x18] sm:$0xff] %vm365, %v500
        %509 = vst.msk [vmem:[%s312 + $0x20] sm:$0xff] %vm365, %v501
        %510 = vst.msk [vmem:[%s312 + $0x28] sm:$0xff] %vm365, %v502
        %511 = vst.msk [vmem:[%s312 + $0x30] sm:$0xff] %vm365, %v503
        %512 = vst.msk [vmem:[%s312 + $0x38] sm:$0xff] %vm365, %v504
      $region44: #{rstb_forward.25} parent=35 // pred_fallthru
        _
      %s513 = smul.u32 8, %s20
      %p514 = scmp.lt.s32.totalorder %s513, 15
      %s515 = scalar_select %p514, %s513, 15
      %p516 = scmp.lt.s32.totalorder %s21, 0
      %s517 = scalar_select %p516, %s21, 0
      %s518 = sadd.s32 %s517, %s515
      %s519 = smul.addr %s518, 8
      %s520 = scalar_lea.vmem %s4, %s519
      // Predicated region
      $region45: #{rstb_forward.25} parent=35 // pred_check
        %p521 = pneg %p164
      $region46: #{rstb_forward.25} parent=35 // pred_check_branch
        %523 = sbr.rel (%p521) target = $region48
      $region47: #{rstb_forward.25} parent=35 // pred_region
        %s524 = smul.u32 8, %s20
      $region48: #{rstb_forward.25} parent=35 // pred_fallthru
        _
    $region36: #{rstb_forward.25} parent=5 // pred_fallthru
      _
    %p525 = scmp.le.s32.totalorder 2, %s10
    // Predicated region
    $region49: #{rstb_forward.25} parent=5 // pred_check
      %p526 = pneg %p525
    $region50: #{rstb_forward.25} parent=5 // pred_check_branch
      %528 = sbr.rel (%p526) target = $region52
    $region51: #{rstb_forward.25} parent=5 // pred_region
      %s529 = ssub.s32 %s10, 2
      // Predicated region
      $region53: #{rstb_forward.25} parent=51 // pred_check
        %p530 = pneg %p170
      $region54: #{rstb_forward.25} parent=51 // pred_check_branch
        %532 = sbr.rel (%p530) target = $region56
      $region55: #{rstb_forward.25} parent=51 // pred_region
        %s533 = smul.u32 8, %s23
        %p534 = scmp.lt.s32.totalorder %s533, 15
        %s535 = scalar_select %p534, %s533, 15
        %p536 = scmp.lt.s32.totalorder %s24, 0
        %s537 = scalar_select %p536, %s24, 0
        %s538 = sadd.s32 %s537, %s535
        %s539 = smul.addr %s538, 8
        %s540 = scalar_lea.vmem %s4, %s539
      $region56: #{rstb_forward.25} parent=51 // pred_fallthru
        _
    $region52: #{rstb_forward.25} parent=5 // pred_fallthru
      _
  $region6: #{rstb_forward.25} parent=0 // loop_footer
    %s14 = sadd.s32 1, %s10
  $region7: #{rstb_forward.25} parent=0 // loop_footer_branch
    %9 = sbr.rel target = $region3
  $region8: #{rstb_forward.25} parent=0 // loop_exit
    _

// kernel: rstb_forward.27
$region0: #{rstb_forward.27}
  #allocation0 [shape = 'u32[]', space=smem, size = 0x4, offset = 0x4, fixed_abs, tag = 'smem constant byte address 0x4 - core index']
  #allocation1 [shape = 'u32[144,128]{1,0:T(1,128)}', space=vmem, size = 0x12000, scoped, tag = 'internal scratch']
  #allocation2 [shape = 'f32[64,16]{1,0:T(8,128)}', space=vmem, size = 0x8000, scoped, tag = 'scratch operand']
  %s0 = inlined_call_operand.vmem [shape: bf16[128,8], index: 0, kind: input, shape index: {}]
  %s1 = inlined_call_operand.vmem [shape: bf16[8,16], index: 1, kind: input, shape index: {}]
  %s2 = inlined_call_operand.vmem [shape: f32[1,16], index: 2, kind: input, shape index: {}]
  %s3 = inlined_call_operand.vmem [shape: bf16[128,16], index: 3, kind: output, shape index: {}]
  %s4 = sld [smem:[#allocation0]]
  $region53: #{rstb_forward.27} parent=0
    _
  %s6 = ssub.s32 1, %s4
  %s7 = scalar_select 0, %s6, %s4
  loop: start=0, step=1, limit=4
  $region2: #{rstb_forward.27} parent=0 // loop_pre_header
    _
  $region3: #{rstb_forward.27} parent=0 // loop_header
    %s9 = sphi 0, %s13
    %p10 = scmp.ge.s32.totalorder %s9, 4
    %s16 = sphi 0, %s35
    %s17 = sphi 0, %s31
    %s18 = sphi 0, %s27
    %s19 = sphi 0, %s16
    %s20 = sphi 0, %s17
    %s21 = sphi 0, %s18
    %s22 = sphi 0, %s19
    %s23 = sphi 0, %s20
    %s24 = sphi 0, %s21
    %s40 = sphi 0, %s42
    %s43 = sphi 0, %s40
    %s44 = sphi 0, %s43
    %s60 = sphi 0, %s44
    %s68 = sphi 0, %s70
    %s71 = sphi 0, %s68
    %s72 = sphi 0, %s71
    %s88 = sphi 0, %s72
    %s94 = sphi 0, %s96
    %s97 = sphi 0, %s94
    %s98 = sphi 0, %s97
    %s114 = sphi 0, %s98
    %s122 = sphi 0, %s124
    %s125 = sphi 0, %s122
    %s126 = sphi 0, %s125
    %s142 = sphi 0, %s126
  $region4: #{rstb_forward.27} parent=0 // loop_header_branch
    %12 = sbr.rel (%p10) target = $region8
  $region5: #{rstb_forward.27} parent=0 // loop_body
    %s14 = ssub.s32 %s9, 1
    %s15 = ssub.s32 %s9, 2
    %s25 = sadd.s32 1, %s18
    %p26 = scmp.ge.s32.totalorder %s25, 1
    %s27 = scalar_select %p26, 0, %s25
    %s28 = sadd.s32 1, %s17
    %s29 = scalar_select %p26, %s28, %s17
    %p30 = scmp.ge.s32.totalorder %s29, 1
    %s31 = scalar_select %p30, 0, %s29
    %s32 = sadd.s32 1, %s16
    %s33 = scalar_select %p30, %s32, %s16
    %p34 = scmp.ge.s32.totalorder %s33, 2
    %s35 = scalar_select %p34, 0, %s33
    %s36 = ssub.s32 %s16, %s35
    %s37 = ssub.s32 %s18, %s27
    %s38 = sor.u32 %s36, %s37
    %p39 = scmp.eq.s32.totalorder %s38, 0
    %s41 = sadd.s32 %s40, 1
    %s42 = scalar_select %p39, %s40, %s41
    %p45 = pneg %p39
    %p46 = scmp.eq.s32.totalorder %s9, 1
    %p47 = por %p45, %p46
    %p48 = scmp.ne.s32.totalorder %s40, %s43
    %p49 = scmp.eq.s32.totalorder %s9, 0
    %p50 = por %p48, %p49
    %p51 = scmp.ne.s32.totalorder %s40, %s43
    %p52 = scmp.eq.s32.totalorder %s14, 1
    %p53 = por %p51, %p52
    %p54 = scmp.ne.s32.totalorder %s43, %s44
    %p55 = scmp.eq.s32.totalorder %s14, 0
    %p56 = por %p54, %p55
    %p57 = scmp.ne.s32.totalorder %s43, %s44
    %p58 = scmp.eq.s32.totalorder %s15, 1
    %p59 = por %p57, %p58
    %p61 = scmp.ne.s32.totalorder %s44, %s60
    %p62 = scmp.eq.s32.totalorder %s15, 0
    %p63 = por %p61, %p62
    %s64 = ssub.s32 %s18, %s27
    %s65 = ssub.s32 %s17, %s31
    %s66 = sor.u32 %s64, %s65
    %p67 = scmp.eq.s32.totalorder %s66, 0
    %s69 = sadd.s32 %s68, 1
    %s70 = scalar_select %p67, %s68, %s69
    %p73 = pneg %p67
    %p74 = scmp.eq.s32.totalorder %s9, 1
    %p75 = por %p73, %p74
    %p76 = scmp.ne.s32.totalorder %s68, %s71
    %p77 = scmp.eq.s32.totalorder %s9, 0
    %p78 = por %p76, %p77
    %p79 = scmp.ne.s32.totalorder %s68, %s71
    %p80 = scmp.eq.s32.totalorder %s14, 1
    %p81 = por %p79, %p80
    %p82 = scmp.ne.s32.totalorder %s71, %s72
    %p83 = scmp.eq.s32.totalorder %s14, 0
    %p84 = por %p82, %p83
    %p85 = scmp.ne.s32.totalorder %s71, %s72
    %p86 = scmp.eq.s32.totalorder %s15, 1
    %p87 = por %p85, %p86
    %p89 = scmp.ne.s32.totalorder %s72, %s88
    %p90 = scmp.eq.s32.totalorder %s15, 0
    %p91 = por %p89, %p90
    %s92 = ssub.s32 %s17, %s31
    %p93 = scmp.eq.s32.totalorder %s92, 0
    %s95 = sadd.s32 %s94, 1
    %s96 = scalar_select %p93, %s94, %s95
    %p99 = pneg %p93
    %p100 = scmp.eq.s32.totalorder %s9, 1
    %p101 = por %p99, %p100
    %p102 = scmp.ne.s32.totalorder %s94, %s97
    %p103 = scmp.eq.s32.totalorder %s9, 0
    %p104 = por %p102, %p103
    %p105 = scmp.ne.s32.totalorder %s94, %s97
    %p106 = scmp.eq.s32.totalorder %s14, 1
    %p107 = por %p105, %p106
    %p108 = scmp.ne.s32.totalorder %s97, %s98
    %p109 = scmp.eq.s32.totalorder %s14, 0
    %p110 = por %p108, %p109
    %p111 = scmp.ne.s32.totalorder %s97, %s98
    %p112 = scmp.eq.s32.totalorder %s15, 1
    %p113 = por %p111, %p112
    %p115 = scmp.ne.s32.totalorder %s98, %s114
    %p116 = scmp.eq.s32.totalorder %s15, 0
    %p117 = por %p115, %p116
    %s118 = ssub.s32 %s16, %s35
    %s119 = ssub.s32 %s17, %s31
    %s120 = sor.u32 %s118, %s119
    %p121 = scmp.eq.s32.totalorder %s120, 0
    %s123 = sadd.s32 %s122, 1
    %s124 = scalar_select %p121, %s122, %s123
    %p127 = pneg %p121
    %p128 = scmp.eq.s32.totalorder %s9, 1
    %p129 = por %p127, %p128
    %p130 = scmp.ne.s32.totalorder %s122, %s125
    %p131 = scmp.eq.s32.totalorder %s9, 0
    %p132 = por %p130, %p131
    %p133 = scmp.ne.s32.totalorder %s122, %s125
    %p134 = scmp.eq.s32.totalorder %s14, 1
    %p135 = por %p133, %p134
    %p136 = scmp.ne.s32.totalorder %s125, %s126
    %p137 = scmp.eq.s32.totalorder %s14, 0
    %p138 = por %p136, %p137
    %p139 = scmp.ne.s32.totalorder %s125, %s126
    %p140 = scmp.eq.s32.totalorder %s15, 1
    %p141 = por %p139, %p140
    %p143 = scmp.ne.s32.totalorder %s126, %s142
    %p144 = scmp.eq.s32.totalorder %s15, 0
    %p145 = por %p143, %p144
    %p146 = scmp.le.s32.totalorder 1, %s9
    %p147 = scmp.lt.s32.totalorder %s9, 3
    %p148 = pnand %p146, %p147
    %p149 = pneg %p148
    // Predicated region
    $region9: #{rstb_forward.27} parent=5 // pred_check
      _
    $region10: #{rstb_forward.27} parent=5 // pred_check_branch
      %151 = sbr.rel (%p148) target = $region12
    $region11: #{rstb_forward.27} parent=5 // pred_region
      %s152 = ssub.s32 %s9, 1
      // Predicated region
      $region13: #{rstb_forward.27} parent=11 // pred_check
        %p153 = pneg %p84
      $region14: #{rstb_forward.27} parent=11 // pred_check_branch
        %155 = sbr.rel (%p153) target = $region16
      $region15: #{rstb_forward.27} parent=11 // pred_region
        %p156 = scmp.lt.s32.totalorder %s21, 0
        %s157 = scalar_select %p156, %s21, 0
        %p158 = scmp.lt.s32.totalorder %s20, 0
        %s159 = scalar_select %p158, %s20, 0
        %s160 = sadd.s32 %s159, %s157
        %s161 = smul.addr %s160, 4
        %s162 = scalar_lea.vmem %s1, %s161
      $region16: #{rstb_forward.27} parent=11 // pred_fallthru
        _
      // Predicated region
      $region17: #{rstb_forward.27} parent=11 // pred_check
        %p163 = pneg %p110
      $region18: #{rstb_forward.27} parent=11 // pred_check_branch
        %165 = sbr.rel (%p163) target = $region20
      $region19: #{rstb_forward.27} parent=11 // pred_region
        %p166 = scmp.lt.s32.totalorder %s20, 0
        %s167 = scalar_select %p166, %s20, 0
        %s168 = scalar_lea.vmem %s2, %s167
      $region20: #{rstb_forward.27} parent=11 // pred_fallthru
        _
    $region12: #{rstb_forward.27} parent=5 // pred_fallthru
      _
    %p169 = scmp.lt.s32.totalorder %s9, 2
    // Predicated region
    $region21: #{rstb_forward.27} parent=5 // pred_check
      %p170 = pneg %p169
    $region22: #{rstb_forward.27} parent=5 // pred_check_branch
      %172 = sbr.rel (%p170) target = $region24
    $region23: #{rstb_forward.27} parent=5 // pred_region
      // Predicated region
      $region25: #{rstb_forward.27} parent=23 // pred_check
        %p173 = pneg %p50
      $region26: #{rstb_forward.27} parent=23 // pred_check_branch
        %175 = sbr.rel (%p173) target = $region28
      $region27: #{rstb_forward.27} parent=23 // pred_region
        %s176 = smul.u32 8, %s16
        %p177 = scmp.lt.s32.totalorder %s176, 15
        %s178 = scalar_select %p177, %s176, 15
        %p179 = scmp.lt.s32.totalorder %s18, 0
        %s180 = scalar_select %p179, %s18, 0
        %s181 = sadd.s32 %s180, %s178
        %s182 = smul.addr %s181, 4
        %s183 = scalar_lea.vmem %s0, %s182
        %s184 = smul.u32 8, %s16
      $region28: #{rstb_forward.27} parent=23 // pred_fallthru
        _
    $region24: #{rstb_forward.27} parent=5 // pred_fallthru
      _
    %p185 = scmp.le.s32.totalorder 1, %s9
    %p186 = scmp.lt.s32.totalorder %s9, 3
    %p187 = pnand %p185, %p186
    %p188 = pneg %p187
    // Predicated region
    $region29: #{rstb_forward.27} parent=5 // pred_check
      _
    $region30: #{rstb_forward.27} parent=5 // pred_check_branch
      %190 = sbr.rel (%p187) target = $region32
    $region31: #{rstb_forward.27} parent=5 // pred_region
      %s191 = ssub.s32 %s9, 1
      %s192 = smul.u32 8, %s19
      %p193 = scmp.lt.s32.totalorder %s192, 15
      %s194 = scalar_select %p193, %s192, 15
      %p195 = scmp.lt.s32.totalorder %s21, 0
      %s196 = scalar_select %p195, %s21, 0
      %s197 = sadd.s32 %s196, %s194
      %s198 = smul.addr %s197, 4
      %s199 = scalar_lea.vmem %s0, %s198
      %p200 = pneg %p56
      %p201 = pneg %p53
      %p202 = scmp.lt.s32.totalorder %s21, 0
      %s203 = scalar_select %p202, %s21, 0
      %p204 = scmp.lt.s32.totalorder %s20, 0
      %s205 = scalar_select %p204, %s20, 0
      %s206 = sadd.s32 %s205, %s203
      %s207 = smul.addr %s206, 4
      %s208 = scalar_lea.vmem %s1, %s207
      %p209 = pneg %p84
      %p210 = pneg %p81
      %p211 = scmp.lt.s32.totalorder %s20, 0
      %s212 = scalar_select %p211, %s20, 0
      %s213 = scalar_lea.vmem %s2, %s212
      %p214 = pneg %p110
      %p215 = pneg %p107
      %p216 = pneg %p138
      %p217 = pneg %p135
      %s218 = smul.u32 8, %s19
      %p219 = scmp.lt.s32.totalorder %s218, 15
      %s220 = scalar_select %p219, %s218, 15
      %p221 = scmp.lt.s32.totalorder %s20, 0
      %s222 = scalar_select %p221, %s20, 0
      %s223 = sadd.s32 %s222, %s220
      %s224 = smul.addr %s223, 4
      %s225 = scalar_lea.vmem %s3, %s224
      %s226 = smul.u32 8, %s19
      %p227 = scmp.lt.s32.totalorder %s226, 15
      %s228 = scalar_select %p227, %s226, 15
      %p229 = scmp.lt.s32.totalorder %s21, 0
      %s230 = scalar_select %p229, %s21, 0
      %s231 = sadd.s32 %s230, %s228
      %s232 = smul.addr %s231, 4
      %s233 = scalar_lea.vmem %s0, %s232
      %s234 = smul.u32 8, %s19
      %p235 = scmp.lt.s32.totalorder %s21, 0
      %s236 = scalar_select %p235, %s21, 0
      %p237 = scmp.lt.s32.totalorder %s20, 0
      %s238 = scalar_select %p237, %s20, 0
      %s239 = sadd.s32 %s238, %s236
      %s240 = smul.addr %s239, 4
      %s241 = scalar_lea.vmem %s1, %s240
      %p242 = scmp.lt.s32.totalorder %s20, 0
      %s243 = scalar_select %p242, %s20, 0
      %s244 = scalar_lea.vmem %s2, %s243
      %s245 = smul.u32 8, %s19
      %p246 = scmp.lt.s32.totalorder %s245, 15
      %s247 = scalar_select %p246, %s245, 15
      %p248 = scmp.lt.s32.totalorder %s20, 0
      %s249 = scalar_select %p248, %s20, 0
      %s250 = sadd.s32 %s249, %s247
      %s251 = smul.addr %s250, 4
      %s252 = scalar_lea.vmem %s3, %s251
      %s253 = smul.u32 8, %s19
      %p255 = scmp.eq.s32.totalorder %s21, 0
      // Predicated region
      $region33: #{rstb_forward.27} parent=31 // pred_check
        %p256 = pneg %p255
      $region34: #{rstb_forward.27} parent=31 // pred_check_branch
        %258 = sbr.rel (%p256) target = $region36
      $region35: #{rstb_forward.27} parent=31 // pred_region
        %vm259 = vcmask 130048
        %260 = vst.msk [vmem:[#allocation2] sm:$0xff] %vm259, 0.0
        %261 = vst.msk [vmem:[#allocation2 + $0x8] sm:$0xff] %vm259, 0.0
        %262 = vst.msk [vmem:[#allocation2 + $0x10] sm:$0xff] %vm259, 0.0
        %263 = vst.msk [vmem:[#allocation2 + $0x18] sm:$0xff] %vm259, 0.0
        %264 = vst.msk [vmem:[#allocation2 + $0x20] sm:$0xff] %vm259, 0.0
        %265 = vst.msk [vmem:[#allocation2 + $0x28] sm:$0xff] %vm259, 0.0
        %266 = vst.msk [vmem:[#allocation2 + $0x30] sm:$0xff] %vm259, 0.0
        %267 = vst.msk [vmem:[#allocation2 + $0x38] sm:$0xff] %vm259, 0.0
      $region36: #{rstb_forward.27} parent=31 // pred_fallthru
        _
      %v268 = vld [vmem:[#allocation2] sm:$0xff]
      %v269 = vld [vmem:[#allocation2 + $0x8] sm:$0xff]
      %v270 = vld [vmem:[#allocation2 + $0x10] sm:$0xff]
      %v271 = vld [vmem:[#allocation2 + $0x18] sm:$0xff]
      %v272 = vld [vmem:[#allocation2 + $0x20] sm:$0xff]
      %v273 = vld [vmem:[#allocation2 + $0x28] sm:$0xff]
      %v274 = vld [vmem:[#allocation2 + $0x30] sm:$0xff]
      %v275 = vld [vmem:[#allocation2 + $0x38] sm:$0xff]
      %v276 = vld [vmem:[%s233] sm:$0xf]
      %v277 = vld [vmem:[%s233 + $0x4] sm:$0xf]
      %v278 = vld [vmem:[%s233 + $0x8] sm:$0xf]
      %v279 = vld [vmem:[%s233 + $0xc] sm:$0xf]
      %v280 = vld [vmem:[%s233 + $0x10] sm:$0xf]
      %v281 = vld [vmem:[%s233 + $0x14] sm:$0xf]
      %v282 = vld [vmem:[%s233 + $0x18] sm:$0xf]
      %v283 = vld [vmem:[%s233 + $0x1c] sm:$0xf]
      %v284 = vld [vmem:[%s241] sm:$0xf]
      %v293 = vunpack.c.l.b16 %v276
      %v294 = vunpack.c.l.b16 %v277
      %v295 = vunpack.c.l.b16 %v278
      %v296 = vunpack.c.l.b16 %v279
      %v297 = vunpack.c.l.b16 %v280
      %v298 = vunpack.c.l.b16 %v281
      %v299 = vunpack.c.l.b16 %v282
      %v300 = vunpack.c.l.b16 %v283
      %v301 = vpack.c.b16 %v294, %v293
      %v302 = vpack.c.b16 %v296, %v295
      %v303 = vpack.c.b16 %v298, %v297
      %v304 = vpack.c.b16 %v300, %v299
      %vm305 = vcmask 64512
      %v307 = vsel %vm305, %v301, 0
      %v310 = vsel %vm305, %v302, 0
      %v313 = vsel %vm305, %v303, 0
      %v316 = vsel %vm305, %v304, 0
      %vm318 = vcmask 1043456
      %v320 = vsel %vm318, %v284, 0
      %322 = vmatprep.subr.bf16.mxu0 0
      %323 = vmatpush1.bf16.msra.mxu0 %v320
      %324 = vmatprep.subr.bf16.mxu0 0
      %325 = vmatpush1.bf16.msra.mxu0 0
      %326 = vmatprep.subr.bf16.mxu0 0
      %327 = vmatpush1.bf16.msra.mxu0 0
      %328 = vmatprep.subr.bf16.mxu0 0
      %329 = vmatpush1.bf16.msra.mxu0 0
      %330 = vmatprep.subr.bf16.mxu0 0
      %331 = vmatpush1.bf16.msra.mxu0 0
      %332 = vmatprep.subr.bf16.mxu0 0
      %333 = vmatpush1.bf16.msra.mxu0 0
      %334 = vmatprep.subr.bf16.mxu0 0
      %335 = vmatpush1.bf16.msra.mxu0 0
      %336 = vmatprep.subr.bf16.mxu0 0
      %337 = vmatpush1.bf16.msra.mxu0 0
      %338 = vmatprep.subr.bf16.mxu0 0
      %339 = vmatpush1.bf16.msra.mxu0 0
      %340 = vmatprep.subr.bf16.mxu0 0
      %341 = vmatpush1.bf16.msra.mxu0 0
      %342 = vmatprep.subr.bf16.mxu0 0
      %343 = vmatpush1.bf16.msra.mxu0 0
      %344 = vmatprep.subr.bf16.mxu0 0
      %345 = vmatpush1.bf16.msra.mxu0 0
      %346 = vmatprep.subr.bf16.mxu0 0
      %347 = vmatpush1.bf16.msra.mxu0 0
      %348 = vmatprep.subr.bf16.mxu0 0
      %349 = vmatpush1.bf16.msra.mxu0 0
      %350 = vmatprep.subr.bf16.mxu0 0
      %351 = vmatpush1.bf16.msra.mxu0 0
      %352 = vmatprep.subr.bf16.mxu0 0
      %353 = vmatpush1.bf16.msra.mxu0 0
      %354 = vmatprep.mubr.bf16.mxu0 0
      %355 = vmatmul.mubr.bf16.gmra.mrb[0].mxu0 %v307
      %v356 = vpop.f32.mrb[0].mxu0
      %v357 = vadd.f32 0.0, %v356
      %v358 = vpop.f32.mrb[0].mxu0
      %v359 = vpop.f32.mrb[0].mxu0
      %v360 = vadd.f32 0.0, %v359
      %v361 = vpop.f32.mrb[0].mxu0
      %362 = vmatprep.mubr.bf16.mxu0 0
      %363 = vmatmul.mubr.bf16.gmra.mrb[0].mxu0 %v310
      %v364 = vpop.f32.mrb[0].mxu0
      %v365 = vadd.f32 0.0, %v364
      %v366 = vpop.f32.mrb[0].mxu0
      %v367 = vpop.f32.mrb[0].mxu0
      %v368 = vadd.f32 0.0, %v367
      %v369 = vpop.f32.mrb[0].mxu0
      %370 = vmatprep.mubr.bf16.mxu0 0
      %371 = vmatmul.mubr.bf16.gmra.mrb[0].mxu0 %v313
      %v372 = vpop.f32.mrb[0].mxu0
      %v373 = vadd.f32 0.0, %v372
      %v374 = vpop.f32.mrb[0].mxu0
      %v375 = vpop.f32.mrb[0].mxu0
      %v376 = vadd.f32 0.0, %v375
      %v377 = vpop.f32.mrb[0].mxu0
      %378 = vmatprep.mubr.bf16.mxu0 0
      %379 = vmatmul.mubr.bf16.gmra.mrb[0].mxu0 %v316
      %v380 = vpop.f32.mrb[0].mxu0
      %v381 = vadd.f32 0.0, %v380
      %v382 = vpop.f32.mrb[0].mxu0
      %v383 = vpop.f32.mrb[0].mxu0
      %v384 = vadd.f32 0.0, %v383
      %v385 = vpop.f32.mrb[0].mxu0
      %386 = vdwg.mxu0
      %v387 = vadd.f32 %v268, %v357
      %v388 = vadd.f32 %v269, %v360
      %v389 = vadd.f32 %v270, %v365
      %v390 = vadd.f32 %v271, %v368
      %v391 = vadd.f32 %v272, %v373
      %v392 = vadd.f32 %v273, %v376
      %v393 = vadd.f32 %v274, %v381
      %v394 = vadd.f32 %v275, %v384
      %vm395 = vcmask 130048
      %396 = vst.msk [vmem:[#allocation2] sm:$0xff] %vm395, %v387
      %397 = vst.msk [vmem:[#allocation2 + $0x8] sm:$0xff] %vm395, %v388
      %398 = vst.msk [vmem:[#allocation2 + $0x10] sm:$0xff] %vm395, %v389
      %399 = vst.msk [vmem:[#allocation2 + $0x18] sm:$0xff] %vm395, %v390
      %400 = vst.msk [vmem:[#allocation2 + $0x20] sm:$0xff] %vm395, %v391
      %401 = vst.msk [vmem:[#allocation2 + $0x28] sm:$0xff] %vm395, %v392
      %402 = vst.msk [vmem:[#allocation2 + $0x30] sm:$0xff] %vm395, %v393
      %403 = vst.msk [vmem:[#allocation2 + $0x38] sm:$0xff] %vm395, %v394
      // Predicated region
      $region37: #{rstb_forward.27} parent=31 // pred_check
        %p404 = pneg %p255
      $region38: #{rstb_forward.27} parent=31 // pred_check_branch
        %406 = sbr.rel (%p404) target = $region40
      $region39: #{rstb_forward.27} parent=31 // pred_region
        %v407 = vld [vmem:[#allocation2] sm:$0xff]
        %v408 = vld [vmem:[#allocation2 + $0x8] sm:$0xff]
        %v409 = vld [vmem:[#allocation2 + $0x10] sm:$0xff]
        %v410 = vld [vmem:[#allocation2 + $0x18] sm:$0xff]
        %v411 = vld [vmem:[#allocation2 + $0x20] sm:$0xff]
        %v412 = vld [vmem:[#allocation2 + $0x28] sm:$0xff]
        %v413 = vld [vmem:[#allocation2 + $0x30] sm:$0xff]
        %v414 = vld [vmem:[#allocation2 + $0x38] sm:$0xff]
        %v415 = vld [vmem:[%s244] sm:$0x1]
        %v417 = vlaneseq
        %v418 = vshrl.u32 %v417, 7
        %v419 = vsub.s32 0, %v418
        %v420 = vrot.slane %v415, %v419
        %v422 = vadd.f32 %v407, %v420
        %v423 = vadd.f32 %v408, %v420
        %v424 = vadd.f32 %v409, %v420
        %v425 = vadd.f32 %v410, %v420
        %v426 = vadd.f32 %v411, %v420
        %v427 = vadd.f32 %v412, %v420
        %v428 = vadd.f32 %v413, %v420
        %v429 = vadd.f32 %v414, %v420
        %v430 = vmul.f32 %v422, 0.5
        %v431 = vmul.f32 %v423, 0.5
        %v432 = vmul.f32 %v424, 0.5
        %v433 = vmul.f32 %v425, 0.5
        %v434 = vmul.f32 %v426, 0.5
        %v435 = vmul.f32 %v427, 0.5
        %v436 = vmul.f32 %v428, 0.5
        %v437 = vmul.f32 %v429, 0.5
        %v438 = vmul.f32 %v422, 0.70710677
        %v439 = vmul.f32 %v423, 0.70710677
        %v440 = vmul.f32 %v424, 0.70710677
        %v441 = vmul.f32 %v425, 0.70710677
        %v442 = vmul.f32 %v426, 0.70710677
        %v443 = vmul.f32 %v427, 0.70710677
        %v444 = vmul.f32 %v428, 0.70710677
        %v445 = vmul.f32 %v429, 0.70710677
        %v446 = vand.u32 2147483647, %v438
        %v447 = vand.u32 2147483647, %v439
        %v448 = vand.u32 2147483647, %v440
        %v449 = vand.u32 2147483647, %v441
        %v450 = vand.u32 2147483647, %v442
        %v451 = vand.u32 2147483647, %v443
        %v452 = vand.u32 2147483647, %v444
        %v453 = vand.u32 2147483647, %v445
        %v454 = vmul.f32 %v446, 0.3275911
        %v455 = vmul.f32 %v447, 0.3275911
        %v456 = vmul.f32 %v448, 0.3275911
        %v457 = vmul.f32 %v449, 0.3275911
        %v458 = vmul.f32 %v450, 0.3275911
        %v459 = vmul.f32 %v451, 0.3275911
        %v460 = vmul.f32 %v452, 0.3275911
        %v461 = vmul.f32 %v453, 0.3275911
        %v462 = vadd.f32 %v454, 1.0
        %v463 = vadd.f32 %v455, 1.0
        %v464 = vadd.f32 %v456, 1.0
        %v465 = vadd.f32 %v457, 1.0
        %v466 = vadd.f32 %v458, 1.0
        %v467 = vadd.f32 %v459, 1.0
        %v468 = vadd.f32 %v460, 1.0
        %v469 = vadd.f32 %v461, 1.0
        %v470 = vrcp.pop %v462
        %v471 = vmul.f32 1.0, %v470
        %v472 = vrcp.pop %v463
        %v473 = vmul.f32 1.0, %v472
        %v474 = vrcp.pop %v464
        %v475 = vmul.f32 1.0, %v474
        %v476 = vrcp.pop %v465
        %v477 = vmul.f32 1.0, %v476
        %v478 = vrcp.pop %v466
        %v479 = vmul.f32 1.0, %v478
        %v480 = vrcp.pop %v467
        %v481 = vmul.f32 1.0, %v480
        %v482 = vrcp.pop %v468
        %v483 = vmul.f32 1.0, %v482
        %v484 = vrcp.pop %v469
        %v485 = vmul.f32 1.0, %v484
        %v486 = vmul.f32 %v471, 1.0614054
        %v487 = vmul.f32 %v473, 1.0614054
        %v488 = vmul.f32 %v475, 1.0614054
        %v489 = vmul.f32 %v477, 1.0614054
        %v490 = vmul.f32 %v479, 1.0614054
        %v491 = vmul.f32 %v481, 1.0614054
        %v492 = vmul.f32 %v483, 1.0614054
        %v493 = vmul.f32 %v485, 1.0614054
        %v494 = vadd.f32 %v486, -1.4531521
        %v495 = vadd.f32 %v487, -1.4531521
        %v496 = vadd.f32 %v488, -1.4531521
        %v497 = vadd.f32 %v489, -1.4531521
        %v498 = vadd.f32 %v490, -1.4531521
        %v499 = vadd.f32 %v491, -1.4531521
        %v500 = vadd.f32 %v492, -1.4531521
        %v501 = vadd.f32 %v493, -1.4531521
        %v502 = vmul.f32 %v494, %v471
        %v503 = vmul.f32 %v495, %v473
        %v504 = vmul.f32 %v496, %v475
        %v505 = vmul.f32 %v497, %v477
        %v506 = vmul.f32 %v498, %v479
        %v507 = vmul.f32 %v499, %v481
        %v508 = vmul.f32 %v500, %v483
        %v509 = vmul.f32 %v501, %v485
        %v510 = vadd.f32 %v502, 1.4214138
        %v511 = vadd.f32 %v503, 1.4214138
        %v512 = vadd.f32 %v504, 1.4214138
        %v513 = vadd.f32 %v505, 1.4214138
        %v514 = vadd.f32 %v506, 1.4214138
        %v515 = vadd.f32 %v507, 1.4214138
        %v516 = vadd.f32 %v508, 1.4214138
        %v517 = vadd.f32 %v509, 1.4214138
        %v518 = vmul.f32 %v510, %v471
        %v519 = vmul.f32 %v511, %v473
        %v520 = vmul.f32 %v512, %v475
        %v521 = vmul.f32 %v513, %v477
        %v522 = vmul.f32 %v514, %v479
        %v523 = vmul.f32 %v515, %v481
        %v524 = vmul.f32 %v516, %v483
        %v525 = vmul.f32 %v517, %v485
        %v526 = vadd.f32 %v518, -0.28449672
        %v527 = vadd.f32 %v519, -0.28449672
        %v528 = vadd.f32 %v520, -0.28449672
        %v529 = vadd.f32 %v521, -0.28449672
        %v530 = vadd.f32 %v522, -0.28449672
        %v531 = vadd.f32 %v523, -0.28449672
        %v532 = vadd.f32 %v524, -0.28449672
        %v533 = vadd.f32 %v525, -0.28449672
        %v534 = vmul.f32 %v526, %v471
        %v535 = vmul.f32 %v527, %v473
        %v536 = vmul.f32 %v528, %v475
        %v537 = vmul.f32 %v529, %v477
        %v538 = vmul.f32 %v530, %v479
        %v539 = vmul.f32 %v531, %v481
        %v540 = vmul.f32 %v532, %v483
        %v541 = vmul.f32 %v533, %v485
        %v542 = vadd.f32 %v534, 0.2548296
        %v543 = vadd.f32 %v535, 0.2548296
        %v544 = vadd.f32 %v536, 0.2548296
        %v545 = vadd.f32 %v537, 0.2548296
        %v546 = vadd.f32 %v538, 0.2548296
        %v547 = vadd.f32 %v539, 0.2548296
        %v548 = vadd.f32 %v540, 0.2548296
        %v549 = vadd.f32 %v541, 0.2548296
        %v550 = vmul.f32 %v542, %v471
        %v551 = vmul.f32 %v543, %v473
        %v552 = vmul.f32 %v544, %v475
        %v553 = vmul.f32 %v545, %v477
        %v554 = vmul.f32 %v546, %v479
        %v555 = vmul.f32 %v547, %v481
        %v556 = vmul.f32 %v548, %v483
        %v557 = vmul.f32 %v549, %v485
        %v558 = vsub.f32 0.0, %v446
        %v559 = vsub.f32 0.0, %v447
        %v560 = vsub.f32 0.0, %v448
        %v561 = vsub.f32 0.0, %v449
        %v562 = vsub.f32 0.0, %v450
        %v563 = vsub.f32 0.0, %v451
        %v564 = vsub.f32 0.0, %v452
        %v565 = vsub.f32 0.0, %v453
        %v566 = vmul.f32 %v558, %v446
        %v567 = vmul.f32 %v559, %v447
        %v568 = vmul.f32 %v560, %v448
        %v569 = vmul.f32 %v561, %v449
        %v570 = vmul.f32 %v562, %v450
        %v571 = vmul.f32 %v563, %v451
        %v572 = vmul.f32 %v564, %v452
        %v573 = vmul.f32 %v565, %v453
        %v574 = vmul.f32 %v566, 1.442695
        %v575 = vpow.pop %v574
        %v576 = vmul.f32 %v567, 1.442695
        %v577 = vpow.pop %v576
        %v578 = vmul.f32 %v568, 1.442695
        %v579 = vpow.pop %v578
        %v580 = vmul.f32 %v569, 1.442695
        %v581 = vpow.pop %v580
        %v582 = vmul.f32 %v570, 1.442695
        %v583 = vpow.pop %v582
        %v584 = vmul.f32 %v571, 1.442695
        %v585 = vpow.pop %v584
        %v586 = vmul.f32 %v572, 1.442695
        %v587 = vpow.pop %v586
        %v588 = vmul.f32 %v573, 1.442695
        %v589 = vpow.pop %v588
        %v590 = vmul.f32 %v550, %v575
        %v591 = vmul.f32 %v551, %v577
        %v592 = vmul.f32 %v552, %v579
        %v593 = vmul.f32 %v553, %v581
        %v594 = vmul.f32 %v554, %v583
        %v595 = vmul.f32 %v555, %v585
        %v596 = vmul.f32 %v556, %v587
        %v597 = vmul.f32 %v557, %v589
        %v598 = vsub.f32 1.0, %v590
        %v599 = vsub.f32 1.0, %v591
        %v600 = vsub.f32 1.0, %v592
        %v601 = vsub.f32 1.0, %v593
        %v602 = vsub.f32 1.0, %v594
        %v603 = vsub.f32 1.0, %v595
        %v604 = vsub.f32 1.0, %v596
        %v605 = vsub.f32 1.0, %v597
        %vm606 = vcmp.lt.f32.partialorder %v438, 0.0
        %vm607 = vcmp.lt.f32.partialorder %v439, 0.0
        %vm608 = vcmp.lt.f32.partialorder %v440, 0.0
        %vm609 = vcmp.lt.f32.partialorder %v441, 0.0
        %vm610 = vcmp.lt.f32.partialorder %v442, 0.0
        %vm611 = vcmp.lt.f32.partialorder %v443, 0.0
        %vm612 = vcmp.lt.f32.partialorder %v444, 0.0
        %vm613 = vcmp.lt.f32.partialorder %v445, 0.0
        %v614 = vsub.f32 0.0, %v598
        %v615 = vsub.f32 0.0, %v599
        %v616 = vsub.f32 0.0, %v600
        %v617 = vsub.f32 0.0, %v601
        %v618 = vsub.f32 0.0, %v602
        %v619 = vsub.f32 0.0, %v603
        %v620 = vsub.f32 0.0, %v604
        %v621 = vsub.f32 0.0, %v605
        %v622 = vsel %vm606, %v614, %v598
        %v623 = vsel %vm607, %v615, %v599
        %v624 = vsel %vm608, %v616, %v600
        %v625 = vsel %vm609, %v617, %v601
        %v626 = vsel %vm610, %v618, %v602
        %v627 = vsel %vm611, %v619, %v603
        %v628 = vsel %vm612, %v620, %v604
        %v629 = vsel %vm613, %v621, %v605
        %v630 = vadd.f32 %v622, 1.0
        %v631 = vadd.f32 %v623, 1.0
        %v632 = vadd.f32 %v624, 1.0
        %v633 = vadd.f32 %v625, 1.0
        %v634 = vadd.f32 %v626, 1.0
        %v635 = vadd.f32 %v627, 1.0
        %v636 = vadd.f32 %v628, 1.0
        %v637 = vadd.f32 %v629, 1.0
        %v638 = vmul.f32 %v430, %v630
        %v639 = vmul.f32 %v431, %v631
        %v640 = vmul.f32 %v432, %v632
        %v641 = vmul.f32 %v433, %v633
        %v642 = vmul.f32 %v434, %v634
        %v643 = vmul.f32 %v435, %v635
        %v644 = vmul.f32 %v436, %v636
        %v645 = vmul.f32 %v437, %v637
        %v646 = vpack.c.bf16 %v639, %v638
        %v647 = vpack.c.bf16 %v641, %v640
        %v648 = vpack.c.bf16 %v643, %v642
        %v649 = vpack.c.bf16 %v645, %v644
        %v654 = vunpack.c.l.b16 %v646
        %v655 = vunpack.c.h.b16 %v646
        %v656 = vunpack.c.l.b16 %v647
        %v657 = vunpack.c.h.b16 %v647
        %v658 = vunpack.c.l.b16 %v648
        %v659 = vunpack.c.h.b16 %v648
        %v660 = vunpack.c.l.b16 %v649
        %v661 = vunpack.c.h.b16 %v649
        %v662 = vpack.c.b16 %v654, %v654
        %v663 = vpack.c.b16 %v655, %v655
        %v664 = vpack.c.b16 %v656, %v656
        %v665 = vpack.c.b16 %v657, %v657
        %v666 = vpack.c.b16 %v658, %v658
        %v667 = vpack.c.b16 %v659, %v659
        %v668 = vpack.c.b16 %v660, %v660
        %v669 = vpack.c.b16 %v661, %v661
        %vm678 = vcmask 125952
        %679 = vst.msk [vmem:[%s252] sm:$0xf] %vm678, %v662
        %680 = vst.msk [vmem:[%s252 + $0x4] sm:$0xf] %vm678, %v663
        %681 = vst.msk [vmem:[%s252 + $0x8] sm:$0xf] %vm678, %v664
        %682 = vst.msk [vmem:[%s252 + $0xc] sm:$0xf] %vm678, %v665
        %683 = vst.msk [vmem:[%s252 + $0x10] sm:$0xf] %vm678, %v666
        %684 = vst.msk [vmem:[%s252 + $0x14] sm:$0xf] %vm678, %v667
        %685 = vst.msk [vmem:[%s252 + $0x18] sm:$0xf] %vm678, %v668
        %686 = vst.msk [vmem:[%s252 + $0x1c] sm:$0xf] %vm678, %v669
      $region40: #{rstb_forward.27} parent=31 // pred_fallthru
        _
      %s687 = smul.u32 8, %s19
      %p688 = scmp.lt.s32.totalorder %s687, 15
      %s689 = scalar_select %p688, %s687, 15
      %p690 = scmp.lt.s32.totalorder %s20, 0
      %s691 = scalar_select %p690, %s20, 0
      %s692 = sadd.s32 %s691, %s689
      %s693 = smul.addr %s692, 4
      %s694 = scalar_lea.vmem %s3, %s693
      // Predicated region
      $region41: #{rstb_forward.27} parent=31 // pred_check
        %p695 = pneg %p135
      $region42: #{rstb_forward.27} parent=31 // pred_check_branch
        %697 = sbr.rel (%p695) target = $region44
      $region43: #{rstb_forward.27} parent=31 // pred_region
        %s698 = smul.u32 8, %s19
      $region44: #{rstb_forward.27} parent=31 // pred_fallthru
        _
    $region32: #{rstb_forward.27} parent=5 // pred_fallthru
      _
    %p699 = scmp.le.s32.totalorder 2, %s9
    // Predicated region
    $region45: #{rstb_forward.27} parent=5 // pred_check
      %p700 = pneg %p699
    $region46: #{rstb_forward.27} parent=5 // pred_check_branch
      %702 = sbr.rel (%p700) target = $region48
    $region47: #{rstb_forward.27} parent=5 // pred_region
      %s703 = ssub.s32 %s9, 2
      // Predicated region
      $region49: #{rstb_forward.27} parent=47 // pred_check
        %p704 = pneg %p141
      $region50: #{rstb_forward.27} parent=47 // pred_check_branch
        %706 = sbr.rel (%p704) target = $region52
      $region51: #{rstb_forward.27} parent=47 // pred_region
        %s707 = smul.u32 8, %s22
        %p708 = scmp.lt.s32.totalorder %s707, 15
        %s709 = scalar_select %p708, %s707, 15
        %p710 = scmp.lt.s32.totalorder %s23, 0
        %s711 = scalar_select %p710, %s23, 0
        %s712 = sadd.s32 %s711, %s709
        %s713 = smul.addr %s712, 4
        %s714 = scalar_lea.vmem %s3, %s713
      $region52: #{rstb_forward.27} parent=47 // pred_fallthru
        _
    $region48: #{rstb_forward.27} parent=5 // pred_fallthru
      _
  $region6: #{rstb_forward.27} parent=0 // loop_footer
    %s13 = sadd.s32 1, %s9
  $region7: #{rstb_forward.27} parent=0 // loop_footer_branch
    %8 = sbr.rel target = $region3
  $region8: #{rstb_forward.27} parent=0 // loop_exit
    _

// kernel: rstb_forward.23
$region0: #{rstb_forward.23}
  #allocation0 [shape = 'u32[]', space=smem, size = 0x4, offset = 0x4, fixed_abs, tag = 'smem constant byte address 0x4 - core index']
  #allocation1 [shape = 'u32[144,128]{1,0:T(1,128)}', space=vmem, size = 0x12000, scoped, tag = 'internal scratch']
  %s0 = inlined_call_operand.vmem [shape: bf16[8,16,4], index: 0, kind: input, shape index: {}]
  %s1 = inlined_call_operand.vmem [shape: bf16[8,16,4], index: 1, kind: input, shape index: {}]
  %s2 = inlined_call_operand.vmem [shape: bf16[8,16,4], index: 2, kind: input, shape index: {}]
  %s3 = inlined_call_operand.vmem [shape: bf16[8,16,4], index: 3, kind: output, shape index: {}]
  %s4 = sld [smem:[#allocation0]]
  $region45: #{rstb_forward.23} parent=0
    _
  %s6 = ssub.s32 1, %s4
  %s7 = scalar_select 0, %s6, %s4
  loop: start=0, step=1, limit=4
  $region2: #{rstb_forward.23} parent=0 // loop_pre_header
    _
  $region3: #{rstb_forward.23} parent=0 // loop_header
    %s9 = sphi 0, %s13
    %p10 = scmp.ge.s32.totalorder %s9, 4
    %s19 = sphi 0, %s21
    %s22 = sphi 0, %s19
    %s23 = sphi 0, %s22
    %s39 = sphi 0, %s23
    %s45 = sphi 0, %s47
    %s48 = sphi 0, %s45
    %s49 = sphi 0, %s48
    %s65 = sphi 0, %s49
    %s71 = sphi 0, %s73
    %s74 = sphi 0, %s71
    %s75 = sphi 0, %s74
    %s91 = sphi 0, %s75
    %s97 = sphi 0, %s99
    %s100 = sphi 0, %s97
    %s101 = sphi 0, %s100
    %s117 = sphi 0, %s101
  $region4: #{rstb_forward.23} parent=0 // loop_header_branch
    %12 = sbr.rel (%p10) target = $region8
  $region5: #{rstb_forward.23} parent=0 // loop_body
    %s14 = ssub.s32 %s9, 1
    %s15 = ssub.s32 %s9, 2
    %s16 = sadd.s32 %s9, 1
    %s17 = ssub.s32 %s9, %s16
    %p18 = scmp.eq.s32.totalorder %s17, 0
    %s20 = sadd.s32 %s19, 1
    %s21 = scalar_select %p18, %s19, %s20
    %p24 = pneg %p18
    %p25 = scmp.eq.s32.totalorder %s9, 1
    %p26 = por %p24, %p25
    %p27 = scmp.ne.s32.totalorder %s19, %s22
    %p28 = scmp.eq.s32.totalorder %s9, 0
    %p29 = por %p27, %p28
    %p30 = scmp.ne.s32.totalorder %s19, %s22
    %p31 = scmp.eq.s32.totalorder %s14, 1
    %p32 = por %p30, %p31
    %p33 = scmp.ne.s32.totalorder %s22, %s23
    %p34 = scmp.eq.s32.totalorder %s14, 0
    %p35 = por %p33, %p34
    %p36 = scmp.ne.s32.totalorder %s22, %s23
    %p37 = scmp.eq.s32.totalorder %s15, 1
    %p38 = por %p36, %p37
    %p40 = scmp.ne.s32.totalorder %s23, %s39
    %p41 = scmp.eq.s32.totalorder %s15, 0
    %p42 = por %p40, %p41
    %s43 = ssub.s32 %s9, %s16
    %p44 = scmp.eq.s32.totalorder %s43, 0
    %s46 = sadd.s32 %s45, 1
    %s47 = scalar_select %p44, %s45, %s46
    %p50 = pneg %p44
    %p51 = scmp.eq.s32.totalorder %s9, 1
    %p52 = por %p50, %p51
    %p53 = scmp.ne.s32.totalorder %s45, %s48
    %p54 = scmp.eq.s32.totalorder %s9, 0
    %p55 = por %p53, %p54
    %p56 = scmp.ne.s32.totalorder %s45, %s48
    %p57 = scmp.eq.s32.totalorder %s14, 1
    %p58 = por %p56, %p57
    %p59 = scmp.ne.s32.totalorder %s48, %s49
    %p60 = scmp.eq.s32.totalorder %s14, 0
    %p61 = por %p59, %p60
    %p62 = scmp.ne.s32.totalorder %s48, %s49
    %p63 = scmp.eq.s32.totalorder %s15, 1
    %p64 = por %p62, %p63
    %p66 = scmp.ne.s32.totalorder %s49, %s65
    %p67 = scmp.eq.s32.totalorder %s15, 0
    %p68 = por %p66, %p67
    %s69 = ssub.s32 %s9, %s16
    %p70 = scmp.eq.s32.totalorder %s69, 0
    %s72 = sadd.s32 %s71, 1
    %s73 = scalar_select %p70, %s71, %s72
    %p76 = pneg %p70
    %p77 = scmp.eq.s32.totalorder %s9, 1
    %p78 = por %p76, %p77
    %p79 = scmp.ne.s32.totalorder %s71, %s74
    %p80 = scmp.eq.s32.totalorder %s9, 0
    %p81 = por %p79, %p80
    %p82 = scmp.ne.s32.totalorder %s71, %s74
    %p83 = scmp.eq.s32.totalorder %s14, 1
    %p84 = por %p82, %p83
    %p85 = scmp.ne.s32.totalorder %s74, %s75
    %p86 = scmp.eq.s32.totalorder %s14, 0
    %p87 = por %p85, %p86
    %p88 = scmp.ne.s32.totalorder %s74, %s75
    %p89 = scmp.eq.s32.totalorder %s15, 1
    %p90 = por %p88, %p89
    %p92 = scmp.ne.s32.totalorder %s75, %s91
    %p93 = scmp.eq.s32.totalorder %s15, 0
    %p94 = por %p92, %p93
    %s95 = ssub.s32 %s9, %s16
    %p96 = scmp.eq.s32.totalorder %s95, 0
    %s98 = sadd.s32 %s97, 1
    %s99 = scalar_select %p96, %s97, %s98
    %p102 = pneg %p96
    %p103 = scmp.eq.s32.totalorder %s9, 1
    %p104 = por %p102, %p103
    %p105 = scmp.ne.s32.totalorder %s97, %s100
    %p106 = scmp.eq.s32.totalorder %s9, 0
    %p107 = por %p105, %p106
    %p108 = scmp.ne.s32.totalorder %s97, %s100
    %p109 = scmp.eq.s32.totalorder %s14, 1
    %p110 = por %p108, %p109
    %p111 = scmp.ne.s32.totalorder %s100, %s101
    %p112 = scmp.eq.s32.totalorder %s14, 0
    %p113 = por %p111, %p112
    %p114 = scmp.ne.s32.totalorder %s100, %s101
    %p115 = scmp.eq.s32.totalorder %s15, 1
    %p116 = por %p114, %p115
    %p118 = scmp.ne.s32.totalorder %s101, %s117
    %p119 = scmp.eq.s32.totalorder %s15, 0
    %p120 = por %p118, %p119
    %p121 = scmp.le.s32.totalorder 1, %s9
    %p122 = scmp.lt.s32.totalorder %s9, 3
    %p123 = pnand %p121, %p122
    %p124 = pneg %p123
    // Predicated region
    $region9: #{rstb_forward.23} parent=5 // pred_check
      _
    $region10: #{rstb_forward.23} parent=5 // pred_check_branch
      %126 = sbr.rel (%p123) target = $region12
    $region11: #{rstb_forward.23} parent=5 // pred_region
      %s127 = ssub.s32 %s9, 1
    $region12: #{rstb_forward.23} parent=5 // pred_fallthru
      _
    %p128 = scmp.lt.s32.totalorder %s9, 2
    // Predicated region
    $region13: #{rstb_forward.23} parent=5 // pred_check
      %p129 = pneg %p128
    $region14: #{rstb_forward.23} parent=5 // pred_check_branch
      %131 = sbr.rel (%p129) target = $region16
    $region15: #{rstb_forward.23} parent=5 // pred_region
      // Predicated region
      $region17: #{rstb_forward.23} parent=15 // pred_check
        %p132 = pneg %p29
      $region18: #{rstb_forward.23} parent=15 // pred_check_branch
        %134 = sbr.rel (%p132) target = $region20
      $region19: #{rstb_forward.23} parent=15 // pred_region
        %s135 = smul.u32 4, %s9
        %p136 = scmp.lt.s32.totalorder %s135, 7
        %s137 = scalar_select %p136, %s135, 7
        %s138 = smul.addr %s137, 2
        %s139 = smul.addr %s138, 4
        %s140 = scalar_lea.vmem %s0, %s139
        %s141 = smul.u32 4, %s9
      $region20: #{rstb_forward.23} parent=15 // pred_fallthru
        _
      // Predicated region
      $region21: #{rstb_forward.23} parent=15 // pred_check
        %p142 = pneg %p55
      $region22: #{rstb_forward.23} parent=15 // pred_check_branch
        %144 = sbr.rel (%p142) target = $region24
      $region23: #{rstb_forward.23} parent=15 // pred_region
        %s145 = smul.u32 4, %s9
        %p146 = scmp.lt.s32.totalorder %s145, 7
        %s147 = scalar_select %p146, %s145, 7
        %s148 = smul.addr %s147, 2
        %s149 = smul.addr %s148, 4
        %s150 = scalar_lea.vmem %s1, %s149
        %s151 = smul.u32 4, %s9
      $region24: #{rstb_forward.23} parent=15 // pred_fallthru
        _
      // Predicated region
      $region25: #{rstb_forward.23} parent=15 // pred_check
        %p152 = pneg %p81
      $region26: #{rstb_forward.23} parent=15 // pred_check_branch
        %154 = sbr.rel (%p152) target = $region28
      $region27: #{rstb_forward.23} parent=15 // pred_region
        %s155 = smul.u32 4, %s9
        %p156 = scmp.lt.s32.totalorder %s155, 7
        %s157 = scalar_select %p156, %s155, 7
        %s158 = smul.addr %s157, 2
        %s159 = smul.addr %s158, 4
        %s160 = scalar_lea.vmem %s2, %s159
        %s161 = smul.u32 4, %s9
      $region28: #{rstb_forward.23} parent=15 // pred_fallthru
        _
    $region16: #{rstb_forward.23} parent=5 // pred_fallthru
      _
    %p162 = scmp.le.s32.totalorder 1, %s9
    %p163 = scmp.lt.s32.totalorder %s9, 3
    %p164 = pnand %p162, %p163
    %p165 = pneg %p164
    // Predicated region
    $region29: #{rstb_forward.23} parent=5 // pred_check
      _
    $region30: #{rstb_forward.23} parent=5 // pred_check_branch
      %167 = sbr.rel (%p164) target = $region32
    $region31: #{rstb_forward.23} parent=5 // pred_region
      %s168 = ssub.s32 %s9, 1
      %s169 = smul.u32 4, %s14
      %p170 = scmp.lt.s32.totalorder %s169, 7
      %s171 = scalar_select %p170, %s169, 7
      %s172 = smul.addr %s171, 2
      %s173 = smul.addr %s172, 4
      %s174 = scalar_lea.vmem %s0, %s173
      %p175 = pneg %p35
      %p176 = pneg %p32
      %s177 = smul.u32 4, %s14
      %p178 = scmp.lt.s32.totalorder %s177, 7
      %s179 = scalar_select %p178, %s177, 7
      %s180 = smul.addr %s179, 2
      %s181 = smul.addr %s180, 4
      %s182 = scalar_lea.vmem %s1, %s181
      %p183 = pneg %p61
      %p184 = pneg %p58
      %s185 = smul.u32 4, %s14
      %p186 = scmp.lt.s32.totalorder %s185, 7
      %s187 = scalar_select %p186, %s185, 7
      %s188 = smul.addr %s187, 2
      %s189 = smul.addr %s188, 4
      %s190 = scalar_lea.vmem %s2, %s189
      %p191 = pneg %p87
      %p192 = pneg %p84
      %p193 = pneg %p113
      %p194 = pneg %p110
      %s195 = smul.u32 4, %s14
      %p196 = scmp.lt.s32.totalorder %s195, 7
      %s197 = scalar_select %p196, %s195, 7
      %s198 = smul.addr %s197, 2
      %s199 = smul.addr %s198, 4
      %s200 = scalar_lea.vmem %s3, %s199
      %s201 = smul.u32 4, %s14
      %p202 = scmp.lt.s32.totalorder %s201, 7
      %s203 = scalar_select %p202, %s201, 7
      %s204 = smul.addr %s203, 2
      %s205 = smul.addr %s204, 4
      %s206 = scalar_lea.vmem %s0, %s205
      %s207 = smul.u32 4, %s14
      %s208 = smul.u32 4, %s14
      %p209 = scmp.lt.s32.totalorder %s208, 7
      %s210 = scalar_select %p209, %s208, 7
      %s211 = smul.addr %s210, 2
      %s212 = smul.addr %s211, 4
      %s213 = scalar_lea.vmem %s1, %s212
      %s214 = smul.u32 4, %s14
      %s215 = smul.u32 4, %s14
      %p216 = scmp.lt.s32.totalorder %s215, 7
      %s217 = scalar_select %p216, %s215, 7
      %s218 = smul.addr %s217, 2
      %s219 = smul.addr %s218, 4
      %s220 = scalar_lea.vmem %s2, %s219
      %s221 = smul.u32 4, %s14
      %s222 = smul.u32 4, %s14
      %p223 = scmp.lt.s32.totalorder %s222, 7
      %s224 = scalar_select %p223, %s222, 7
      %s225 = smul.addr %s224, 2
      %s226 = smul.addr %s225, 4
      %s227 = scalar_lea.vmem %s3, %s226
      %s228 = smul.u32 4, %s14
      %v230 = vld [vmem:[%s206] sm:$0xf]
      %v231 = vld [vmem:[%s206 + $0x4] sm:$0xf]
      %v232 = vld [vmem:[%s206 + $0x8] sm:$0xf]
      %v233 = vld [vmem:[%s206 + $0xc] sm:$0xf]
      %v234 = vld [vmem:[%s206 + $0x10] sm:$0xf]
      %v235 = vld [vmem:[%s206 + $0x14] sm:$0xf]
      %v236 = vld [vmem:[%s206 + $0x18] sm:$0xf]
      %v237 = vld [vmem:[%s206 + $0x1c] sm:$0xf]
      %v238 = vld [vmem:[%s213] sm:$0xf]
      %v239 = vld [vmem:[%s213 + $0x4] sm:$0xf]
      %v240 = vld [vmem:[%s213 + $0x8] sm:$0xf]
      %v241 = vld [vmem:[%s213 + $0xc] sm:$0xf]
      %v242 = vld [vmem:[%s213 + $0x10] sm:$0xf]
      %v243 = vld [vmem:[%s213 + $0x14] sm:$0xf]
      %v244 = vld [vmem:[%s213 + $0x18] sm:$0xf]
      %v245 = vld [vmem:[%s213 + $0x1c] sm:$0xf]
      %v246 = vld [vmem:[%s220] sm:$0xf]
      %v247 = vld [vmem:[%s220 + $0x4] sm:$0xf]
      %v248 = vld [vmem:[%s220 + $0x8] sm:$0xf]
      %v249 = vld [vmem:[%s220 + $0xc] sm:$0xf]
      %v250 = vld [vmem:[%s220 + $0x10] sm:$0xf]
      %v251 = vld [vmem:[%s220 + $0x14] sm:$0xf]
      %v252 = vld [vmem:[%s220 + $0x18] sm:$0xf]
      %v253 = vld [vmem:[%s220 + $0x1c] sm:$0xf]
      %v256 = vunpack.c.l.b16 %v230
      %v257 = vunpack.c.l.b16 %v231
      %v258 = vpack.c.b16 %v257, %v256
      %v261 = vunpack.c.l.b16 %v238
      %v262 = vunpack.c.l.b16 %v239
      %v263 = vpack.c.b16 %v262, %v261
      %vm264 = vcmask 15360
      %v266 = vsel %vm264, %v258, 0
      %v269 = vsel %vm264, %v263, 0
      %271 = vmatprep.subr.bf16.mxu0 0
      %272 = vmatpush1.bf16.xpose.msra.mxu0 %v269
      %273 = vmatprep.subr.bf16.mxu0 0
      %274 = vmatpush1.bf16.xpose.msra.mxu0 0
      %275 = vmatprep.subr.bf16.mxu0 0
      %276 = vmatpush1.bf16.xpose.msra.mxu0 0
      %277 = vmatprep.subr.bf16.mxu0 0
      %278 = vmatpush1.bf16.xpose.msra.mxu0 0
      %279 = vmatprep.subr.bf16.mxu0 0
      %280 = vmatpush1.bf16.xpose.msra.mxu0 0
      %281 = vmatprep.subr.bf16.mxu0 0
      %282 = vmatpush1.bf16.xpose.msra.mxu0 0
      %283 = vmatprep.subr.bf16.mxu0 0
      %284 = vmatpush1.bf16.xpose.msra.mxu0 0
      %285 = vmatprep.subr.bf16.mxu0 0
      %286 = vmatpush1.bf16.xpose.msra.mxu0 0
      %287 = vmatprep.subr.bf16.mxu0 0
      %288 = vmatpush1.bf16.xpose.msra.mxu0 0
      %289 = vmatprep.subr.bf16.mxu0 0
      %290 = vmatpush1.bf16.xpose.msra.mxu0 0
      %291 = vmatprep.subr.bf16.mxu0 0
      %292 = vmatpush1.bf16.xpose.msra.mxu0 0
      %293 = vmatprep.subr.bf16.mxu0 0
      %294 = vmatpush1.bf16.xpose.msra.mxu0 0
      %295 = vmatprep.subr.bf16.mxu0 0
      %296 = vmatpush1.bf16.xpose.msra.mxu0 0
      %297 = vmatprep.subr.bf16.mxu0 0
      %298 = vmatpush1.bf16.xpose.msra.mxu0 0
      %299 = vmatprep.subr.bf16.mxu0 0
      %300 = vmatpush1.bf16.xpose.msra.mxu0 0
      %301 = vmatprep.subr.bf16.mxu0 0
      %302 = vmatpush1.bf16.xpose.msra.mxu0 0
      %303 = vmatprep.mubr.bf16.mxu0 0
      %304 = vmatmul.mubr.bf16.gmra.mrb[0].mxu0 %v266
      %v305 = vpop.f32.mrb[0].mxu0
      %v306 = vadd.f32 0.0, %v305
      %v307 = vpop.f32.mrb[0].mxu0
      %v308 = vpop.f32.mrb[0].mxu0
      %v309 = vadd.f32 0.0, %v308
      %v310 = vpop.f32.mrb[0].mxu0
      %311 = vdwg.mxu0
      %v314 = vunpack.c.l.b16 %v232
      %v315 = vunpack.c.l.b16 %v233
      %v316 = vpack.c.b16 %v315, %v314
      %v319 = vunpack.c.l.b16 %v240
      %v320 = vunpack.c.l.b16 %v241
      %v321 = vpack.c.b16 %v320, %v319
      %v323 = vsel %vm264, %v316, 0
      %v326 = vsel %vm264, %v321, 0
      %328 = vmatprep.subr.bf16.mxu0 0
      %329 = vmatpush1.bf16.xpose.msra.mxu0 %v326
      %330 = vmatprep.subr.bf16.mxu0 0
      %331 = vmatpush1.bf16.xpose.msra.mxu0 0
      %332 = vmatprep.subr.bf16.mxu0 0
      %333 = vmatpush1.bf16.xpose.msra.mxu0 0
      %334 = vmatprep.subr.bf16.mxu0 0
      %335 = vmatpush1.bf16.xpose.msra.mxu0 0
      %336 = vmatprep.subr.bf16.mxu0 0
      %337 = vmatpush1.bf16.xpose.msra.mxu0 0
      %338 = vmatprep.subr.bf16.mxu0 0
      %339 = vmatpush1.bf16.xpose.msra.mxu0 0
      %340 = vmatprep.subr.bf16.mxu0 0
      %341 = vmatpush1.bf16.xpose.msra.mxu0 0
      %342 = vmatprep.subr.bf16.mxu0 0
      %343 = vmatpush1.bf16.xpose.msra.mxu0 0
      %344 = vmatprep.subr.bf16.mxu0 0
      %345 = vmatpush1.bf16.xpose.msra.mxu0 0
      %346 = vmatprep.subr.bf16.mxu0 0
      %347 = vmatpush1.bf16.xpose.msra.mxu0 0
      %348 = vmatprep.subr.bf16.mxu0 0
      %349 = vmatpush1.bf16.xpose.msra.mxu0 0
      %350 = vmatprep.subr.bf16.mxu0 0
      %351 = vmatpush1.bf16.xpose.msra.mxu0 0
      %352 = vmatprep.subr.bf16.mxu0 0
      %353 = vmatpush1.bf16.xpose.msra.mxu0 0
      %354 = vmatprep.subr.bf16.mxu0 0
      %355 = vmatpush1.bf16.xpose.msra.mxu0 0
      %356 = vmatprep.subr.bf16.mxu0 0
      %357 = vmatpush1.bf16.xpose.msra.mxu0 0
      %358 = vmatprep.subr.bf16.mxu0 0
      %359 = vmatpush1.bf16.xpose.msra.mxu0 0
      %360 = vmatprep.mubr.bf16.mxu0 0
      %361 = vmatmul.mubr.bf16.gmra.mrb[0].mxu0 %v323
      %v362 = vpop.f32.mrb[0].mxu0
      %v363 = vadd.f32 0.0, %v362
      %v364 = vpop.f32.mrb[0].mxu0
      %v365 = vpop.f32.mrb[0].mxu0
      %v366 = vadd.f32 0.0, %v365
      %v367 = vpop.f32.mrb[0].mxu0
      %368 = vdwg.mxu0
      %v371 = vunpack.c.l.b16 %v234
      %v372 = vunpack.c.l.b16 %v235
      %v373 = vpack.c.b16 %v372, %v371
      %v376 = vunpack.c.l.b16 %v242
      %v377 = vunpack.c.l.b16 %v243
      %v378 = vpack.c.b16 %v377, %v376
      %v380 = vsel %vm264, %v373, 0
      %v383 = vsel %vm264, %v378, 0
      %385 = vmatprep.subr.bf16.mxu0 0
      %386 = vmatpush1.bf16.xpose.msra.mxu0 %v383
      %387 = vmatprep.subr.bf16.mxu0 0
      %388 = vmatpush1.bf16.xpose.msra.mxu0 0
      %389 = vmatprep.subr.bf16.mxu0 0
      %390 = vmatpush1.bf16.xpose.msra.mxu0 0
      %391 = vmatprep.subr.bf16.mxu0 0
      %392 = vmatpush1.bf16.xpose.msra.mxu0 0
      %393 = vmatprep.subr.bf16.mxu0 0
      %394 = vmatpush1.bf16.xpose.msra.mxu0 0
      %395 = vmatprep.subr.bf16.mxu0 0
      %396 = vmatpush1.bf16.xpose.msra.mxu0 0
      %397 = vmatprep.subr.bf16.mxu0 0
      %398 = vmatpush1.bf16.xpose.msra.mxu0 0
      %399 = vmatprep.subr.bf16.mxu0 0
      %400 = vmatpush1.bf16.xpose.msra.mxu0 0
      %401 = vmatprep.subr.bf16.mxu0 0
      %402 = vmatpush1.bf16.xpose.msra.mxu0 0
      %403 = vmatprep.subr.bf16.mxu0 0
      %404 = vmatpush1.bf16.xpose.msra.mxu0 0
      %405 = vmatprep.subr.bf16.mxu0 0
      %406 = vmatpush1.bf16.xpose.msra.mxu0 0
      %407 = vmatprep.subr.bf16.mxu0 0
      %408 = vmatpush1.bf16.xpose.msra.mxu0 0
      %409 = vmatprep.subr.bf16.mxu0 0
      %410 = vmatpush1.bf16.xpose.msra.mxu0 0
      %411 = vmatprep.subr.bf16.mxu0 0
      %412 = vmatpush1.bf16.xpose.msra.mxu0 0
      %413 = vmatprep.subr.bf16.mxu0 0
      %414 = vmatpush1.bf16.xpose.msra.mxu0 0
      %415 = vmatprep.subr.bf16.mxu0 0
      %416 = vmatpush1.bf16.xpose.msra.mxu0 0
      %417 = vmatprep.mubr.bf16.mxu0 0
      %418 = vmatmul.mubr.bf16.gmra.mrb[0].mxu0 %v380
      %v419 = vpop.f32.mrb[0].mxu0
      %v420 = vadd.f32 0.0, %v419
      %v421 = vpop.f32.mrb[0].mxu0
      %v422 = vpop.f32.mrb[0].mxu0
      %v423 = vadd.f32 0.0, %v422
      %v424 = vpop.f32.mrb[0].mxu0
      %425 = vdwg.mxu0
      %v428 = vunpack.c.l.b16 %v236
      %v429 = vunpack.c.l.b16 %v237
      %v430 = vpack.c.b16 %v429, %v428
      %v433 = vunpack.c.l.b16 %v244
      %v434 = vunpack.c.l.b16 %v245
      %v435 = vpack.c.b16 %v434, %v433
      %v437 = vsel %vm264, %v430, 0
      %v440 = vsel %vm264, %v435, 0
      %442 = vmatprep.subr.bf16.mxu0 0
      %443 = vmatpush1.bf16.xpose.msra.mxu0 %v440
      %444 = vmatprep.subr.bf16.mxu0 0
      %445 = vmatpush1.bf16.xpose.msra.mxu0 0
      %446 = vmatprep.subr.bf16.mxu0 0
      %447 = vmatpush1.bf16.xpose.msra.mxu0 0
      %448 = vmatprep.subr.bf16.mxu0 0
      %449 = vmatpush1.bf16.xpose.msra.mxu0 0
      %450 = vmatprep.subr.bf16.mxu0 0
      %451 = vmatpush1.bf16.xpose.msra.mxu0 0
      %452 = vmatprep.subr.bf16.mxu0 0
      %453 = vmatpush1.bf16.xpose.msra.mxu0 0
      %454 = vmatprep.subr.bf16.mxu0 0
      %455 = vmatpush1.bf16.xpose.msra.mxu0 0
      %456 = vmatprep.subr.bf16.mxu0 0
      %457 = vmatpush1.bf16.xpose.msra.mxu0 0
      %458 = vmatprep.subr.bf16.mxu0 0
      %459 = vmatpush1.bf16.xpose.msra.mxu0 0
      %460 = vmatprep.subr.bf16.mxu0 0
      %461 = vmatpush1.bf16.xpose.msra.mxu0 0
      %462 = vmatprep.subr.bf16.mxu0 0
      %463 = vmatpush1.bf16.xpose.msra.mxu0 0
      %464 = vmatprep.subr.bf16.mxu0 0
      %465 = vmatpush1.bf16.xpose.msra.mxu0 0
      %466 = vmatprep.subr.bf16.mxu0 0
      %467 = vmatpush1.bf16.xpose.msra.mxu0 0
      %468 = vmatprep.subr.bf16.mxu0 0
      %469 = vmatpush1.bf16.xpose.msra.mxu0 0
      %470 = vmatprep.subr.bf16.mxu0 0
      %471 = vmatpush1.bf16.xpose.msra.mxu0 0
      %472 = vmatprep.subr.bf16.mxu0 0
      %473 = vmatpush1.bf16.xpose.msra.mxu0 0
      %474 = vmatprep.mubr.bf16.mxu0 0
      %475 = vmatmul.mubr.bf16.gmra.mrb[0].mxu0 %v437
      %v476 = vpop.f32.mrb[0].mxu0
      %v477 = vadd.f32 0.0, %v476
      %v478 = vpop.f32.mrb[0].mxu0
      %v479 = vpop.f32.mrb[0].mxu0
      %v480 = vadd.f32 0.0, %v479
      %v481 = vpop.f32.mrb[0].mxu0
      %482 = vdwg.mxu0
      %v483 = vmul.f32 %v306, 0.70710677
      %v484 = vmul.f32 %v309, 0.70710677
      %v485 = vmul.f32 %v363, 0.70710677
      %v486 = vmul.f32 %v366, 0.70710677
      %v487 = vmul.f32 %v420, 0.70710677
      %v488 = vmul.f32 %v423, 0.70710677
      %v489 = vmul.f32 %v477, 0.70710677
      %v490 = vmul.f32 %v480, 0.70710677
      %vm491 = vcmask 130048
      %v492 = vsel %vm491, %v483, -inf
      %493 = vmax.xlane.f32.xlu0 %v492
      %v494 = vpop.xlane.xlu0 %493
      %v495 = vsel %vm491, %v484, -inf
      %496 = vmax.xlane.f32.xlu0 %v495
      %v497 = vpop.xlane.xlu0 %496
      %v498 = vsel %vm491, %v485, -inf
      %499 = vmax.xlane.f32.xlu0 %v498
      %v500 = vpop.xlane.xlu0 %499
      %v501 = vsel %vm491, %v486, -inf
      %502 = vmax.xlane.f32.xlu0 %v501
      %v503 = vpop.xlane.xlu0 %502
      %v504 = vsel %vm491, %v487, -inf
      %505 = vmax.xlane.f32.xlu0 %v504
      %v506 = vpop.xlane.xlu0 %505
      %v507 = vsel %vm491, %v488, -inf
      %508 = vmax.xlane.f32.xlu0 %v507
      %v509 = vpop.xlane.xlu0 %508
      %v510 = vsel %vm491, %v489, -inf
      %511 = vmax.xlane.f32.xlu0 %v510
      %v512 = vpop.xlane.xlu0 %511
      %v513 = vsel %vm491, %v490, -inf
      %514 = vmax.xlane.f32.xlu0 %v513
      %v515 = vpop.xlane.xlu0 %514
      %v516 = vsub.f32 %v483, %v494
      %v517 = vsub.f32 %v484, %v497
      %v518 = vsub.f32 %v485, %v500
      %v519 = vsub.f32 %v486, %v503
      %v520 = vsub.f32 %v487, %v506
      %v521 = vsub.f32 %v488, %v509
      %v522 = vsub.f32 %v489, %v512
      %v523 = vsub.f32 %v490, %v515
      %v524 = vmul.f32 %v516, 1.442695
      %v525 = vpow.pop %v524
      %v526 = vmul.f32 %v517, 1.442695
      %v527 = vpow.pop %v526
      %v528 = vmul.f32 %v518, 1.442695
      %v529 = vpow.pop %v528
      %v530 = vmul.f32 %v519, 1.442695
      %v531 = vpow.pop %v530
      %v532 = vmul.f32 %v520, 1.442695
      %v533 = vpow.pop %v532
      %v534 = vmul.f32 %v521, 1.442695
      %v535 = vpow.pop %v534
      %v536 = vmul.f32 %v522, 1.442695
      %v537 = vpow.pop %v536
      %v538 = vmul.f32 %v523, 1.442695
      %v539 = vpow.pop %v538
      %v540 = vsel %vm491, %v525, 0.0
      %541 = vadd.xlane.f32.xlu0 %v540
      %v542 = vpop.xlane.xlu0 %541
      %v543 = vsel %vm491, %v527, 0.0
      %544 = vadd.xlane.f32.xlu0 %v543
      %v545 = vpop.xlane.xlu0 %544
      %v546 = vsel %vm491, %v529, 0.0
      %547 = vadd.xlane.f32.xlu0 %v546
      %v548 = vpop.xlane.xlu0 %547
      %v549 = vsel %vm491, %v531, 0.0
      %550 = vadd.xlane.f32.xlu0 %v549
      %v551 = vpop.xlane.xlu0 %550
      %v552 = vsel %vm491, %v533, 0.0
      %553 = vadd.xlane.f32.xlu0 %v552
      %v554 = vpop.xlane.xlu0 %553
      %v555 = vsel %vm491, %v535, 0.0
      %556 = vadd.xlane.f32.xlu0 %v555
      %v557 = vpop.xlane.xlu0 %556
      %v558 = vsel %vm491, %v537, 0.0
      %559 = vadd.xlane.f32.xlu0 %v558
      %v560 = vpop.xlane.xlu0 %559
      %v561 = vsel %vm491, %v539, 0.0
      %562 = vadd.xlane.f32.xlu0 %v561
      %v563 = vpop.xlane.xlu0 %562
      %v564 = vrcp.pop %v542
      %v565 = vrcp.pop %v545
      %v566 = vrcp.pop %v548
      %v567 = vrcp.pop %v551
      %v568 = vrcp.pop %v554
      %v569 = vrcp.pop %v557
      %v570 = vrcp.pop %v560
      %v571 = vrcp.pop %v563
      %v572 = vmul.f32 %v525, %v564
      %v573 = vmul.f32 %v527, %v565
      %v574 = vmul.f32 %v529, %v566
      %v575 = vmul.f32 %v531, %v567
      %v576 = vmul.f32 %v533, %v568
      %v577 = vmul.f32 %v535, %v569
      %v578 = vmul.f32 %v537, %v570
      %v579 = vmul.f32 %v539, %v571
      %v580 = vpack.c.bf16 %v573, %v572
      %v581 = vpack.c.bf16 %v575, %v574
      %v582 = vpack.c.bf16 %v577, %v576
      %v583 = vpack.c.bf16 %v579, %v578
      %v586 = vunpack.c.l.b16 %v246
      %v587 = vunpack.c.l.b16 %v247
      %v588 = vpack.c.b16 %v587, %v586
      %v591 = vsel %vm491, %v580, 0
      %593 = vmatprep.subr.bf16.mxu0 0
      %594 = vmatpush1.bf16.msra.mxu0 %v588
      %595 = vmatprep.subr.bf16.mxu0 0
      %596 = vmatpush1.bf16.msra.mxu0 0
      %597 = vmatprep.subr.bf16.mxu0 0
      %598 = vmatpush1.bf16.msra.mxu0 0
      %599 = vmatprep.subr.bf16.mxu0 0
      %600 = vmatpush1.bf16.msra.mxu0 0
      %601 = vmatprep.subr.bf16.mxu0 0
      %602 = vmatpush1.bf16.msra.mxu0 0
      %603 = vmatprep.subr.bf16.mxu0 0
      %604 = vmatpush1.bf16.msra.mxu0 0
      %605 = vmatprep.subr.bf16.mxu0 0
      %606 = vmatpush1.bf16.msra.mxu0 0
      %607 = vmatprep.subr.bf16.mxu0 0
      %608 = vmatpush1.bf16.msra.mxu0 0
      %609 = vmatprep.subr.bf16.mxu0 0
      %610 = vmatpush1.bf16.msra.mxu0 0
      %611 = vmatprep.subr.bf16.mxu0 0
      %612 = vmatpush1.bf16.msra.mxu0 0
      %613 = vmatprep.subr.bf16.mxu0 0
      %614 = vmatpush1.bf16.msra.mxu0 0
      %615 = vmatprep.subr.bf16.mxu0 0
      %616 = vmatpush1.bf16.msra.mxu0 0
      %617 = vmatprep.subr.bf16.mxu0 0
      %618 = vmatpush1.bf16.msra.mxu0 0
      %619 = vmatprep.subr.bf16.mxu0 0
      %620 = vmatpush1.bf16.msra.mxu0 0
      %621 = vmatprep.subr.bf16.mxu0 0
      %622 = vmatpush1.bf16.msra.mxu0 0
      %623 = vmatprep.subr.bf16.mxu0 0
      %624 = vmatpush1.bf16.msra.mxu0 0
      %625 = vmatprep.mubr.bf16.mxu0 0
      %626 = vmatmul.mubr.bf16.gmra.mrb[0].mxu0 %v591
      %v627 = vpop.f32.mrb[0].mxu0
      %v628 = vadd.f32 0.0, %v627
      %v629 = vpop.f32.mrb[0].mxu0
      %v630 = vpop.f32.mrb[0].mxu0
      %v631 = vadd.f32 0.0, %v630
      %v632 = vpop.f32.mrb[0].mxu0
      %633 = vdwg.mxu0
      %v636 = vunpack.c.l.b16 %v248
      %v637 = vunpack.c.l.b16 %v249
      %v638 = vpack.c.b16 %v637, %v636
      %v641 = vsel %vm491, %v581, 0
      %643 = vmatprep.subr.bf16.mxu0 0
      %644 = vmatpush1.bf16.msra.mxu0 %v638
      %645 = vmatprep.subr.bf16.mxu0 0
      %646 = vmatpush1.bf16.msra.mxu0 0
      %647 = vmatprep.subr.bf16.mxu0 0
      %648 = vmatpush1.bf16.msra.mxu0 0
      %649 = vmatprep.subr.bf16.mxu0 0
      %650 = vmatpush1.bf16.msra.mxu0 0
      %651 = vmatprep.subr.bf16.mxu0 0
      %652 = vmatpush1.bf16.msra.mxu0 0
      %653 = vmatprep.subr.bf16.mxu0 0
      %654 = vmatpush1.bf16.msra.mxu0 0
      %655 = vmatprep.subr.bf16.mxu0 0
      %656 = vmatpush1.bf16.msra.mxu0 0
      %657 = vmatprep.subr.bf16.mxu0 0
      %658 = vmatpush1.bf16.msra.mxu0 0
      %659 = vmatprep.subr.bf16.mxu0 0
      %660 = vmatpush1.bf16.msra.mxu0 0
      %661 = vmatprep.subr.bf16.mxu0 0
      %662 = vmatpush1.bf16.msra.mxu0 0
      %663 = vmatprep.subr.bf16.mxu0 0
      %664 = vmatpush1.bf16.msra.mxu0 0
      %665 = vmatprep.subr.bf16.mxu0 0
      %666 = vmatpush1.bf16.msra.mxu0 0
      %667 = vmatprep.subr.bf16.mxu0 0
      %668 = vmatpush1.bf16.msra.mxu0 0
      %669 = vmatprep.subr.bf16.mxu0 0
      %670 = vmatpush1.bf16.msra.mxu0 0
      %671 = vmatprep.subr.bf16.mxu0 0
      %672 = vmatpush1.bf16.msra.mxu0 0
      %673 = vmatprep.subr.bf16.mxu0 0
      %674 = vmatpush1.bf16.msra.mxu0 0
      %675 = vmatprep.mubr.bf16.mxu0 0
      %676 = vmatmul.mubr.bf16.gmra.mrb[0].mxu0 %v641
      %v677 = vpop.f32.mrb[0].mxu0
      %v678 = vadd.f32 0.0, %v677
      %v679 = vpop.f32.mrb[0].mxu0
      %v680 = vpop.f32.mrb[0].mxu0
      %v681 = vadd.f32 0.0, %v680
      %v682 = vpop.f32.mrb[0].mxu0
      %683 = vdwg.mxu0
      %v686 = vunpack.c.l.b16 %v250
      %v687 = vunpack.c.l.b16 %v251
      %v688 = vpack.c.b16 %v687, %v686
      %v691 = vsel %vm491, %v582, 0
      %693 = vmatprep.subr.bf16.mxu0 0
      %694 = vmatpush1.bf16.msra.mxu0 %v688
      %695 = vmatprep.subr.bf16.mxu0 0
      %696 = vmatpush1.bf16.msra.mxu0 0
      %697 = vmatprep.subr.bf16.mxu0 0
      %698 = vmatpush1.bf16.msra.mxu0 0
      %699 = vmatprep.subr.bf16.mxu0 0
      %700 = vmatpush1.bf16.msra.mxu0 0
      %701 = vmatprep.subr.bf16.mxu0 0
      %702 = vmatpush1.bf16.msra.mxu0 0
      %703 = vmatprep.subr.bf16.mxu0 0
      %704 = vmatpush1.bf16.msra.mxu0 0
      %705 = vmatprep.subr.bf16.mxu0 0
      %706 = vmatpush1.bf16.msra.mxu0 0
      %707 = vmatprep.subr.bf16.mxu0 0
      %708 = vmatpush1.bf16.msra.mxu0 0
      %709 = vmatprep.subr.bf16.mxu0 0
      %710 = vmatpush1.bf16.msra.mxu0 0
      %711 = vmatprep.subr.bf16.mxu0 0
      %712 = vmatpush1.bf16.msra.mxu0 0
      %713 = vmatprep.subr.bf16.mxu0 0
      %714 = vmatpush1.bf16.msra.mxu0 0
      %715 = vmatprep.subr.bf16.mxu0 0
      %716 = vmatpush1.bf16.msra.mxu0 0
      %717 = vmatprep.subr.bf16.mxu0 0
      %718 = vmatpush1.bf16.msra.mxu0 0
      %719 = vmatprep.subr.bf16.mxu0 0
      %720 = vmatpush1.bf16.msra.mxu0 0
      %721 = vmatprep.subr.bf16.mxu0 0
      %722 = vmatpush1.bf16.msra.mxu0 0
      %723 = vmatprep.subr.bf16.mxu0 0
      %724 = vmatpush1.bf16.msra.mxu0 0
      %725 = vmatprep.mubr.bf16.mxu0 0
      %726 = vmatmul.mubr.bf16.gmra.mrb[0].mxu0 %v691
      %v727 = vpop.f32.mrb[0].mxu0
      %v728 = vadd.f32 0.0, %v727
      %v729 = vpop.f32.mrb[0].mxu0
      %v730 = vpop.f32.mrb[0].mxu0
      %v731 = vadd.f32 0.0, %v730
      %v732 = vpop.f32.mrb[0].mxu0
      %733 = vdwg.mxu0
      %v736 = vunpack.c.l.b16 %v252
      %v737 = vunpack.c.l.b16 %v253
      %v738 = vpack.c.b16 %v737, %v736
      %v741 = vsel %vm491, %v583, 0
      %743 = vmatprep.subr.bf16.mxu0 0
      %744 = vmatpush1.bf16.msra.mxu0 %v738
      %745 = vmatprep.subr.bf16.mxu0 0
      %746 = vmatpush1.bf16.msra.mxu0 0
      %747 = vmatprep.subr.bf16.mxu0 0
      %748 = vmatpush1.bf16.msra.mxu0 0
      %749 = vmatprep.subr.bf16.mxu0 0
      %750 = vmatpush1.bf16.msra.mxu0 0
      %751 = vmatprep.subr.bf16.mxu0 0
      %752 = vmatpush1.bf16.msra.mxu0 0
      %753 = vmatprep.subr.bf16.mxu0 0
      %754 = vmatpush1.bf16.msra.mxu0 0
      %755 = vmatprep.subr.bf16.mxu0 0
      %756 = vmatpush1.bf16.msra.mxu0 0
      %757 = vmatprep.subr.bf16.mxu0 0
      %758 = vmatpush1.bf16.msra.mxu0 0
      %759 = vmatprep.subr.bf16.mxu0 0
      %760 = vmatpush1.bf16.msra.mxu0 0
      %761 = vmatprep.subr.bf16.mxu0 0
      %762 = vmatpush1.bf16.msra.mxu0 0
      %763 = vmatprep.subr.bf16.mxu0 0
      %764 = vmatpush1.bf16.msra.mxu0 0
      %765 = vmatprep.subr.bf16.mxu0 0
      %766 = vmatpush1.bf16.msra.mxu0 0
      %767 = vmatprep.subr.bf16.mxu0 0
      %768 = vmatpush1.bf16.msra.mxu0 0
      %769 = vmatprep.subr.bf16.mxu0 0
      %770 = vmatpush1.bf16.msra.mxu0 0
      %771 = vmatprep.subr.bf16.mxu0 0
      %772 = vmatpush1.bf16.msra.mxu0 0
      %773 = vmatprep.subr.bf16.mxu0 0
      %774 = vmatpush1.bf16.msra.mxu0 0
      %775 = vmatprep.mubr.bf16.mxu0 0
      %776 = vmatmul.mubr.bf16.gmra.mrb[0].mxu0 %v741
      %v777 = vpop.f32.mrb[0].mxu0
      %v778 = vadd.f32 0.0, %v777
      %v779 = vpop.f32.mrb[0].mxu0
      %v780 = vpop.f32.mrb[0].mxu0
      %v781 = vadd.f32 0.0, %v780
      %v782 = vpop.f32.mrb[0].mxu0
      %783 = vdwg.mxu0
      %784 = vrot.lane.b32.xlu0 %v258, 126
      %v785 = vpop.permute.xlu0 %784
      %786 = vrot.lane.b32.xlu0 %v263, 126
      %v787 = vpop.permute.xlu0 %786
      %v789 = vsel %vm264, %v785, 0
      %v792 = vsel %vm264, %v787, 0
      %794 = vmatprep.subr.bf16.mxu0 0
      %795 = vmatpush1.bf16.xpose.msra.mxu0 %v792
      %796 = vmatprep.subr.bf16.mxu0 0
      %797 = vmatpush1.bf16.xpose.msra.mxu0 0
      %798 = vmatprep.subr.bf16.mxu0 0
      %799 = vmatpush1.bf16.xpose.msra.mxu0 0
      %800 = vmatprep.subr.bf16.mxu0 0
      %801 = vmatpush1.bf16.xpose.msra.mxu0 0
      %802 = vmatprep.subr.bf16.mxu0 0
      %803 = vmatpush1.bf16.xpose.msra.mxu0 0
      %804 = vmatprep.subr.bf16.mxu0 0
      %805 = vmatpush1.bf16.xpose.msra.mxu0 0
      %806 = vmatprep.subr.bf16.mxu0 0
      %807 = vmatpush1.bf16.xpose.msra.mxu0 0
      %808 = vmatprep.subr.bf16.mxu0 0
      %809 = vmatpush1.bf16.xpose.msra.mxu0 0
      %810 = vmatprep.subr.bf16.mxu0 0
      %811 = vmatpush1.bf16.xpose.msra.mxu0 0
      %812 = vmatprep.subr.bf16.mxu0 0
      %813 = vmatpush1.bf16.xpose.msra.mxu0 0
      %814 = vmatprep.subr.bf16.mxu0 0
      %815 = vmatpush1.bf16.xpose.msra.mxu0 0
      %816 = vmatprep.subr.bf16.mxu0 0
      %817 = vmatpush1.bf16.xpose.msra.mxu0 0
      %818 = vmatprep.subr.bf16.mxu0 0
      %819 = vmatpush1.bf16.xpose.msra.mxu0 0
      %820 = vmatprep.subr.bf16.mxu0 0
      %821 = vmatpush1.bf16.xpose.msra.mxu0 0
      %822 = vmatprep.subr.bf16.mxu0 0
      %823 = vmatpush1.bf16.xpose.msra.mxu0 0
      %824 = vmatprep.subr.bf16.mxu0 0
      %825 = vmatpush1.bf16.xpose.msra.mxu0 0
      %826 = vmatprep.mubr.bf16.mxu0 0
      %827 = vmatmul.mubr.bf16.gmra.mrb[0].mxu0 %v789
      %v828 = vpop.f32.mrb[0].mxu0
      %v829 = vadd.f32 0.0, %v828
      %v830 = vpop.f32.mrb[0].mxu0
      %v831 = vpop.f32.mrb[0].mxu0
      %v832 = vadd.f32 0.0, %v831
      %v833 = vpop.f32.mrb[0].mxu0
      %834 = vdwg.mxu0
      %835 = vrot.lane.b32.xlu0 %v316, 126
      %v836 = vpop.permute.xlu0 %835
      %837 = vrot.lane.b32.xlu0 %v321, 126
      %v838 = vpop.permute.xlu0 %837
      %v840 = vsel %vm264, %v836, 0
      %v843 = vsel %vm264, %v838, 0
      %845 = vmatprep.subr.bf16.mxu0 0
      %846 = vmatpush1.bf16.xpose.msra.mxu0 %v843
      %847 = vmatprep.subr.bf16.mxu0 0
      %848 = vmatpush1.bf16.xpose.msra.mxu0 0
      %849 = vmatprep.subr.bf16.mxu0 0
      %850 = vmatpush1.bf16.xpose.msra.mxu0 0
      %851 = vmatprep.subr.bf16.mxu0 0
      %852 = vmatpush1.bf16.xpose.msra.mxu0 0
      %853 = vmatprep.subr.bf16.mxu0 0
      %854 = vmatpush1.bf16.xpose.msra.mxu0 0
      %855 = vmatprep.subr.bf16.mxu0 0
      %856 = vmatpush1.bf16.xpose.msra.mxu0 0
      %857 = vmatprep.subr.bf16.mxu0 0
      %858 = vmatpush1.bf16.xpose.msra.mxu0 0
      %859 = vmatprep.subr.bf16.mxu0 0
      %860 = vmatpush1.bf16.xpose.msra.mxu0 0
      %861 = vmatprep.subr.bf16.mxu0 0
      %862 = vmatpush1.bf16.xpose.msra.mxu0 0
      %863 = vmatprep.subr.bf16.mxu0 0
      %864 = vmatpush1.bf16.xpose.msra.mxu0 0
      %865 = vmatprep.subr.bf16.mxu0 0
      %866 = vmatpush1.bf16.xpose.msra.mxu0 0
      %867 = vmatprep.subr.bf16.mxu0 0
      %868 = vmatpush1.bf16.xpose.msra.mxu0 0
      %869 = vmatprep.subr.bf16.mxu0 0
      %870 = vmatpush1.bf16.xpose.msra.mxu0 0
      %871 = vmatprep.subr.bf16.mxu0 0
      %872 = vmatpush1.bf16.xpose.msra.mxu0 0
      %873 = vmatprep.subr.bf16.mxu0 0
      %874 = vmatpush1.bf16.xpose.msra.mxu0 0
      %875 = vmatprep.subr.bf16.mxu0 0
      %876 = vmatpush1.bf16.xpose.msra.mxu0 0
      %877 = vmatprep.mubr.bf16.mxu0 0
      %878 = vmatmul.mubr.bf16.gmra.mrb[0].mxu0 %v840
      %v879 = vpop.f32.mrb[0].mxu0
      %v880 = vadd.f32 0.0, %v879
      %v881 = vpop.f32.mrb[0].mxu0
      %v882 = vpop.f32.mrb[0].mxu0
      %v883 = vadd.f32 0.0, %v882
      %v884 = vpop.f32.mrb[0].mxu0
      %885 = vdwg.mxu0
      %886 = vrot.lane.b32.xlu0 %v373, 126
      %v887 = vpop.permute.xlu0 %886
      %888 = vrot.lane.b32.xlu0 %v378, 126
      %v889 = vpop.permute.xlu0 %888
      %v891 = vsel %vm264, %v887, 0
      %v894 = vsel %vm264, %v889, 0
      %896 = vmatprep.subr.bf16.mxu0 0
      %897 = vmatpush1.bf16.xpose.msra.mxu0 %v894
      %898 = vmatprep.subr.bf16.mxu0 0
      %899 = vmatpush1.bf16.xpose.msra.mxu0 0
      %900 = vmatprep.subr.bf16.mxu0 0
      %901 = vmatpush1.bf16.xpose.msra.mxu0 0
      %902 = vmatprep.subr.bf16.mxu0 0
      %903 = vmatpush1.bf16.xpose.msra.mxu0 0
      %904 = vmatprep.subr.bf16.mxu0 0
      %905 = vmatpush1.bf16.xpose.msra.mxu0 0
      %906 = vmatprep.subr.bf16.mxu0 0
      %907 = vmatpush1.bf16.xpose.msra.mxu0 0
      %908 = vmatprep.subr.bf16.mxu0 0
      %909 = vmatpush1.bf16.xpose.msra.mxu0 0
      %910 = vmatprep.subr.bf16.mxu0 0
      %911 = vmatpush1.bf16.xpose.msra.mxu0 0
      %912 = vmatprep.subr.bf16.mxu0 0
      %913 = vmatpush1.bf16.xpose.msra.mxu0 0
      %914 = vmatprep.subr.bf16.mxu0 0
      %915 = vmatpush1.bf16.xpose.msra.mxu0 0
      %916 = vmatprep.subr.bf16.mxu0 0
      %917 = vmatpush1.bf16.xpose.msra.mxu0 0
      %918 = vmatprep.subr.bf16.mxu0 0
      %919 = vmatpush1.bf16.xpose.msra.mxu0 0
      %920 = vmatprep.subr.bf16.mxu0 0
      %921 = vmatpush1.bf16.xpose.msra.mxu0 0
      %922 = vmatprep.subr.bf16.mxu0 0
      %923 = vmatpush1.bf16.xpose.msra.mxu0 0
      %924 = vmatprep.subr.bf16.mxu0 0
      %925 = vmatpush1.bf16.xpose.msra.mxu0 0
      %926 = vmatprep.subr.bf16.mxu0 0
      %927 = vmatpush1.bf16.xpose.msra.mxu0 0
      %928 = vmatprep.mubr.bf16.mxu0 0
      %929 = vmatmul.mubr.bf16.gmra.mrb[0].mxu0 %v891
      %v930 = vpop.f32.mrb[0].mxu0
      %v931 = vadd.f32 0.0, %v930
      %v932 = vpop.f32.mrb[0].mxu0
      %v933 = vpop.f32.mrb[0].mxu0
      %v934 = vadd.f32 0.0, %v933
      %v935 = vpop.f32.mrb[0].mxu0
      %936 = vdwg.mxu0
      %937 = vrot.lane.b32.xlu0 %v430, 126
      %v938 = vpop.permute.xlu0 %937
      %939 = vrot.lane.b32.xlu0 %v435, 126
      %v940 = vpop.permute.xlu0 %939
      %v942 = vsel %vm264, %v938, 0
      %v945 = vsel %vm264, %v940, 0
      %947 = vmatprep.subr.bf16.mxu0 0
      %948 = vmatpush1.bf16.xpose.msra.mxu0 %v945
      %949 = vmatprep.subr.bf16.mxu0 0
      %950 = vmatpush1.bf16.xpose.msra.mxu0 0
      %951 = vmatprep.subr.bf16.mxu0 0
      %952 = vmatpush1.bf16.xpose.msra.mxu0 0
      %953 = vmatprep.subr.bf16.mxu0 0
      %954 = vmatpush1.bf16.xpose.msra.mxu0 0
      %955 = vmatprep.subr.bf16.mxu0 0
      %956 = vmatpush1.bf16.xpose.msra.mxu0 0
      %957 = vmatprep.subr.bf16.mxu0 0
      %958 = vmatpush1.bf16.xpose.msra.mxu0 0
      %959 = vmatprep.subr.bf16.mxu0 0
      %960 = vmatpush1.bf16.xpose.msra.mxu0 0
      %961 = vmatprep.subr.bf16.mxu0 0
      %962 = vmatpush1.bf16.xpose.msra.mxu0 0
      %963 = vmatprep.subr.bf16.mxu0 0
      %964 = vmatpush1.bf16.xpose.msra.mxu0 0
      %965 = vmatprep.subr.bf16.mxu0 0
      %966 = vmatpush1.bf16.xpose.msra.mxu0 0
      %967 = vmatprep.subr.bf16.mxu0 0
      %968 = vmatpush1.bf16.xpose.msra.mxu0 0
      %969 = vmatprep.subr.bf16.mxu0 0
      %970 = vmatpush1.bf16.xpose.msra.mxu0 0
      %971 = vmatprep.subr.bf16.mxu0 0
      %972 = vmatpush1.bf16.xpose.msra.mxu0 0
      %973 = vmatprep.subr.bf16.mxu0 0
      %974 = vmatpush1.bf16.xpose.msra.mxu0 0
      %975 = vmatprep.subr.bf16.mxu0 0
      %976 = vmatpush1.bf16.xpose.msra.mxu0 0
      %977 = vmatprep.subr.bf16.mxu0 0
      %978 = vmatpush1.bf16.xpose.msra.mxu0 0
      %979 = vmatprep.mubr.bf16.mxu0 0
      %980 = vmatmul.mubr.bf16.gmra.mrb[0].mxu0 %v942
      %v981 = vpop.f32.mrb[0].mxu0
      %v982 = vadd.f32 0.0, %v981
      %v983 = vpop.f32.mrb[0].mxu0
      %v984 = vpop.f32.mrb[0].mxu0
      %v985 = vadd.f32 0.0, %v984
      %v986 = vpop.f32.mrb[0].mxu0
      %987 = vdwg.mxu0
      %v988 = vmul.f32 %v829, 0.70710677
      %v989 = vmul.f32 %v832, 0.70710677
      %v990 = vmul.f32 %v880, 0.70710677
      %v991 = vmul.f32 %v883, 0.70710677
      %v992 = vmul.f32 %v931, 0.70710677
      %v993 = vmul.f32 %v934, 0.70710677
      %v994 = vmul.f32 %v982, 0.70710677
      %v995 = vmul.f32 %v985, 0.70710677
      %v996 = vsel %vm491, %v988, -inf
      %997 = vmax.xlane.f32.xlu0 %v996
      %v998 = vpop.xlane.xlu0 %997
      %v999 = vsel %vm491, %v989, -inf
      %1000 = vmax.xlane.f32.xlu0 %v999
      %v1001 = vpop.xlane.xlu0 %1000
      %v1002 = vsel %vm491, %v990, -inf
      %1003 = vmax.xlane.f32.xlu0 %v1002
      %v1004 = vpop.xlane.xlu0 %1003
      %v1005 = vsel %vm491, %v991, -inf
      %1006 = vmax.xlane.f32.xlu0 %v1005
      %v1007 = vpop.xlane.xlu0 %1006
      %v1008 = vsel %vm491, %v992, -inf
      %1009 = vmax.xlane.f32.xlu0 %v1008
      %v1010 = vpop.xlane.xlu0 %1009
      %v1011 = vsel %vm491, %v993, -inf
      %1012 = vmax.xlane.f32.xlu0 %v1011
      %v1013 = vpop.xlane.xlu0 %1012
      %v1014 = vsel %vm491, %v994, -inf
      %1015 = vmax.xlane.f32.xlu0 %v1014
      %v1016 = vpop.xlane.xlu0 %1015
      %v1017 = vsel %vm491, %v995, -inf
      %1018 = vmax.xlane.f32.xlu0 %v1017
      %v1019 = vpop.xlane.xlu0 %1018
      %v1020 = vsub.f32 %v988, %v998
      %v1021 = vsub.f32 %v989, %v1001
      %v1022 = vsub.f32 %v990, %v1004
      %v1023 = vsub.f32 %v991, %v1007
      %v1024 = vsub.f32 %v992, %v1010
      %v1025 = vsub.f32 %v993, %v1013
      %v1026 = vsub.f32 %v994, %v1016
      %v1027 = vsub.f32 %v995, %v1019
      %v1028 = vmul.f32 %v1020, 1.442695
      %v1029 = vpow.pop %v1028
      %v1030 = vmul.f32 %v1021, 1.442695
      %v1031 = vpow.pop %v1030
      %v1032 = vmul.f32 %v1022, 1.442695
      %v1033 = vpow.pop %v1032
      %v1034 = vmul.f32 %v1023, 1.442695
      %v1035 = vpow.pop %v1034
      %v1036 = vmul.f32 %v1024, 1.442695
      %v1037 = vpow.pop %v1036
      %v1038 = vmul.f32 %v1025, 1.442695
      %v1039 = vpow.pop %v1038
      %v1040 = vmul.f32 %v1026, 1.442695
      %v1041 = vpow.pop %v1040
      %v1042 = vmul.f32 %v1027, 1.442695
      %v1043 = vpow.pop %v1042
      %v1044 = vsel %vm491, %v1029, 0.0
      %1045 = vadd.xlane.f32.xlu0 %v1044
      %v1046 = vpop.xlane.xlu0 %1045
      %v1047 = vsel %vm491, %v1031, 0.0
      %1048 = vadd.xlane.f32.xlu0 %v1047
      %v1049 = vpop.xlane.xlu0 %1048
      %v1050 = vsel %vm491, %v1033, 0.0
      %1051 = vadd.xlane.f32.xlu0 %v1050
      %v1052 = vpop.xlane.xlu0 %1051
      %v1053 = vsel %vm491, %v1035, 0.0
      %1054 = vadd.xlane.f32.xlu0 %v1053
      %v1055 = vpop.xlane.xlu0 %1054
      %v1056 = vsel %vm491, %v1037, 0.0
      %1057 = vadd.xlane.f32.xlu0 %v1056
      %v1058 = vpop.xlane.xlu0 %1057
      %v1059 = vsel %vm491, %v1039, 0.0
      %1060 = vadd.xlane.f32.xlu0 %v1059
      %v1061 = vpop.xlane.xlu0 %1060
      %v1062 = vsel %vm491, %v1041, 0.0
      %1063 = vadd.xlane.f32.xlu0 %v1062
      %v1064 = vpop.xlane.xlu0 %1063
      %v1065 = vsel %vm491, %v1043, 0.0
      %1066 = vadd.xlane.f32.xlu0 %v1065
      %v1067 = vpop.xlane.xlu0 %1066
      %v1068 = vrcp.pop %v1046
      %v1069 = vrcp.pop %v1049
      %v1070 = vrcp.pop %v1052
      %v1071 = vrcp.pop %v1055
      %v1072 = vrcp.pop %v1058
      %v1073 = vrcp.pop %v1061
      %v1074 = vrcp.pop %v1064
      %v1075 = vrcp.pop %v1067
      %v1076 = vmul.f32 %v1029, %v1068
      %v1077 = vmul.f32 %v1031, %v1069
      %v1078 = vmul.f32 %v1033, %v1070
      %v1079 = vmul.f32 %v1035, %v1071
      %v1080 = vmul.f32 %v1037, %v1072
      %v1081 = vmul.f32 %v1039, %v1073
      %v1082 = vmul.f32 %v1041, %v1074
      %v1083 = vmul.f32 %v1043, %v1075
      %v1084 = vpack.c.bf16 %v1077, %v1076
      %v1085 = vpack.c.bf16 %v1079, %v1078
      %v1086 = vpack.c.bf16 %v1081, %v1080
      %v1087 = vpack.c.bf16 %v1083, %v1082
      %1088 = vrot.lane.b32.xlu0 %v588, 126
      %v1089 = vpop.permute.xlu0 %1088
      %v1092 = vsel %vm491, %v1084, 0
      %1094 = vmatprep.subr.bf16.mxu0 0
      %1095 = vmatpush1.bf16.msra.mxu0 %v1089
      %1096 = vmatprep.subr.bf16.mxu0 0
      %1097 = vmatpush1.bf16.msra.mxu0 0
      %1098 = vmatprep.subr.bf16.mxu0 0
      %1099 = vmatpush1.bf16.msra.mxu0 0
      %1100 = vmatprep.subr.bf16.mxu0 0
      %1101 = vmatpush1.bf16.msra.mxu0 0
      %1102 = vmatprep.subr.bf16.mxu0 0
      %1103 = vmatpush1.bf16.msra.mxu0 0
      %1104 = vmatprep.subr.bf16.mxu0 0
      %1105 = vmatpush1.bf16.msra.mxu0 0
      %1106 = vmatprep.subr.bf16.mxu0 0
      %1107 = vmatpush1.bf16.msra.mxu0 0
      %1108 = vmatprep.subr.bf16.mxu0 0
      %1109 = vmatpush1.bf16.msra.mxu0 0
      %1110 = vmatprep.subr.bf16.mxu0 0
      %1111 = vmatpush1.bf16.msra.mxu0 0
      %1112 = vmatprep.subr.bf16.mxu0 0
      %1113 = vmatpush1.bf16.msra.mxu0 0
      %1114 = vmatprep.subr.bf16.mxu0 0
      %1115 = vmatpush1.bf16.msra.mxu0 0
      %1116 = vmatprep.subr.bf16.mxu0 0
      %1117 = vmatpush1.bf16.msra.mxu0 0
      %1118 = vmatprep.subr.bf16.mxu0 0
      %1119 = vmatpush1.bf16.msra.mxu0 0
      %1120 = vmatprep.subr.bf16.mxu0 0
      %1121 = vmatpush1.bf16.msra.mxu0 0
      %1122 = vmatprep.subr.bf16.mxu0 0
      %1123 = vmatpush1.bf16.msra.mxu0 0
      %1124 = vmatprep.subr.bf16.mxu0 0
      %1125 = vmatpush1.bf16.msra.mxu0 0
      %1126 = vmatprep.mubr.bf16.mxu0 0
      %1127 = vmatmul.mubr.bf16.gmra.mrb[0].mxu0 %v1092
      %v1128 = vpop.f32.mrb[0].mxu0
      %v1129 = vadd.f32 0.0, %v1128
      %v1130 = vpop.f32.mrb[0].mxu0
      %v1131 = vpop.f32.mrb[0].mxu0
      %v1132 = vadd.f32 0.0, %v1131
      %v1133 = vpop.f32.mrb[0].mxu0
      %1134 = vdwg.mxu0
      %1135 = vrot.lane.b32.xlu0 %v638, 126
      %v1136 = vpop.permute.xlu0 %1135
      %v1139 = vsel %vm491, %v1085, 0
      %1141 = vmatprep.subr.bf16.mxu0 0
      %1142 = vmatpush1.bf16.msra.mxu0 %v1136
      %1143 = vmatprep.subr.bf16.mxu0 0
      %1144 = vmatpush1.bf16.msra.mxu0 0
      %1145 = vmatprep.subr.bf16.mxu0 0
      %1146 = vmatpush1.bf16.msra.mxu0 0
      %1147 = vmatprep.subr.bf16.mxu0 0
      %1148 = vmatpush1.bf16.msra.mxu0 0
      %1149 = vmatprep.subr.bf16.mxu0 0
      %1150 = vmatpush1.bf16.msra.mxu0 0
      %1151 = vmatprep.subr.bf16.mxu0 0
      %1152 = vmatpush1.bf16.msra.mxu0 0
      %1153 = vmatprep.subr.bf16.mxu0 0
      %1154 = vmatpush1.bf16.msra.mxu0 0
      %1155 = vmatprep.subr.bf16.mxu0 0
      %1156 = vmatpush1.bf16.msra.mxu0 0
      %1157 = vmatprep.subr.bf16.mxu0 0
      %1158 = vmatpush1.bf16.msra.mxu0 0
      %1159 = vmatprep.subr.bf16.mxu0 0
      %1160 = vmatpush1.bf16.msra.mxu0 0
      %1161 = vmatprep.subr.bf16.mxu0 0
      %1162 = vmatpush1.bf16.msra.mxu0 0
      %1163 = vmatprep.subr.bf16.mxu0 0
      %1164 = vmatpush1.bf16.msra.mxu0 0
      %1165 = vmatprep.subr.bf16.mxu0 0
      %1166 = vmatpush1.bf16.msra.mxu0 0
      %1167 = vmatprep.subr.bf16.mxu0 0
      %1168 = vmatpush1.bf16.msra.mxu0 0
      %1169 = vmatprep.subr.bf16.mxu0 0
      %1170 = vmatpush1.bf16.msra.mxu0 0
      %1171 = vmatprep.subr.bf16.mxu0 0
      %1172 = vmatpush1.bf16.msra.mxu0 0
      %1173 = vmatprep.mubr.bf16.mxu0 0
      %1174 = vmatmul.mubr.bf16.gmra.mrb[0].mxu0 %v1139
      %v1175 = vpop.f32.mrb[0].mxu0
      %v1176 = vadd.f32 0.0, %v1175
      %v1177 = vpop.f32.mrb[0].mxu0
      %v1178 = vpop.f32.mrb[0].mxu0
      %v1179 = vadd.f32 0.0, %v1178
      %v1180 = vpop.f32.mrb[0].mxu0
      %1181 = vdwg.mxu0
      %1182 = vrot.lane.b32.xlu0 %v688, 126
      %v1183 = vpop.permute.xlu0 %1182
      %v1186 = vsel %vm491, %v1086, 0
      %1188 = vmatprep.subr.bf16.mxu0 0
      %1189 = vmatpush1.bf16.msra.mxu0 %v1183
      %1190 = vmatprep.subr.bf16.mxu0 0
      %1191 = vmatpush1.bf16.msra.mxu0 0
      %1192 = vmatprep.subr.bf16.mxu0 0
      %1193 = vmatpush1.bf16.msra.mxu0 0
      %1194 = vmatprep.subr.bf16.mxu0 0
      %1195 = vmatpush1.bf16.msra.mxu0 0
      %1196 = vmatprep.subr.bf16.mxu0 0
      %1197 = vmatpush1.bf16.msra.mxu0 0
      %1198 = vmatprep.subr.bf16.mxu0 0
      %1199 = vmatpush1.bf16.msra.mxu0 0
      %1200 = vmatprep.subr.bf16.mxu0 0
      %1201 = vmatpush1.bf16.msra.mxu0 0
      %1202 = vmatprep.subr.bf16.mxu0 0
      %1203 = vmatpush1.bf16.msra.mxu0 0
      %1204 = vmatprep.subr.bf16.mxu0 0
      %1205 = vmatpush1.bf16.msra.mxu0 0
      %1206 = vmatprep.subr.bf16.mxu0 0
      %1207 = vmatpush1.bf16.msra.mxu0 0
      %1208 = vmatprep.subr.bf16.mxu0 0
      %1209 = vmatpush1.bf16.msra.mxu0 0
      %1210 = vmatprep.subr.bf16.mxu0 0
      %1211 = vmatpush1.bf16.msra.mxu0 0
      %1212 = vmatprep.subr.bf16.mxu0 0
      %1213 = vmatpush1.bf16.msra.mxu0 0
      %1214 = vmatprep.subr.bf16.mxu0 0
      %1215 = vmatpush1.bf16.msra.mxu0 0
      %1216 = vmatprep.subr.bf16.mxu0 0
      %1217 = vmatpush1.bf16.msra.mxu0 0
      %1218 = vmatprep.subr.bf16.mxu0 0
      %1219 = vmatpush1.bf16.msra.mxu0 0
      %1220 = vmatprep.mubr.bf16.mxu0 0
      %1221 = vmatmul.mubr.bf16.gmra.mrb[0].mxu0 %v1186
      %v1222 = vpop.f32.mrb[0].mxu0
      %v1223 = vadd.f32 0.0, %v1222
      %v1224 = vpop.f32.mrb[0].mxu0
      %v1225 = vpop.f32.mrb[0].mxu0
      %v1226 = vadd.f32 0.0, %v1225
      %v1227 = vpop.f32.mrb[0].mxu0
      %1228 = vdwg.mxu0
      %1229 = vrot.lane.b32.xlu0 %v738, 126
      %v1230 = vpop.permute.xlu0 %1229
      %v1233 = vsel %vm491, %v1087, 0
      %1235 = vmatprep.subr.bf16.mxu0 0
      %1236 = vmatpush1.bf16.msra.mxu0 %v1230
      %1237 = vmatprep.subr.bf16.mxu0 0
      %1238 = vmatpush1.bf16.msra.mxu0 0
      %1239 = vmatprep.subr.bf16.mxu0 0
      %1240 = vmatpush1.bf16.msra.mxu0 0
      %1241 = vmatprep.subr.bf16.mxu0 0
      %1242 = vmatpush1.bf16.msra.mxu0 0
      %1243 = vmatprep.subr.bf16.mxu0 0
      %1244 = vmatpush1.bf16.msra.mxu0 0
      %1245 = vmatprep.subr.bf16.mxu0 0
      %1246 = vmatpush1.bf16.msra.mxu0 0
      %1247 = vmatprep.subr.bf16.mxu0 0
      %1248 = vmatpush1.bf16.msra.mxu0 0
      %1249 = vmatprep.subr.bf16.mxu0 0
      %1250 = vmatpush1.bf16.msra.mxu0 0
      %1251 = vmatprep.subr.bf16.mxu0 0
      %1252 = vmatpush1.bf16.msra.mxu0 0
      %1253 = vmatprep.subr.bf16.mxu0 0
      %1254 = vmatpush1.bf16.msra.mxu0 0
      %1255 = vmatprep.subr.bf16.mxu0 0
      %1256 = vmatpush1.bf16.msra.mxu0 0
      %1257 = vmatprep.subr.bf16.mxu0 0
      %1258 = vmatpush1.bf16.msra.mxu0 0
      %1259 = vmatprep.subr.bf16.mxu0 0
      %1260 = vmatpush1.bf16.msra.mxu0 0
      %1261 = vmatprep.subr.bf16.mxu0 0
      %1262 = vmatpush1.bf16.msra.mxu0 0
      %1263 = vmatprep.subr.bf16.mxu0 0
      %1264 = vmatpush1.bf16.msra.mxu0 0
      %1265 = vmatprep.subr.bf16.mxu0 0
      %1266 = vmatpush1.bf16.msra.mxu0 0
      %1267 = vmatprep.mubr.bf16.mxu0 0
      %1268 = vmatmul.mubr.bf16.gmra.mrb[0].mxu0 %v1233
      %v1269 = vpop.f32.mrb[0].mxu0
      %v1270 = vadd.f32 0.0, %v1269
      %v1271 = vpop.f32.mrb[0].mxu0
      %v1272 = vpop.f32.mrb[0].mxu0
      %v1273 = vadd.f32 0.0, %v1272
      %v1274 = vpop.f32.mrb[0].mxu0
      %1275 = vdwg.mxu0
      %1284 = vrot.lane.b32.xlu0 %v1129, 2
      %v1285 = vpop.permute.xlu0 %1284
      %1286 = vrot.lane.b32.xlu0 %v1132, 2
      %v1287 = vpop.permute.xlu0 %1286
      %1288 = vrot.lane.b32.xlu0 %v1176, 2
      %v1289 = vpop.permute.xlu0 %1288
      %1290 = vrot.lane.b32.xlu0 %v1179, 2
      %v1291 = vpop.permute.xlu0 %1290
      %1292 = vrot.lane.b32.xlu0 %v1223, 2
      %v1293 = vpop.permute.xlu0 %1292
      %1294 = vrot.lane.b32.xlu0 %v1226, 2
      %v1295 = vpop.permute.xlu0 %1294
      %1296 = vrot.lane.b32.xlu0 %v1270, 2
      %v1297 = vpop.permute.xlu0 %1296
      %1298 = vrot.lane.b32.xlu0 %v1273, 2
      %v1299 = vpop.permute.xlu0 %1298
      %v1308 = vsel %vm264, %v628, %v1285
      %v1309 = vsel %vm264, %v631, %v1287
      %v1310 = vsel %vm264, %v678, %v1289
      %v1311 = vsel %vm264, %v681, %v1291
      %v1312 = vsel %vm264, %v728, %v1293
      %v1313 = vsel %vm264, %v731, %v1295
      %v1314 = vsel %vm264, %v778, %v1297
      %v1315 = vsel %vm264, %v781, %v1299
      %v1316 = vpack.c.bf16 %v1309, %v1308
      %v1317 = vpack.c.bf16 %v1311, %v1310
      %v1318 = vpack.c.bf16 %v1313, %v1312
      %v1319 = vpack.c.bf16 %v1315, %v1314
      %v1324 = vunpack.c.l.b16 %v1316
      %v1325 = vunpack.c.h.b16 %v1316
      %v1326 = vunpack.c.l.b16 %v1317
      %v1327 = vunpack.c.h.b16 %v1317
      %v1328 = vunpack.c.l.b16 %v1318
      %v1329 = vunpack.c.h.b16 %v1318
      %v1330 = vunpack.c.l.b16 %v1319
      %v1331 = vunpack.c.h.b16 %v1319
      %v1332 = vpack.c.b16 %v1324, %v1324
      %v1333 = vpack.c.b16 %v1325, %v1325
      %v1334 = vpack.c.b16 %v1326, %v1326
      %v1335 = vpack.c.b16 %v1327, %v1327
      %v1336 = vpack.c.b16 %v1328, %v1328
      %v1337 = vpack.c.b16 %v1329, %v1329
      %v1338 = vpack.c.b16 %v1330, %v1330
      %v1339 = vpack.c.b16 %v1331, %v1331
      %vm1348 = vcmask 27648
      %1349 = vst.msk [vmem:[%s227] sm:$0xf] %vm1348, %v1332
      %1350 = vst.msk [vmem:[%s227 + $0x4] sm:$0xf] %vm1348, %v1333
      %1351 = vst.msk [vmem:[%s227 + $0x8] sm:$0xf] %vm1348, %v1334
      %1352 = vst.msk [vmem:[%s227 + $0xc] sm:$0xf] %vm1348, %v1335
      %1353 = vst.msk [vmem:[%s227 + $0x10] sm:$0xf] %vm1348, %v1336
      %1354 = vst.msk [vmem:[%s227 + $0x14] sm:$0xf] %vm1348, %v1337
      %1355 = vst.msk [vmem:[%s227 + $0x18] sm:$0xf] %vm1348, %v1338
      %1356 = vst.msk [vmem:[%s227 + $0x1c] sm:$0xf] %vm1348, %v1339
      %s1357 = smul.u32 4, %s14
      %p1358 = scmp.lt.s32.totalorder %s1357, 7
      %s1359 = scalar_select %p1358, %s1357, 7
      %s1360 = smul.addr %s1359, 2
      %s1361 = smul.addr %s1360, 4
      %s1362 = scalar_lea.vmem %s3, %s1361
      // Predicated region
      $region33: #{rstb_forward.23} parent=31 // pred_check
        %p1363 = pneg %p110
      $region34: #{rstb_forward.23} parent=31 // pred_check_branch
        %1365 = sbr.rel (%p1363) target = $region36
      $region35: #{rstb_forward.23} parent=31 // pred_region
        %s1366 = smul.u32 4, %s14
      $region36: #{rstb_forward.23} parent=31 // pred_fallthru
        _
    $region32: #{rstb_forward.23} parent=5 // pred_fallthru
      _
    %p1367 = scmp.le.s32.totalorder 2, %s9
    // Predicated region
    $region37: #{rstb_forward.23} parent=5 // pred_check
      %p1368 = pneg %p1367
    $region38: #{rstb_forward.23} parent=5 // pred_check_branch
      %1370 = sbr.rel (%p1368) target = $region40
    $region39: #{rstb_forward.23} parent=5 // pred_region
      %s1371 = ssub.s32 %s9, 2
      // Predicated region
      $region41: #{rstb_forward.23} parent=39 // pred_check
        %p1372 = pneg %p116
      $region42: #{rstb_forward.23} parent=39 // pred_check_branch
        %1374 = sbr.rel (%p1372) target = $region44
      $region43: #{rstb_forward.23} parent=39 // pred_region
        %s1375 = smul.u32 4, %s15
        %p1376 = scmp.lt.s32.totalorder %s1375, 7
        %s1377 = scalar_select %p1376, %s1375, 7
        %s1378 = smul.addr %s1377, 2
        %s1379 = smul.addr %s1378, 4
        %s1380 = scalar_lea.vmem %s3, %s1379
      $region44: #{rstb_forward.23} parent=39 // pred_fallthru
        _
    $region40: #{rstb_forward.23} parent=5 // pred_fallthru
      _
  $region6: #{rstb_forward.23} parent=0 // loop_footer
    %s13 = sadd.s32 1, %s9
  $region7: #{rstb_forward.23} parent=0 // loop_footer_branch
    %8 = sbr.rel target = $region3
  $region8: #{rstb_forward.23} parent=0 // loop_exit
    _

// kernel: rstb_forward.28
$region0: #{rstb_forward.28}
  #allocation0 [shape = 'u32[]', space=smem, size = 0x4, offset = 0x4, fixed_abs, tag = 'smem constant byte address 0x4 - core index']
  #allocation1 [shape = 'u32[144,128]{1,0:T(1,128)}', space=vmem, size = 0x12000, scoped, tag = 'internal scratch']
  %s0 = inlined_call_operand.vmem [shape: bf16[2,10,10,16], index: 0, kind: input, shape index: {}]
  %s1 = inlined_call_operand.vmem [shape: f32[9,16], index: 1, kind: input, shape index: {}]
  %s2 = inlined_call_operand.vmem [shape: f32[1,16], index: 2, kind: input, shape index: {}]
  %s3 = inlined_call_operand.vmem [shape: bf16[2,8,8,16], index: 3, kind: output, shape index: {}]
  %s4 = sld [smem:[#allocation0]]
  $region45: #{rstb_forward.28} parent=0
    _
  %s6 = ssub.s32 1, %s4
  %s7 = scalar_select 0, %s6, %s4
  loop: start=0, step=1, limit=4
  $region2: #{rstb_forward.28} parent=0 // loop_pre_header
    _
  $region3: #{rstb_forward.28} parent=0 // loop_header
    %s9 = sphi 0, %s13
    %p10 = scmp.ge.s32.totalorder %s9, 4
    %s16 = sphi 0, %s28
    %s17 = sphi 0, %s24
    %s18 = sphi 0, %s16
    %s19 = sphi 0, %s17
    %s20 = sphi 0, %s18
    %s21 = sphi 0, %s19
    %s33 = sphi 0, %s35
    %s36 = sphi 0, %s33
    %s37 = sphi 0, %s36
    %s53 = sphi 0, %s37
    %s59 = sphi 0, %s61
    %s62 = sphi 0, %s59
    %s63 = sphi 0, %s62
    %s79 = sphi 0, %s63
    %s85 = sphi 0, %s87
    %s88 = sphi 0, %s85
    %s89 = sphi 0, %s88
    %s105 = sphi 0, %s89
    %s113 = sphi 0, %s115
    %s116 = sphi 0, %s113
    %s117 = sphi 0, %s116
    %s133 = sphi 0, %s117
  $region4: #{rstb_forward.28} parent=0 // loop_header_branch
    %12 = sbr.rel (%p10) target = $region8
  $region5: #{rstb_forward.28} parent=0 // loop_body
    %s14 = ssub.s32 %s9, 1
    %s15 = ssub.s32 %s9, 2
    %s22 = sadd.s32 1, %s17
    %p23 = scmp.ge.s32.totalorder %s22, 1
    %s24 = scalar_select %p23, 0, %s22
    %s25 = sadd.s32 1, %s16
    %s26 = scalar_select %p23, %s25, %s16
    %p27 = scmp.ge.s32.totalorder %s26, 2
    %s28 = scalar_select %p27, 0, %s26
    %s29 = ssub.s32 %s16, %s28
    %s30 = ssub.s32 %s17, %s24
    %s31 = sor.u32 %s29, %s30
    %p32 = scmp.eq.s32.totalorder %s31, 0
    %s34 = sadd.s32 %s33, 1
    %s35 = scalar_select %p32, %s33, %s34
    %p38 = pneg %p32
    %p39 = scmp.eq.s32.totalorder %s9, 1
    %p40 = por %p38, %p39
    %p41 = scmp.ne.s32.totalorder %s33, %s36
    %p42 = scmp.eq.s32.totalorder %s9, 0
    %p43 = por %p41, %p42
    %p44 = scmp.ne.s32.totalorder %s33, %s36
    %p45 = scmp.eq.s32.totalorder %s14, 1
    %p46 = por %p44, %p45
    %p47 = scmp.ne.s32.totalorder %s36, %s37
    %p48 = scmp.eq.s32.totalorder %s14, 0
    %p49 = por %p47, %p48
    %p50 = scmp.ne.s32.totalorder %s36, %s37
    %p51 = scmp.eq.s32.totalorder %s15, 1
    %p52 = por %p50, %p51
    %p54 = scmp.ne.s32.totalorder %s37, %s53
    %p55 = scmp.eq.s32.totalorder %s15, 0
    %p56 = por %p54, %p55
    %s57 = ssub.s32 %s17, %s24
    %p58 = scmp.eq.s32.totalorder %s57, 0
    %s60 = sadd.s32 %s59, 1
    %s61 = scalar_select %p58, %s59, %s60
    %p64 = pneg %p58
    %p65 = scmp.eq.s32.totalorder %s9, 1
    %p66 = por %p64, %p65
    %p67 = scmp.ne.s32.totalorder %s59, %s62
    %p68 = scmp.eq.s32.totalorder %s9, 0
    %p69 = por %p67, %p68
    %p70 = scmp.ne.s32.totalorder %s59, %s62
    %p71 = scmp.eq.s32.totalorder %s14, 1
    %p72 = por %p70, %p71
    %p73 = scmp.ne.s32.totalorder %s62, %s63
    %p74 = scmp.eq.s32.totalorder %s14, 0
    %p75 = por %p73, %p74
    %p76 = scmp.ne.s32.totalorder %s62, %s63
    %p77 = scmp.eq.s32.totalorder %s15, 1
    %p78 = por %p76, %p77
    %p80 = scmp.ne.s32.totalorder %s63, %s79
    %p81 = scmp.eq.s32.totalorder %s15, 0
    %p82 = por %p80, %p81
    %s83 = ssub.s32 %s17, %s24
    %p84 = scmp.eq.s32.totalorder %s83, 0
    %s86 = sadd.s32 %s85, 1
    %s87 = scalar_select %p84, %s85, %s86
    %p90 = pneg %p84
    %p91 = scmp.eq.s32.totalorder %s9, 1
    %p92 = por %p90, %p91
    %p93 = scmp.ne.s32.totalorder %s85, %s88
    %p94 = scmp.eq.s32.totalorder %s9, 0
    %p95 = por %p93, %p94
    %p96 = scmp.ne.s32.totalorder %s85, %s88
    %p97 = scmp.eq.s32.totalorder %s14, 1
    %p98 = por %p96, %p97
    %p99 = scmp.ne.s32.totalorder %s88, %s89
    %p100 = scmp.eq.s32.totalorder %s14, 0
    %p101 = por %p99, %p100
    %p102 = scmp.ne.s32.totalorder %s88, %s89
    %p103 = scmp.eq.s32.totalorder %s15, 1
    %p104 = por %p102, %p103
    %p106 = scmp.ne.s32.totalorder %s89, %s105
    %p107 = scmp.eq.s32.totalorder %s15, 0
    %p108 = por %p106, %p107
    %s109 = ssub.s32 %s16, %s28
    %s110 = ssub.s32 %s17, %s24
    %s111 = sor.u32 %s109, %s110
    %p112 = scmp.eq.s32.totalorder %s111, 0
    %s114 = sadd.s32 %s113, 1
    %s115 = scalar_select %p112, %s113, %s114
    %p118 = pneg %p112
    %p119 = scmp.eq.s32.totalorder %s9, 1
    %p120 = por %p118, %p119
    %p121 = scmp.ne.s32.totalorder %s113, %s116
    %p122 = scmp.eq.s32.totalorder %s9, 0
    %p123 = por %p121, %p122
    %p124 = scmp.ne.s32.totalorder %s113, %s116
    %p125 = scmp.eq.s32.totalorder %s14, 1
    %p126 = por %p124, %p125
    %p127 = scmp.ne.s32.totalorder %s116, %s117
    %p128 = scmp.eq.s32.totalorder %s14, 0
    %p129 = por %p127, %p128
    %p130 = scmp.ne.s32.totalorder %s116, %s117
    %p131 = scmp.eq.s32.totalorder %s15, 1
    %p132 = por %p130, %p131
    %p134 = scmp.ne.s32.totalorder %s117, %s133
    %p135 = scmp.eq.s32.totalorder %s15, 0
    %p136 = por %p134, %p135
    %p137 = scmp.le.s32.totalorder 1, %s9
    %p138 = scmp.lt.s32.totalorder %s9, 3
    %p139 = pnand %p137, %p138
    %p140 = pneg %p139
    // Predicated region
    $region9: #{rstb_forward.28} parent=5 // pred_check
      _
    $region10: #{rstb_forward.28} parent=5 // pred_check_branch
      %142 = sbr.rel (%p139) target = $region12
    $region11: #{rstb_forward.28} parent=5 // pred_region
      %s143 = ssub.s32 %s9, 1
      // Predicated region
      $region13: #{rstb_forward.28} parent=11 // pred_check
        %p144 = pneg %p75
      $region14: #{rstb_forward.28} parent=11 // pred_check_branch
        %146 = sbr.rel (%p144) target = $region16
      $region15: #{rstb_forward.28} parent=11 // pred_region
        %p147 = scmp.lt.s32.totalorder %s19, 0
        %s148 = scalar_select %p147, %s19, 0
        %s149 = smul.addr %s148, 8
        %s150 = scalar_lea.vmem %s1, %s149
      $region16: #{rstb_forward.28} parent=11 // pred_fallthru
        _
      // Predicated region
      $region17: #{rstb_forward.28} parent=11 // pred_check
        %p151 = pneg %p101
      $region18: #{rstb_forward.28} parent=11 // pred_check_branch
        %153 = sbr.rel (%p151) target = $region20
      $region19: #{rstb_forward.28} parent=11 // pred_region
        %p154 = scmp.lt.s32.totalorder %s19, 0
        %s155 = scalar_select %p154, %s19, 0
        %s156 = scalar_lea.vmem %s2, %s155
      $region20: #{rstb_forward.28} parent=11 // pred_fallthru
        _
    $region12: #{rstb_forward.28} parent=5 // pred_fallthru
      _
    %p157 = scmp.lt.s32.totalorder %s9, 2
    // Predicated region
    $region21: #{rstb_forward.28} parent=5 // pred_check
      %p158 = pneg %p157
    $region22: #{rstb_forward.28} parent=5 // pred_check_branch
      %160 = sbr.rel (%p158) target = $region24
    $region23: #{rstb_forward.28} parent=5 // pred_region
      // Predicated region
      $region25: #{rstb_forward.28} parent=23 // pred_check
        %p161 = pneg %p43
      $region26: #{rstb_forward.28} parent=23 // pred_check_branch
        %163 = sbr.rel (%p161) target = $region28
      $region27: #{rstb_forward.28} parent=23 // pred_region
        %p164 = scmp.lt.s32.totalorder %s16, 1
        %s165 = scalar_select %p164, %s16, 1
        %p166 = scmp.lt.s32.totalorder %s17, 0
        %s167 = scalar_select %p166, %s17, 0
        %s168 = smul.addr %s165, 20
        %s169 = sadd.s32 %s167, %s168
        %s170 = smul.addr %s169, 4
        %s171 = scalar_lea.vmem %s0, %s170
      $region28: #{rstb_forward.28} parent=23 // pred_fallthru
        _
    $region24: #{rstb_forward.28} parent=5 // pred_fallthru
      _
    %p172 = scmp.le.s32.totalorder 1, %s9
    %p173 = scmp.lt.s32.totalorder %s9, 3
    %p174 = pnand %p172, %p173
    %p175 = pneg %p174
    // Predicated region
    $region29: #{rstb_forward.28} parent=5 // pred_check
      _
    $region30: #{rstb_forward.28} parent=5 // pred_check_branch
      %177 = sbr.rel (%p174) target = $region32
    $region31: #{rstb_forward.28} parent=5 // pred_region
      %s178 = ssub.s32 %s9, 1
      %p179 = scmp.lt.s32.totalorder %s18, 1
      %s180 = scalar_select %p179, %s18, 1
      %p181 = scmp.lt.s32.totalorder %s19, 0
      %s182 = scalar_select %p181, %s19, 0
      %s183 = smul.addr %s180, 20
      %s184 = sadd.s32 %s182, %s183
      %s185 = smul.addr %s184, 4
      %s186 = scalar_lea.vmem %s0, %s185
      %p187 = pneg %p49
      %p188 = pneg %p46
      %p189 = scmp.lt.s32.totalorder %s19, 0
      %s190 = scalar_select %p189, %s19, 0
      %s191 = smul.addr %s190, 8
      %s192 = scalar_lea.vmem %s1, %s191
      %p193 = pneg %p75
      %p194 = pneg %p72
      %p195 = scmp.lt.s32.totalorder %s19, 0
      %s196 = scalar_select %p195, %s19, 0
      %s197 = scalar_lea.vmem %s2, %s196
      %p198 = pneg %p101
      %p199 = pneg %p98
      %p200 = pneg %p129
      %p201 = pneg %p126
      %p202 = scmp.lt.s32.totalorder %s18, 1
      %s203 = scalar_select %p202, %s18, 1
      %p204 = scmp.lt.s32.totalorder %s19, 0
      %s205 = scalar_select %p204, %s19, 0
      %s206 = smul.addr %s203, 8
      %s207 = sadd.s32 %s205, %s206
      %s208 = smul.addr %s207, 4
      %s209 = scalar_lea.vmem %s3, %s208
      %p210 = scmp.lt.s32.totalorder %s18, 1
      %s211 = scalar_select %p210, %s18, 1
      %p212 = scmp.lt.s32.totalorder %s19, 0
      %s213 = scalar_select %p212, %s19, 0
      %s214 = smul.addr %s211, 20
      %s215 = sadd.s32 %s213, %s214
      %s216 = smul.addr %s215, 4
      %s217 = scalar_lea.vmem %s0, %s216
      %p218 = scmp.lt.s32.totalorder %s19, 0
      %s219 = scalar_select %p218, %s19, 0
      %s220 = smul.addr %s219, 8
      %s221 = scalar_lea.vmem %s1, %s220
      %p222 = scmp.lt.s32.totalorder %s19, 0
      %s223 = scalar_select %p222, %s19, 0
      %s224 = scalar_lea.vmem %s2, %s223
      %p225 = scmp.lt.s32.totalorder %s18, 1
      %s226 = scalar_select %p225, %s18, 1
      %p227 = scmp.lt.s32.totalorder %s19, 0
      %s228 = scalar_select %p227, %s19, 0
      %s229 = smul.addr %s226, 8
      %s230 = sadd.s32 %s228, %s229
      %s231 = smul.addr %s230, 4
      %s232 = scalar_lea.vmem %s3, %s231
      %v233 = vld [vmem:[%s217] sm:$0xf]
      %v234 = vld [vmem:[%s217 + $0x4] sm:$0x1]
      %v235 = vld [vmem:[%s217 + $0x8] sm:$0xf]
      %v236 = vld [vmem:[%s217 + $0xc] sm:$0x1]
      %v237 = vld [vmem:[%s217 + $0x10] sm:$0xf]
      %v238 = vld [vmem:[%s217 + $0x14] sm:$0x1]
      %v239 = vld [vmem:[%s217 + $0x18] sm:$0xf]
      %v240 = vld [vmem:[%s217 + $0x1c] sm:$0x1]
      %v241 = vld [vmem:[%s217 + $0x20] sm:$0xf]
      %v242 = vld [vmem:[%s217 + $0x24] sm:$0x1]
      %v243 = vld [vmem:[%s217 + $0x28] sm:$0xf]
      %v244 = vld [vmem:[%s217 + $0x2c] sm:$0x1]
      %v245 = vld [vmem:[%s217 + $0x30] sm:$0xf]
      %v246 = vld [vmem:[%s217 + $0x34] sm:$0x1]
      %v247 = vld [vmem:[%s217 + $0x38] sm:$0xf]
      %v248 = vld [vmem:[%s217 + $0x3c] sm:$0x1]
      %v249 = vld [vmem:[%s217 + $0x40] sm:$0xf]
      %v250 = vld [vmem:[%s217 + $0x44] sm:$0x1]
      %v251 = vld [vmem:[%s217 + $0x48] sm:$0xf]
      %v252 = vld [vmem:[%s217 + $0x4c] sm:$0x1]
      %v253 = vunpack.c.l.bf16 %v233
      %v254 = vunpack.c.l.bf16 %v234
      %v255 = vunpack.c.l.bf16 %v235
      %v256 = vunpack.c.l.bf16 %v236
      %v257 = vunpack.c.l.bf16 %v237
      %v258 = vunpack.c.l.bf16 %v238
      %v259 = vunpack.c.l.bf16 %v239
      %v260 = vunpack.c.l.bf16 %v240
      %v261 = vunpack.c.l.bf16 %v241
      %v262 = vunpack.c.l.bf16 %v242
      %v263 = vunpack.c.l.bf16 %v243
      %v264 = vunpack.c.l.bf16 %v244
      %v265 = vunpack.c.l.bf16 %v245
      %v266 = vunpack.c.l.bf16 %v246
      %v267 = vunpack.c.l.bf16 %v247
      %v268 = vunpack.c.l.bf16 %v248
      %v269 = vunpack.c.l.bf16 %v249
      %v270 = vunpack.c.l.bf16 %v250
      %v271 = vunpack.c.l.bf16 %v251
      %v272 = vunpack.c.l.bf16 %v252
      %v273 = vld [vmem:[%s221] sm:$0xff]
      %v274 = vld [vmem:[%s221 + $0x8] sm:$0x1]
      %v275 = vlaneseq
      %v276 = vshrl.u32 %v275, 7
      %v277 = vsub.s32 0, %v276
      %v278 = vrot.slane %v273, %v277
      %v279 = vmul.f32 %v253, %v278
      %v280 = vmul.f32 %v255, %v278
      %v281 = vmul.f32 %v257, %v278
      %v282 = vmul.f32 %v259, %v278
      %v283 = vmul.f32 %v261, %v278
      %v284 = vmul.f32 %v263, %v278
      %v285 = vmul.f32 %v265, %v278
      %v286 = vmul.f32 %v267, %v278
      %v287 = vadd.f32 %v279, 0.0
      %v288 = vadd.f32 %v280, 0.0
      %v289 = vadd.f32 %v281, 0.0
      %v290 = vadd.f32 %v282, 0.0
      %v291 = vadd.f32 %v283, 0.0
      %v292 = vadd.f32 %v284, 0.0
      %v293 = vadd.f32 %v285, 0.0
      %v294 = vadd.f32 %v286, 0.0
      %v295 = vlaneseq
      %v296 = vshrl.u32 %v295, 7
      %v297 = vsub.s32 1, %v296
      %v298 = vrot.slane %v273, %v297
      %v299 = vmul.f32 %v253, %v298
      %v300 = vmul.f32 %v254, %v298
      %v301 = vmul.f32 %v255, %v298
      %v302 = vmul.f32 %v256, %v298
      %v303 = vmul.f32 %v257, %v298
      %v304 = vmul.f32 %v258, %v298
      %v305 = vmul.f32 %v259, %v298
      %v306 = vmul.f32 %v260, %v298
      %v307 = vmul.f32 %v261, %v298
      %v308 = vmul.f32 %v262, %v298
      %v309 = vmul.f32 %v263, %v298
      %v310 = vmul.f32 %v264, %v298
      %v311 = vmul.f32 %v265, %v298
      %v312 = vmul.f32 %v266, %v298
      %v313 = vmul.f32 %v267, %v298
      %v314 = vmul.f32 %v268, %v298
      %vm331 = vcmask 1046528
      %v332 = vrot.slane %v299, 1
      %v333 = vrot.slane %v300, 1
      %v334 = vsel %vm331, %v332, %v333
      %v335 = vrot.slane %v301, 1
      %v336 = vrot.slane %v302, 1
      %v337 = vsel %vm331, %v335, %v336
      %v338 = vrot.slane %v303, 1
      %v339 = vrot.slane %v304, 1
      %v340 = vsel %vm331, %v338, %v339
      %v341 = vrot.slane %v305, 1
      %v342 = vrot.slane %v306, 1
      %v343 = vsel %vm331, %v341, %v342
      %v344 = vrot.slane %v307, 1
      %v345 = vrot.slane %v308, 1
      %v346 = vsel %vm331, %v344, %v345
      %v347 = vrot.slane %v309, 1
      %v348 = vrot.slane %v310, 1
      %v349 = vsel %vm331, %v347, %v348
      %v350 = vrot.slane %v311, 1
      %v351 = vrot.slane %v312, 1
      %v352 = vsel %vm331, %v350, %v351
      %v353 = vrot.slane %v313, 1
      %v354 = vrot.slane %v314, 1
      %v355 = vsel %vm331, %v353, %v354
      %v364 = vadd.f32 %v287, %v334
      %v365 = vadd.f32 %v288, %v337
      %v366 = vadd.f32 %v289, %v340
      %v367 = vadd.f32 %v290, %v343
      %v368 = vadd.f32 %v291, %v346
      %v369 = vadd.f32 %v292, %v349
      %v370 = vadd.f32 %v293, %v352
      %v371 = vadd.f32 %v294, %v355
      %v372 = vlaneseq
      %v373 = vshrl.u32 %v372, 7
      %v374 = vsub.s32 2, %v373
      %v375 = vrot.slane %v273, %v374
      %v376 = vmul.f32 %v253, %v375
      %v377 = vmul.f32 %v254, %v375
      %v378 = vmul.f32 %v255, %v375
      %v379 = vmul.f32 %v256, %v375
      %v380 = vmul.f32 %v257, %v375
      %v381 = vmul.f32 %v258, %v375
      %v382 = vmul.f32 %v259, %v375
      %v383 = vmul.f32 %v260, %v375
      %v384 = vmul.f32 %v261, %v375
      %v385 = vmul.f32 %v262, %v375
      %v386 = vmul.f32 %v263, %v375
      %v387 = vmul.f32 %v264, %v375
      %v388 = vmul.f32 %v265, %v375
      %v389 = vmul.f32 %v266, %v375
      %v390 = vmul.f32 %v267, %v375
      %v391 = vmul.f32 %v268, %v375
      %vm408 = vcmask 1045504
      %v409 = vrot.slane %v376, 2
      %v410 = vrot.slane %v377, 2
      %v411 = vsel %vm408, %v409, %v410
      %v412 = vrot.slane %v378, 2
      %v413 = vrot.slane %v379, 2
      %v414 = vsel %vm408, %v412, %v413
      %v415 = vrot.slane %v380, 2
      %v416 = vrot.slane %v381, 2
      %v417 = vsel %vm408, %v415, %v416
      %v418 = vrot.slane %v382, 2
      %v419 = vrot.slane %v383, 2
      %v420 = vsel %vm408, %v418, %v419
      %v421 = vrot.slane %v384, 2
      %v422 = vrot.slane %v385, 2
      %v423 = vsel %vm408, %v421, %v422
      %v424 = vrot.slane %v386, 2
      %v425 = vrot.slane %v387, 2
      %v426 = vsel %vm408, %v424, %v425
      %v427 = vrot.slane %v388, 2
      %v428 = vrot.slane %v389, 2
      %v429 = vsel %vm408, %v427, %v428
      %v430 = vrot.slane %v390, 2
      %v431 = vrot.slane %v391, 2
      %v432 = vsel %vm408, %v430, %v431
      %v441 = vadd.f32 %v364, %v411
      %v442 = vadd.f32 %v365, %v414
      %v443 = vadd.f32 %v366, %v417
      %v444 = vadd.f32 %v367, %v420
      %v445 = vadd.f32 %v368, %v423
      %v446 = vadd.f32 %v369, %v426
      %v447 = vadd.f32 %v370, %v429
      %v448 = vadd.f32 %v371, %v432
      %v449 = vlaneseq
      %v450 = vshrl.u32 %v449, 7
      %v451 = vsub.s32 3, %v450
      %v452 = vrot.slane %v273, %v451
      %v453 = vmul.f32 %v255, %v452
      %v454 = vmul.f32 %v257, %v452
      %v455 = vmul.f32 %v259, %v452
      %v456 = vmul.f32 %v261, %v452
      %v457 = vmul.f32 %v263, %v452
      %v458 = vmul.f32 %v265, %v452
      %v459 = vmul.f32 %v267, %v452
      %v460 = vmul.f32 %v269, %v452
      %v461 = vadd.f32 %v441, %v453
      %v462 = vadd.f32 %v442, %v454
      %v463 = vadd.f32 %v443, %v455
      %v464 = vadd.f32 %v444, %v456
      %v465 = vadd.f32 %v445, %v457
      %v466 = vadd.f32 %v446, %v458
      %v467 = vadd.f32 %v447, %v459
      %v468 = vadd.f32 %v448, %v460
      %v469 = vlaneseq
      %v470 = vshrl.u32 %v469, 7
      %v471 = vsub.s32 4, %v470
      %v472 = vrot.slane %v273, %v471
      %v473 = vmul.f32 %v255, %v472
      %v474 = vmul.f32 %v256, %v472
      %v475 = vmul.f32 %v257, %v472
      %v476 = vmul.f32 %v258, %v472
      %v477 = vmul.f32 %v259, %v472
      %v478 = vmul.f32 %v260, %v472
      %v479 = vmul.f32 %v261, %v472
      %v480 = vmul.f32 %v262, %v472
      %v481 = vmul.f32 %v263, %v472
      %v482 = vmul.f32 %v264, %v472
      %v483 = vmul.f32 %v265, %v472
      %v484 = vmul.f32 %v266, %v472
      %v485 = vmul.f32 %v267, %v472
      %v486 = vmul.f32 %v268, %v472
      %v487 = vmul.f32 %v269, %v472
      %v488 = vmul.f32 %v270, %v472
      %v505 = vrot.slane %v473, 1
      %v506 = vrot.slane %v474, 1
      %v507 = vsel %vm331, %v505, %v506
      %v508 = vrot.slane %v475, 1
      %v509 = vrot.slane %v476, 1
      %v510 = vsel %vm331, %v508, %v509
      %v511 = vrot.slane %v477, 1
      %v512 = vrot.slane %v478, 1
      %v513 = vsel %vm331, %v511, %v512
      %v514 = vrot.slane %v479, 1
      %v515 = vrot.slane %v480, 1
      %v516 = vsel %vm331, %v514, %v515
      %v517 = vrot.slane %v481, 1
      %v518 = vrot.slane %v482, 1
      %v519 = vsel %vm331, %v517, %v518
      %v520 = vrot.slane %v483, 1
      %v521 = vrot.slane %v484, 1
      %v522 = vsel %vm331, %v520, %v521
      %v523 = vrot.slane %v485, 1
      %v524 = vrot.slane %v486, 1
      %v525 = vsel %vm331, %v523, %v524
      %v526 = vrot.slane %v487, 1
      %v527 = vrot.slane %v488, 1
      %v528 = vsel %vm331, %v526, %v527
      %v537 = vadd.f32 %v461, %v507
      %v538 = vadd.f32 %v462, %v510
      %v539 = vadd.f32 %v463, %v513
      %v540 = vadd.f32 %v464, %v516
      %v541 = vadd.f32 %v465, %v519
      %v542 = vadd.f32 %v466, %v522
      %v543 = vadd.f32 %v467, %v525
      %v544 = vadd.f32 %v468, %v528
      %v545 = vlaneseq
      %v546 = vshrl.u32 %v545, 7
      %v547 = vsub.s32 5, %v546
      %v548 = vrot.slane %v273, %v547
      %v549 = vmul.f32 %v255, %v548
      %v550 = vmul.f32 %v256, %v548
      %v551 = vmul.f32 %v257, %v548
      %v552 = vmul.f32 %v258, %v548
      %v553 = vmul.f32 %v259, %v548
      %v554 = vmul.f32 %v260, %v548
      %v555 = vmul.f32 %v261, %v548
      %v556 = vmul.f32 %v262, %v548
      %v557 = vmul.f32 %v263, %v548
      %v558 = vmul.f32 %v264, %v548
      %v559 = vmul.f32 %v265, %v548
      %v560 = vmul.f32 %v266, %v548
      %v561 = vmul.f32 %v267, %v548
      %v562 = vmul.f32 %v268, %v548
      %v563 = vmul.f32 %v269, %v548
      %v564 = vmul.f32 %v270, %v548
      %v581 = vrot.slane %v549, 2
      %v582 = vrot.slane %v550, 2
      %v583 = vsel %vm408, %v581, %v582
      %v584 = vrot.slane %v551, 2
      %v585 = vrot.slane %v552, 2
      %v586 = vsel %vm408, %v584, %v585
      %v587 = vrot.slane %v553, 2
      %v588 = vrot.slane %v554, 2
      %v589 = vsel %vm408, %v587, %v588
      %v590 = vrot.slane %v555, 2
      %v591 = vrot.slane %v556, 2
      %v592 = vsel %vm408, %v590, %v591
      %v593 = vrot.slane %v557, 2
      %v594 = vrot.slane %v558, 2
      %v595 = vsel %vm408, %v593, %v594
      %v596 = vrot.slane %v559, 2
      %v597 = vrot.slane %v560, 2
      %v598 = vsel %vm408, %v596, %v597
      %v599 = vrot.slane %v561, 2
      %v600 = vrot.slane %v562, 2
      %v601 = vsel %vm408, %v599, %v600
      %v602 = vrot.slane %v563, 2
      %v603 = vrot.slane %v564, 2
      %v604 = vsel %vm408, %v602, %v603
      %v613 = vadd.f32 %v537, %v583
      %v614 = vadd.f32 %v538, %v586
      %v615 = vadd.f32 %v539, %v589
      %v616 = vadd.f32 %v540, %v592
      %v617 = vadd.f32 %v541, %v595
      %v618 = vadd.f32 %v542, %v598
      %v619 = vadd.f32 %v543, %v601
      %v620 = vadd.f32 %v544, %v604
      %v621 = vlaneseq
      %v622 = vshrl.u32 %v621, 7
      %v623 = vsub.s32 6, %v622
      %v624 = vrot.slane %v273, %v623
      %v625 = vmul.f32 %v257, %v624
      %v626 = vmul.f32 %v259, %v624
      %v627 = vmul.f32 %v261, %v624
      %v628 = vmul.f32 %v263, %v624
      %v629 = vmul.f32 %v265, %v624
      %v630 = vmul.f32 %v267, %v624
      %v631 = vmul.f32 %v269, %v624
      %v632 = vmul.f32 %v271, %v624
      %v633 = vadd.f32 %v613, %v625
      %v634 = vadd.f32 %v614, %v626
      %v635 = vadd.f32 %v615, %v627
      %v636 = vadd.f32 %v616, %v628
      %v637 = vadd.f32 %v617, %v629
      %v638 = vadd.f32 %v618, %v630
      %v639 = vadd.f32 %v619, %v631
      %v640 = vadd.f32 %v620, %v632
      %v641 = vlaneseq
      %v642 = vshrl.u32 %v641, 7
      %v643 = vsub.s32 7, %v642
      %v644 = vrot.slane %v273, %v643
      %v645 = vmul.f32 %v257, %v644
      %v646 = vmul.f32 %v258, %v644
      %v647 = vmul.f32 %v259, %v644
      %v648 = vmul.f32 %v260, %v644
      %v649 = vmul.f32 %v261, %v644
      %v650 = vmul.f32 %v262, %v644
      %v651 = vmul.f32 %v263, %v644
      %v652 = vmul.f32 %v264, %v644
      %v653 = vmul.f32 %v265, %v644
      %v654 = vmul.f32 %v266, %v644
      %v655 = vmul.f32 %v267, %v644
      %v656 = vmul.f32 %v268, %v644
      %v657 = vmul.f32 %v269, %v644
      %v658 = vmul.f32 %v270, %v644
      %v659 = vmul.f32 %v271, %v644
      %v660 = vmul.f32 %v272, %v644
      %v677 = vrot.slane %v645, 1
      %v678 = vrot.slane %v646, 1
      %v679 = vsel %vm331, %v677, %v678
      %v680 = vrot.slane %v647, 1
      %v681 = vrot.slane %v648, 1
      %v682 = vsel %vm331, %v680, %v681
      %v683 = vrot.slane %v649, 1
      %v684 = vrot.slane %v650, 1
      %v685 = vsel %vm331, %v683, %v684
      %v686 = vrot.slane %v651, 1
      %v687 = vrot.slane %v652, 1
      %v688 = vsel %vm331, %v686, %v687
      %v689 = vrot.slane %v653, 1
      %v690 = vrot.slane %v654, 1
      %v691 = vsel %vm331, %v689, %v690
      %v692 = vrot.slane %v655, 1
      %v693 = vrot.slane %v656, 1
      %v694 = vsel %vm331, %v692, %v693
      %v695 = vrot.slane %v657, 1
      %v696 = vrot.slane %v658, 1
      %v697 = vsel %vm331, %v695, %v696
      %v698 = vrot.slane %v659, 1
      %v699 = vrot.slane %v660, 1
      %v700 = vsel %vm331, %v698, %v699
      %v709 = vadd.f32 %v633, %v679
      %v710 = vadd.f32 %v634, %v682
      %v711 = vadd.f32 %v635, %v685
      %v712 = vadd.f32 %v636, %v688
      %v713 = vadd.f32 %v637, %v691
      %v714 = vadd.f32 %v638, %v694
      %v715 = vadd.f32 %v639, %v697
      %v716 = vadd.f32 %v640, %v700
      %v717 = vlaneseq
      %v718 = vshrl.u32 %v717, 7
      %v719 = vsub.s32 0, %v718
      %v720 = vrot.slane %v274, %v719
      %v721 = vmul.f32 %v257, %v720
      %v722 = vmul.f32 %v258, %v720
      %v723 = vmul.f32 %v259, %v720
      %v724 = vmul.f32 %v260, %v720
      %v725 = vmul.f32 %v261, %v720
      %v726 = vmul.f32 %v262, %v720
      %v727 = vmul.f32 %v263, %v720
      %v728 = vmul.f32 %v264, %v720
      %v729 = vmul.f32 %v265, %v720
      %v730 = vmul.f32 %v266, %v720
      %v731 = vmul.f32 %v267, %v720
      %v732 = vmul.f32 %v268, %v720
      %v733 = vmul.f32 %v269, %v720
      %v734 = vmul.f32 %v270, %v720
      %v735 = vmul.f32 %v271, %v720
      %v736 = vmul.f32 %v272, %v720
      %v753 = vrot.slane %v721, 2
      %v754 = vrot.slane %v722, 2
      %v755 = vsel %vm408, %v753, %v754
      %v756 = vrot.slane %v723, 2
      %v757 = vrot.slane %v724, 2
      %v758 = vsel %vm408, %v756, %v757
      %v759 = vrot.slane %v725, 2
      %v760 = vrot.slane %v726, 2
      %v761 = vsel %vm408, %v759, %v760
      %v762 = vrot.slane %v727, 2
      %v763 = vrot.slane %v728, 2
      %v764 = vsel %vm408, %v762, %v763
      %v765 = vrot.slane %v729, 2
      %v766 = vrot.slane %v730, 2
      %v767 = vsel %vm408, %v765, %v766
      %v768 = vrot.slane %v731, 2
      %v769 = vrot.slane %v732, 2
      %v770 = vsel %vm408, %v768, %v769
      %v771 = vrot.slane %v733, 2
      %v772 = vrot.slane %v734, 2
      %v773 = vsel %vm408, %v771, %v772
      %v774 = vrot.slane %v735, 2
      %v775 = vrot.slane %v736, 2
      %v776 = vsel %vm408, %v774, %v775
      %v785 = vadd.f32 %v709, %v755
      %v786 = vadd.f32 %v710, %v758
      %v787 = vadd.f32 %v711, %v761
      %v788 = vadd.f32 %v712, %v764
      %v789 = vadd.f32 %v713, %v767
      %v790 = vadd.f32 %v714, %v770
      %v791 = vadd.f32 %v715, %v773
      %v792 = vadd.f32 %v716, %v776
      %v793 = vld [vmem:[%s224] sm:$0x1]
      %v795 = vlaneseq
      %v796 = vshrl.u32 %v795, 7
      %v797 = vsub.s32 0, %v796
      %v798 = vrot.slane %v793, %v797
      %v800 = vadd.f32 %v785, %v798
      %v801 = vadd.f32 %v786, %v798
      %v802 = vadd.f32 %v787, %v798
      %v803 = vadd.f32 %v788, %v798
      %v804 = vadd.f32 %v789, %v798
      %v805 = vadd.f32 %v790, %v798
      %v806 = vadd.f32 %v791, %v798
      %v807 = vadd.f32 %v792, %v798
      %v808 = vmul.f32 %v800, 0.5
      %v809 = vmul.f32 %v801, 0.5
      %v810 = vmul.f32 %v802, 0.5
      %v811 = vmul.f32 %v803, 0.5
      %v812 = vmul.f32 %v804, 0.5
      %v813 = vmul.f32 %v805, 0.5
      %v814 = vmul.f32 %v806, 0.5
      %v815 = vmul.f32 %v807, 0.5
      %v816 = vmul.f32 %v800, 0.70710677
      %v817 = vmul.f32 %v801, 0.70710677
      %v818 = vmul.f32 %v802, 0.70710677
      %v819 = vmul.f32 %v803, 0.70710677
      %v820 = vmul.f32 %v804, 0.70710677
      %v821 = vmul.f32 %v805, 0.70710677
      %v822 = vmul.f32 %v806, 0.70710677
      %v823 = vmul.f32 %v807, 0.70710677
      %v824 = vand.u32 2147483647, %v816
      %v825 = vand.u32 2147483647, %v817
      %v826 = vand.u32 2147483647, %v818
      %v827 = vand.u32 2147483647, %v819
      %v828 = vand.u32 2147483647, %v820
      %v829 = vand.u32 2147483647, %v821
      %v830 = vand.u32 2147483647, %v822
      %v831 = vand.u32 2147483647, %v823
      %v832 = vmul.f32 %v824, 0.3275911
      %v833 = vmul.f32 %v825, 0.3275911
      %v834 = vmul.f32 %v826, 0.3275911
      %v835 = vmul.f32 %v827, 0.3275911
      %v836 = vmul.f32 %v828, 0.3275911
      %v837 = vmul.f32 %v829, 0.3275911
      %v838 = vmul.f32 %v830, 0.3275911
      %v839 = vmul.f32 %v831, 0.3275911
      %v840 = vadd.f32 %v832, 1.0
      %v841 = vadd.f32 %v833, 1.0
      %v842 = vadd.f32 %v834, 1.0
      %v843 = vadd.f32 %v835, 1.0
      %v844 = vadd.f32 %v836, 1.0
      %v845 = vadd.f32 %v837, 1.0
      %v846 = vadd.f32 %v838, 1.0
      %v847 = vadd.f32 %v839, 1.0
      %v848 = vrcp.pop %v840
      %v849 = vmul.f32 1.0, %v848
      %v850 = vrcp.pop %v841
      %v851 = vmul.f32 1.0, %v850
      %v852 = vrcp.pop %v842
      %v853 = vmul.f32 1.0, %v852
      %v854 = vrcp.pop %v843
      %v855 = vmul.f32 1.0, %v854
      %v856 = vrcp.pop %v844
      %v857 = vmul.f32 1.0, %v856
      %v858 = vrcp.pop %v845
      %v859 = vmul.f32 1.0, %v858
      %v860 = vrcp.pop %v846
      %v861 = vmul.f32 1.0, %v860
      %v862 = vrcp.pop %v847
      %v863 = vmul.f32 1.0, %v862
      %v864 = vmul.f32 %v849, 1.0614054
      %v865 = vmul.f32 %v851, 1.0614054
      %v866 = vmul.f32 %v853, 1.0614054
      %v867 = vmul.f32 %v855, 1.0614054
      %v868 = vmul.f32 %v857, 1.0614054
      %v869 = vmul.f32 %v859, 1.0614054
      %v870 = vmul.f32 %v861, 1.0614054
      %v871 = vmul.f32 %v863, 1.0614054
      %v872 = vadd.f32 %v864, -1.4531521
      %v873 = vadd.f32 %v865, -1.4531521
      %v874 = vadd.f32 %v866, -1.4531521
      %v875 = vadd.f32 %v867, -1.4531521
      %v876 = vadd.f32 %v868, -1.4531521
      %v877 = vadd.f32 %v869, -1.4531521
      %v878 = vadd.f32 %v870, -1.4531521
      %v879 = vadd.f32 %v871, -1.4531521
      %v880 = vmul.f32 %v872, %v849
      %v881 = vmul.f32 %v873, %v851
      %v882 = vmul.f32 %v874, %v853
      %v883 = vmul.f32 %v875, %v855
      %v884 = vmul.f32 %v876, %v857
      %v885 = vmul.f32 %v877, %v859
      %v886 = vmul.f32 %v878, %v861
      %v887 = vmul.f32 %v879, %v863
      %v888 = vadd.f32 %v880, 1.4214138
      %v889 = vadd.f32 %v881, 1.4214138
      %v890 = vadd.f32 %v882, 1.4214138
      %v891 = vadd.f32 %v883, 1.4214138
      %v892 = vadd.f32 %v884, 1.4214138
      %v893 = vadd.f32 %v885, 1.4214138
      %v894 = vadd.f32 %v886, 1.4214138
      %v895 = vadd.f32 %v887, 1.4214138
      %v896 = vmul.f32 %v888, %v849
      %v897 = vmul.f32 %v889, %v851
      %v898 = vmul.f32 %v890, %v853
      %v899 = vmul.f32 %v891, %v855
      %v900 = vmul.f32 %v892, %v857
      %v901 = vmul.f32 %v893, %v859
      %v902 = vmul.f32 %v894, %v861
      %v903 = vmul.f32 %v895, %v863
      %v904 = vadd.f32 %v896, -0.28449672
      %v905 = vadd.f32 %v897, -0.28449672
      %v906 = vadd.f32 %v898, -0.28449672
      %v907 = vadd.f32 %v899, -0.28449672
      %v908 = vadd.f32 %v900, -0.28449672
      %v909 = vadd.f32 %v901, -0.28449672
      %v910 = vadd.f32 %v902, -0.28449672
      %v911 = vadd.f32 %v903, -0.28449672
      %v912 = vmul.f32 %v904, %v849
      %v913 = vmul.f32 %v905, %v851
      %v914 = vmul.f32 %v906, %v853
      %v915 = vmul.f32 %v907, %v855
      %v916 = vmul.f32 %v908, %v857
      %v917 = vmul.f32 %v909, %v859
      %v918 = vmul.f32 %v910, %v861
      %v919 = vmul.f32 %v911, %v863
      %v920 = vadd.f32 %v912, 0.2548296
      %v921 = vadd.f32 %v913, 0.2548296
      %v922 = vadd.f32 %v914, 0.2548296
      %v923 = vadd.f32 %v915, 0.2548296
      %v924 = vadd.f32 %v916, 0.2548296
      %v925 = vadd.f32 %v917, 0.2548296
      %v926 = vadd.f32 %v918, 0.2548296
      %v927 = vadd.f32 %v919, 0.2548296
      %v928 = vmul.f32 %v920, %v849
      %v929 = vmul.f32 %v921, %v851
      %v930 = vmul.f32 %v922, %v853
      %v931 = vmul.f32 %v923, %v855
      %v932 = vmul.f32 %v924, %v857
      %v933 = vmul.f32 %v925, %v859
      %v934 = vmul.f32 %v926, %v861
      %v935 = vmul.f32 %v927, %v863
      %v936 = vsub.f32 0.0, %v824
      %v937 = vsub.f32 0.0, %v825
      %v938 = vsub.f32 0.0, %v826
      %v939 = vsub.f32 0.0, %v827
      %v940 = vsub.f32 0.0, %v828
      %v941 = vsub.f32 0.0, %v829
      %v942 = vsub.f32 0.0, %v830
      %v943 = vsub.f32 0.0, %v831
      %v944 = vmul.f32 %v936, %v824
      %v945 = vmul.f32 %v937, %v825
      %v946 = vmul.f32 %v938, %v826
      %v947 = vmul.f32 %v939, %v827
      %v948 = vmul.f32 %v940, %v828
      %v949 = vmul.f32 %v941, %v829
      %v950 = vmul.f32 %v942, %v830
      %v951 = vmul.f32 %v943, %v831
      %v952 = vmul.f32 %v944, 1.442695
      %v953 = vpow.pop %v952
      %v954 = vmul.f32 %v945, 1.442695
      %v955 = vpow.pop %v954
      %v956 = vmul.f32 %v946, 1.442695
      %v957 = vpow.pop %v956
      %v958 = vmul.f32 %v947, 1.442695
      %v959 = vpow.pop %v958
      %v960 = vmul.f32 %v948, 1.442695
      %v961 = vpow.pop %v960
      %v962 = vmul.f32 %v949, 1.442695
      %v963 = vpow.pop %v962
      %v964 = vmul.f32 %v950, 1.442695
      %v965 = vpow.pop %v964
      %v966 = vmul.f32 %v951, 1.442695
      %v967 = vpow.pop %v966
      %v968 = vmul.f32 %v928, %v953
      %v969 = vmul.f32 %v929, %v955
      %v970 = vmul.f32 %v930, %v957
      %v971 = vmul.f32 %v931, %v959
      %v972 = vmul.f32 %v932, %v961
      %v973 = vmul.f32 %v933, %v963
      %v974 = vmul.f32 %v934, %v965
      %v975 = vmul.f32 %v935, %v967
      %v976 = vsub.f32 1.0, %v968
      %v977 = vsub.f32 1.0, %v969
      %v978 = vsub.f32 1.0, %v970
      %v979 = vsub.f32 1.0, %v971
      %v980 = vsub.f32 1.0, %v972
      %v981 = vsub.f32 1.0, %v973
      %v982 = vsub.f32 1.0, %v974
      %v983 = vsub.f32 1.0, %v975
      %vm984 = vcmp.lt.f32.partialorder %v816, 0.0
      %vm985 = vcmp.lt.f32.partialorder %v817, 0.0
      %vm986 = vcmp.lt.f32.partialorder %v818, 0.0
      %vm987 = vcmp.lt.f32.partialorder %v819, 0.0
      %vm988 = vcmp.lt.f32.partialorder %v820, 0.0
      %vm989 = vcmp.lt.f32.partialorder %v821, 0.0
      %vm990 = vcmp.lt.f32.partialorder %v822, 0.0
      %vm991 = vcmp.lt.f32.partialorder %v823, 0.0
      %v992 = vsub.f32 0.0, %v976
      %v993 = vsub.f32 0.0, %v977
      %v994 = vsub.f32 0.0, %v978
      %v995 = vsub.f32 0.0, %v979
      %v996 = vsub.f32 0.0, %v980
      %v997 = vsub.f32 0.0, %v981
      %v998 = vsub.f32 0.0, %v982
      %v999 = vsub.f32 0.0, %v983
      %v1000 = vsel %vm984, %v992, %v976
      %v1001 = vsel %vm985, %v993, %v977
      %v1002 = vsel %vm986, %v994, %v978
      %v1003 = vsel %vm987, %v995, %v979
      %v1004 = vsel %vm988, %v996, %v980
      %v1005 = vsel %vm989, %v997, %v981
      %v1006 = vsel %vm990, %v998, %v982
      %v1007 = vsel %vm991, %v999, %v983
      %v1008 = vadd.f32 %v1000, 1.0
      %v1009 = vadd.f32 %v1001, 1.0
      %v1010 = vadd.f32 %v1002, 1.0
      %v1011 = vadd.f32 %v1003, 1.0
      %v1012 = vadd.f32 %v1004, 1.0
      %v1013 = vadd.f32 %v1005, 1.0
      %v1014 = vadd.f32 %v1006, 1.0
      %v1015 = vadd.f32 %v1007, 1.0
      %v1016 = vmul.f32 %v808, %v1008
      %v1017 = vmul.f32 %v809, %v1009
      %v1018 = vmul.f32 %v810, %v1010
      %v1019 = vmul.f32 %v811, %v1011
      %v1020 = vmul.f32 %v812, %v1012
      %v1021 = vmul.f32 %v813, %v1013
      %v1022 = vmul.f32 %v814, %v1014
      %v1023 = vmul.f32 %v815, %v1015
      %v1024 = vpack.c.bf16 %v1016, %v1016
      %v1025 = vpack.c.bf16 %v1017, %v1017
      %v1026 = vpack.c.bf16 %v1018, %v1018
      %v1027 = vpack.c.bf16 %v1019, %v1019
      %v1028 = vpack.c.bf16 %v1020, %v1020
      %v1029 = vpack.c.bf16 %v1021, %v1021
      %v1030 = vpack.c.bf16 %v1022, %v1022
      %v1031 = vpack.c.bf16 %v1023, %v1023
      %vm1032 = vcmask 125952
      %1033 = vst.msk [vmem:[%s232] sm:$0xf] %vm1032, %v1024
      %1034 = vst.msk [vmem:[%s232 + $0x4] sm:$0xf] %vm1032, %v1025
      %1035 = vst.msk [vmem:[%s232 + $0x8] sm:$0xf] %vm1032, %v1026
      %1036 = vst.msk [vmem:[%s232 + $0xc] sm:$0xf] %vm1032, %v1027
      %1037 = vst.msk [vmem:[%s232 + $0x10] sm:$0xf] %vm1032, %v1028
      %1038 = vst.msk [vmem:[%s232 + $0x14] sm:$0xf] %vm1032, %v1029
      %1039 = vst.msk [vmem:[%s232 + $0x18] sm:$0xf] %vm1032, %v1030
      %1040 = vst.msk [vmem:[%s232 + $0x1c] sm:$0xf] %vm1032, %v1031
      %p1041 = scmp.lt.s32.totalorder %s18, 1
      %s1042 = scalar_select %p1041, %s18, 1
      %p1043 = scmp.lt.s32.totalorder %s19, 0
      %s1044 = scalar_select %p1043, %s19, 0
      %s1045 = smul.addr %s1042, 8
      %s1046 = sadd.s32 %s1044, %s1045
      %s1047 = smul.addr %s1046, 4
      %s1048 = scalar_lea.vmem %s3, %s1047
      // Predicated region
      $region33: #{rstb_forward.28} parent=31 // pred_check
        %p1049 = pneg %p126
      $region34: #{rstb_forward.28} parent=31 // pred_check_branch
        %1051 = sbr.rel (%p1049) target = $region36
      $region35: #{rstb_forward.28} parent=31 // pred_region
        _
      $region36: #{rstb_forward.28} parent=31 // pred_fallthru
        _
    $region32: #{rstb_forward.28} parent=5 // pred_fallthru
      _
    %p1052 = scmp.le.s32.totalorder 2, %s9
    // Predicated region
    $region37: #{rstb_forward.28} parent=5 // pred_check
      %p1053 = pneg %p1052
    $region38: #{rstb_forward.28} parent=5 // pred_check_branch
      %1055 = sbr.rel (%p1053) target = $region40
    $region39: #{rstb_forward.28} parent=5 // pred_region
      %s1056 = ssub.s32 %s9, 2
      // Predicated region
      $region41: #{rstb_forward.28} parent=39 // pred_check
        %p1057 = pneg %p132
      $region42: #{rstb_forward.28} parent=39 // pred_check_branch
        %1059 = sbr.rel (%p1057) target = $region44
      $region43: #{rstb_forward.28} parent=39 // pred_region
        %p1060 = scmp.lt.s32.totalorder %s20, 1
        %s1061 = scalar_select %p1060, %s20, 1
        %p1062 = scmp.lt.s32.totalorder %s21, 0
        %s1063 = scalar_select %p1062, %s21, 0
        %s1064 = smul.addr %s1061, 8
        %s1065 = sadd.s32 %s1063, %s1064
        %s1066 = smul.addr %s1065, 4
        %s1067 = scalar_lea.vmem %s3, %s1066
      $region44: #{rstb_forward.28} parent=39 // pred_fallthru
        _
    $region40: #{rstb_forward.28} parent=5 // pred_fallthru
      _
  $region6: #{rstb_forward.28} parent=0 // loop_footer
    %s13 = sadd.s32 1, %s9
  $region7: #{rstb_forward.28} parent=0 // loop_footer_branch
    %8 = sbr.rel target = $region3
  $region8: #{rstb_forward.28} parent=0 // loop_exit
    _

// kernel: rstb_forward.29
$region0: #{rstb_forward.29}
  #allocation0 [shape = 'u32[]', space=smem, size = 0x4, offset = 0x4, fixed_abs, tag = 'smem constant byte address 0x4 - core index']
  #allocation1 [shape = 'u32[144,128]{1,0:T(1,128)}', space=vmem, size = 0x12000, scoped, tag = 'internal scratch']
  #allocation2 [shape = 'f32[64,8]{1,0:T(8,128)}', space=vmem, size = 0x8000, scoped, tag = 'scratch operand']
  %s0 = inlined_call_operand.vmem [shape: bf16[128,16], index: 0, kind: input, shape index: {}]
  %s1 = inlined_call_operand.vmem [shape: bf16[16,8], index: 1, kind: input, shape index: {}]
  %s2 = inlined_call_operand.vmem [shape: f32[1,8], index: 2, kind: input, shape index: {}]
  %s3 = inlined_call_operand.vmem [shape: f32[128,8], index: 3, kind: input, shape index: {}]
  %s4 = inlined_call_operand.vmem [shape: f32[128,8], index: 4, kind: output, shape index: {}]
  %s5 = sld [smem:[#allocation0]]
  $region57: #{rstb_forward.29} parent=0
    _
  %s7 = ssub.s32 1, %s5
  %s8 = scalar_select 0, %s7, %s5
  loop: start=0, step=1, limit=4
  $region2: #{rstb_forward.29} parent=0 // loop_pre_header
    _
  $region3: #{rstb_forward.29} parent=0 // loop_header
    %s10 = sphi 0, %s14
    %p11 = scmp.ge.s32.totalorder %s10, 4
    %s17 = sphi 0, %s36
    %s18 = sphi 0, %s32
    %s19 = sphi 0, %s28
    %s20 = sphi 0, %s17
    %s21 = sphi 0, %s18
    %s22 = sphi 0, %s19
    %s23 = sphi 0, %s20
    %s24 = sphi 0, %s21
    %s25 = sphi 0, %s22
    %s41 = sphi 0, %s43
    %s44 = sphi 0, %s41
    %s45 = sphi 0, %s44
    %s61 = sphi 0, %s45
    %s69 = sphi 0, %s71
    %s72 = sphi 0, %s69
    %s73 = sphi 0, %s72
    %s89 = sphi 0, %s73
    %s95 = sphi 0, %s97
    %s98 = sphi 0, %s95
    %s99 = sphi 0, %s98
    %s115 = sphi 0, %s99
    %s123 = sphi 0, %s125
    %s126 = sphi 0, %s123
    %s127 = sphi 0, %s126
    %s143 = sphi 0, %s127
    %s151 = sphi 0, %s153
    %s154 = sphi 0, %s151
    %s155 = sphi 0, %s154
    %s171 = sphi 0, %s155
  $region4: #{rstb_forward.29} parent=0 // loop_header_branch
    %13 = sbr.rel (%p11) target = $region8
  $region5: #{rstb_forward.29} parent=0 // loop_body
    %s15 = ssub.s32 %s10, 1
    %s16 = ssub.s32 %s10, 2
    %s26 = sadd.s32 1, %s19
    %p27 = scmp.ge.s32.totalorder %s26, 1
    %s28 = scalar_select %p27, 0, %s26
    %s29 = sadd.s32 1, %s18
    %s30 = scalar_select %p27, %s29, %s18
    %p31 = scmp.ge.s32.totalorder %s30, 1
    %s32 = scalar_select %p31, 0, %s30
    %s33 = sadd.s32 1, %s17
    %s34 = scalar_select %p31, %s33, %s17
    %p35 = scmp.ge.s32.totalorder %s34, 2
    %s36 = scalar_select %p35, 0, %s34
    %s37 = ssub.s32 %s17, %s36
    %s38 = ssub.s32 %s19, %s28
    %s39 = sor.u32 %s37, %s38
    %p40 = scmp.eq.s32.totalorder %s39, 0
    %s42 = sadd.s32 %s41, 1
    %s43 = scalar_select %p40, %s41, %s42
    %p46 = pneg %p40
    %p47 = scmp.eq.s32.totalorder %s10, 1
    %p48 = por %p46, %p47
    %p49 = scmp.ne.s32.totalorder %s41, %s44
    %p50 = scmp.eq.s32.totalorder %s10, 0
    %p51 = por %p49, %p50
    %p52 = scmp.ne.s32.totalorder %s41, %s44
    %p53 = scmp.eq.s32.totalorder %s15, 1
    %p54 = por %p52, %p53
    %p55 = scmp.ne.s32.totalorder %s44, %s45
    %p56 = scmp.eq.s32.totalorder %s15, 0
    %p57 = por %p55, %p56
    %p58 = scmp.ne.s32.totalorder %s44, %s45
    %p59 = scmp.eq.s32.totalorder %s16, 1
    %p60 = por %p58, %p59
    %p62 = scmp.ne.s32.totalorder %s45, %s61
    %p63 = scmp.eq.s32.totalorder %s16, 0
    %p64 = por %p62, %p63
    %s65 = ssub.s32 %s19, %s28
    %s66 = ssub.s32 %s18, %s32
    %s67 = sor.u32 %s65, %s66
    %p68 = scmp.eq.s32.totalorder %s67, 0
    %s70 = sadd.s32 %s69, 1
    %s71 = scalar_select %p68, %s69, %s70
    %p74 = pneg %p68
    %p75 = scmp.eq.s32.totalorder %s10, 1
    %p76 = por %p74, %p75
    %p77 = scmp.ne.s32.totalorder %s69, %s72
    %p78 = scmp.eq.s32.totalorder %s10, 0
    %p79 = por %p77, %p78
    %p80 = scmp.ne.s32.totalorder %s69, %s72
    %p81 = scmp.eq.s32.totalorder %s15, 1
    %p82 = por %p80, %p81
    %p83 = scmp.ne.s32.totalorder %s72, %s73
    %p84 = scmp.eq.s32.totalorder %s15, 0
    %p85 = por %p83, %p84
    %p86 = scmp.ne.s32.totalorder %s72, %s73
    %p87 = scmp.eq.s32.totalorder %s16, 1
    %p88 = por %p86, %p87
    %p90 = scmp.ne.s32.totalorder %s73, %s89
    %p91 = scmp.eq.s32.totalorder %s16, 0
    %p92 = por %p90, %p91
    %s93 = ssub.s32 %s18, %s32
    %p94 = scmp.eq.s32.totalorder %s93, 0
    %s96 = sadd.s32 %s95, 1
    %s97 = scalar_select %p94, %s95, %s96
    %p100 = pneg %p94
    %p101 = scmp.eq.s32.totalorder %s10, 1
    %p102 = por %p100, %p101
    %p103 = scmp.ne.s32.totalorder %s95, %s98
    %p104 = scmp.eq.s32.totalorder %s10, 0
    %p105 = por %p103, %p104
    %p106 = scmp.ne.s32.totalorder %s95, %s98
    %p107 = scmp.eq.s32.totalorder %s15, 1
    %p108 = por %p106, %p107
    %p109 = scmp.ne.s32.totalorder %s98, %s99
    %p110 = scmp.eq.s32.totalorder %s15, 0
    %p111 = por %p109, %p110
    %p112 = scmp.ne.s32.totalorder %s98, %s99
    %p113 = scmp.eq.s32.totalorder %s16, 1
    %p114 = por %p112, %p113
    %p116 = scmp.ne.s32.totalorder %s99, %s115
    %p117 = scmp.eq.s32.totalorder %s16, 0
    %p118 = por %p116, %p117
    %s119 = ssub.s32 %s17, %s36
    %s120 = ssub.s32 %s18, %s32
    %s121 = sor.u32 %s119, %s120
    %p122 = scmp.eq.s32.totalorder %s121, 0
    %s124 = sadd.s32 %s123, 1
    %s125 = scalar_select %p122, %s123, %s124
    %p128 = pneg %p122
    %p129 = scmp.eq.s32.totalorder %s10, 1
    %p130 = por %p128, %p129
    %p131 = scmp.ne.s32.totalorder %s123, %s126
    %p132 = scmp.eq.s32.totalorder %s10, 0
    %p133 = por %p131, %p132
    %p134 = scmp.ne.s32.totalorder %s123, %s126
    %p135 = scmp.eq.s32.totalorder %s15, 1
    %p136 = por %p134, %p135
    %p137 = scmp.ne.s32.totalorder %s126, %s127
    %p138 = scmp.eq.s32.totalorder %s15, 0
    %p139 = por %p137, %p138
    %p140 = scmp.ne.s32.totalorder %s126, %s127
    %p141 = scmp.eq.s32.totalorder %s16, 1
    %p142 = por %p140, %p141
    %p144 = scmp.ne.s32.totalorder %s127, %s143
    %p145 = scmp.eq.s32.totalorder %s16, 0
    %p146 = por %p144, %p145
    %s147 = ssub.s32 %s17, %s36
    %s148 = ssub.s32 %s18, %s32
    %s149 = sor.u32 %s147, %s148
    %p150 = scmp.eq.s32.totalorder %s149, 0
    %s152 = sadd.s32 %s151, 1
    %s153 = scalar_select %p150, %s151, %s152
    %p156 = pneg %p150
    %p157 = scmp.eq.s32.totalorder %s10, 1
    %p158 = por %p156, %p157
    %p159 = scmp.ne.s32.totalorder %s151, %s154
    %p160 = scmp.eq.s32.totalorder %s10, 0
    %p161 = por %p159, %p160
    %p162 = scmp.ne.s32.totalorder %s151, %s154
    %p163 = scmp.eq.s32.totalorder %s15, 1
    %p164 = por %p162, %p163
    %p165 = scmp.ne.s32.totalorder %s154, %s155
    %p166 = scmp.eq.s32.totalorder %s15, 0
    %p167 = por %p165, %p166
    %p168 = scmp.ne.s32.totalorder %s154, %s155
    %p169 = scmp.eq.s32.totalorder %s16, 1
    %p170 = por %p168, %p169
    %p172 = scmp.ne.s32.totalorder %s155, %s171
    %p173 = scmp.eq.s32.totalorder %s16, 0
    %p174 = por %p172, %p173
    %p175 = scmp.le.s32.totalorder 1, %s10
    %p176 = scmp.lt.s32.totalorder %s10, 3
    %p177 = pnand %p175, %p176
    %p178 = pneg %p177
    // Predicated region
    $region9: #{rstb_forward.29} parent=5 // pred_check
      _
    $region10: #{rstb_forward.29} parent=5 // pred_check_branch
      %180 = sbr.rel (%p177) target = $region12
    $region11: #{rstb_forward.29} parent=5 // pred_region
      %s181 = ssub.s32 %s10, 1
      // Predicated region
      $region13: #{rstb_forward.29} parent=11 // pred_check
        %p182 = pneg %p85
      $region14: #{rstb_forward.29} parent=11 // pred_check_branch
        %184 = sbr.rel (%p182) target = $region16
      $region15: #{rstb_forward.29} parent=11 // pred_region
        %s185 = smul.u32 2, %s22
        %p186 = scmp.lt.s32.totalorder %s185, 1
        %s187 = scalar_select %p186, %s185, 1
        %p188 = scmp.lt.s32.totalorder %s21, 0
        %s189 = scalar_select %p188, %s21, 0
        %s190 = sadd.s32 %s189, %s187
        %s191 = smul.addr %s190, 4
        %s192 = scalar_lea.vmem %s1, %s191
        %s193 = smul.u32 2, %s22
      $region16: #{rstb_forward.29} parent=11 // pred_fallthru
        _
      // Predicated region
      $region17: #{rstb_forward.29} parent=11 // pred_check
        %p194 = pneg %p111
      $region18: #{rstb_forward.29} parent=11 // pred_check_branch
        %196 = sbr.rel (%p194) target = $region20
      $region19: #{rstb_forward.29} parent=11 // pred_region
        %p197 = scmp.lt.s32.totalorder %s21, 0
        %s198 = scalar_select %p197, %s21, 0
        %s199 = scalar_lea.vmem %s2, %s198
      $region20: #{rstb_forward.29} parent=11 // pred_fallthru
        _
    $region12: #{rstb_forward.29} parent=5 // pred_fallthru
      _
    %p200 = scmp.lt.s32.totalorder %s10, 2
    // Predicated region
    $region21: #{rstb_forward.29} parent=5 // pred_check
      %p201 = pneg %p200
    $region22: #{rstb_forward.29} parent=5 // pred_check_branch
      %203 = sbr.rel (%p201) target = $region24
    $region23: #{rstb_forward.29} parent=5 // pred_region
      // Predicated region
      $region25: #{rstb_forward.29} parent=23 // pred_check
        %p204 = pneg %p51
      $region26: #{rstb_forward.29} parent=23 // pred_check_branch
        %206 = sbr.rel (%p204) target = $region28
      $region27: #{rstb_forward.29} parent=23 // pred_region
        %s207 = smul.u32 8, %s17
        %p208 = scmp.lt.s32.totalorder %s207, 15
        %s209 = scalar_select %p208, %s207, 15
        %p210 = scmp.lt.s32.totalorder %s19, 0
        %s211 = scalar_select %p210, %s19, 0
        %s212 = sadd.s32 %s211, %s209
        %s213 = smul.addr %s212, 4
        %s214 = scalar_lea.vmem %s0, %s213
        %s215 = smul.u32 8, %s17
      $region28: #{rstb_forward.29} parent=23 // pred_fallthru
        _
      // Predicated region
      $region29: #{rstb_forward.29} parent=23 // pred_check
        %p216 = pneg %p133
      $region30: #{rstb_forward.29} parent=23 // pred_check_branch
        %218 = sbr.rel (%p216) target = $region32
      $region31: #{rstb_forward.29} parent=23 // pred_region
        %s219 = smul.u32 8, %s17
        %p220 = scmp.lt.s32.totalorder %s219, 15
        %s221 = scalar_select %p220, %s219, 15
        %p222 = scmp.lt.s32.totalorder %s18, 0
        %s223 = scalar_select %p222, %s18, 0
        %s224 = sadd.s32 %s223, %s221
        %s225 = smul.addr %s224, 8
        %s226 = scalar_lea.vmem %s3, %s225
        %s227 = smul.u32 8, %s17
      $region32: #{rstb_forward.29} parent=23 // pred_fallthru
        _
    $region24: #{rstb_forward.29} parent=5 // pred_fallthru
      _
    %p228 = scmp.le.s32.totalorder 1, %s10
    %p229 = scmp.lt.s32.totalorder %s10, 3
    %p230 = pnand %p228, %p229
    %p231 = pneg %p230
    // Predicated region
    $region33: #{rstb_forward.29} parent=5 // pred_check
      _
    $region34: #{rstb_forward.29} parent=5 // pred_check_branch
      %233 = sbr.rel (%p230) target = $region36
    $region35: #{rstb_forward.29} parent=5 // pred_region
      %s234 = ssub.s32 %s10, 1
      %s235 = smul.u32 8, %s20
      %p236 = scmp.lt.s32.totalorder %s235, 15
      %s237 = scalar_select %p236, %s235, 15
      %p238 = scmp.lt.s32.totalorder %s22, 0
      %s239 = scalar_select %p238, %s22, 0
      %s240 = sadd.s32 %s239, %s237
      %s241 = smul.addr %s240, 4
      %s242 = scalar_lea.vmem %s0, %s241
      %p243 = pneg %p57
      %p244 = pneg %p54
      %s245 = smul.u32 2, %s22
      %p246 = scmp.lt.s32.totalorder %s245, 1
      %s247 = scalar_select %p246, %s245, 1
      %p248 = scmp.lt.s32.totalorder %s21, 0
      %s249 = scalar_select %p248, %s21, 0
      %s250 = sadd.s32 %s249, %s247
      %s251 = smul.addr %s250, 4
      %s252 = scalar_lea.vmem %s1, %s251
      %p253 = pneg %p85
      %p254 = pneg %p82
      %p255 = scmp.lt.s32.totalorder %s21, 0
      %s256 = scalar_select %p255, %s21, 0
      %s257 = scalar_lea.vmem %s2, %s256
      %p258 = pneg %p111
      %p259 = pneg %p108
      %s260 = smul.u32 8, %s20
      %p261 = scmp.lt.s32.totalorder %s260, 15
      %s262 = scalar_select %p261, %s260, 15
      %p263 = scmp.lt.s32.totalorder %s21, 0
      %s264 = scalar_select %p263, %s21, 0
      %s265 = sadd.s32 %s264, %s262
      %s266 = smul.addr %s265, 8
      %s267 = scalar_lea.vmem %s3, %s266
      %p268 = pneg %p139
      %p269 = pneg %p136
      %p270 = pneg %p167
      %p271 = pneg %p164
      %s272 = smul.u32 8, %s20
      %p273 = scmp.lt.s32.totalorder %s272, 15
      %s274 = scalar_select %p273, %s272, 15
      %p275 = scmp.lt.s32.totalorder %s21, 0
      %s276 = scalar_select %p275, %s21, 0
      %s277 = sadd.s32 %s276, %s274
      %s278 = smul.addr %s277, 8
      %s279 = scalar_lea.vmem %s4, %s278
      %s280 = smul.u32 8, %s20
      %p281 = scmp.lt.s32.totalorder %s280, 15
      %s282 = scalar_select %p281, %s280, 15
      %p283 = scmp.lt.s32.totalorder %s22, 0
      %s284 = scalar_select %p283, %s22, 0
      %s285 = sadd.s32 %s284, %s282
      %s286 = smul.addr %s285, 4
      %s287 = scalar_lea.vmem %s0, %s286
      %s288 = smul.u32 8, %s20
      %s289 = smul.u32 2, %s22
      %p290 = scmp.lt.s32.totalorder %s289, 1
      %s291 = scalar_select %p290, %s289, 1
      %p292 = scmp.lt.s32.totalorder %s21, 0
      %s293 = scalar_select %p292, %s21, 0
      %s294 = sadd.s32 %s293, %s291
      %s295 = smul.addr %s294, 4
      %s296 = scalar_lea.vmem %s1, %s295
      %s297 = smul.u32 2, %s22
      %p298 = scmp.lt.s32.totalorder %s21, 0
      %s299 = scalar_select %p298, %s21, 0
      %s300 = scalar_lea.vmem %s2, %s299
      %s301 = smul.u32 8, %s20
      %p302 = scmp.lt.s32.totalorder %s301, 15
      %s303 = scalar_select %p302, %s301, 15
      %p304 = scmp.lt.s32.totalorder %s21, 0
      %s305 = scalar_select %p304, %s21, 0
      %s306 = sadd.s32 %s305, %s303
      %s307 = smul.addr %s306, 8
      %s308 = scalar_lea.vmem %s3, %s307
      %s309 = smul.u32 8, %s20
      %s310 = smul.u32 8, %s20
      %p311 = scmp.lt.s32.totalorder %s310, 15
      %s312 = scalar_select %p311, %s310, 15
      %p313 = scmp.lt.s32.totalorder %s21, 0
      %s314 = scalar_select %p313, %s21, 0
      %s315 = sadd.s32 %s314, %s312
      %s316 = smul.addr %s315, 8
      %s317 = scalar_lea.vmem %s4, %s316
      %s318 = smul.u32 8, %s20
      %p320 = scmp.eq.s32.totalorder %s22, 0
      // Predicated region
      $region37: #{rstb_forward.29} parent=35 // pred_check
        %p321 = pneg %p320
      $region38: #{rstb_forward.29} parent=35 // pred_check_branch
        %323 = sbr.rel (%p321) target = $region40
      $region39: #{rstb_forward.29} parent=35 // pred_region
        %vm324 = vcmask 64512
        %325 = vst.msk [vmem:[#allocation2] sm:$0xff] %vm324, 0.0
        %326 = vst.msk [vmem:[#allocation2 + $0x8] sm:$0xff] %vm324, 0.0
        %327 = vst.msk [vmem:[#allocation2 + $0x10] sm:$0xff] %vm324, 0.0
        %328 = vst.msk [vmem:[#allocation2 + $0x18] sm:$0xff] %vm324, 0.0
        %329 = vst.msk [vmem:[#allocation2 + $0x20] sm:$0xff] %vm324, 0.0
        %330 = vst.msk [vmem:[#allocation2 + $0x28] sm:$0xff] %vm324, 0.0
        %331 = vst.msk [vmem:[#allocation2 + $0x30] sm:$0xff] %vm324, 0.0
        %332 = vst.msk [vmem:[#allocation2 + $0x38] sm:$0xff] %vm324, 0.0
      $region40: #{rstb_forward.29} parent=35 // pred_fallthru
        _
      %v333 = vld [vmem:[#allocation2] sm:$0xff]
      %v334 = vld [vmem:[#allocation2 + $0x8] sm:$0xff]
      %v335 = vld [vmem:[#allocation2 + $0x10] sm:$0xff]
      %v336 = vld [vmem:[#allocation2 + $0x18] sm:$0xff]
      %v337 = vld [vmem:[#allocation2 + $0x20] sm:$0xff]
      %v338 = vld [vmem:[#allocation2 + $0x28] sm:$0xff]
      %v339 = vld [vmem:[#allocation2 + $0x30] sm:$0xff]
      %v340 = vld [vmem:[#allocation2 + $0x38] sm:$0xff]
      %v341 = vld [vmem:[%s287] sm:$0xf]
      %v342 = vld [vmem:[%s287 + $0x4] sm:$0xf]
      %v343 = vld [vmem:[%s287 + $0x8] sm:$0xf]
      %v344 = vld [vmem:[%s287 + $0xc] sm:$0xf]
      %v345 = vld [vmem:[%s287 + $0x10] sm:$0xf]
      %v346 = vld [vmem:[%s287 + $0x14] sm:$0xf]
      %v347 = vld [vmem:[%s287 + $0x18] sm:$0xf]
      %v348 = vld [vmem:[%s287 + $0x1c] sm:$0xf]
      %v349 = vld [vmem:[%s296] sm:$0xf]
      %v350 = vld [vmem:[%s296 + $0x4] sm:$0xf]
      %v359 = vunpack.c.l.b16 %v341
      %v360 = vunpack.c.l.b16 %v342
      %v361 = vunpack.c.l.b16 %v343
      %v362 = vunpack.c.l.b16 %v344
      %v363 = vunpack.c.l.b16 %v345
      %v364 = vunpack.c.l.b16 %v346
      %v365 = vunpack.c.l.b16 %v347
      %v366 = vunpack.c.l.b16 %v348
      %v367 = vpack.c.b16 %v360, %v359
      %v368 = vpack.c.b16 %v362, %v361
      %v369 = vpack.c.b16 %v364, %v363
      %v370 = vpack.c.b16 %v366, %v365
      %v373 = vunpack.c.l.b16 %v349
      %v374 = vunpack.c.l.b16 %v350
      %v375 = vpack.c.b16 %v374, %v373
      %vm377 = vcmask 130048
      %v379 = vsel %vm377, %v367, 0
      %v382 = vsel %vm377, %v368, 0
      %v385 = vsel %vm377, %v369, 0
      %v388 = vsel %vm377, %v370, 0
      %390 = vmatprep.subr.bf16.mxu0 0
      %391 = vmatpush1.bf16.msra.mxu0 %v375
      %392 = vmatprep.subr.bf16.mxu0 0
      %393 = vmatpush1.bf16.msra.mxu0 0
      %394 = vmatprep.subr.bf16.mxu0 0
      %395 = vmatpush1.bf16.msra.mxu0 0
      %396 = vmatprep.subr.bf16.mxu0 0
      %397 = vmatpush1.bf16.msra.mxu0 0
      %398 = vmatprep.subr.bf16.mxu0 0
      %399 = vmatpush1.bf16.msra.mxu0 0
      %400 = vmatprep.subr.bf16.mxu0 0
      %401 = vmatpush1.bf16.msra.mxu0 0
      %402 = vmatprep.subr.bf16.mxu0 0
      %403 = vmatpush1.bf16.msra.mxu0 0
      %404 = vmatprep.subr.bf16.mxu0 0
      %405 = vmatpush1.bf16.msra.mxu0 0
      %406 = vmatprep.subr.bf16.mxu0 0
      %407 = vmatpush1.bf16.msra.mxu0 0
      %408 = vmatprep.subr.bf16.mxu0 0
      %409 = vmatpush1.bf16.msra.mxu0 0
      %410 = vmatprep.subr.bf16.mxu0 0
      %411 = vmatpush1.bf16.msra.mxu0 0
      %412 = vmatprep.subr.bf16.mxu0 0
      %413 = vmatpush1.bf16.msra.mxu0 0
      %414 = vmatprep.subr.bf16.mxu0 0
      %415 = vmatpush1.bf16.msra.mxu0 0
      %416 = vmatprep.subr.bf16.mxu0 0
      %417 = vmatpush1.bf16.msra.mxu0 0
      %418 = vmatprep.subr.bf16.mxu0 0
      %419 = vmatpush1.bf16.msra.mxu0 0
      %420 = vmatprep.subr.bf16.mxu0 0
      %421 = vmatpush1.bf16.msra.mxu0 0
      %422 = vmatprep.mubr.bf16.mxu0 0
      %423 = vmatmul.mubr.bf16.gmra.mrb[0].mxu0 %v379
      %v424 = vpop.f32.mrb[0].mxu0
      %v425 = vadd.f32 0.0, %v424
      %v426 = vpop.f32.mrb[0].mxu0
      %v427 = vpop.f32.mrb[0].mxu0
      %v428 = vadd.f32 0.0, %v427
      %v429 = vpop.f32.mrb[0].mxu0
      %430 = vmatprep.mubr.bf16.mxu0 0
      %431 = vmatmul.mubr.bf16.gmra.mrb[0].mxu0 %v382
      %v432 = vpop.f32.mrb[0].mxu0
      %v433 = vadd.f32 0.0, %v432
      %v434 = vpop.f32.mrb[0].mxu0
      %v435 = vpop.f32.mrb[0].mxu0
      %v436 = vadd.f32 0.0, %v435
      %v437 = vpop.f32.mrb[0].mxu0
      %438 = vmatprep.mubr.bf16.mxu0 0
      %439 = vmatmul.mubr.bf16.gmra.mrb[0].mxu0 %v385
      %v440 = vpop.f32.mrb[0].mxu0
      %v441 = vadd.f32 0.0, %v440
      %v442 = vpop.f32.mrb[0].mxu0
      %v443 = vpop.f32.mrb[0].mxu0
      %v444 = vadd.f32 0.0, %v443
      %v445 = vpop.f32.mrb[0].mxu0
      %446 = vmatprep.mubr.bf16.mxu0 0
      %447 = vmatmul.mubr.bf16.gmra.mrb[0].mxu0 %v388
      %v448 = vpop.f32.mrb[0].mxu0
      %v449 = vadd.f32 0.0, %v448
      %v450 = vpop.f32.mrb[0].mxu0
      %v451 = vpop.f32.mrb[0].mxu0
      %v452 = vadd.f32 0.0, %v451
      %v453 = vpop.f32.mrb[0].mxu0
      %454 = vdwg.mxu0
      %v455 = vadd.f32 %v333, %v425
      %v456 = vadd.f32 %v334, %v428
      %v457 = vadd.f32 %v335, %v433
      %v458 = vadd.f32 %v336, %v436
      %v459 = vadd.f32 %v337, %v441
      %v460 = vadd.f32 %v338, %v444
      %v461 = vadd.f32 %v339, %v449
      %v462 = vadd.f32 %v340, %v452
      %vm463 = vcmask 64512
      %464 = vst.msk [vmem:[#allocation2] sm:$0xff] %vm463, %v455
      %465 = vst.msk [vmem:[#allocation2 + $0x8] sm:$0xff] %vm463, %v456
      %466 = vst.msk [vmem:[#allocation2 + $0x10] sm:$0xff] %vm463, %v457
      %467 = vst.msk [vmem:[#allocation2 + $0x18] sm:$0xff] %vm463, %v458
      %468 = vst.msk [vmem:[#allocation2 + $0x20] sm:$0xff] %vm463, %v459
      %469 = vst.msk [vmem:[#allocation2 + $0x28] sm:$0xff] %vm463, %v460
      %470 = vst.msk [vmem:[#allocation2 + $0x30] sm:$0xff] %vm463, %v461
      %471 = vst.msk [vmem:[#allocation2 + $0x38] sm:$0xff] %vm463, %v462
      // Predicated region
      $region41: #{rstb_forward.29} parent=35 // pred_check
        %p472 = pneg %p320
      $region42: #{rstb_forward.29} parent=35 // pred_check_branch
        %474 = sbr.rel (%p472) target = $region44
      $region43: #{rstb_forward.29} parent=35 // pred_region
        %v475 = vld [vmem:[#allocation2] sm:$0xff]
        %v476 = vld [vmem:[#allocation2 + $0x8] sm:$0xff]
        %v477 = vld [vmem:[#allocation2 + $0x10] sm:$0xff]
        %v478 = vld [vmem:[#allocation2 + $0x18] sm:$0xff]
        %v479 = vld [vmem:[#allocation2 + $0x20] sm:$0xff]
        %v480 = vld [vmem:[#allocation2 + $0x28] sm:$0xff]
        %v481 = vld [vmem:[#allocation2 + $0x30] sm:$0xff]
        %v482 = vld [vmem:[#allocation2 + $0x38] sm:$0xff]
        %v483 = vld [vmem:[%s300] sm:$0x1]
        %v485 = vlaneseq
        %v486 = vshrl.u32 %v485, 7
        %v487 = vsub.s32 0, %v486
        %v488 = vrot.slane %v483, %v487
        %v490 = vadd.f32 %v475, %v488
        %v491 = vadd.f32 %v476, %v488
        %v492 = vadd.f32 %v477, %v488
        %v493 = vadd.f32 %v478, %v488
        %v494 = vadd.f32 %v479, %v488
        %v495 = vadd.f32 %v480, %v488
        %v496 = vadd.f32 %v481, %v488
        %v497 = vadd.f32 %v482, %v488
        %v498 = vld [vmem:[%s308] sm:$0xff]
        %v499 = vld [vmem:[%s308 + $0x8] sm:$0xff]
        %v500 = vld [vmem:[%s308 + $0x10] sm:$0xff]
        %v501 = vld [vmem:[%s308 + $0x18] sm:$0xff]
        %v502 = vld [vmem:[%s308 + $0x20] sm:$0xff]
        %v503 = vld [vmem:[%s308 + $0x28] sm:$0xff]
        %v504 = vld [vmem:[%s308 + $0x30] sm:$0xff]
        %v505 = vld [vmem:[%s308 + $0x38] sm:$0xff]
        %v506 = vadd.f32 %v490, %v498
        %v507 = vadd.f32 %v491, %v499
        %v508 = vadd.f32 %v492, %v500
        %v509 = vadd.f32 %v493, %v501
        %v510 = vadd.f32 %v494, %v502
        %v511 = vadd.f32 %v495, %v503
        %v512 = vadd.f32 %v496, %v504
        %v513 = vadd.f32 %v497, %v505
        %514 = vst.msk [vmem:[%s317] sm:$0xff] %vm463, %v506
        %515 = vst.msk [vmem:[%s317 + $0x8] sm:$0xff] %vm463, %v507
        %516 = vst.msk [vmem:[%s317 + $0x10] sm:$0xff] %vm463, %v508
        %517 = vst.msk [vmem:[%s317 + $0x18] sm:$0xff] %vm463, %v509
        %518 = vst.msk [vmem:[%s317 + $0x20] sm:$0xff] %vm463, %v510
        %519 = vst.msk [vmem:[%s317 + $0x28] sm:$0xff] %vm463, %v511
        %520 = vst.msk [vmem:[%s317 + $0x30] sm:$0xff] %vm463, %v512
        %521 = vst.msk [vmem:[%s317 + $0x38] sm:$0xff] %vm463, %v513
      $region44: #{rstb_forward.29} parent=35 // pred_fallthru
        _
      %s522 = smul.u32 8, %s20
      %p523 = scmp.lt.s32.totalorder %s522, 15
      %s524 = scalar_select %p523, %s522, 15
      %p525 = scmp.lt.s32.totalorder %s21, 0
      %s526 = scalar_select %p525, %s21, 0
      %s527 = sadd.s32 %s526, %s524
      %s528 = smul.addr %s527, 8
      %s529 = scalar_lea.vmem %s4, %s528
      // Predicated region
      $region45: #{rstb_forward.29} parent=35 // pred_check
        %p530 = pneg %p164
      $region46: #{rstb_forward.29} parent=35 // pred_check_branch
        %532 = sbr.rel (%p530) target = $region48
      $region47: #{rstb_forward.29} parent=35 // pred_region
        %s533 = smul.u32 8, %s20
      $region48: #{rstb_forward.29} parent=35 // pred_fallthru
        _
    $region36: #{rstb_forward.29} parent=5 // pred_fallthru
      _
    %p534 = scmp.le.s32.totalorder 2, %s10
    // Predicated region
    $region49: #{rstb_forward.29} parent=5 // pred_check
      %p535 = pneg %p534
    $region50: #{rstb_forward.29} parent=5 // pred_check_branch
      %537 = sbr.rel (%p535) target = $region52
    $region51: #{rstb_forward.29} parent=5 // pred_region
      %s538 = ssub.s32 %s10, 2
      // Predicated region
      $region53: #{rstb_forward.29} parent=51 // pred_check
        %p539 = pneg %p170
      $region54: #{rstb_forward.29} parent=51 // pred_check_branch
        %541 = sbr.rel (%p539) target = $region56
      $region55: #{rstb_forward.29} parent=51 // pred_region
        %s542 = smul.u32 8, %s23
        %p543 = scmp.lt.s32.totalorder %s542, 15
        %s544 = scalar_select %p543, %s542, 15
        %p545 = scmp.lt.s32.totalorder %s24, 0
        %s546 = scalar_select %p545, %s24, 0
        %s547 = sadd.s32 %s546, %s544
        %s548 = smul.addr %s547, 8
        %s549 = scalar_lea.vmem %s4, %s548
      $region56: #{rstb_forward.29} parent=51 // pred_fallthru
        _
    $region52: #{rstb_forward.29} parent=5 // pred_fallthru
      _
  $region6: #{rstb_forward.29} parent=0 // loop_footer
    %s14 = sadd.s32 1, %s10
  $region7: #{rstb_forward.29} parent=0 // loop_footer_branch
    %9 = sbr.rel target = $region3
  $region8: #{rstb_forward.29} parent=0 // loop_exit
    _

// kernel: rstb_forward.39
$region0: #{rstb_forward.39}
  #allocation0 [shape = 'u32[]', space=smem, size = 0x4, offset = 0x4, fixed_abs, tag = 'smem constant byte address 0x4 - core index']
  #allocation1 [shape = 'u32[144,128]{1,0:T(1,128)}', space=vmem, size = 0x12000, scoped, tag = 'internal scratch']
  %s0 = inlined_call_operand.vmem [shape: bf16[2,10,10,8], index: 0, kind: input, shape index: {}]
  %s1 = inlined_call_operand.vmem [shape: bf16[9,8,8], index: 1, kind: input, shape index: {}]
  %s2 = inlined_call_operand.vmem [shape: f32[1,8], index: 2, kind: input, shape index: {}]
  %s3 = inlined_call_operand.vmem [shape: f32[2,64,8], index: 3, kind: input, shape index: {}]
  %s4 = inlined_call_operand.vmem [shape: f32[2,64,8], index: 4, kind: output, shape index: {}]
  %s5 = sld [smem:[#allocation0]]
  $region49: #{rstb_forward.39} parent=0
    _
  %s7 = ssub.s32 1, %s5
  %s8 = scalar_select 0, %s7, %s5
  loop: start=0, step=1, limit=4
  $region2: #{rstb_forward.39} parent=0 // loop_pre_header
    _
  $region3: #{rstb_forward.39} parent=0 // loop_header
    %s10 = sphi 0, %s14
    %p11 = scmp.ge.s32.totalorder %s10, 4
    %s17 = sphi 0, %s29
    %s18 = sphi 0, %s25
    %s19 = sphi 0, %s17
    %s20 = sphi 0, %s18
    %s21 = sphi 0, %s19
    %s22 = sphi 0, %s20
    %s32 = sphi 0, %s34
    %s35 = sphi 0, %s32
    %s36 = sphi 0, %s35
    %s52 = sphi 0, %s36
    %s58 = sphi 0, %s60
    %s61 = sphi 0, %s58
    %s62 = sphi 0, %s61
    %s78 = sphi 0, %s62
    %s84 = sphi 0, %s86
    %s87 = sphi 0, %s84
    %s88 = sphi 0, %s87
    %s104 = sphi 0, %s88
    %s112 = sphi 0, %s114
    %s115 = sphi 0, %s112
    %s116 = sphi 0, %s115
    %s132 = sphi 0, %s116
    %s140 = sphi 0, %s142
    %s143 = sphi 0, %s140
    %s144 = sphi 0, %s143
    %s160 = sphi 0, %s144
  $region4: #{rstb_forward.39} parent=0 // loop_header_branch
    %13 = sbr.rel (%p11) target = $region8
  $region5: #{rstb_forward.39} parent=0 // loop_body
    %s15 = ssub.s32 %s10, 1
    %s16 = ssub.s32 %s10, 2
    %s23 = sadd.s32 1, %s18
    %p24 = scmp.ge.s32.totalorder %s23, 1
    %s25 = scalar_select %p24, 0, %s23
    %s26 = sadd.s32 1, %s17
    %s27 = scalar_select %p24, %s26, %s17
    %p28 = scmp.ge.s32.totalorder %s27, 2
    %s29 = scalar_select %p28, 0, %s27
    %s30 = ssub.s32 %s17, %s29
    %p31 = scmp.eq.s32.totalorder %s30, 0
    %s33 = sadd.s32 %s32, 1
    %s34 = scalar_select %p31, %s32, %s33
    %p37 = pneg %p31
    %p38 = scmp.eq.s32.totalorder %s10, 1
    %p39 = por %p37, %p38
    %p40 = scmp.ne.s32.totalorder %s32, %s35
    %p41 = scmp.eq.s32.totalorder %s10, 0
    %p42 = por %p40, %p41
    %p43 = scmp.ne.s32.totalorder %s32, %s35
    %p44 = scmp.eq.s32.totalorder %s15, 1
    %p45 = por %p43, %p44
    %p46 = scmp.ne.s32.totalorder %s35, %s36
    %p47 = scmp.eq.s32.totalorder %s15, 0
    %p48 = por %p46, %p47
    %p49 = scmp.ne.s32.totalorder %s35, %s36
    %p50 = scmp.eq.s32.totalorder %s16, 1
    %p51 = por %p49, %p50
    %p53 = scmp.ne.s32.totalorder %s36, %s52
    %p54 = scmp.eq.s32.totalorder %s16, 0
    %p55 = por %p53, %p54
    %s56 = ssub.s32 %s18, %s25
    %p57 = scmp.eq.s32.totalorder %s56, 0
    %s59 = sadd.s32 %s58, 1
    %s60 = scalar_select %p57, %s58, %s59
    %p63 = pneg %p57
    %p64 = scmp.eq.s32.totalorder %s10, 1
    %p65 = por %p63, %p64
    %p66 = scmp.ne.s32.totalorder %s58, %s61
    %p67 = scmp.eq.s32.totalorder %s10, 0
    %p68 = por %p66, %p67
    %p69 = scmp.ne.s32.totalorder %s58, %s61
    %p70 = scmp.eq.s32.totalorder %s15, 1
    %p71 = por %p69, %p70
    %p72 = scmp.ne.s32.totalorder %s61, %s62
    %p73 = scmp.eq.s32.totalorder %s15, 0
    %p74 = por %p72, %p73
    %p75 = scmp.ne.s32.totalorder %s61, %s62
    %p76 = scmp.eq.s32.totalorder %s16, 1
    %p77 = por %p75, %p76
    %p79 = scmp.ne.s32.totalorder %s62, %s78
    %p80 = scmp.eq.s32.totalorder %s16, 0
    %p81 = por %p79, %p80
    %s82 = ssub.s32 %s18, %s25
    %p83 = scmp.eq.s32.totalorder %s82, 0
    %s85 = sadd.s32 %s84, 1
    %s86 = scalar_select %p83, %s84, %s85
    %p89 = pneg %p83
    %p90 = scmp.eq.s32.totalorder %s10, 1
    %p91 = por %p89, %p90
    %p92 = scmp.ne.s32.totalorder %s84, %s87
    %p93 = scmp.eq.s32.totalorder %s10, 0
    %p94 = por %p92, %p93
    %p95 = scmp.ne.s32.totalorder %s84, %s87
    %p96 = scmp.eq.s32.totalorder %s15, 1
    %p97 = por %p95, %p96
    %p98 = scmp.ne.s32.totalorder %s87, %s88
    %p99 = scmp.eq.s32.totalorder %s15, 0
    %p100 = por %p98, %p99
    %p101 = scmp.ne.s32.totalorder %s87, %s88
    %p102 = scmp.eq.s32.totalorder %s16, 1
    %p103 = por %p101, %p102
    %p105 = scmp.ne.s32.totalorder %s88, %s104
    %p106 = scmp.eq.s32.totalorder %s16, 0
    %p107 = por %p105, %p106
    %s108 = ssub.s32 %s17, %s29
    %s109 = ssub.s32 %s18, %s25
    %s110 = sor.u32 %s108, %s109
    %p111 = scmp.eq.s32.totalorder %s110, 0
    %s113 = sadd.s32 %s112, 1
    %s114 = scalar_select %p111, %s112, %s113
    %p117 = pneg %p111
    %p118 = scmp.eq.s32.totalorder %s10, 1
    %p119 = por %p117, %p118
    %p120 = scmp.ne.s32.totalorder %s112, %s115
    %p121 = scmp.eq.s32.totalorder %s10, 0
    %p122 = por %p120, %p121
    %p123 = scmp.ne.s32.totalorder %s112, %s115
    %p124 = scmp.eq.s32.totalorder %s15, 1
    %p125 = por %p123, %p124
    %p126 = scmp.ne.s32.totalorder %s115, %s116
    %p127 = scmp.eq.s32.totalorder %s15, 0
    %p128 = por %p126, %p127
    %p129 = scmp.ne.s32.totalorder %s115, %s116
    %p130 = scmp.eq.s32.totalorder %s16, 1
    %p131 = por %p129, %p130
    %p133 = scmp.ne.s32.totalorder %s116, %s132
    %p134 = scmp.eq.s32.totalorder %s16, 0
    %p135 = por %p133, %p134
    %s136 = ssub.s32 %s17, %s29
    %s137 = ssub.s32 %s18, %s25
    %s138 = sor.u32 %s136, %s137
    %p139 = scmp.eq.s32.totalorder %s138, 0
    %s141 = sadd.s32 %s140, 1
    %s142 = scalar_select %p139, %s140, %s141
    %p145 = pneg %p139
    %p146 = scmp.eq.s32.totalorder %s10, 1
    %p147 = por %p145, %p146
    %p148 = scmp.ne.s32.totalorder %s140, %s143
    %p149 = scmp.eq.s32.totalorder %s10, 0
    %p150 = por %p148, %p149
    %p151 = scmp.ne.s32.totalorder %s140, %s143
    %p152 = scmp.eq.s32.totalorder %s15, 1
    %p153 = por %p151, %p152
    %p154 = scmp.ne.s32.totalorder %s143, %s144
    %p155 = scmp.eq.s32.totalorder %s15, 0
    %p156 = por %p154, %p155
    %p157 = scmp.ne.s32.totalorder %s143, %s144
    %p158 = scmp.eq.s32.totalorder %s16, 1
    %p159 = por %p157, %p158
    %p161 = scmp.ne.s32.totalorder %s144, %s160
    %p162 = scmp.eq.s32.totalorder %s16, 0
    %p163 = por %p161, %p162
    %p164 = scmp.le.s32.totalorder 1, %s10
    %p165 = scmp.lt.s32.totalorder %s10, 3
    %p166 = pnand %p164, %p165
    %p167 = pneg %p166
    // Predicated region
    $region9: #{rstb_forward.39} parent=5 // pred_check
      _
    $region10: #{rstb_forward.39} parent=5 // pred_check_branch
      %169 = sbr.rel (%p166) target = $region12
    $region11: #{rstb_forward.39} parent=5 // pred_region
      %s170 = ssub.s32 %s10, 1
      // Predicated region
      $region13: #{rstb_forward.39} parent=11 // pred_check
        %p171 = pneg %p74
      $region14: #{rstb_forward.39} parent=11 // pred_check_branch
        %173 = sbr.rel (%p171) target = $region16
      $region15: #{rstb_forward.39} parent=11 // pred_region
        %p174 = scmp.lt.s32.totalorder %s20, 0
        %s175 = scalar_select %p174, %s20, 0
        %s176 = smul.addr %s175, 4
        %s177 = scalar_lea.vmem %s1, %s176
      $region16: #{rstb_forward.39} parent=11 // pred_fallthru
        _
      // Predicated region
      $region17: #{rstb_forward.39} parent=11 // pred_check
        %p178 = pneg %p100
      $region18: #{rstb_forward.39} parent=11 // pred_check_branch
        %180 = sbr.rel (%p178) target = $region20
      $region19: #{rstb_forward.39} parent=11 // pred_region
        %p181 = scmp.lt.s32.totalorder %s20, 0
        %s182 = scalar_select %p181, %s20, 0
        %s183 = scalar_lea.vmem %s2, %s182
      $region20: #{rstb_forward.39} parent=11 // pred_fallthru
        _
    $region12: #{rstb_forward.39} parent=5 // pred_fallthru
      _
    %p184 = scmp.lt.s32.totalorder %s10, 2
    // Predicated region
    $region21: #{rstb_forward.39} parent=5 // pred_check
      %p185 = pneg %p184
    $region22: #{rstb_forward.39} parent=5 // pred_check_branch
      %187 = sbr.rel (%p185) target = $region24
    $region23: #{rstb_forward.39} parent=5 // pred_region
      // Predicated region
      $region25: #{rstb_forward.39} parent=23 // pred_check
        %p188 = pneg %p42
      $region26: #{rstb_forward.39} parent=23 // pred_check_branch
        %190 = sbr.rel (%p188) target = $region28
      $region27: #{rstb_forward.39} parent=23 // pred_region
        %p191 = scmp.lt.s32.totalorder %s17, 1
        %s192 = scalar_select %p191, %s17, 1
        %s193 = smul.addr %s192, 20
        %s194 = smul.addr %s193, 4
        %s195 = scalar_lea.vmem %s0, %s194
      $region28: #{rstb_forward.39} parent=23 // pred_fallthru
        _
      // Predicated region
      $region29: #{rstb_forward.39} parent=23 // pred_check
        %p196 = pneg %p122
      $region30: #{rstb_forward.39} parent=23 // pred_check_branch
        %198 = sbr.rel (%p196) target = $region32
      $region31: #{rstb_forward.39} parent=23 // pred_region
        %p199 = scmp.lt.s32.totalorder %s17, 1
        %s200 = scalar_select %p199, %s17, 1
        %p201 = scmp.lt.s32.totalorder %s18, 0
        %s202 = scalar_select %p201, %s18, 0
        %s203 = smul.addr %s200, 8
        %s204 = sadd.s32 %s202, %s203
        %s205 = smul.addr %s204, 8
        %s206 = scalar_lea.vmem %s3, %s205
      $region32: #{rstb_forward.39} parent=23 // pred_fallthru
        _
    $region24: #{rstb_forward.39} parent=5 // pred_fallthru
      _
    %p207 = scmp.le.s32.totalorder 1, %s10
    %p208 = scmp.lt.s32.totalorder %s10, 3
    %p209 = pnand %p207, %p208
    %p210 = pneg %p209
    // Predicated region
    $region33: #{rstb_forward.39} parent=5 // pred_check
      _
    $region34: #{rstb_forward.39} parent=5 // pred_check_branch
      %212 = sbr.rel (%p209) target = $region36
    $region35: #{rstb_forward.39} parent=5 // pred_region
      %s213 = ssub.s32 %s10, 1
      %p214 = scmp.lt.s32.totalorder %s19, 1
      %s215 = scalar_select %p214, %s19, 1
      %s216 = smul.addr %s215, 20
      %s217 = smul.addr %s216, 4
      %s218 = scalar_lea.vmem %s0, %s217
      %p219 = pneg %p48
      %p220 = pneg %p45
      %p221 = scmp.lt.s32.totalorder %s20, 0
      %s222 = scalar_select %p221, %s20, 0
      %s223 = smul.addr %s222, 4
      %s224 = scalar_lea.vmem %s1, %s223
      %p225 = pneg %p74
      %p226 = pneg %p71
      %p227 = scmp.lt.s32.totalorder %s20, 0
      %s228 = scalar_select %p227, %s20, 0
      %s229 = scalar_lea.vmem %s2, %s228
      %p230 = pneg %p100
      %p231 = pneg %p97
      %p232 = scmp.lt.s32.totalorder %s19, 1
      %s233 = scalar_select %p232, %s19, 1
      %p234 = scmp.lt.s32.totalorder %s20, 0
      %s235 = scalar_select %p234, %s20, 0
      %s236 = smul.addr %s233, 8
      %s237 = sadd.s32 %s235, %s236
      %s238 = smul.addr %s237, 8
      %s239 = scalar_lea.vmem %s3, %s238
      %p240 = pneg %p128
      %p241 = pneg %p125
      %p242 = pneg %p156
      %p243 = pneg %p153
      %p244 = scmp.lt.s32.totalorder %s19, 1
      %s245 = scalar_select %p244, %s19, 1
      %p246 = scmp.lt.s32.totalorder %s20, 0
      %s247 = scalar_select %p246, %s20, 0
      %s248 = smul.addr %s245, 8
      %s249 = sadd.s32 %s247, %s248
      %s250 = smul.addr %s249, 8
      %s251 = scalar_lea.vmem %s4, %s250
      %p252 = scmp.lt.s32.totalorder %s19, 1
      %s253 = scalar_select %p252, %s19, 1
      %s254 = smul.addr %s253, 20
      %s255 = smul.addr %s254, 4
      %s256 = scalar_lea.vmem %s0, %s255
      %p257 = scmp.lt.s32.totalorder %s20, 0
      %s258 = scalar_select %p257, %s20, 0
      %s259 = smul.addr %s258, 4
      %s260 = scalar_lea.vmem %s1, %s259
      %p261 = scmp.lt.s32.totalorder %s20, 0
      %s262 = scalar_select %p261, %s20, 0
      %s263 = scalar_lea.vmem %s2, %s262
      %p264 = scmp.lt.s32.totalorder %s19, 1
      %s265 = scalar_select %p264, %s19, 1
      %p266 = scmp.lt.s32.totalorder %s20, 0
      %s267 = scalar_select %p266, %s20, 0
      %s268 = smul.addr %s265, 8
      %s269 = sadd.s32 %s267, %s268
      %s270 = smul.addr %s269, 8
      %s271 = scalar_lea.vmem %s3, %s270
      %p272 = scmp.lt.s32.totalorder %s19, 1
      %s273 = scalar_select %p272, %s19, 1
      %p274 = scmp.lt.s32.totalorder %s20, 0
      %s275 = scalar_select %p274, %s20, 0
      %s276 = smul.addr %s273, 8
      %s277 = sadd.s32 %s275, %s276
      %s278 = smul.addr %s277, 8
      %s279 = scalar_lea.vmem %s4, %s278
      %v281 = vld [vmem:[%s256] sm:$0xf]
      %v282 = vld [vmem:[%s256 + $0x4] sm:$0x1]
      %v283 = vld [vmem:[%s256 + $0x8] sm:$0xf]
      %v284 = vld [vmem:[%s256 + $0xc] sm:$0x1]
      %v285 = vld [vmem:[%s256 + $0x10] sm:$0xf]
      %v286 = vld [vmem:[%s256 + $0x14] sm:$0x1]
      %v287 = vld [vmem:[%s256 + $0x18] sm:$0xf]
      %v288 = vld [vmem:[%s256 + $0x1c] sm:$0x1]
      %v289 = vld [vmem:[%s256 + $0x20] sm:$0xf]
      %v290 = vld [vmem:[%s256 + $0x24] sm:$0x1]
      %v291 = vld [vmem:[%s256 + $0x28] sm:$0xf]
      %v292 = vld [vmem:[%s256 + $0x2c] sm:$0x1]
      %v293 = vld [vmem:[%s256 + $0x30] sm:$0xf]
      %v294 = vld [vmem:[%s256 + $0x34] sm:$0x1]
      %v295 = vld [vmem:[%s256 + $0x38] sm:$0xf]
      %v296 = vld [vmem:[%s256 + $0x3c] sm:$0x1]
      %v297 = vld [vmem:[%s256 + $0x40] sm:$0xf]
      %v298 = vld [vmem:[%s256 + $0x44] sm:$0x1]
      %v299 = vld [vmem:[%s256 + $0x48] sm:$0xf]
      %v300 = vld [vmem:[%s256 + $0x4c] sm:$0x1]
      %v301 = vld [vmem:[%s260] sm:$0xf]
      %vm302 = vsmask.f32 3328
      %vm303 = vsmask.f32 7440
      %vm304 = vmor %vm302, %vm303
      %v306 = vshrl.u32 %v281, 16
      %v308 = vrot.slane %v306, 4
      %v309 = vshll.u32 %v281, 16
      %v311 = vrot.slane %v309, 5
      %v312 = vor.u32 %v308, %v311
      %v313 = vrot.slane %v312, 4
      %v315 = vshll.u32 %v282, 16
      %v317 = vrot.slane %v315, 5
      %v318 = vsel %vm304, %v313, %v317
      %v320 = vshrl.u32 %v283, 16
      %v322 = vrot.slane %v320, 4
      %v323 = vshll.u32 %v283, 16
      %v325 = vrot.slane %v323, 5
      %v326 = vor.u32 %v322, %v325
      %v327 = vrot.slane %v326, 4
      %v329 = vshll.u32 %v284, 16
      %v331 = vrot.slane %v329, 5
      %v332 = vsel %vm304, %v327, %v331
      %v334 = vshrl.u32 %v285, 16
      %v336 = vrot.slane %v334, 4
      %v337 = vshll.u32 %v285, 16
      %v339 = vrot.slane %v337, 5
      %v340 = vor.u32 %v336, %v339
      %v341 = vrot.slane %v340, 4
      %v343 = vshll.u32 %v286, 16
      %v345 = vrot.slane %v343, 5
      %v346 = vsel %vm304, %v341, %v345
      %v348 = vshrl.u32 %v287, 16
      %v350 = vrot.slane %v348, 4
      %v351 = vshll.u32 %v287, 16
      %v353 = vrot.slane %v351, 5
      %v354 = vor.u32 %v350, %v353
      %v355 = vrot.slane %v354, 4
      %v357 = vshll.u32 %v288, 16
      %v359 = vrot.slane %v357, 5
      %v360 = vsel %vm304, %v355, %v359
      %v362 = vshrl.u32 %v289, 16
      %v364 = vrot.slane %v362, 4
      %v365 = vshll.u32 %v289, 16
      %v367 = vrot.slane %v365, 5
      %v368 = vor.u32 %v364, %v367
      %v369 = vrot.slane %v368, 4
      %v371 = vshll.u32 %v290, 16
      %v373 = vrot.slane %v371, 5
      %v374 = vsel %vm304, %v369, %v373
      %v376 = vshrl.u32 %v291, 16
      %v378 = vrot.slane %v376, 4
      %v379 = vshll.u32 %v291, 16
      %v381 = vrot.slane %v379, 5
      %v382 = vor.u32 %v378, %v381
      %v383 = vrot.slane %v382, 4
      %v385 = vshll.u32 %v292, 16
      %v387 = vrot.slane %v385, 5
      %v388 = vsel %vm304, %v383, %v387
      %v390 = vshrl.u32 %v293, 16
      %v392 = vrot.slane %v390, 4
      %v393 = vshll.u32 %v293, 16
      %v395 = vrot.slane %v393, 5
      %v396 = vor.u32 %v392, %v395
      %v397 = vrot.slane %v396, 4
      %v399 = vshll.u32 %v294, 16
      %v401 = vrot.slane %v399, 5
      %v402 = vsel %vm304, %v397, %v401
      %v404 = vshrl.u32 %v295, 16
      %v406 = vrot.slane %v404, 4
      %v407 = vshll.u32 %v295, 16
      %v409 = vrot.slane %v407, 5
      %v410 = vor.u32 %v406, %v409
      %v411 = vrot.slane %v410, 4
      %v413 = vshll.u32 %v296, 16
      %v415 = vrot.slane %v413, 5
      %v416 = vsel %vm304, %v411, %v415
      %s417 = scalar_lea.vmem %s260, 4
      %v418 = vld [vmem:[%s417] sm:$0xf]
      %v419 = vunpack.c.l.b16 %v318
      %v420 = vunpack.c.l.b16 %v332
      %v421 = vunpack.c.l.b16 %v346
      %v422 = vunpack.c.l.b16 %v360
      %v423 = vunpack.c.l.b16 %v374
      %v424 = vunpack.c.l.b16 %v388
      %v425 = vunpack.c.l.b16 %v402
      %v426 = vunpack.c.l.b16 %v416
      %v427 = vpack.c.b16 %v420, %v419
      %v428 = vpack.c.b16 %v422, %v421
      %v429 = vpack.c.b16 %v424, %v423
      %v430 = vpack.c.b16 %v426, %v425
      %vm431 = vcmask 64512
      %v433 = vsel %vm431, %v427, 0
      %v436 = vsel %vm431, %v428, 0
      %v439 = vsel %vm431, %v429, 0
      %v442 = vsel %vm431, %v430, 0
      %vm444 = vcmask 1043456
      %v446 = vsel %vm444, %v418, 0
      %448 = vmatprep.subr.bf16.mxu0 0
      %449 = vmatpush1.bf16.msra.mxu0 %v446
      %450 = vmatprep.subr.bf16.mxu0 0
      %451 = vmatpush1.bf16.msra.mxu0 0
      %452 = vmatprep.subr.bf16.mxu0 0
      %453 = vmatpush1.bf16.msra.mxu0 0
      %454 = vmatprep.subr.bf16.mxu0 0
      %455 = vmatpush1.bf16.msra.mxu0 0
      %456 = vmatprep.subr.bf16.mxu0 0
      %457 = vmatpush1.bf16.msra.mxu0 0
      %458 = vmatprep.subr.bf16.mxu0 0
      %459 = vmatpush1.bf16.msra.mxu0 0
      %460 = vmatprep.subr.bf16.mxu0 0
      %461 = vmatpush1.bf16.msra.mxu0 0
      %462 = vmatprep.subr.bf16.mxu0 0
      %463 = vmatpush1.bf16.msra.mxu0 0
      %464 = vmatprep.subr.bf16.mxu0 0
      %465 = vmatpush1.bf16.msra.mxu0 0
      %466 = vmatprep.subr.bf16.mxu0 0
      %467 = vmatpush1.bf16.msra.mxu0 0
      %468 = vmatprep.subr.bf16.mxu0 0
      %469 = vmatpush1.bf16.msra.mxu0 0
      %470 = vmatprep.subr.bf16.mxu0 0
      %471 = vmatpush1.bf16.msra.mxu0 0
      %472 = vmatprep.subr.bf16.mxu0 0
      %473 = vmatpush1.bf16.msra.mxu0 0
      %474 = vmatprep.subr.bf16.mxu0 0
      %475 = vmatpush1.bf16.msra.mxu0 0
      %476 = vmatprep.subr.bf16.mxu0 0
      %477 = vmatpush1.bf16.msra.mxu0 0
      %478 = vmatprep.subr.bf16.mxu0 0
      %479 = vmatpush1.bf16.msra.mxu0 0
      %480 = vmatprep.mubr.bf16.mxu0 0
      %481 = vmatmul.mubr.bf16.gmra.mrb[0].mxu0 %v433
      %v482 = vpop.f32.mrb[0].mxu0
      %v483 = vadd.f32 0.0, %v482
      %v484 = vpop.f32.mrb[0].mxu0
      %v485 = vpop.f32.mrb[0].mxu0
      %v486 = vadd.f32 0.0, %v485
      %v487 = vpop.f32.mrb[0].mxu0
      %488 = vmatprep.mubr.bf16.mxu0 0
      %489 = vmatmul.mubr.bf16.gmra.mrb[0].mxu0 %v436
      %v490 = vpop.f32.mrb[0].mxu0
      %v491 = vadd.f32 0.0, %v490
      %v492 = vpop.f32.mrb[0].mxu0
      %v493 = vpop.f32.mrb[0].mxu0
      %v494 = vadd.f32 0.0, %v493
      %v495 = vpop.f32.mrb[0].mxu0
      %496 = vmatprep.mubr.bf16.mxu0 0
      %497 = vmatmul.mubr.bf16.gmra.mrb[0].mxu0 %v439
      %v498 = vpop.f32.mrb[0].mxu0
      %v499 = vadd.f32 0.0, %v498
      %v500 = vpop.f32.mrb[0].mxu0
      %v501 = vpop.f32.mrb[0].mxu0
      %v502 = vadd.f32 0.0, %v501
      %v503 = vpop.f32.mrb[0].mxu0
      %504 = vmatprep.mubr.bf16.mxu0 0
      %505 = vmatmul.mubr.bf16.gmra.mrb[0].mxu0 %v442
      %v506 = vpop.f32.mrb[0].mxu0
      %v507 = vadd.f32 0.0, %v506
      %v508 = vpop.f32.mrb[0].mxu0
      %v509 = vpop.f32.mrb[0].mxu0
      %v510 = vadd.f32 0.0, %v509
      %v511 = vpop.f32.mrb[0].mxu0
      %512 = vdwg.mxu0
      %v521 = vunpack.c.l.b16 %v281
      %v522 = vunpack.c.l.b16 %v283
      %v523 = vunpack.c.l.b16 %v285
      %v524 = vunpack.c.l.b16 %v287
      %v525 = vunpack.c.l.b16 %v289
      %v526 = vunpack.c.l.b16 %v291
      %v527 = vunpack.c.l.b16 %v293
      %v528 = vunpack.c.l.b16 %v295
      %v529 = vpack.c.b16 %v522, %v521
      %v530 = vpack.c.b16 %v524, %v523
      %v531 = vpack.c.b16 %v526, %v525
      %v532 = vpack.c.b16 %v528, %v527
      %v534 = vsel %vm431, %v529, 0
      %v537 = vsel %vm431, %v530, 0
      %v540 = vsel %vm431, %v531, 0
      %v543 = vsel %vm431, %v532, 0
      %v546 = vsel %vm444, %v301, 0
      %548 = vmatprep.subr.bf16.mxu0 0
      %549 = vmatpush1.bf16.msra.mxu0 %v546
      %550 = vmatprep.subr.bf16.mxu0 0
      %551 = vmatpush1.bf16.msra.mxu0 0
      %552 = vmatprep.subr.bf16.mxu0 0
      %553 = vmatpush1.bf16.msra.mxu0 0
      %554 = vmatprep.subr.bf16.mxu0 0
      %555 = vmatpush1.bf16.msra.mxu0 0
      %556 = vmatprep.subr.bf16.mxu0 0
      %557 = vmatpush1.bf16.msra.mxu0 0
      %558 = vmatprep.subr.bf16.mxu0 0
      %559 = vmatpush1.bf16.msra.mxu0 0
      %560 = vmatprep.subr.bf16.mxu0 0
      %561 = vmatpush1.bf16.msra.mxu0 0
      %562 = vmatprep.subr.bf16.mxu0 0
      %563 = vmatpush1.bf16.msra.mxu0 0
      %564 = vmatprep.subr.bf16.mxu0 0
      %565 = vmatpush1.bf16.msra.mxu0 0
      %566 = vmatprep.subr.bf16.mxu0 0
      %567 = vmatpush1.bf16.msra.mxu0 0
      %568 = vmatprep.subr.bf16.mxu0 0
      %569 = vmatpush1.bf16.msra.mxu0 0
      %570 = vmatprep.subr.bf16.mxu0 0
      %571 = vmatpush1.bf16.msra.mxu0 0
      %572 = vmatprep.subr.bf16.mxu0 0
      %573 = vmatpush1.bf16.msra.mxu0 0
      %574 = vmatprep.subr.bf16.mxu0 0
      %575 = vmatpush1.bf16.msra.mxu0 0
      %576 = vmatprep.subr.bf16.mxu0 0
      %577 = vmatpush1.bf16.msra.mxu0 0
      %578 = vmatprep.subr.bf16.mxu0 0
      %579 = vmatpush1.bf16.msra.mxu0 0
      %580 = vmatprep.mubr.bf16.mxu0 0
      %581 = vmatmul.mubr.bf16.gmra.mrb[0].mxu0 %v534
      %v582 = vpop.f32.mrb[0].mxu0
      %v583 = vadd.f32 %v483, %v582
      %v584 = vpop.f32.mrb[0].mxu0
      %v585 = vpop.f32.mrb[0].mxu0
      %v586 = vadd.f32 %v486, %v585
      %v587 = vpop.f32.mrb[0].mxu0
      %588 = vmatprep.mubr.bf16.mxu0 0
      %589 = vmatmul.mubr.bf16.gmra.mrb[0].mxu0 %v537
      %v590 = vpop.f32.mrb[0].mxu0
      %v591 = vadd.f32 %v491, %v590
      %v592 = vpop.f32.mrb[0].mxu0
      %v593 = vpop.f32.mrb[0].mxu0
      %v594 = vadd.f32 %v494, %v593
      %v595 = vpop.f32.mrb[0].mxu0
      %596 = vmatprep.mubr.bf16.mxu0 0
      %597 = vmatmul.mubr.bf16.gmra.mrb[0].mxu0 %v540
      %v598 = vpop.f32.mrb[0].mxu0
      %v599 = vadd.f32 %v499, %v598
      %v600 = vpop.f32.mrb[0].mxu0
      %v601 = vpop.f32.mrb[0].mxu0
      %v602 = vadd.f32 %v502, %v601
      %v603 = vpop.f32.mrb[0].mxu0
      %604 = vmatprep.mubr.bf16.mxu0 0
      %605 = vmatmul.mubr.bf16.gmra.mrb[0].mxu0 %v543
      %v606 = vpop.f32.mrb[0].mxu0
      %v607 = vadd.f32 %v507, %v606
      %v608 = vpop.f32.mrb[0].mxu0
      %v609 = vpop.f32.mrb[0].mxu0
      %v610 = vadd.f32 %v510, %v609
      %v611 = vpop.f32.mrb[0].mxu0
      %612 = vdwg.mxu0
      %vm621 = vcmask 1042432
      %vm622 = vcmask 1046532
      %vm623 = vmor %vm621, %vm622
      %v624 = vrot.slane %v281, 5
      %v625 = vrot.slane %v624, 4
      %v626 = vrot.slane %v282, 5
      %v627 = vsel %vm623, %v625, %v626
      %v628 = vrot.slane %v283, 5
      %v629 = vrot.slane %v628, 4
      %v630 = vrot.slane %v284, 5
      %v631 = vsel %vm623, %v629, %v630
      %v632 = vrot.slane %v285, 5
      %v633 = vrot.slane %v632, 4
      %v634 = vrot.slane %v286, 5
      %v635 = vsel %vm623, %v633, %v634
      %v636 = vrot.slane %v287, 5
      %v637 = vrot.slane %v636, 4
      %v638 = vrot.slane %v288, 5
      %v639 = vsel %vm623, %v637, %v638
      %v640 = vrot.slane %v289, 5
      %v641 = vrot.slane %v640, 4
      %v642 = vrot.slane %v290, 5
      %v643 = vsel %vm623, %v641, %v642
      %v644 = vrot.slane %v291, 5
      %v645 = vrot.slane %v644, 4
      %v646 = vrot.slane %v292, 5
      %v647 = vsel %vm623, %v645, %v646
      %v648 = vrot.slane %v293, 5
      %v649 = vrot.slane %v648, 4
      %v650 = vrot.slane %v294, 5
      %v651 = vsel %vm623, %v649, %v650
      %v652 = vrot.slane %v295, 5
      %v653 = vrot.slane %v652, 4
      %v654 = vrot.slane %v296, 5
      %v655 = vsel %vm623, %v653, %v654
      %s656 = scalar_lea.vmem %s260, 8
      %v657 = vld [vmem:[%s656] sm:$0xf]
      %v658 = vunpack.c.l.b16 %v627
      %v659 = vunpack.c.l.b16 %v631
      %v660 = vunpack.c.l.b16 %v635
      %v661 = vunpack.c.l.b16 %v639
      %v662 = vunpack.c.l.b16 %v643
      %v663 = vunpack.c.l.b16 %v647
      %v664 = vunpack.c.l.b16 %v651
      %v665 = vunpack.c.l.b16 %v655
      %v666 = vpack.c.b16 %v659, %v658
      %v667 = vpack.c.b16 %v661, %v660
      %v668 = vpack.c.b16 %v663, %v662
      %v669 = vpack.c.b16 %v665, %v664
      %v671 = vsel %vm431, %v666, 0
      %v674 = vsel %vm431, %v667, 0
      %v677 = vsel %vm431, %v668, 0
      %v680 = vsel %vm431, %v669, 0
      %v683 = vsel %vm444, %v657, 0
      %685 = vmatprep.subr.bf16.mxu0 0
      %686 = vmatpush1.bf16.msra.mxu0 %v683
      %687 = vmatprep.subr.bf16.mxu0 0
      %688 = vmatpush1.bf16.msra.mxu0 0
      %689 = vmatprep.subr.bf16.mxu0 0
      %690 = vmatpush1.bf16.msra.mxu0 0
      %691 = vmatprep.subr.bf16.mxu0 0
      %692 = vmatpush1.bf16.msra.mxu0 0
      %693 = vmatprep.subr.bf16.mxu0 0
      %694 = vmatpush1.bf16.msra.mxu0 0
      %695 = vmatprep.subr.bf16.mxu0 0
      %696 = vmatpush1.bf16.msra.mxu0 0
      %697 = vmatprep.subr.bf16.mxu0 0
      %698 = vmatpush1.bf16.msra.mxu0 0
      %699 = vmatprep.subr.bf16.mxu0 0
      %700 = vmatpush1.bf16.msra.mxu0 0
      %701 = vmatprep.subr.bf16.mxu0 0
      %702 = vmatpush1.bf16.msra.mxu0 0
      %703 = vmatprep.subr.bf16.mxu0 0
      %704 = vmatpush1.bf16.msra.mxu0 0
      %705 = vmatprep.subr.bf16.mxu0 0
      %706 = vmatpush1.bf16.msra.mxu0 0
      %707 = vmatprep.subr.bf16.mxu0 0
      %708 = vmatpush1.bf16.msra.mxu0 0
      %709 = vmatprep.subr.bf16.mxu0 0
      %710 = vmatpush1.bf16.msra.mxu0 0
      %711 = vmatprep.subr.bf16.mxu0 0
      %712 = vmatpush1.bf16.msra.mxu0 0
      %713 = vmatprep.subr.bf16.mxu0 0
      %714 = vmatpush1.bf16.msra.mxu0 0
      %715 = vmatprep.subr.bf16.mxu0 0
      %716 = vmatpush1.bf16.msra.mxu0 0
      %717 = vmatprep.mubr.bf16.mxu0 0
      %718 = vmatmul.mubr.bf16.gmra.mrb[0].mxu0 %v671
      %v719 = vpop.f32.mrb[0].mxu0
      %v720 = vadd.f32 0.0, %v719
      %v721 = vpop.f32.mrb[0].mxu0
      %v722 = vpop.f32.mrb[0].mxu0
      %v723 = vadd.f32 0.0, %v722
      %v724 = vpop.f32.mrb[0].mxu0
      %725 = vmatprep.mubr.bf16.mxu0 0
      %726 = vmatmul.mubr.bf16.gmra.mrb[0].mxu0 %v674
      %v727 = vpop.f32.mrb[0].mxu0
      %v728 = vadd.f32 0.0, %v727
      %v729 = vpop.f32.mrb[0].mxu0
      %v730 = vpop.f32.mrb[0].mxu0
      %v731 = vadd.f32 0.0, %v730
      %v732 = vpop.f32.mrb[0].mxu0
      %733 = vmatprep.mubr.bf16.mxu0 0
      %734 = vmatmul.mubr.bf16.gmra.mrb[0].mxu0 %v677
      %v735 = vpop.f32.mrb[0].mxu0
      %v736 = vadd.f32 0.0, %v735
      %v737 = vpop.f32.mrb[0].mxu0
      %v738 = vpop.f32.mrb[0].mxu0
      %v739 = vadd.f32 0.0, %v738
      %v740 = vpop.f32.mrb[0].mxu0
      %741 = vmatprep.mubr.bf16.mxu0 0
      %742 = vmatmul.mubr.bf16.gmra.mrb[0].mxu0 %v680
      %v743 = vpop.f32.mrb[0].mxu0
      %v744 = vadd.f32 0.0, %v743
      %v745 = vpop.f32.mrb[0].mxu0
      %v746 = vpop.f32.mrb[0].mxu0
      %v747 = vadd.f32 0.0, %v746
      %v748 = vpop.f32.mrb[0].mxu0
      %749 = vdwg.mxu0
      %v750 = vadd.f32 %v583, %v720
      %v751 = vadd.f32 %v586, %v723
      %v752 = vadd.f32 %v591, %v728
      %v753 = vadd.f32 %v594, %v731
      %v754 = vadd.f32 %v599, %v736
      %v755 = vadd.f32 %v602, %v739
      %v756 = vadd.f32 %v607, %v744
      %v757 = vadd.f32 %v610, %v747
      %s758 = scalar_lea.vmem %s260, 12
      %v759 = vld [vmem:[%s758] sm:$0xf]
      %v761 = vunpack.c.l.b16 %v297
      %v762 = vpack.c.b16 %v523, %v522
      %v763 = vpack.c.b16 %v525, %v524
      %v764 = vpack.c.b16 %v527, %v526
      %v765 = vpack.c.b16 %v761, %v528
      %v767 = vsel %vm431, %v762, 0
      %v770 = vsel %vm431, %v763, 0
      %v773 = vsel %vm431, %v764, 0
      %v776 = vsel %vm431, %v765, 0
      %v779 = vsel %vm444, %v759, 0
      %781 = vmatprep.subr.bf16.mxu0 0
      %782 = vmatpush1.bf16.msra.mxu0 %v779
      %783 = vmatprep.subr.bf16.mxu0 0
      %784 = vmatpush1.bf16.msra.mxu0 0
      %785 = vmatprep.subr.bf16.mxu0 0
      %786 = vmatpush1.bf16.msra.mxu0 0
      %787 = vmatprep.subr.bf16.mxu0 0
      %788 = vmatpush1.bf16.msra.mxu0 0
      %789 = vmatprep.subr.bf16.mxu0 0
      %790 = vmatpush1.bf16.msra.mxu0 0
      %791 = vmatprep.subr.bf16.mxu0 0
      %792 = vmatpush1.bf16.msra.mxu0 0
      %793 = vmatprep.subr.bf16.mxu0 0
      %794 = vmatpush1.bf16.msra.mxu0 0
      %795 = vmatprep.subr.bf16.mxu0 0
      %796 = vmatpush1.bf16.msra.mxu0 0
      %797 = vmatprep.subr.bf16.mxu0 0
      %798 = vmatpush1.bf16.msra.mxu0 0
      %799 = vmatprep.subr.bf16.mxu0 0
      %800 = vmatpush1.bf16.msra.mxu0 0
      %801 = vmatprep.subr.bf16.mxu0 0
      %802 = vmatpush1.bf16.msra.mxu0 0
      %803 = vmatprep.subr.bf16.mxu0 0
      %804 = vmatpush1.bf16.msra.mxu0 0
      %805 = vmatprep.subr.bf16.mxu0 0
      %806 = vmatpush1.bf16.msra.mxu0 0
      %807 = vmatprep.subr.bf16.mxu0 0
      %808 = vmatpush1.bf16.msra.mxu0 0
      %809 = vmatprep.subr.bf16.mxu0 0
      %810 = vmatpush1.bf16.msra.mxu0 0
      %811 = vmatprep.subr.bf16.mxu0 0
      %812 = vmatpush1.bf16.msra.mxu0 0
      %813 = vmatprep.mubr.bf16.mxu0 0
      %814 = vmatmul.mubr.bf16.gmra.mrb[0].mxu0 %v767
      %v815 = vpop.f32.mrb[0].mxu0
      %v816 = vadd.f32 0.0, %v815
      %v817 = vpop.f32.mrb[0].mxu0
      %v818 = vpop.f32.mrb[0].mxu0
      %v819 = vadd.f32 0.0, %v818
      %v820 = vpop.f32.mrb[0].mxu0
      %821 = vmatprep.mubr.bf16.mxu0 0
      %822 = vmatmul.mubr.bf16.gmra.mrb[0].mxu0 %v770
      %v823 = vpop.f32.mrb[0].mxu0
      %v824 = vadd.f32 0.0, %v823
      %v825 = vpop.f32.mrb[0].mxu0
      %v826 = vpop.f32.mrb[0].mxu0
      %v827 = vadd.f32 0.0, %v826
      %v828 = vpop.f32.mrb[0].mxu0
      %829 = vmatprep.mubr.bf16.mxu0 0
      %830 = vmatmul.mubr.bf16.gmra.mrb[0].mxu0 %v773
      %v831 = vpop.f32.mrb[0].mxu0
      %v832 = vadd.f32 0.0, %v831
      %v833 = vpop.f32.mrb[0].mxu0
      %v834 = vpop.f32.mrb[0].mxu0
      %v835 = vadd.f32 0.0, %v834
      %v836 = vpop.f32.mrb[0].mxu0
      %837 = vmatprep.mubr.bf16.mxu0 0
      %838 = vmatmul.mubr.bf16.gmra.mrb[0].mxu0 %v776
      %v839 = vpop.f32.mrb[0].mxu0
      %v840 = vadd.f32 0.0, %v839
      %v841 = vpop.f32.mrb[0].mxu0
      %v842 = vpop.f32.mrb[0].mxu0
      %v843 = vadd.f32 0.0, %v842
      %v844 = vpop.f32.mrb[0].mxu0
      %845 = vdwg.mxu0
      %v846 = vadd.f32 %v750, %v816
      %v847 = vadd.f32 %v751, %v819
      %v848 = vadd.f32 %v752, %v824
      %v849 = vadd.f32 %v753, %v827
      %v850 = vadd.f32 %v754, %v832
      %v851 = vadd.f32 %v755, %v835
      %v852 = vadd.f32 %v756, %v840
      %v853 = vadd.f32 %v757, %v843
      %v855 = vshrl.u32 %v297, 16
      %v857 = vrot.slane %v855, 4
      %v858 = vshll.u32 %v297, 16
      %v860 = vrot.slane %v858, 5
      %v861 = vor.u32 %v857, %v860
      %v862 = vrot.slane %v861, 4
      %v864 = vshll.u32 %v298, 16
      %v866 = vrot.slane %v864, 5
      %v867 = vsel %vm304, %v862, %v866
      %s868 = scalar_lea.vmem %s260, 16
      %v869 = vld [vmem:[%s868] sm:$0xf]
      %v870 = vunpack.c.l.b16 %v867
      %v871 = vpack.c.b16 %v421, %v420
      %v872 = vpack.c.b16 %v423, %v422
      %v873 = vpack.c.b16 %v425, %v424
      %v874 = vpack.c.b16 %v870, %v426
      %v876 = vsel %vm431, %v871, 0
      %v879 = vsel %vm431, %v872, 0
      %v882 = vsel %vm431, %v873, 0
      %v885 = vsel %vm431, %v874, 0
      %v888 = vsel %vm444, %v869, 0
      %890 = vmatprep.subr.bf16.mxu0 0
      %891 = vmatpush1.bf16.msra.mxu0 %v888
      %892 = vmatprep.subr.bf16.mxu0 0
      %893 = vmatpush1.bf16.msra.mxu0 0
      %894 = vmatprep.subr.bf16.mxu0 0
      %895 = vmatpush1.bf16.msra.mxu0 0
      %896 = vmatprep.subr.bf16.mxu0 0
      %897 = vmatpush1.bf16.msra.mxu0 0
      %898 = vmatprep.subr.bf16.mxu0 0
      %899 = vmatpush1.bf16.msra.mxu0 0
      %900 = vmatprep.subr.bf16.mxu0 0
      %901 = vmatpush1.bf16.msra.mxu0 0
      %902 = vmatprep.subr.bf16.mxu0 0
      %903 = vmatpush1.bf16.msra.mxu0 0
      %904 = vmatprep.subr.bf16.mxu0 0
      %905 = vmatpush1.bf16.msra.mxu0 0
      %906 = vmatprep.subr.bf16.mxu0 0
      %907 = vmatpush1.bf16.msra.mxu0 0
      %908 = vmatprep.subr.bf16.mxu0 0
      %909 = vmatpush1.bf16.msra.mxu0 0
      %910 = vmatprep.subr.bf16.mxu0 0
      %911 = vmatpush1.bf16.msra.mxu0 0
      %912 = vmatprep.subr.bf16.mxu0 0
      %913 = vmatpush1.bf16.msra.mxu0 0
      %914 = vmatprep.subr.bf16.mxu0 0
      %915 = vmatpush1.bf16.msra.mxu0 0
      %916 = vmatprep.subr.bf16.mxu0 0
      %917 = vmatpush1.bf16.msra.mxu0 0
      %918 = vmatprep.subr.bf16.mxu0 0
      %919 = vmatpush1.bf16.msra.mxu0 0
      %920 = vmatprep.subr.bf16.mxu0 0
      %921 = vmatpush1.bf16.msra.mxu0 0
      %922 = vmatprep.mubr.bf16.mxu0 0
      %923 = vmatmul.mubr.bf16.gmra.mrb[0].mxu0 %v876
      %v924 = vpop.f32.mrb[0].mxu0
      %v925 = vadd.f32 0.0, %v924
      %v926 = vpop.f32.mrb[0].mxu0
      %v927 = vpop.f32.mrb[0].mxu0
      %v928 = vadd.f32 0.0, %v927
      %v929 = vpop.f32.mrb[0].mxu0
      %930 = vmatprep.mubr.bf16.mxu0 0
      %931 = vmatmul.mubr.bf16.gmra.mrb[0].mxu0 %v879
      %v932 = vpop.f32.mrb[0].mxu0
      %v933 = vadd.f32 0.0, %v932
      %v934 = vpop.f32.mrb[0].mxu0
      %v935 = vpop.f32.mrb[0].mxu0
      %v936 = vadd.f32 0.0, %v935
      %v937 = vpop.f32.mrb[0].mxu0
      %938 = vmatprep.mubr.bf16.mxu0 0
      %939 = vmatmul.mubr.bf16.gmra.mrb[0].mxu0 %v882
      %v940 = vpop.f32.mrb[0].mxu0
      %v941 = vadd.f32 0.0, %v940
      %v942 = vpop.f32.mrb[0].mxu0
      %v943 = vpop.f32.mrb[0].mxu0
      %v944 = vadd.f32 0.0, %v943
      %v945 = vpop.f32.mrb[0].mxu0
      %946 = vmatprep.mubr.bf16.mxu0 0
      %947 = vmatmul.mubr.bf16.gmra.mrb[0].mxu0 %v885
      %v948 = vpop.f32.mrb[0].mxu0
      %v949 = vadd.f32 0.0, %v948
      %v950 = vpop.f32.mrb[0].mxu0
      %v951 = vpop.f32.mrb[0].mxu0
      %v952 = vadd.f32 0.0, %v951
      %v953 = vpop.f32.mrb[0].mxu0
      %954 = vdwg.mxu0
      %v955 = vadd.f32 %v846, %v925
      %v956 = vadd.f32 %v847, %v928
      %v957 = vadd.f32 %v848, %v933
      %v958 = vadd.f32 %v849, %v936
      %v959 = vadd.f32 %v850, %v941
      %v960 = vadd.f32 %v851, %v944
      %v961 = vadd.f32 %v852, %v949
      %v962 = vadd.f32 %v853, %v952
      %v964 = vrot.slane %v297, 5
      %v965 = vrot.slane %v964, 4
      %v966 = vrot.slane %v298, 5
      %v967 = vsel %vm623, %v965, %v966
      %s968 = scalar_lea.vmem %s260, 20
      %v969 = vld [vmem:[%s968] sm:$0xf]
      %v970 = vunpack.c.l.b16 %v967
      %v971 = vpack.c.b16 %v660, %v659
      %v972 = vpack.c.b16 %v662, %v661
      %v973 = vpack.c.b16 %v664, %v663
      %v974 = vpack.c.b16 %v970, %v665
      %v976 = vsel %vm431, %v971, 0
      %v979 = vsel %vm431, %v972, 0
      %v982 = vsel %vm431, %v973, 0
      %v985 = vsel %vm431, %v974, 0
      %v988 = vsel %vm444, %v969, 0
      %990 = vmatprep.subr.bf16.mxu0 0
      %991 = vmatpush1.bf16.msra.mxu0 %v988
      %992 = vmatprep.subr.bf16.mxu0 0
      %993 = vmatpush1.bf16.msra.mxu0 0
      %994 = vmatprep.subr.bf16.mxu0 0
      %995 = vmatpush1.bf16.msra.mxu0 0
      %996 = vmatprep.subr.bf16.mxu0 0
      %997 = vmatpush1.bf16.msra.mxu0 0
      %998 = vmatprep.subr.bf16.mxu0 0
      %999 = vmatpush1.bf16.msra.mxu0 0
      %1000 = vmatprep.subr.bf16.mxu0 0
      %1001 = vmatpush1.bf16.msra.mxu0 0
      %1002 = vmatprep.subr.bf16.mxu0 0
      %1003 = vmatpush1.bf16.msra.mxu0 0
      %1004 = vmatprep.subr.bf16.mxu0 0
      %1005 = vmatpush1.bf16.msra.mxu0 0
      %1006 = vmatprep.subr.bf16.mxu0 0
      %1007 = vmatpush1.bf16.msra.mxu0 0
      %1008 = vmatprep.subr.bf16.mxu0 0
      %1009 = vmatpush1.bf16.msra.mxu0 0
      %1010 = vmatprep.subr.bf16.mxu0 0
      %1011 = vmatpush1.bf16.msra.mxu0 0
      %1012 = vmatprep.subr.bf16.mxu0 0
      %1013 = vmatpush1.bf16.msra.mxu0 0
      %1014 = vmatprep.subr.bf16.mxu0 0
      %1015 = vmatpush1.bf16.msra.mxu0 0
      %1016 = vmatprep.subr.bf16.mxu0 0
      %1017 = vmatpush1.bf16.msra.mxu0 0
      %1018 = vmatprep.subr.bf16.mxu0 0
      %1019 = vmatpush1.bf16.msra.mxu0 0
      %1020 = vmatprep.subr.bf16.mxu0 0
      %1021 = vmatpush1.bf16.msra.mxu0 0
      %1022 = vmatprep.mubr.bf16.mxu0 0
      %1023 = vmatmul.mubr.bf16.gmra.mrb[0].mxu0 %v976
      %v1024 = vpop.f32.mrb[0].mxu0
      %v1025 = vadd.f32 0.0, %v1024
      %v1026 = vpop.f32.mrb[0].mxu0
      %v1027 = vpop.f32.mrb[0].mxu0
      %v1028 = vadd.f32 0.0, %v1027
      %v1029 = vpop.f32.mrb[0].mxu0
      %1030 = vmatprep.mubr.bf16.mxu0 0
      %1031 = vmatmul.mubr.bf16.gmra.mrb[0].mxu0 %v979
      %v1032 = vpop.f32.mrb[0].mxu0
      %v1033 = vadd.f32 0.0, %v1032
      %v1034 = vpop.f32.mrb[0].mxu0
      %v1035 = vpop.f32.mrb[0].mxu0
      %v1036 = vadd.f32 0.0, %v1035
      %v1037 = vpop.f32.mrb[0].mxu0
      %1038 = vmatprep.mubr.bf16.mxu0 0
      %1039 = vmatmul.mubr.bf16.gmra.mrb[0].mxu0 %v982
      %v1040 = vpop.f32.mrb[0].mxu0
      %v1041 = vadd.f32 0.0, %v1040
      %v1042 = vpop.f32.mrb[0].mxu0
      %v1043 = vpop.f32.mrb[0].mxu0
      %v1044 = vadd.f32 0.0, %v1043
      %v1045 = vpop.f32.mrb[0].mxu0
      %1046 = vmatprep.mubr.bf16.mxu0 0
      %1047 = vmatmul.mubr.bf16.gmra.mrb[0].mxu0 %v985
      %v1048 = vpop.f32.mrb[0].mxu0
      %v1049 = vadd.f32 0.0, %v1048
      %v1050 = vpop.f32.mrb[0].mxu0
      %v1051 = vpop.f32.mrb[0].mxu0
      %v1052 = vadd.f32 0.0, %v1051
      %v1053 = vpop.f32.mrb[0].mxu0
      %1054 = vdwg.mxu0
      %v1055 = vadd.f32 %v955, %v1025
      %v1056 = vadd.f32 %v956, %v1028
      %v1057 = vadd.f32 %v957, %v1033
      %v1058 = vadd.f32 %v958, %v1036
      %v1059 = vadd.f32 %v959, %v1041
      %v1060 = vadd.f32 %v960, %v1044
      %v1061 = vadd.f32 %v961, %v1049
      %v1062 = vadd.f32 %v962, %v1052
      %s1063 = scalar_lea.vmem %s260, 24
      %v1064 = vld [vmem:[%s1063] sm:$0xf]
      %v1066 = vunpack.c.l.b16 %v299
      %v1067 = vpack.c.b16 %v1066, %v761
      %v1069 = vsel %vm431, %v1067, 0
      %v1072 = vsel %vm444, %v1064, 0
      %1074 = vmatprep.subr.bf16.mxu0 0
      %1075 = vmatpush1.bf16.msra.mxu0 %v1072
      %1076 = vmatprep.subr.bf16.mxu0 0
      %1077 = vmatpush1.bf16.msra.mxu0 0
      %1078 = vmatprep.subr.bf16.mxu0 0
      %1079 = vmatpush1.bf16.msra.mxu0 0
      %1080 = vmatprep.subr.bf16.mxu0 0
      %1081 = vmatpush1.bf16.msra.mxu0 0
      %1082 = vmatprep.subr.bf16.mxu0 0
      %1083 = vmatpush1.bf16.msra.mxu0 0
      %1084 = vmatprep.subr.bf16.mxu0 0
      %1085 = vmatpush1.bf16.msra.mxu0 0
      %1086 = vmatprep.subr.bf16.mxu0 0
      %1087 = vmatpush1.bf16.msra.mxu0 0
      %1088 = vmatprep.subr.bf16.mxu0 0
      %1089 = vmatpush1.bf16.msra.mxu0 0
      %1090 = vmatprep.subr.bf16.mxu0 0
      %1091 = vmatpush1.bf16.msra.mxu0 0
      %1092 = vmatprep.subr.bf16.mxu0 0
      %1093 = vmatpush1.bf16.msra.mxu0 0
      %1094 = vmatprep.subr.bf16.mxu0 0
      %1095 = vmatpush1.bf16.msra.mxu0 0
      %1096 = vmatprep.subr.bf16.mxu0 0
      %1097 = vmatpush1.bf16.msra.mxu0 0
      %1098 = vmatprep.subr.bf16.mxu0 0
      %1099 = vmatpush1.bf16.msra.mxu0 0
      %1100 = vmatprep.subr.bf16.mxu0 0
      %1101 = vmatpush1.bf16.msra.mxu0 0
      %1102 = vmatprep.subr.bf16.mxu0 0
      %1103 = vmatpush1.bf16.msra.mxu0 0
      %1104 = vmatprep.subr.bf16.mxu0 0
      %1105 = vmatpush1.bf16.msra.mxu0 0
      %1106 = vmatprep.mubr.bf16.mxu0 0
      %1107 = vmatmul.mubr.bf16.gmra.mrb[0].mxu0 %v537
      %v1108 = vpop.f32.mrb[0].mxu0
      %v1109 = vadd.f32 0.0, %v1108
      %v1110 = vpop.f32.mrb[0].mxu0
      %v1111 = vpop.f32.mrb[0].mxu0
      %v1112 = vadd.f32 0.0, %v1111
      %v1113 = vpop.f32.mrb[0].mxu0
      %1114 = vmatprep.mubr.bf16.mxu0 0
      %1115 = vmatmul.mubr.bf16.gmra.mrb[0].mxu0 %v540
      %v1116 = vpop.f32.mrb[0].mxu0
      %v1117 = vadd.f32 0.0, %v1116
      %v1118 = vpop.f32.mrb[0].mxu0
      %v1119 = vpop.f32.mrb[0].mxu0
      %v1120 = vadd.f32 0.0, %v1119
      %v1121 = vpop.f32.mrb[0].mxu0
      %1122 = vmatprep.mubr.bf16.mxu0 0
      %1123 = vmatmul.mubr.bf16.gmra.mrb[0].mxu0 %v543
      %v1124 = vpop.f32.mrb[0].mxu0
      %v1125 = vadd.f32 0.0, %v1124
      %v1126 = vpop.f32.mrb[0].mxu0
      %v1127 = vpop.f32.mrb[0].mxu0
      %v1128 = vadd.f32 0.0, %v1127
      %v1129 = vpop.f32.mrb[0].mxu0
      %1130 = vmatprep.mubr.bf16.mxu0 0
      %1131 = vmatmul.mubr.bf16.gmra.mrb[0].mxu0 %v1069
      %v1132 = vpop.f32.mrb[0].mxu0
      %v1133 = vadd.f32 0.0, %v1132
      %v1134 = vpop.f32.mrb[0].mxu0
      %v1135 = vpop.f32.mrb[0].mxu0
      %v1136 = vadd.f32 0.0, %v1135
      %v1137 = vpop.f32.mrb[0].mxu0
      %1138 = vdwg.mxu0
      %v1139 = vadd.f32 %v1055, %v1109
      %v1140 = vadd.f32 %v1056, %v1112
      %v1141 = vadd.f32 %v1057, %v1117
      %v1142 = vadd.f32 %v1058, %v1120
      %v1143 = vadd.f32 %v1059, %v1125
      %v1144 = vadd.f32 %v1060, %v1128
      %v1145 = vadd.f32 %v1061, %v1133
      %v1146 = vadd.f32 %v1062, %v1136
      %v1148 = vshrl.u32 %v299, 16
      %v1150 = vrot.slane %v1148, 4
      %v1151 = vshll.u32 %v299, 16
      %v1153 = vrot.slane %v1151, 5
      %v1154 = vor.u32 %v1150, %v1153
      %v1155 = vrot.slane %v1154, 4
      %v1157 = vshll.u32 %v300, 16
      %v1159 = vrot.slane %v1157, 5
      %v1160 = vsel %vm304, %v1155, %v1159
      %s1161 = scalar_lea.vmem %s260, 28
      %v1162 = vld [vmem:[%s1161] sm:$0xf]
      %v1163 = vunpack.c.l.b16 %v1160
      %v1164 = vpack.c.b16 %v1163, %v870
      %v1166 = vsel %vm431, %v1164, 0
      %v1169 = vsel %vm444, %v1162, 0
      %1171 = vmatprep.subr.bf16.mxu0 0
      %1172 = vmatpush1.bf16.msra.mxu0 %v1169
      %1173 = vmatprep.subr.bf16.mxu0 0
      %1174 = vmatpush1.bf16.msra.mxu0 0
      %1175 = vmatprep.subr.bf16.mxu0 0
      %1176 = vmatpush1.bf16.msra.mxu0 0
      %1177 = vmatprep.subr.bf16.mxu0 0
      %1178 = vmatpush1.bf16.msra.mxu0 0
      %1179 = vmatprep.subr.bf16.mxu0 0
      %1180 = vmatpush1.bf16.msra.mxu0 0
      %1181 = vmatprep.subr.bf16.mxu0 0
      %1182 = vmatpush1.bf16.msra.mxu0 0
      %1183 = vmatprep.subr.bf16.mxu0 0
      %1184 = vmatpush1.bf16.msra.mxu0 0
      %1185 = vmatprep.subr.bf16.mxu0 0
      %1186 = vmatpush1.bf16.msra.mxu0 0
      %1187 = vmatprep.subr.bf16.mxu0 0
      %1188 = vmatpush1.bf16.msra.mxu0 0
      %1189 = vmatprep.subr.bf16.mxu0 0
      %1190 = vmatpush1.bf16.msra.mxu0 0
      %1191 = vmatprep.subr.bf16.mxu0 0
      %1192 = vmatpush1.bf16.msra.mxu0 0
      %1193 = vmatprep.subr.bf16.mxu0 0
      %1194 = vmatpush1.bf16.msra.mxu0 0
      %1195 = vmatprep.subr.bf16.mxu0 0
      %1196 = vmatpush1.bf16.msra.mxu0 0
      %1197 = vmatprep.subr.bf16.mxu0 0
      %1198 = vmatpush1.bf16.msra.mxu0 0
      %1199 = vmatprep.subr.bf16.mxu0 0
      %1200 = vmatpush1.bf16.msra.mxu0 0
      %1201 = vmatprep.subr.bf16.mxu0 0
      %1202 = vmatpush1.bf16.msra.mxu0 0
      %1203 = vmatprep.mubr.bf16.mxu0 0
      %1204 = vmatmul.mubr.bf16.gmra.mrb[0].mxu0 %v436
      %v1205 = vpop.f32.mrb[0].mxu0
      %v1206 = vadd.f32 0.0, %v1205
      %v1207 = vpop.f32.mrb[0].mxu0
      %v1208 = vpop.f32.mrb[0].mxu0
      %v1209 = vadd.f32 0.0, %v1208
      %v1210 = vpop.f32.mrb[0].mxu0
      %1211 = vmatprep.mubr.bf16.mxu0 0
      %1212 = vmatmul.mubr.bf16.gmra.mrb[0].mxu0 %v439
      %v1213 = vpop.f32.mrb[0].mxu0
      %v1214 = vadd.f32 0.0, %v1213
      %v1215 = vpop.f32.mrb[0].mxu0
      %v1216 = vpop.f32.mrb[0].mxu0
      %v1217 = vadd.f32 0.0, %v1216
      %v1218 = vpop.f32.mrb[0].mxu0
      %1219 = vmatprep.mubr.bf16.mxu0 0
      %1220 = vmatmul.mubr.bf16.gmra.mrb[0].mxu0 %v442
      %v1221 = vpop.f32.mrb[0].mxu0
      %v1222 = vadd.f32 0.0, %v1221
      %v1223 = vpop.f32.mrb[0].mxu0
      %v1224 = vpop.f32.mrb[0].mxu0
      %v1225 = vadd.f32 0.0, %v1224
      %v1226 = vpop.f32.mrb[0].mxu0
      %1227 = vmatprep.mubr.bf16.mxu0 0
      %1228 = vmatmul.mubr.bf16.gmra.mrb[0].mxu0 %v1166
      %v1229 = vpop.f32.mrb[0].mxu0
      %v1230 = vadd.f32 0.0, %v1229
      %v1231 = vpop.f32.mrb[0].mxu0
      %v1232 = vpop.f32.mrb[0].mxu0
      %v1233 = vadd.f32 0.0, %v1232
      %v1234 = vpop.f32.mrb[0].mxu0
      %1235 = vdwg.mxu0
      %v1236 = vadd.f32 %v1139, %v1206
      %v1237 = vadd.f32 %v1140, %v1209
      %v1238 = vadd.f32 %v1141, %v1214
      %v1239 = vadd.f32 %v1142, %v1217
      %v1240 = vadd.f32 %v1143, %v1222
      %v1241 = vadd.f32 %v1144, %v1225
      %v1242 = vadd.f32 %v1145, %v1230
      %v1243 = vadd.f32 %v1146, %v1233
      %v1245 = vrot.slane %v299, 5
      %v1246 = vrot.slane %v1245, 4
      %v1247 = vrot.slane %v300, 5
      %v1248 = vsel %vm623, %v1246, %v1247
      %s1249 = scalar_lea.vmem %s260, 32
      %v1250 = vld [vmem:[%s1249] sm:$0xf]
      %v1251 = vunpack.c.l.b16 %v1248
      %v1252 = vpack.c.b16 %v1251, %v970
      %v1254 = vsel %vm431, %v1252, 0
      %v1257 = vsel %vm444, %v1250, 0
      %1259 = vmatprep.subr.bf16.mxu0 0
      %1260 = vmatpush1.bf16.msra.mxu0 %v1257
      %1261 = vmatprep.subr.bf16.mxu0 0
      %1262 = vmatpush1.bf16.msra.mxu0 0
      %1263 = vmatprep.subr.bf16.mxu0 0
      %1264 = vmatpush1.bf16.msra.mxu0 0
      %1265 = vmatprep.subr.bf16.mxu0 0
      %1266 = vmatpush1.bf16.msra.mxu0 0
      %1267 = vmatprep.subr.bf16.mxu0 0
      %1268 = vmatpush1.bf16.msra.mxu0 0
      %1269 = vmatprep.subr.bf16.mxu0 0
      %1270 = vmatpush1.bf16.msra.mxu0 0
      %1271 = vmatprep.subr.bf16.mxu0 0
      %1272 = vmatpush1.bf16.msra.mxu0 0
      %1273 = vmatprep.subr.bf16.mxu0 0
      %1274 = vmatpush1.bf16.msra.mxu0 0
      %1275 = vmatprep.subr.bf16.mxu0 0
      %1276 = vmatpush1.bf16.msra.mxu0 0
      %1277 = vmatprep.subr.bf16.mxu0 0
      %1278 = vmatpush1.bf16.msra.mxu0 0
      %1279 = vmatprep.subr.bf16.mxu0 0
      %1280 = vmatpush1.bf16.msra.mxu0 0
      %1281 = vmatprep.subr.bf16.mxu0 0
      %1282 = vmatpush1.bf16.msra.mxu0 0
      %1283 = vmatprep.subr.bf16.mxu0 0
      %1284 = vmatpush1.bf16.msra.mxu0 0
      %1285 = vmatprep.subr.bf16.mxu0 0
      %1286 = vmatpush1.bf16.msra.mxu0 0
      %1287 = vmatprep.subr.bf16.mxu0 0
      %1288 = vmatpush1.bf16.msra.mxu0 0
      %1289 = vmatprep.subr.bf16.mxu0 0
      %1290 = vmatpush1.bf16.msra.mxu0 0
      %1291 = vmatprep.mubr.bf16.mxu0 0
      %1292 = vmatmul.mubr.bf16.gmra.mrb[0].mxu0 %v674
      %v1293 = vpop.f32.mrb[0].mxu0
      %v1294 = vadd.f32 0.0, %v1293
      %v1295 = vpop.f32.mrb[0].mxu0
      %v1296 = vpop.f32.mrb[0].mxu0
      %v1297 = vadd.f32 0.0, %v1296
      %v1298 = vpop.f32.mrb[0].mxu0
      %1299 = vmatprep.mubr.bf16.mxu0 0
      %1300 = vmatmul.mubr.bf16.gmra.mrb[0].mxu0 %v677
      %v1301 = vpop.f32.mrb[0].mxu0
      %v1302 = vadd.f32 0.0, %v1301
      %v1303 = vpop.f32.mrb[0].mxu0
      %v1304 = vpop.f32.mrb[0].mxu0
      %v1305 = vadd.f32 0.0, %v1304
      %v1306 = vpop.f32.mrb[0].mxu0
      %1307 = vmatprep.mubr.bf16.mxu0 0
      %1308 = vmatmul.mubr.bf16.gmra.mrb[0].mxu0 %v680
      %v1309 = vpop.f32.mrb[0].mxu0
      %v1310 = vadd.f32 0.0, %v1309
      %v1311 = vpop.f32.mrb[0].mxu0
      %v1312 = vpop.f32.mrb[0].mxu0
      %v1313 = vadd.f32 0.0, %v1312
      %v1314 = vpop.f32.mrb[0].mxu0
      %1315 = vmatprep.mubr.bf16.mxu0 0
      %1316 = vmatmul.mubr.bf16.gmra.mrb[0].mxu0 %v1254
      %v1317 = vpop.f32.mrb[0].mxu0
      %v1318 = vadd.f32 0.0, %v1317
      %v1319 = vpop.f32.mrb[0].mxu0
      %v1320 = vpop.f32.mrb[0].mxu0
      %v1321 = vadd.f32 0.0, %v1320
      %v1322 = vpop.f32.mrb[0].mxu0
      %1323 = vdwg.mxu0
      %v1324 = vadd.f32 %v1236, %v1294
      %v1325 = vadd.f32 %v1237, %v1297
      %v1326 = vadd.f32 %v1238, %v1302
      %v1327 = vadd.f32 %v1239, %v1305
      %v1328 = vadd.f32 %v1240, %v1310
      %v1329 = vadd.f32 %v1241, %v1313
      %v1330 = vadd.f32 %v1242, %v1318
      %v1331 = vadd.f32 %v1243, %v1321
      %v1332 = vld [vmem:[%s263] sm:$0x1]
      %v1334 = vlaneseq
      %v1335 = vshrl.u32 %v1334, 7
      %v1336 = vsub.s32 0, %v1335
      %v1337 = vrot.slane %v1332, %v1336
      %v1339 = vadd.f32 %v1324, %v1337
      %v1340 = vadd.f32 %v1325, %v1337
      %v1341 = vadd.f32 %v1326, %v1337
      %v1342 = vadd.f32 %v1327, %v1337
      %v1343 = vadd.f32 %v1328, %v1337
      %v1344 = vadd.f32 %v1329, %v1337
      %v1345 = vadd.f32 %v1330, %v1337
      %v1346 = vadd.f32 %v1331, %v1337
      %v1347 = vld [vmem:[%s271] sm:$0xff]
      %v1348 = vld [vmem:[%s271 + $0x8] sm:$0xff]
      %v1349 = vld [vmem:[%s271 + $0x10] sm:$0xff]
      %v1350 = vld [vmem:[%s271 + $0x18] sm:$0xff]
      %v1351 = vld [vmem:[%s271 + $0x20] sm:$0xff]
      %v1352 = vld [vmem:[%s271 + $0x28] sm:$0xff]
      %v1353 = vld [vmem:[%s271 + $0x30] sm:$0xff]
      %v1354 = vld [vmem:[%s271 + $0x38] sm:$0xff]
      %v1355 = vadd.f32 %v1339, %v1347
      %v1356 = vadd.f32 %v1340, %v1348
      %v1357 = vadd.f32 %v1341, %v1349
      %v1358 = vadd.f32 %v1342, %v1350
      %v1359 = vadd.f32 %v1343, %v1351
      %v1360 = vadd.f32 %v1344, %v1352
      %v1361 = vadd.f32 %v1345, %v1353
      %v1362 = vadd.f32 %v1346, %v1354
      %1363 = vst.msk [vmem:[%s279] sm:$0xff] %vm431, %v1355
      %1364 = vst.msk [vmem:[%s279 + $0x8] sm:$0xff] %vm431, %v1356
      %1365 = vst.msk [vmem:[%s279 + $0x10] sm:$0xff] %vm431, %v1357
      %1366 = vst.msk [vmem:[%s279 + $0x18] sm:$0xff] %vm431, %v1358
      %1367 = vst.msk [vmem:[%s279 + $0x20] sm:$0xff] %vm431, %v1359
      %1368 = vst.msk [vmem:[%s279 + $0x28] sm:$0xff] %vm431, %v1360
      %1369 = vst.msk [vmem:[%s279 + $0x30] sm:$0xff] %vm431, %v1361
      %1370 = vst.msk [vmem:[%s279 + $0x38] sm:$0xff] %vm431, %v1362
      %p1371 = scmp.lt.s32.totalorder %s19, 1
      %s1372 = scalar_select %p1371, %s19, 1
      %p1373 = scmp.lt.s32.totalorder %s20, 0
      %s1374 = scalar_select %p1373, %s20, 0
      %s1375 = smul.addr %s1372, 8
      %s1376 = sadd.s32 %s1374, %s1375
      %s1377 = smul.addr %s1376, 8
      %s1378 = scalar_lea.vmem %s4, %s1377
      // Predicated region
      $region37: #{rstb_forward.39} parent=35 // pred_check
        %p1379 = pneg %p153
      $region38: #{rstb_forward.39} parent=35 // pred_check_branch
        %1381 = sbr.rel (%p1379) target = $region40
      $region39: #{rstb_forward.39} parent=35 // pred_region
        _
      $region40: #{rstb_forward.39} parent=35 // pred_fallthru
        _
    $region36: #{rstb_forward.39} parent=5 // pred_fallthru
      _
    %p1382 = scmp.le.s32.totalorder 2, %s10
    // Predicated region
    $region41: #{rstb_forward.39} parent=5 // pred_check
      %p1383 = pneg %p1382
    $region42: #{rstb_forward.39} parent=5 // pred_check_branch
      %1385 = sbr.rel (%p1383) target = $region44
    $region43: #{rstb_forward.39} parent=5 // pred_region
      %s1386 = ssub.s32 %s10, 2
      // Predicated region
      $region45: #{rstb_forward.39} parent=43 // pred_check
        %p1387 = pneg %p159
      $region46: #{rstb_forward.39} parent=43 // pred_check_branch
        %1389 = sbr.rel (%p1387) target = $region48
      $region47: #{rstb_forward.39} parent=43 // pred_region
        %p1390 = scmp.lt.s32.totalorder %s21, 1
        %s1391 = scalar_select %p1390, %s21, 1
        %p1392 = scmp.lt.s32.totalorder %s22, 0
        %s1393 = scalar_select %p1392, %s22, 0
        %s1394 = smul.addr %s1391, 8
        %s1395 = sadd.s32 %s1393, %s1394
        %s1396 = smul.addr %s1395, 8
        %s1397 = scalar_lea.vmem %s4, %s1396
      $region48: #{rstb_forward.39} parent=43 // pred_fallthru
        _
    $region44: #{rstb_forward.39} parent=5 // pred_fallthru
      _
  $region6: #{rstb_forward.39} parent=0 // loop_footer
    %s14 = sadd.s32 1, %s10
  $region7: #{rstb_forward.39} parent=0 // loop_footer_branch
    %9 = sbr.rel target = $region3
  $region8: #{rstb_forward.39} parent=0 // loop_exit
    _

</llo_original>
